<compile_context>
chip_gen: v6e
topology: v6e:2x2x1
jax: 0.10.0
libtpu: 0.0.40
codegen_flags: <defaults>
</compile_context>

<pallas_src>
import functools

import jax
import jax.numpy as jnp
from jax.experimental import pallas as pl
from jax.experimental.pallas import tpu as pltpu

LANE = 128  # padded hidden / lane width


# ------------------------------ fused model kernel ----------------------------

def fused_lstm_model_kernel(
        x_ref,                                     # (T*B, Din)  time-major flattened
        w1x_ref, w1h_ref, b1_ref,                  # (Din,4Hp) (Hp,4Hp) (1,4Hp)
        w2x_ref, w2h_ref, b2_ref,                  # (Hp,4H2)  (H2,4H2) (1,4H2)
        w3x_ref, w3h_ref, b3_ref,                  # (H2,4Hp)  (Hp,4Hp) (1,4Hp)
        fw1_ref, fb1_ref, fw2_ref, fb2_ref, fw3_ref, fb3_ref,   # (128,128)/(1,128)
        out_ref,                                   # (B, 128) lane-padded logits
        *, batch, seq_len):
    B, T = batch, seq_len
    Hp = w1h_ref.shape[0]          # padded hidden for layers 1 & 3 (=128)
    H2 = w2h_ref.shape[0]          # layer-2 hidden (=128)
    f32 = jnp.float32

    # ---- hoisted layer-1 input projection + bias: one M = T*B matmul ----
    g1_all = (jnp.dot(x_ref[...], w1x_ref[...], preferred_element_type=f32)
              + b1_ref[...])                                         # (T*B, 4Hp)

    # ---- bias broadcasts hoisted out of the unrolled recurrence ----
    b2 = jnp.broadcast_to(b2_ref[...], (B, 4 * H2))
    b3 = jnp.broadcast_to(b3_ref[...], (B, 4 * Hp))

    def gates_to_hc(gates, c, h_dim):
        # gate layout [i | f | o | g], each block h_dim (=128) lanes wide
        sig = jax.nn.sigmoid(gates[:, :3 * h_dim])
        i_g = sig[:, 0 * h_dim:1 * h_dim]
        f_g = sig[:, 1 * h_dim:2 * h_dim]
        o_g = sig[:, 2 * h_dim:3 * h_dim]
        g_g = jnp.tanh(gates[:, 3 * h_dim:])
        c_new = f_g * c + i_g * g_g
        h_new = o_g * jnp.tanh(c_new)
        return h_new, c_new

    h1 = jnp.zeros((B, Hp), f32); c1 = jnp.zeros((B, Hp), f32)
    h2 = jnp.zeros((B, H2), f32); c2 = jnp.zeros((B, H2), f32)
    h3 = jnp.zeros((B, Hp), f32); c3 = jnp.zeros((B, Hp), f32)

    # Fully unrolled recurrence (T static, carried state tiny -> no spill pressure).
    # TODO(synk): evaluate pltpu.matmul_push_rhs staging of Whh across steps and the
    # layer-major restructuring suggested by the perf review once bundle dumps exist.
    for t in range(T):
        # layer 1: input projection already hoisted; only the recurrent matmul here
        g1 = g1_all[t * B:(t + 1) * B, :] + jnp.dot(
            h1, w1h_ref[...], preferred_element_type=f32)
        h1, c1 = gates_to_hc(g1, c1, Hp)
        # layer 2
        g2 = (jnp.dot(h1, w2x_ref[...], preferred_element_type=f32)
              + jnp.dot(h2, w2h_ref[...], preferred_element_type=f32) + b2)
        h2, c2 = gates_to_hc(g2, c2, H2)
        # layer 3
        g3 = (jnp.dot(h2, w3x_ref[...], preferred_element_type=f32)
              + jnp.dot(h3, w3h_ref[...], preferred_element_type=f32) + b3)
        h3, c3 = gates_to_hc(g3, c3, Hp)

    # ---- FC head on the final layer-3 hidden state (all lane-padded to 128) ----
    y = jnp.maximum(jnp.dot(h3, fw1_ref[...], preferred_element_type=f32)
                    + fb1_ref[...], 0.0)
    y = jnp.maximum(jnp.dot(y, fw2_ref[...], preferred_element_type=f32)
                    + fb2_ref[...], 0.0)
    out_ref[...] = (jnp.dot(y, fw3_ref[...], preferred_element_type=f32)
                    + fb3_ref[...])
    # note: self.softmax is defined in the PyTorch __init__ but never applied in forward()


def lstm_model_forward(kparams, x, num_classes):
    """x: (B, T, input_size) batch-first, matching the PyTorch module."""
    B, T, Din = x.shape
    # Time-major flatten so the hoisted projection rows for step t are [t*B, (t+1)*B).
    x_tb = jnp.transpose(x, (1, 0, 2)).reshape(T * B, Din).astype(jnp.float32)
    vmem = pl.BlockSpec(memory_space=pltpu.MemorySpace.VMEM)
    args = (
        x_tb,
        kparams["l1_wx"], kparams["l1_wh"], kparams["l1_b"],
        kparams["l2_wx"], kparams["l2_wh"], kparams["l2_b"],
        kparams["l3_wx"], kparams["l3_wh"], kparams["l3_b"],
        kparams["fc1_w"], kparams["fc1_b"],
        kparams["fc2_w"], kparams["fc2_b"],
        kparams["fc3_w"], kparams["fc3_b"],
    )
    out_pad = pl.pallas_call(
        functools.partial(fused_lstm_model_kernel, batch=B, seq_len=T),
        out_shape=jax.ShapeDtypeStruct((B, LANE), jnp.float32),
        in_specs=[vmem] * len(args),
        out_specs=vmem,
    )(*args)
    return out_pad[:, :num_classes]


# ------------------------------ parameter setup ------------------------------

def _uniform(key, shape, scale):
    return jax.random.uniform(key, shape, jnp.float32, -scale, scale)


def _raw_lstm(key, din, h):
    """PyTorch nn.LSTM layout: weight_ih (4h,din), weight_hh (4h,h), biases (4h,)."""
    k = jax.random.split(key, 4)
    s = 1.0 / (h ** 0.5)
    return (_uniform(k[0], (4 * h, din), s), _uniform(k[1], (4 * h, h), s),
            _uniform(k[2], (4 * h,), s), _uniform(k[3], (4 * h,), s))


def _raw_linear(key, fan_in, fan_out):
    """PyTorch nn.Linear layout: weight (out,in), bias (out,)."""
    k = jax.random.split(key, 2)
    s = 1.0 / (fan_in ** 0.5)
    return _uniform(k[0], (fan_out, fan_in), s), _uniform(k[1], (fan_out,), s)


def _reorder_gates(w, h):
    """PyTorch gate blocks [i|f|g|o] -> kernel layout [i|f|o|g] along axis 0."""
    return jnp.concatenate([w[0:2 * h], w[3 * h:4 * h], w[2 * h:3 * h]], axis=0)


def _pad_axis(a, axis, new_size):
    pad = new_size - a.shape[axis]
    if pad == 0:
        return a
    widths = [(0, 0)] * a.ndim
    widths[axis] = (0, pad)
    return jnp.pad(a, widths)


def _pad_gate_blocks(a, h, hp):
    """a: (..., 4h) in [i|f|o|g]; zero-pad each gate block to hp along the last axis."""
    if h == hp:
        return a
    return jnp.concatenate(
        [_pad_axis(a[..., k * h:(k + 1) * h], -1, hp) for k in range(4)], axis=-1)


def _to_kernel_lstm(wih, whh, bih, bhh, din_pad, hp):
    """-> wx (din_pad,4hp), wh (hp,4hp), b (1,4hp); gate layout [i|f|o|g], zero-padded."""
    h = whh.shape[1]
    wx = _pad_axis(_pad_gate_blocks(_reorder_gates(wih, h).T, h, hp), 0, din_pad)
    wh = _pad_axis(_pad_gate_blocks(_reorder_gates(whh, h).T, h, hp), 0, hp)
    b = _pad_gate_blocks(_reorder_gates(bih + bhh, h)[None, :], h, hp)
    return wx, wh, b


def _to_kernel_linear(w, b, in_pad, out_pad):
    """PyTorch (out,in)/(out,) -> ((in_pad,out_pad), (1,out_pad)), zero-padded."""
    return (_pad_axis(_pad_axis(w.T, 0, in_pad), 1, out_pad),
            _pad_axis(b[None, :], 1, out_pad))


def init_params(key, input_size, num_classes):
    keys = jax.random.split(key, 6)
    raw = {
        "l1": _raw_lstm(keys[0], input_size, 64),
        "l2": _raw_lstm(keys[1], 64, 128),
        "l3": _raw_lstm(keys[2], 128, 64),
        "fc1": _raw_linear(keys[3], 64, 64),
        "fc2": _raw_linear(keys[4], 64, 32),
        "fc3": _raw_linear(keys[5], 32, num_classes),
    }
    l1 = _to_kernel_lstm(*raw["l1"], din_pad=input_size, hp=LANE)
    l2 = _to_kernel_lstm(*raw["l2"], din_pad=LANE, hp=LANE)
    l3 = _to_kernel_lstm(*raw["l3"], din_pad=LANE, hp=LANE)
    fc1 = _to_kernel_linear(*raw["fc1"], in_pad=LANE, out_pad=LANE)
    fc2 = _to_kernel_linear(*raw["fc2"], in_pad=LANE, out_pad=LANE)
    fc3 = _to_kernel_linear(*raw["fc3"], in_pad=LANE, out_pad=LANE)
    kern = {
        "l1_wx": l1[0], "l1_wh": l1[1], "l1_b": l1[2],
        "l2_wx": l2[0], "l2_wh": l2[1], "l2_b": l2[2],
        "l3_wx": l3[0], "l3_wh": l3[1], "l3_b": l3[2],
        "fc1_w": fc1[0], "fc1_b": fc1[1],
        "fc2_w": fc2[0], "fc2_b": fc2[1],
        "fc3_w": fc3[0], "fc3_b": fc3[1],
    }
    return raw, kern


# ------------------------- pure-JAX reference (PyTorch semantics) --------------

def reference_forward(raw, x):
    hp = jax.lax.Precision.HIGHEST

    def lstm_layer(xs, wih, whh, bih, bhh):
        h_size = whh.shape[1]
        B, T, _ = xs.shape
        h = jnp.zeros((B, h_size), jnp.float32)
        c = jnp.zeros((B, h_size), jnp.float32)
        outs = []
        for t in range(T):
            g = (jnp.dot(xs[:, t, :], wih.T, precision=hp)
                 + jnp.dot(h, whh.T, precision=hp) + bih + bhh)
            i = jax.nn.sigmoid(g[:, 0 * h_size:1 * h_size])
            f = jax.nn.sigmoid(g[:, 1 * h_size:2 * h_size])
            gg = jnp.tanh(g[:, 2 * h_size:3 * h_size])
            o = jax.nn.sigmoid(g[:, 3 * h_size:4 * h_size])
            c = f * c + i * gg
            h = o * jnp.tanh(c)
            outs.append(h)
        return jnp.stack(outs, axis=1)

    y = lstm_layer(x, *raw["l1"])
    y = lstm_layer(y, *raw["l2"])
    y = lstm_layer(y, *raw["l3"])
    y = y[:, -1, :]
    w, b = raw["fc1"]; y = jax.nn.relu(jnp.dot(y, w.T, precision=hp) + b)
    w, b = raw["fc2"]; y = jax.nn.relu(jnp.dot(y, w.T, precision=hp) + b)
    w, b = raw["fc3"]; y = jnp.dot(y, w.T, precision=hp) + b
    return y


# ----------------------------------- main -------------------------------------

if __name__ == "__main__":
    B, T, input_size, num_classes = 2, 8, 16, 10
    key = jax.random.PRNGKey(0)
    k_x, k_p = jax.random.split(key)
    x = jax.random.normal(k_x, (B, T, input_size), jnp.float32)
    raw, kern = init_params(k_p, input_size, num_classes)

    fwd = jax.jit(lambda p, xx: lstm_model_forward(p, xx, num_classes))
    out = fwd(kern, x)
    jax.block_until_ready(out)
    assert out.shape == (B, num_classes), out.shape
    assert out.dtype == jnp.float32

    ref = reference_forward(raw, x)
    err = float(jnp.max(jnp.abs(out - ref)))
    assert err < 5e-2, f"kernel vs reference max abs err {err}"
    print("KERNEL_OK")
</pallas_src>

<mosaic_0001>
module attributes {stable_mosaic.version = 11 : i64} {
  func.func @fused_lstm_model_kernel(%arg0: memref<16x16xf32, #tpu.memory_space<vmem>>, %arg1: memref<16x512xf32, #tpu.memory_space<vmem>>, %arg2: memref<128x512xf32, #tpu.memory_space<vmem>>, %arg3: memref<1x512xf32, #tpu.memory_space<vmem>>, %arg4: memref<128x512xf32, #tpu.memory_space<vmem>>, %arg5: memref<128x512xf32, #tpu.memory_space<vmem>>, %arg6: memref<1x512xf32, #tpu.memory_space<vmem>>, %arg7: memref<128x512xf32, #tpu.memory_space<vmem>>, %arg8: memref<128x512xf32, #tpu.memory_space<vmem>>, %arg9: memref<1x512xf32, #tpu.memory_space<vmem>>, %arg10: memref<128x128xf32, #tpu.memory_space<vmem>>, %arg11: memref<1x128xf32, #tpu.memory_space<vmem>>, %arg12: memref<128x128xf32, #tpu.memory_space<vmem>>, %arg13: memref<1x128xf32, #tpu.memory_space<vmem>>, %arg14: memref<128x128xf32, #tpu.memory_space<vmem>>, %arg15: memref<1x128xf32, #tpu.memory_space<vmem>>, %arg16: memref<2x128xf32, #tpu.memory_space<vmem>>) attributes {dimension_semantics = [], scalar_prefetch = 0 : i64, scratch_operands = 0 : i64, tpu.core_type = #tpu.core_type<tc>} {
    %c0 = arith.constant 0 : index
    %c0_0 = arith.constant 0 : index
    %0 = vector.load %arg0[%c0, %c0_0] : memref<16x16xf32, #tpu.memory_space<vmem>>, vector<16x16xf32>
    %c0_1 = arith.constant 0 : index
    %c0_2 = arith.constant 0 : index
    %1 = vector.load %arg1[%c0_1, %c0_2] : memref<16x512xf32, #tpu.memory_space<vmem>>, vector<16x512xf32>
    %cst = arith.constant dense<0.000000e+00> : vector<16x512xf32>
    %2 = tpu.matmul %0, %1, %cst {dimension_numbers = #tpu.dot_dimension_numbers<[1], [0], [0], [1], [0, 0, 1, 1], [], []>} : vector<16x16xf32>, vector<16x512xf32>, vector<16x512xf32> -> vector<16x512xf32>
    %c0_3 = arith.constant 0 : index
    %c0_4 = arith.constant 0 : index
    %3 = vector.load %arg3[%c0_3, %c0_4] : memref<1x512xf32, #tpu.memory_space<vmem>>, vector<1x512xf32>
    %4 = vector.broadcast %3 : vector<1x512xf32> to vector<16x512xf32>
    %5 = arith.addf %2, %4 : vector<16x512xf32>
    %c0_5 = arith.constant 0 : index
    %c0_6 = arith.constant 0 : index
    %6 = vector.load %arg6[%c0_5, %c0_6] : memref<1x512xf32, #tpu.memory_space<vmem>>, vector<1x512xf32>
    %7 = vector.shape_cast %6 : vector<1x512xf32> to vector<1x512xf32>
    %8 = vector.broadcast %7 : vector<1x512xf32> to vector<2x512xf32>
    %c0_7 = arith.constant 0 : index
    %c0_8 = arith.constant 0 : index
    %9 = vector.load %arg9[%c0_7, %c0_8] : memref<1x512xf32, #tpu.memory_space<vmem>>, vector<1x512xf32>
    %10 = vector.shape_cast %9 : vector<1x512xf32> to vector<1x512xf32>
    %11 = vector.broadcast %10 : vector<1x512xf32> to vector<2x512xf32>
    %cst_9 = arith.constant 0.000000e+00 : f32
    %12 = vector.broadcast %cst_9 : f32 to vector<2x128xf32>
    %cst_10 = arith.constant 0.000000e+00 : f32
    %13 = vector.broadcast %cst_10 : f32 to vector<2x128xf32>
    %cst_11 = arith.constant 0.000000e+00 : f32
    %14 = vector.broadcast %cst_11 : f32 to vector<2x128xf32>
    %cst_12 = arith.constant 0.000000e+00 : f32
    %15 = vector.broadcast %cst_12 : f32 to vector<2x128xf32>
    %cst_13 = arith.constant 0.000000e+00 : f32
    %16 = vector.broadcast %cst_13 : f32 to vector<2x128xf32>
    %cst_14 = arith.constant 0.000000e+00 : f32
    %17 = vector.broadcast %cst_14 : f32 to vector<2x128xf32>
    %18 = vector.extract_strided_slice %5 {offsets = [0, 0], sizes = [2, 512], strides = [1, 1]} : vector<16x512xf32> to vector<2x512xf32>
    %c0_15 = arith.constant 0 : index
    %c0_16 = arith.constant 0 : index
    %19 = vector.load %arg2[%c0_15, %c0_16] : memref<128x512xf32, #tpu.memory_space<vmem>>, vector<128x512xf32>
    %cst_17 = arith.constant dense<0.000000e+00> : vector<2x512xf32>
    %20 = tpu.matmul %12, %19, %cst_17 {dimension_numbers = #tpu.dot_dimension_numbers<[1], [0], [0], [1], [0, 0, 1, 1], [], []>} : vector<2x128xf32>, vector<128x512xf32>, vector<2x512xf32> -> vector<2x512xf32>
    %21 = arith.addf %18, %20 : vector<2x512xf32>
    %22 = vector.extract_strided_slice %21 {offsets = [0, 0], sizes = [2, 384], strides = [1, 1]} : vector<2x512xf32> to vector<2x384xf32>
    %23 = arith.negf %22 : vector<2x384xf32>
    %24 = math.exp %23 : vector<2x384xf32>
    %cst_18 = arith.constant 1.000000e+00 : f32
    %25 = vector.broadcast %cst_18 : f32 to vector<2x384xf32>
    %26 = arith.addf %25, %24 : vector<2x384xf32>
    %27 = arith.divf %25, %26 : vector<2x384xf32>
    %28 = vector.extract_strided_slice %27 {offsets = [0, 0], sizes = [2, 128], strides = [1, 1]} : vector<2x384xf32> to vector<2x128xf32>
    %29 = vector.extract_strided_slice %27 {offsets = [0, 128], sizes = [2, 128], strides = [1, 1]} : vector<2x384xf32> to vector<2x128xf32>
    %30 = vector.extract_strided_slice %27 {offsets = [0, 256], sizes = [2, 128], strides = [1, 1]} : vector<2x384xf32> to vector<2x128xf32>
    %31 = vector.extract_strided_slice %21 {offsets = [0, 384], sizes = [2, 128], strides = [1, 1]} : vector<2x512xf32> to vector<2x128xf32>
    %32 = math.tanh %31 : vector<2x128xf32>
    %33 = arith.mulf %29, %13 : vector<2x128xf32>
    %34 = arith.mulf %28, %32 : vector<2x128xf32>
    %35 = arith.addf %33, %34 : vector<2x128xf32>
    %36 = math.tanh %35 : vector<2x128xf32>
    %37 = arith.mulf %30, %36 : vector<2x128xf32>
    %c0_19 = arith.constant 0 : index
    %c0_20 = arith.constant 0 : index
    %38 = vector.load %arg4[%c0_19, %c0_20] : memref<128x512xf32, #tpu.memory_space<vmem>>, vector<128x512xf32>
    %cst_21 = arith.constant dense<0.000000e+00> : vector<2x512xf32>
    %39 = tpu.matmul %37, %38, %cst_21 {dimension_numbers = #tpu.dot_dimension_numbers<[1], [0], [0], [1], [0, 0, 1, 1], [], []>} : vector<2x128xf32>, vector<128x512xf32>, vector<2x512xf32> -> vector<2x512xf32>
    %c0_22 = arith.constant 0 : index
    %c0_23 = arith.constant 0 : index
    %40 = vector.load %arg5[%c0_22, %c0_23] : memref<128x512xf32, #tpu.memory_space<vmem>>, vector<128x512xf32>
    %cst_24 = arith.constant dense<0.000000e+00> : vector<2x512xf32>
    %41 = tpu.matmul %14, %40, %cst_24 {dimension_numbers = #tpu.dot_dimension_numbers<[1], [0], [0], [1], [0, 0, 1, 1], [], []>} : vector<2x128xf32>, vector<128x512xf32>, vector<2x512xf32> -> vector<2x512xf32>
    %42 = arith.addf %39, %41 : vector<2x512xf32>
    %43 = arith.addf %42, %8 : vector<2x512xf32>
    %44 = vector.extract_strided_slice %43 {offsets = [0, 0], sizes = [2, 384], strides = [1, 1]} : vector<2x512xf32> to vector<2x384xf32>
    %45 = arith.negf %44 : vector<2x384xf32>
    %46 = math.exp %45 : vector<2x384xf32>
    %cst_25 = arith.constant 1.000000e+00 : f32
    %47 = vector.broadcast %cst_25 : f32 to vector<2x384xf32>
    %48 = arith.addf %47, %46 : vector<2x384xf32>
    %49 = arith.divf %47, %48 : vector<2x384xf32>
    %50 = vector.extract_strided_slice %49 {offsets = [0, 0], sizes = [2, 128], strides = [1, 1]} : vector<2x384xf32> to vector<2x128xf32>
    %51 = vector.extract_strided_slice %49 {offsets = [0, 128], sizes = [2, 128], strides = [1, 1]} : vector<2x384xf32> to vector<2x128xf32>
    %52 = vector.extract_strided_slice %49 {offsets = [0, 256], sizes = [2, 128], strides = [1, 1]} : vector<2x384xf32> to vector<2x128xf32>
    %53 = vector.extract_strided_slice %43 {offsets = [0, 384], sizes = [2, 128], strides = [1, 1]} : vector<2x512xf32> to vector<2x128xf32>
    %54 = math.tanh %53 : vector<2x128xf32>
    %55 = arith.mulf %51, %15 : vector<2x128xf32>
    %56 = arith.mulf %50, %54 : vector<2x128xf32>
    %57 = arith.addf %55, %56 : vector<2x128xf32>
    %58 = math.tanh %57 : vector<2x128xf32>
    %59 = arith.mulf %52, %58 : vector<2x128xf32>
    %c0_26 = arith.constant 0 : index
    %c0_27 = arith.constant 0 : index
    %60 = vector.load %arg7[%c0_26, %c0_27] : memref<128x512xf32, #tpu.memory_space<vmem>>, vector<128x512xf32>
    %cst_28 = arith.constant dense<0.000000e+00> : vector<2x512xf32>
    %61 = tpu.matmul %59, %60, %cst_28 {dimension_numbers = #tpu.dot_dimension_numbers<[1], [0], [0], [1], [0, 0, 1, 1], [], []>} : vector<2x128xf32>, vector<128x512xf32>, vector<2x512xf32> -> vector<2x512xf32>
    %c0_29 = arith.constant 0 : index
    %c0_30 = arith.constant 0 : index
    %62 = vector.load %arg8[%c0_29, %c0_30] : memref<128x512xf32, #tpu.memory_space<vmem>>, vector<128x512xf32>
    %cst_31 = arith.constant dense<0.000000e+00> : vector<2x512xf32>
    %63 = tpu.matmul %16, %62, %cst_31 {dimension_numbers = #tpu.dot_dimension_numbers<[1], [0], [0], [1], [0, 0, 1, 1], [], []>} : vector<2x128xf32>, vector<128x512xf32>, vector<2x512xf32> -> vector<2x512xf32>
    %64 = arith.addf %61, %63 : vector<2x512xf32>
    %65 = arith.addf %64, %11 : vector<2x512xf32>
    %66 = vector.extract_strided_slice %65 {offsets = [0, 0], sizes = [2, 384], strides = [1, 1]} : vector<2x512xf32> to vector<2x384xf32>
    %67 = arith.negf %66 : vector<2x384xf32>
    %68 = math.exp %67 : vector<2x384xf32>
    %cst_32 = arith.constant 1.000000e+00 : f32
    %69 = vector.broadcast %cst_32 : f32 to vector<2x384xf32>
    %70 = arith.addf %69, %68 : vector<2x384xf32>
    %71 = arith.divf %69, %70 : vector<2x384xf32>
    %72 = vector.extract_strided_slice %71 {offsets = [0, 0], sizes = [2, 128], strides = [1, 1]} : vector<2x384xf32> to vector<2x128xf32>
    %73 = vector.extract_strided_slice %71 {offsets = [0, 128], sizes = [2, 128], strides = [1, 1]} : vector<2x384xf32> to vector<2x128xf32>
    %74 = vector.extract_strided_slice %71 {offsets = [0, 256], sizes = [2, 128], strides = [1, 1]} : vector<2x384xf32> to vector<2x128xf32>
    %75 = vector.extract_strided_slice %65 {offsets = [0, 384], sizes = [2, 128], strides = [1, 1]} : vector<2x512xf32> to vector<2x128xf32>
    %76 = math.tanh %75 : vector<2x128xf32>
    %77 = arith.mulf %73, %17 : vector<2x128xf32>
    %78 = arith.mulf %72, %76 : vector<2x128xf32>
    %79 = arith.addf %77, %78 : vector<2x128xf32>
    %80 = math.tanh %79 : vector<2x128xf32>
    %81 = arith.mulf %74, %80 : vector<2x128xf32>
    %82 = vector.extract_strided_slice %5 {offsets = [2, 0], sizes = [2, 512], strides = [1, 1]} : vector<16x512xf32> to vector<2x512xf32>
    %c0_33 = arith.constant 0 : index
    %c0_34 = arith.constant 0 : index
    %83 = vector.load %arg2[%c0_33, %c0_34] : memref<128x512xf32, #tpu.memory_space<vmem>>, vector<128x512xf32>
    %cst_35 = arith.constant dense<0.000000e+00> : vector<2x512xf32>
    %84 = tpu.matmul %37, %83, %cst_35 {dimension_numbers = #tpu.dot_dimension_numbers<[1], [0], [0], [1], [0, 0, 1, 1], [], []>} : vector<2x128xf32>, vector<128x512xf32>, vector<2x512xf32> -> vector<2x512xf32>
    %85 = arith.addf %82, %84 : vector<2x512xf32>
    %86 = vector.extract_strided_slice %85 {offsets = [0, 0], sizes = [2, 384], strides = [1, 1]} : vector<2x512xf32> to vector<2x384xf32>
    %87 = arith.negf %86 : vector<2x384xf32>
    %88 = math.exp %87 : vector<2x384xf32>
    %cst_36 = arith.constant 1.000000e+00 : f32
    %89 = vector.broadcast %cst_36 : f32 to vector<2x384xf32>
    %90 = arith.addf %89, %88 : vector<2x384xf32>
    %91 = arith.divf %89, %90 : vector<2x384xf32>
    %92 = vector.extract_strided_slice %91 {offsets = [0, 0], sizes = [2, 128], strides = [1, 1]} : vector<2x384xf32> to vector<2x128xf32>
    %93 = vector.extract_strided_slice %91 {offsets = [0, 128], sizes = [2, 128], strides = [1, 1]} : vector<2x384xf32> to vector<2x128xf32>
    %94 = vector.extract_strided_slice %91 {offsets = [0, 256], sizes = [2, 128], strides = [1, 1]} : vector<2x384xf32> to vector<2x128xf32>
    %95 = vector.extract_strided_slice %85 {offsets = [0, 384], sizes = [2, 128], strides = [1, 1]} : vector<2x512xf32> to vector<2x128xf32>
    %96 = math.tanh %95 : vector<2x128xf32>
    %97 = arith.mulf %93, %35 : vector<2x128xf32>
    %98 = arith.mulf %92, %96 : vector<2x128xf32>
    %99 = arith.addf %97, %98 : vector<2x128xf32>
    %100 = math.tanh %99 : vector<2x128xf32>
    %101 = arith.mulf %94, %100 : vector<2x128xf32>
    %c0_37 = arith.constant 0 : index
    %c0_38 = arith.constant 0 : index
    %102 = vector.load %arg4[%c0_37, %c0_38] : memref<128x512xf32, #tpu.memory_space<vmem>>, vector<128x512xf32>
    %cst_39 = arith.constant dense<0.000000e+00> : vector<2x512xf32>
    %103 = tpu.matmul %101, %102, %cst_39 {dimension_numbers = #tpu.dot_dimension_numbers<[1], [0], [0], [1], [0, 0, 1, 1], [], []>} : vector<2x128xf32>, vector<128x512xf32>, vector<2x512xf32> -> vector<2x512xf32>
    %c0_40 = arith.constant 0 : index
    %c0_41 = arith.constant 0 : index
    %104 = vector.load %arg5[%c0_40, %c0_41] : memref<128x512xf32, #tpu.memory_space<vmem>>, vector<128x512xf32>
    %cst_42 = arith.constant dense<0.000000e+00> : vector<2x512xf32>
    %105 = tpu.matmul %59, %104, %cst_42 {dimension_numbers = #tpu.dot_dimension_numbers<[1], [0], [0], [1], [0, 0, 1, 1], [], []>} : vector<2x128xf32>, vector<128x512xf32>, vector<2x512xf32> -> vector<2x512xf32>
    %106 = arith.addf %103, %105 : vector<2x512xf32>
    %107 = arith.addf %106, %8 : vector<2x512xf32>
    %108 = vector.extract_strided_slice %107 {offsets = [0, 0], sizes = [2, 384], strides = [1, 1]} : vector<2x512xf32> to vector<2x384xf32>
    %109 = arith.negf %108 : vector<2x384xf32>
    %110 = math.exp %109 : vector<2x384xf32>
    %cst_43 = arith.constant 1.000000e+00 : f32
    %111 = vector.broadcast %cst_43 : f32 to vector<2x384xf32>
    %112 = arith.addf %111, %110 : vector<2x384xf32>
    %113 = arith.divf %111, %112 : vector<2x384xf32>
    %114 = vector.extract_strided_slice %113 {offsets = [0, 0], sizes = [2, 128], strides = [1, 1]} : vector<2x384xf32> to vector<2x128xf32>
    %115 = vector.extract_strided_slice %113 {offsets = [0, 128], sizes = [2, 128], strides = [1, 1]} : vector<2x384xf32> to vector<2x128xf32>
    %116 = vector.extract_strided_slice %113 {offsets = [0, 256], sizes = [2, 128], strides = [1, 1]} : vector<2x384xf32> to vector<2x128xf32>
    %117 = vector.extract_strided_slice %107 {offsets = [0, 384], sizes = [2, 128], strides = [1, 1]} : vector<2x512xf32> to vector<2x128xf32>
    %118 = math.tanh %117 : vector<2x128xf32>
    %119 = arith.mulf %115, %57 : vector<2x128xf32>
    %120 = arith.mulf %114, %118 : vector<2x128xf32>
    %121 = arith.addf %119, %120 : vector<2x128xf32>
    %122 = math.tanh %121 : vector<2x128xf32>
    %123 = arith.mulf %116, %122 : vector<2x128xf32>
    %c0_44 = arith.constant 0 : index
    %c0_45 = arith.constant 0 : index
    %124 = vector.load %arg7[%c0_44, %c0_45] : memref<128x512xf32, #tpu.memory_space<vmem>>, vector<128x512xf32>
    %cst_46 = arith.constant dense<0.000000e+00> : vector<2x512xf32>
    %125 = tpu.matmul %123, %124, %cst_46 {dimension_numbers = #tpu.dot_dimension_numbers<[1], [0], [0], [1], [0, 0, 1, 1], [], []>} : vector<2x128xf32>, vector<128x512xf32>, vector<2x512xf32> -> vector<2x512xf32>
    %c0_47 = arith.constant 0 : index
    %c0_48 = arith.constant 0 : index
    %126 = vector.load %arg8[%c0_47, %c0_48] : memref<128x512xf32, #tpu.memory_space<vmem>>, vector<128x512xf32>
    %cst_49 = arith.constant dense<0.000000e+00> : vector<2x512xf32>
    %127 = tpu.matmul %81, %126, %cst_49 {dimension_numbers = #tpu.dot_dimension_numbers<[1], [0], [0], [1], [0, 0, 1, 1], [], []>} : vector<2x128xf32>, vector<128x512xf32>, vector<2x512xf32> -> vector<2x512xf32>
    %128 = arith.addf %125, %127 : vector<2x512xf32>
    %129 = arith.addf %128, %11 : vector<2x512xf32>
    %130 = vector.extract_strided_slice %129 {offsets = [0, 0], sizes = [2, 384], strides = [1, 1]} : vector<2x512xf32> to vector<2x384xf32>
    %131 = arith.negf %130 : vector<2x384xf32>
    %132 = math.exp %131 : vector<2x384xf32>
    %cst_50 = arith.constant 1.000000e+00 : f32
    %133 = vector.broadcast %cst_50 : f32 to vector<2x384xf32>
    %134 = arith.addf %133, %132 : vector<2x384xf32>
    %135 = arith.divf %133, %134 : vector<2x384xf32>
    %136 = vector.extract_strided_slice %135 {offsets = [0, 0], sizes = [2, 128], strides = [1, 1]} : vector<2x384xf32> to vector<2x128xf32>
    %137 = vector.extract_strided_slice %135 {offsets = [0, 128], sizes = [2, 128], strides = [1, 1]} : vector<2x384xf32> to vector<2x128xf32>
    %138 = vector.extract_strided_slice %135 {offsets = [0, 256], sizes = [2, 128], strides = [1, 1]} : vector<2x384xf32> to vector<2x128xf32>
    %139 = vector.extract_strided_slice %129 {offsets = [0, 384], sizes = [2, 128], strides = [1, 1]} : vector<2x512xf32> to vector<2x128xf32>
    %140 = math.tanh %139 : vector<2x128xf32>
    %141 = arith.mulf %137, %79 : vector<2x128xf32>
    %142 = arith.mulf %136, %140 : vector<2x128xf32>
    %143 = arith.addf %141, %142 : vector<2x128xf32>
    %144 = math.tanh %143 : vector<2x128xf32>
    %145 = arith.mulf %138, %144 : vector<2x128xf32>
    %146 = vector.extract_strided_slice %5 {offsets = [4, 0], sizes = [2, 512], strides = [1, 1]} : vector<16x512xf32> to vector<2x512xf32>
    %c0_51 = arith.constant 0 : index
    %c0_52 = arith.constant 0 : index
    %147 = vector.load %arg2[%c0_51, %c0_52] : memref<128x512xf32, #tpu.memory_space<vmem>>, vector<128x512xf32>
    %cst_53 = arith.constant dense<0.000000e+00> : vector<2x512xf32>
    %148 = tpu.matmul %101, %147, %cst_53 {dimension_numbers = #tpu.dot_dimension_numbers<[1], [0], [0], [1], [0, 0, 1, 1], [], []>} : vector<2x128xf32>, vector<128x512xf32>, vector<2x512xf32> -> vector<2x512xf32>
    %149 = arith.addf %146, %148 : vector<2x512xf32>
    %150 = vector.extract_strided_slice %149 {offsets = [0, 0], sizes = [2, 384], strides = [1, 1]} : vector<2x512xf32> to vector<2x384xf32>
    %151 = arith.negf %150 : vector<2x384xf32>
    %152 = math.exp %151 : vector<2x384xf32>
    %cst_54 = arith.constant 1.000000e+00 : f32
    %153 = vector.broadcast %cst_54 : f32 to vector<2x384xf32>
    %154 = arith.addf %153, %152 : vector<2x384xf32>
    %155 = arith.divf %153, %154 : vector<2x384xf32>
    %156 = vector.extract_strided_slice %155 {offsets = [0, 0], sizes = [2, 128], strides = [1, 1]} : vector<2x384xf32> to vector<2x128xf32>
    %157 = vector.extract_strided_slice %155 {offsets = [0, 128], sizes = [2, 128], strides = [1, 1]} : vector<2x384xf32> to vector<2x128xf32>
    %158 = vector.extract_strided_slice %155 {offsets = [0, 256], sizes = [2, 128], strides = [1, 1]} : vector<2x384xf32> to vector<2x128xf32>
    %159 = vector.extract_strided_slice %149 {offsets = [0, 384], sizes = [2, 128], strides = [1, 1]} : vector<2x512xf32> to vector<2x128xf32>
    %160 = math.tanh %159 : vector<2x128xf32>
    %161 = arith.mulf %157, %99 : vector<2x128xf32>
    %162 = arith.mulf %156, %160 : vector<2x128xf32>
    %163 = arith.addf %161, %162 : vector<2x128xf32>
    %164 = math.tanh %163 : vector<2x128xf32>
    %165 = arith.mulf %158, %164 : vector<2x128xf32>
    %c0_55 = arith.constant 0 : index
    %c0_56 = arith.constant 0 : index
    %166 = vector.load %arg4[%c0_55, %c0_56] : memref<128x512xf32, #tpu.memory_space<vmem>>, vector<128x512xf32>
    %cst_57 = arith.constant dense<0.000000e+00> : vector<2x512xf32>
    %167 = tpu.matmul %165, %166, %cst_57 {dimension_numbers = #tpu.dot_dimension_numbers<[1], [0], [0], [1], [0, 0, 1, 1], [], []>} : vector<2x128xf32>, vector<128x512xf32>, vector<2x512xf32> -> vector<2x512xf32>
    %c0_58 = arith.constant 0 : index
    %c0_59 = arith.constant 0 : index
    %168 = vector.load %arg5[%c0_58, %c0_59] : memref<128x512xf32, #tpu.memory_space<vmem>>, vector<128x512xf32>
    %cst_60 = arith.constant dense<0.000000e+00> : vector<2x512xf32>
    %169 = tpu.matmul %123, %168, %cst_60 {dimension_numbers = #tpu.dot_dimension_numbers<[1], [0], [0], [1], [0, 0, 1, 1], [], []>} : vector<2x128xf32>, vector<128x512xf32>, vector<2x512xf32> -> vector<2x512xf32>
    %170 = arith.addf %167, %169 : vector<2x512xf32>
    %171 = arith.addf %170, %8 : vector<2x512xf32>
    %172 = vector.extract_strided_slice %171 {offsets = [0, 0], sizes = [2, 384], strides = [1, 1]} : vector<2x512xf32> to vector<2x384xf32>
    %173 = arith.negf %172 : vector<2x384xf32>
    %174 = math.exp %173 : vector<2x384xf32>
    %cst_61 = arith.constant 1.000000e+00 : f32
    %175 = vector.broadcast %cst_61 : f32 to vector<2x384xf32>
    %176 = arith.addf %175, %174 : vector<2x384xf32>
    %177 = arith.divf %175, %176 : vector<2x384xf32>
    %178 = vector.extract_strided_slice %177 {offsets = [0, 0], sizes = [2, 128], strides = [1, 1]} : vector<2x384xf32> to vector<2x128xf32>
    %179 = vector.extract_strided_slice %177 {offsets = [0, 128], sizes = [2, 128], strides = [1, 1]} : vector<2x384xf32> to vector<2x128xf32>
    %180 = vector.extract_strided_slice %177 {offsets = [0, 256], sizes = [2, 128], strides = [1, 1]} : vector<2x384xf32> to vector<2x128xf32>
    %181 = vector.extract_strided_slice %171 {offsets = [0, 384], sizes = [2, 128], strides = [1, 1]} : vector<2x512xf32> to vector<2x128xf32>
    %182 = math.tanh %181 : vector<2x128xf32>
    %183 = arith.mulf %179, %121 : vector<2x128xf32>
    %184 = arith.mulf %178, %182 : vector<2x128xf32>
    %185 = arith.addf %183, %184 : vector<2x128xf32>
    %186 = math.tanh %185 : vector<2x128xf32>
    %187 = arith.mulf %180, %186 : vector<2x128xf32>
    %c0_62 = arith.constant 0 : index
    %c0_63 = arith.constant 0 : index
    %188 = vector.load %arg7[%c0_62, %c0_63] : memref<128x512xf32, #tpu.memory_space<vmem>>, vector<128x512xf32>
    %cst_64 = arith.constant dense<0.000000e+00> : vector<2x512xf32>
    %189 = tpu.matmul %187, %188, %cst_64 {dimension_numbers = #tpu.dot_dimension_numbers<[1], [0], [0], [1], [0, 0, 1, 1], [], []>} : vector<2x128xf32>, vector<128x512xf32>, vector<2x512xf32> -> vector<2x512xf32>
    %c0_65 = arith.constant 0 : index
    %c0_66 = arith.constant 0 : index
    %190 = vector.load %arg8[%c0_65, %c0_66] : memref<128x512xf32, #tpu.memory_space<vmem>>, vector<128x512xf32>
    %cst_67 = arith.constant dense<0.000000e+00> : vector<2x512xf32>
    %191 = tpu.matmul %145, %190, %cst_67 {dimension_numbers = #tpu.dot_dimension_numbers<[1], [0], [0], [1], [0, 0, 1, 1], [], []>} : vector<2x128xf32>, vector<128x512xf32>, vector<2x512xf32> -> vector<2x512xf32>
    %192 = arith.addf %189, %191 : vector<2x512xf32>
    %193 = arith.addf %192, %11 : vector<2x512xf32>
    %194 = vector.extract_strided_slice %193 {offsets = [0, 0], sizes = [2, 384], strides = [1, 1]} : vector<2x512xf32> to vector<2x384xf32>
    %195 = arith.negf %194 : vector<2x384xf32>
    %196 = math.exp %195 : vector<2x384xf32>
    %cst_68 = arith.constant 1.000000e+00 : f32
    %197 = vector.broadcast %cst_68 : f32 to vector<2x384xf32>
    %198 = arith.addf %197, %196 : vector<2x384xf32>
    %199 = arith.divf %197, %198 : vector<2x384xf32>
    %200 = vector.extract_strided_slice %199 {offsets = [0, 0], sizes = [2, 128], strides = [1, 1]} : vector<2x384xf32> to vector<2x128xf32>
    %201 = vector.extract_strided_slice %199 {offsets = [0, 128], sizes = [2, 128], strides = [1, 1]} : vector<2x384xf32> to vector<2x128xf32>
    %202 = vector.extract_strided_slice %199 {offsets = [0, 256], sizes = [2, 128], strides = [1, 1]} : vector<2x384xf32> to vector<2x128xf32>
    %203 = vector.extract_strided_slice %193 {offsets = [0, 384], sizes = [2, 128], strides = [1, 1]} : vector<2x512xf32> to vector<2x128xf32>
    %204 = math.tanh %203 : vector<2x128xf32>
    %205 = arith.mulf %201, %143 : vector<2x128xf32>
    %206 = arith.mulf %200, %204 : vector<2x128xf32>
    %207 = arith.addf %205, %206 : vector<2x128xf32>
    %208 = math.tanh %207 : vector<2x128xf32>
    %209 = arith.mulf %202, %208 : vector<2x128xf32>
    %210 = vector.extract_strided_slice %5 {offsets = [6, 0], sizes = [2, 512], strides = [1, 1]} : vector<16x512xf32> to vector<2x512xf32>
    %c0_69 = arith.constant 0 : index
    %c0_70 = arith.constant 0 : index
    %211 = vector.load %arg2[%c0_69, %c0_70] : memref<128x512xf32, #tpu.memory_space<vmem>>, vector<128x512xf32>
    %cst_71 = arith.constant dense<0.000000e+00> : vector<2x512xf32>
    %212 = tpu.matmul %165, %211, %cst_71 {dimension_numbers = #tpu.dot_dimension_numbers<[1], [0], [0], [1], [0, 0, 1, 1], [], []>} : vector<2x128xf32>, vector<128x512xf32>, vector<2x512xf32> -> vector<2x512xf32>
    %213 = arith.addf %210, %212 : vector<2x512xf32>
    %214 = vector.extract_strided_slice %213 {offsets = [0, 0], sizes = [2, 384], strides = [1, 1]} : vector<2x512xf32> to vector<2x384xf32>
    %215 = arith.negf %214 : vector<2x384xf32>
    %216 = math.exp %215 : vector<2x384xf32>
    %cst_72 = arith.constant 1.000000e+00 : f32
    %217 = vector.broadcast %cst_72 : f32 to vector<2x384xf32>
    %218 = arith.addf %217, %216 : vector<2x384xf32>
    %219 = arith.divf %217, %218 : vector<2x384xf32>
    %220 = vector.extract_strided_slice %219 {offsets = [0, 0], sizes = [2, 128], strides = [1, 1]} : vector<2x384xf32> to vector<2x128xf32>
    %221 = vector.extract_strided_slice %219 {offsets = [0, 128], sizes = [2, 128], strides = [1, 1]} : vector<2x384xf32> to vector<2x128xf32>
    %222 = vector.extract_strided_slice %219 {offsets = [0, 256], sizes = [2, 128], strides = [1, 1]} : vector<2x384xf32> to vector<2x128xf32>
    %223 = vector.extract_strided_slice %213 {offsets = [0, 384], sizes = [2, 128], strides = [1, 1]} : vector<2x512xf32> to vector<2x128xf32>
    %224 = math.tanh %223 : vector<2x128xf32>
    %225 = arith.mulf %221, %163 : vector<2x128xf32>
    %226 = arith.mulf %220, %224 : vector<2x128xf32>
    %227 = arith.addf %225, %226 : vector<2x128xf32>
    %228 = math.tanh %227 : vector<2x128xf32>
    %229 = arith.mulf %222, %228 : vector<2x128xf32>
    %c0_73 = arith.constant 0 : index
    %c0_74 = arith.constant 0 : index
    %230 = vector.load %arg4[%c0_73, %c0_74] : memref<128x512xf32, #tpu.memory_space<vmem>>, vector<128x512xf32>
    %cst_75 = arith.constant dense<0.000000e+00> : vector<2x512xf32>
    %231 = tpu.matmul %229, %230, %cst_75 {dimension_numbers = #tpu.dot_dimension_numbers<[1], [0], [0], [1], [0, 0, 1, 1], [], []>} : vector<2x128xf32>, vector<128x512xf32>, vector<2x512xf32> -> vector<2x512xf32>
    %c0_76 = arith.constant 0 : index
    %c0_77 = arith.constant 0 : index
    %232 = vector.load %arg5[%c0_76, %c0_77] : memref<128x512xf32, #tpu.memory_space<vmem>>, vector<128x512xf32>
    %cst_78 = arith.constant dense<0.000000e+00> : vector<2x512xf32>
    %233 = tpu.matmul %187, %232, %cst_78 {dimension_numbers = #tpu.dot_dimension_numbers<[1], [0], [0], [1], [0, 0, 1, 1], [], []>} : vector<2x128xf32>, vector<128x512xf32>, vector<2x512xf32> -> vector<2x512xf32>
    %234 = arith.addf %231, %233 : vector<2x512xf32>
    %235 = arith.addf %234, %8 : vector<2x512xf32>
    %236 = vector.extract_strided_slice %235 {offsets = [0, 0], sizes = [2, 384], strides = [1, 1]} : vector<2x512xf32> to vector<2x384xf32>
    %237 = arith.negf %236 : vector<2x384xf32>
    %238 = math.exp %237 : vector<2x384xf32>
    %cst_79 = arith.constant 1.000000e+00 : f32
    %239 = vector.broadcast %cst_79 : f32 to vector<2x384xf32>
    %240 = arith.addf %239, %238 : vector<2x384xf32>
    %241 = arith.divf %239, %240 : vector<2x384xf32>
    %242 = vector.extract_strided_slice %241 {offsets = [0, 0], sizes = [2, 128], strides = [1, 1]} : vector<2x384xf32> to vector<2x128xf32>
    %243 = vector.extract_strided_slice %241 {offsets = [0, 128], sizes = [2, 128], strides = [1, 1]} : vector<2x384xf32> to vector<2x128xf32>
    %244 = vector.extract_strided_slice %241 {offsets = [0, 256], sizes = [2, 128], strides = [1, 1]} : vector<2x384xf32> to vector<2x128xf32>
    %245 = vector.extract_strided_slice %235 {offsets = [0, 384], sizes = [2, 128], strides = [1, 1]} : vector<2x512xf32> to vector<2x128xf32>
    %246 = math.tanh %245 : vector<2x128xf32>
    %247 = arith.mulf %243, %185 : vector<2x128xf32>
    %248 = arith.mulf %242, %246 : vector<2x128xf32>
    %249 = arith.addf %247, %248 : vector<2x128xf32>
    %250 = math.tanh %249 : vector<2x128xf32>
    %251 = arith.mulf %244, %250 : vector<2x128xf32>
    %c0_80 = arith.constant 0 : index
    %c0_81 = arith.constant 0 : index
    %252 = vector.load %arg7[%c0_80, %c0_81] : memref<128x512xf32, #tpu.memory_space<vmem>>, vector<128x512xf32>
    %cst_82 = arith.constant dense<0.000000e+00> : vector<2x512xf32>
    %253 = tpu.matmul %251, %252, %cst_82 {dimension_numbers = #tpu.dot_dimension_numbers<[1], [0], [0], [1], [0, 0, 1, 1], [], []>} : vector<2x128xf32>, vector<128x512xf32>, vector<2x512xf32> -> vector<2x512xf32>
    %c0_83 = arith.constant 0 : index
    %c0_84 = arith.constant 0 : index
    %254 = vector.load %arg8[%c0_83, %c0_84] : memref<128x512xf32, #tpu.memory_space<vmem>>, vector<128x512xf32>
    %cst_85 = arith.constant dense<0.000000e+00> : vector<2x512xf32>
    %255 = tpu.matmul %209, %254, %cst_85 {dimension_numbers = #tpu.dot_dimension_numbers<[1], [0], [0], [1], [0, 0, 1, 1], [], []>} : vector<2x128xf32>, vector<128x512xf32>, vector<2x512xf32> -> vector<2x512xf32>
    %256 = arith.addf %253, %255 : vector<2x512xf32>
    %257 = arith.addf %256, %11 : vector<2x512xf32>
    %258 = vector.extract_strided_slice %257 {offsets = [0, 0], sizes = [2, 384], strides = [1, 1]} : vector<2x512xf32> to vector<2x384xf32>
    %259 = arith.negf %258 : vector<2x384xf32>
    %260 = math.exp %259 : vector<2x384xf32>
    %cst_86 = arith.constant 1.000000e+00 : f32
    %261 = vector.broadcast %cst_86 : f32 to vector<2x384xf32>
    %262 = arith.addf %261, %260 : vector<2x384xf32>
    %263 = arith.divf %261, %262 : vector<2x384xf32>
    %264 = vector.extract_strided_slice %263 {offsets = [0, 0], sizes = [2, 128], strides = [1, 1]} : vector<2x384xf32> to vector<2x128xf32>
    %265 = vector.extract_strided_slice %263 {offsets = [0, 128], sizes = [2, 128], strides = [1, 1]} : vector<2x384xf32> to vector<2x128xf32>
    %266 = vector.extract_strided_slice %263 {offsets = [0, 256], sizes = [2, 128], strides = [1, 1]} : vector<2x384xf32> to vector<2x128xf32>
    %267 = vector.extract_strided_slice %257 {offsets = [0, 384], sizes = [2, 128], strides = [1, 1]} : vector<2x512xf32> to vector<2x128xf32>
    %268 = math.tanh %267 : vector<2x128xf32>
    %269 = arith.mulf %265, %207 : vector<2x128xf32>
    %270 = arith.mulf %264, %268 : vector<2x128xf32>
    %271 = arith.addf %269, %270 : vector<2x128xf32>
    %272 = math.tanh %271 : vector<2x128xf32>
    %273 = arith.mulf %266, %272 : vector<2x128xf32>
    %274 = vector.extract_strided_slice %5 {offsets = [8, 0], sizes = [2, 512], strides = [1, 1]} : vector<16x512xf32> to vector<2x512xf32>
    %c0_87 = arith.constant 0 : index
    %c0_88 = arith.constant 0 : index
    %275 = vector.load %arg2[%c0_87, %c0_88] : memref<128x512xf32, #tpu.memory_space<vmem>>, vector<128x512xf32>
    %cst_89 = arith.constant dense<0.000000e+00> : vector<2x512xf32>
    %276 = tpu.matmul %229, %275, %cst_89 {dimension_numbers = #tpu.dot_dimension_numbers<[1], [0], [0], [1], [0, 0, 1, 1], [], []>} : vector<2x128xf32>, vector<128x512xf32>, vector<2x512xf32> -> vector<2x512xf32>
    %277 = arith.addf %274, %276 : vector<2x512xf32>
    %278 = vector.extract_strided_slice %277 {offsets = [0, 0], sizes = [2, 384], strides = [1, 1]} : vector<2x512xf32> to vector<2x384xf32>
    %279 = arith.negf %278 : vector<2x384xf32>
    %280 = math.exp %279 : vector<2x384xf32>
    %cst_90 = arith.constant 1.000000e+00 : f32
    %281 = vector.broadcast %cst_90 : f32 to vector<2x384xf32>
    %282 = arith.addf %281, %280 : vector<2x384xf32>
    %283 = arith.divf %281, %282 : vector<2x384xf32>
    %284 = vector.extract_strided_slice %283 {offsets = [0, 0], sizes = [2, 128], strides = [1, 1]} : vector<2x384xf32> to vector<2x128xf32>
    %285 = vector.extract_strided_slice %283 {offsets = [0, 128], sizes = [2, 128], strides = [1, 1]} : vector<2x384xf32> to vector<2x128xf32>
    %286 = vector.extract_strided_slice %283 {offsets = [0, 256], sizes = [2, 128], strides = [1, 1]} : vector<2x384xf32> to vector<2x128xf32>
    %287 = vector.extract_strided_slice %277 {offsets = [0, 384], sizes = [2, 128], strides = [1, 1]} : vector<2x512xf32> to vector<2x128xf32>
    %288 = math.tanh %287 : vector<2x128xf32>
    %289 = arith.mulf %285, %227 : vector<2x128xf32>
    %290 = arith.mulf %284, %288 : vector<2x128xf32>
    %291 = arith.addf %289, %290 : vector<2x128xf32>
    %292 = math.tanh %291 : vector<2x128xf32>
    %293 = arith.mulf %286, %292 : vector<2x128xf32>
    %c0_91 = arith.constant 0 : index
    %c0_92 = arith.constant 0 : index
    %294 = vector.load %arg4[%c0_91, %c0_92] : memref<128x512xf32, #tpu.memory_space<vmem>>, vector<128x512xf32>
    %cst_93 = arith.constant dense<0.000000e+00> : vector<2x512xf32>
    %295 = tpu.matmul %293, %294, %cst_93 {dimension_numbers = #tpu.dot_dimension_numbers<[1], [0], [0], [1], [0, 0, 1, 1], [], []>} : vector<2x128xf32>, vector<128x512xf32>, vector<2x512xf32> -> vector<2x512xf32>
    %c0_94 = arith.constant 0 : index
    %c0_95 = arith.constant 0 : index
    %296 = vector.load %arg5[%c0_94, %c0_95] : memref<128x512xf32, #tpu.memory_space<vmem>>, vector<128x512xf32>
    %cst_96 = arith.constant dense<0.000000e+00> : vector<2x512xf32>
    %297 = tpu.matmul %251, %296, %cst_96 {dimension_numbers = #tpu.dot_dimension_numbers<[1], [0], [0], [1], [0, 0, 1, 1], [], []>} : vector<2x128xf32>, vector<128x512xf32>, vector<2x512xf32> -> vector<2x512xf32>
    %298 = arith.addf %295, %297 : vector<2x512xf32>
    %299 = arith.addf %298, %8 : vector<2x512xf32>
    %300 = vector.extract_strided_slice %299 {offsets = [0, 0], sizes = [2, 384], strides = [1, 1]} : vector<2x512xf32> to vector<2x384xf32>
    %301 = arith.negf %300 : vector<2x384xf32>
    %302 = math.exp %301 : vector<2x384xf32>
    %cst_97 = arith.constant 1.000000e+00 : f32
    %303 = vector.broadcast %cst_97 : f32 to vector<2x384xf32>
    %304 = arith.addf %303, %302 : vector<2x384xf32>
    %305 = arith.divf %303, %304 : vector<2x384xf32>
    %306 = vector.extract_strided_slice %305 {offsets = [0, 0], sizes = [2, 128], strides = [1, 1]} : vector<2x384xf32> to vector<2x128xf32>
    %307 = vector.extract_strided_slice %305 {offsets = [0, 128], sizes = [2, 128], strides = [1, 1]} : vector<2x384xf32> to vector<2x128xf32>
    %308 = vector.extract_strided_slice %305 {offsets = [0, 256], sizes = [2, 128], strides = [1, 1]} : vector<2x384xf32> to vector<2x128xf32>
    %309 = vector.extract_strided_slice %299 {offsets = [0, 384], sizes = [2, 128], strides = [1, 1]} : vector<2x512xf32> to vector<2x128xf32>
    %310 = math.tanh %309 : vector<2x128xf32>
    %311 = arith.mulf %307, %249 : vector<2x128xf32>
    %312 = arith.mulf %306, %310 : vector<2x128xf32>
    %313 = arith.addf %311, %312 : vector<2x128xf32>
    %314 = math.tanh %313 : vector<2x128xf32>
    %315 = arith.mulf %308, %314 : vector<2x128xf32>
    %c0_98 = arith.constant 0 : index
    %c0_99 = arith.constant 0 : index
    %316 = vector.load %arg7[%c0_98, %c0_99] : memref<128x512xf32, #tpu.memory_space<vmem>>, vector<128x512xf32>
    %cst_100 = arith.constant dense<0.000000e+00> : vector<2x512xf32>
    %317 = tpu.matmul %315, %316, %cst_100 {dimension_numbers = #tpu.dot_dimension_numbers<[1], [0], [0], [1], [0, 0, 1, 1], [], []>} : vector<2x128xf32>, vector<128x512xf32>, vector<2x512xf32> -> vector<2x512xf32>
    %c0_101 = arith.constant 0 : index
    %c0_102 = arith.constant 0 : index
    %318 = vector.load %arg8[%c0_101, %c0_102] : memref<128x512xf32, #tpu.memory_space<vmem>>, vector<128x512xf32>
    %cst_103 = arith.constant dense<0.000000e+00> : vector<2x512xf32>
    %319 = tpu.matmul %273, %318, %cst_103 {dimension_numbers = #tpu.dot_dimension_numbers<[1], [0], [0], [1], [0, 0, 1, 1], [], []>} : vector<2x128xf32>, vector<128x512xf32>, vector<2x512xf32> -> vector<2x512xf32>
    %320 = arith.addf %317, %319 : vector<2x512xf32>
    %321 = arith.addf %320, %11 : vector<2x512xf32>
    %322 = vector.extract_strided_slice %321 {offsets = [0, 0], sizes = [2, 384], strides = [1, 1]} : vector<2x512xf32> to vector<2x384xf32>
    %323 = arith.negf %322 : vector<2x384xf32>
    %324 = math.exp %323 : vector<2x384xf32>
    %cst_104 = arith.constant 1.000000e+00 : f32
    %325 = vector.broadcast %cst_104 : f32 to vector<2x384xf32>
    %326 = arith.addf %325, %324 : vector<2x384xf32>
    %327 = arith.divf %325, %326 : vector<2x384xf32>
    %328 = vector.extract_strided_slice %327 {offsets = [0, 0], sizes = [2, 128], strides = [1, 1]} : vector<2x384xf32> to vector<2x128xf32>
    %329 = vector.extract_strided_slice %327 {offsets = [0, 128], sizes = [2, 128], strides = [1, 1]} : vector<2x384xf32> to vector<2x128xf32>
    %330 = vector.extract_strided_slice %327 {offsets = [0, 256], sizes = [2, 128], strides = [1, 1]} : vector<2x384xf32> to vector<2x128xf32>
    %331 = vector.extract_strided_slice %321 {offsets = [0, 384], sizes = [2, 128], strides = [1, 1]} : vector<2x512xf32> to vector<2x128xf32>
    %332 = math.tanh %331 : vector<2x128xf32>
    %333 = arith.mulf %329, %271 : vector<2x128xf32>
    %334 = arith.mulf %328, %332 : vector<2x128xf32>
    %335 = arith.addf %333, %334 : vector<2x128xf32>
    %336 = math.tanh %335 : vector<2x128xf32>
    %337 = arith.mulf %330, %336 : vector<2x128xf32>
    %338 = vector.extract_strided_slice %5 {offsets = [10, 0], sizes = [2, 512], strides = [1, 1]} : vector<16x512xf32> to vector<2x512xf32>
    %c0_105 = arith.constant 0 : index
    %c0_106 = arith.constant 0 : index
    %339 = vector.load %arg2[%c0_105, %c0_106] : memref<128x512xf32, #tpu.memory_space<vmem>>, vector<128x512xf32>
    %cst_107 = arith.constant dense<0.000000e+00> : vector<2x512xf32>
    %340 = tpu.matmul %293, %339, %cst_107 {dimension_numbers = #tpu.dot_dimension_numbers<[1], [0], [0], [1], [0, 0, 1, 1], [], []>} : vector<2x128xf32>, vector<128x512xf32>, vector<2x512xf32> -> vector<2x512xf32>
    %341 = arith.addf %338, %340 : vector<2x512xf32>
    %342 = vector.extract_strided_slice %341 {offsets = [0, 0], sizes = [2, 384], strides = [1, 1]} : vector<2x512xf32> to vector<2x384xf32>
    %343 = arith.negf %342 : vector<2x384xf32>
    %344 = math.exp %343 : vector<2x384xf32>
    %cst_108 = arith.constant 1.000000e+00 : f32
    %345 = vector.broadcast %cst_108 : f32 to vector<2x384xf32>
    %346 = arith.addf %345, %344 : vector<2x384xf32>
    %347 = arith.divf %345, %346 : vector<2x384xf32>
    %348 = vector.extract_strided_slice %347 {offsets = [0, 0], sizes = [2, 128], strides = [1, 1]} : vector<2x384xf32> to vector<2x128xf32>
    %349 = vector.extract_strided_slice %347 {offsets = [0, 128], sizes = [2, 128], strides = [1, 1]} : vector<2x384xf32> to vector<2x128xf32>
    %350 = vector.extract_strided_slice %347 {offsets = [0, 256], sizes = [2, 128], strides = [1, 1]} : vector<2x384xf32> to vector<2x128xf32>
    %351 = vector.extract_strided_slice %341 {offsets = [0, 384], sizes = [2, 128], strides = [1, 1]} : vector<2x512xf32> to vector<2x128xf32>
    %352 = math.tanh %351 : vector<2x128xf32>
    %353 = arith.mulf %349, %291 : vector<2x128xf32>
    %354 = arith.mulf %348, %352 : vector<2x128xf32>
    %355 = arith.addf %353, %354 : vector<2x128xf32>
    %356 = math.tanh %355 : vector<2x128xf32>
    %357 = arith.mulf %350, %356 : vector<2x128xf32>
    %c0_109 = arith.constant 0 : index
    %c0_110 = arith.constant 0 : index
    %358 = vector.load %arg4[%c0_109, %c0_110] : memref<128x512xf32, #tpu.memory_space<vmem>>, vector<128x512xf32>
    %cst_111 = arith.constant dense<0.000000e+00> : vector<2x512xf32>
    %359 = tpu.matmul %357, %358, %cst_111 {dimension_numbers = #tpu.dot_dimension_numbers<[1], [0], [0], [1], [0, 0, 1, 1], [], []>} : vector<2x128xf32>, vector<128x512xf32>, vector<2x512xf32> -> vector<2x512xf32>
    %c0_112 = arith.constant 0 : index
    %c0_113 = arith.constant 0 : index
    %360 = vector.load %arg5[%c0_112, %c0_113] : memref<128x512xf32, #tpu.memory_space<vmem>>, vector<128x512xf32>
    %cst_114 = arith.constant dense<0.000000e+00> : vector<2x512xf32>
    %361 = tpu.matmul %315, %360, %cst_114 {dimension_numbers = #tpu.dot_dimension_numbers<[1], [0], [0], [1], [0, 0, 1, 1], [], []>} : vector<2x128xf32>, vector<128x512xf32>, vector<2x512xf32> -> vector<2x512xf32>
    %362 = arith.addf %359, %361 : vector<2x512xf32>
    %363 = arith.addf %362, %8 : vector<2x512xf32>
    %364 = vector.extract_strided_slice %363 {offsets = [0, 0], sizes = [2, 384], strides = [1, 1]} : vector<2x512xf32> to vector<2x384xf32>
    %365 = arith.negf %364 : vector<2x384xf32>
    %366 = math.exp %365 : vector<2x384xf32>
    %cst_115 = arith.constant 1.000000e+00 : f32
    %367 = vector.broadcast %cst_115 : f32 to vector<2x384xf32>
    %368 = arith.addf %367, %366 : vector<2x384xf32>
    %369 = arith.divf %367, %368 : vector<2x384xf32>
    %370 = vector.extract_strided_slice %369 {offsets = [0, 0], sizes = [2, 128], strides = [1, 1]} : vector<2x384xf32> to vector<2x128xf32>
    %371 = vector.extract_strided_slice %369 {offsets = [0, 128], sizes = [2, 128], strides = [1, 1]} : vector<2x384xf32> to vector<2x128xf32>
    %372 = vector.extract_strided_slice %369 {offsets = [0, 256], sizes = [2, 128], strides = [1, 1]} : vector<2x384xf32> to vector<2x128xf32>
    %373 = vector.extract_strided_slice %363 {offsets = [0, 384], sizes = [2, 128], strides = [1, 1]} : vector<2x512xf32> to vector<2x128xf32>
    %374 = math.tanh %373 : vector<2x128xf32>
    %375 = arith.mulf %371, %313 : vector<2x128xf32>
    %376 = arith.mulf %370, %374 : vector<2x128xf32>
    %377 = arith.addf %375, %376 : vector<2x128xf32>
    %378 = math.tanh %377 : vector<2x128xf32>
    %379 = arith.mulf %372, %378 : vector<2x128xf32>
    %c0_116 = arith.constant 0 : index
    %c0_117 = arith.constant 0 : index
    %380 = vector.load %arg7[%c0_116, %c0_117] : memref<128x512xf32, #tpu.memory_space<vmem>>, vector<128x512xf32>
    %cst_118 = arith.constant dense<0.000000e+00> : vector<2x512xf32>
    %381 = tpu.matmul %379, %380, %cst_118 {dimension_numbers = #tpu.dot_dimension_numbers<[1], [0], [0], [1], [0, 0, 1, 1], [], []>} : vector<2x128xf32>, vector<128x512xf32>, vector<2x512xf32> -> vector<2x512xf32>
    %c0_119 = arith.constant 0 : index
    %c0_120 = arith.constant 0 : index
    %382 = vector.load %arg8[%c0_119, %c0_120] : memref<128x512xf32, #tpu.memory_space<vmem>>, vector<128x512xf32>
    %cst_121 = arith.constant dense<0.000000e+00> : vector<2x512xf32>
    %383 = tpu.matmul %337, %382, %cst_121 {dimension_numbers = #tpu.dot_dimension_numbers<[1], [0], [0], [1], [0, 0, 1, 1], [], []>} : vector<2x128xf32>, vector<128x512xf32>, vector<2x512xf32> -> vector<2x512xf32>
    %384 = arith.addf %381, %383 : vector<2x512xf32>
    %385 = arith.addf %384, %11 : vector<2x512xf32>
    %386 = vector.extract_strided_slice %385 {offsets = [0, 0], sizes = [2, 384], strides = [1, 1]} : vector<2x512xf32> to vector<2x384xf32>
    %387 = arith.negf %386 : vector<2x384xf32>
    %388 = math.exp %387 : vector<2x384xf32>
    %cst_122 = arith.constant 1.000000e+00 : f32
    %389 = vector.broadcast %cst_122 : f32 to vector<2x384xf32>
    %390 = arith.addf %389, %388 : vector<2x384xf32>
    %391 = arith.divf %389, %390 : vector<2x384xf32>
    %392 = vector.extract_strided_slice %391 {offsets = [0, 0], sizes = [2, 128], strides = [1, 1]} : vector<2x384xf32> to vector<2x128xf32>
    %393 = vector.extract_strided_slice %391 {offsets = [0, 128], sizes = [2, 128], strides = [1, 1]} : vector<2x384xf32> to vector<2x128xf32>
    %394 = vector.extract_strided_slice %391 {offsets = [0, 256], sizes = [2, 128], strides = [1, 1]} : vector<2x384xf32> to vector<2x128xf32>
    %395 = vector.extract_strided_slice %385 {offsets = [0, 384], sizes = [2, 128], strides = [1, 1]} : vector<2x512xf32> to vector<2x128xf32>
    %396 = math.tanh %395 : vector<2x128xf32>
    %397 = arith.mulf %393, %335 : vector<2x128xf32>
    %398 = arith.mulf %392, %396 : vector<2x128xf32>
    %399 = arith.addf %397, %398 : vector<2x128xf32>
    %400 = math.tanh %399 : vector<2x128xf32>
    %401 = arith.mulf %394, %400 : vector<2x128xf32>
    %402 = vector.extract_strided_slice %5 {offsets = [12, 0], sizes = [2, 512], strides = [1, 1]} : vector<16x512xf32> to vector<2x512xf32>
    %c0_123 = arith.constant 0 : index
    %c0_124 = arith.constant 0 : index
    %403 = vector.load %arg2[%c0_123, %c0_124] : memref<128x512xf32, #tpu.memory_space<vmem>>, vector<128x512xf32>
    %cst_125 = arith.constant dense<0.000000e+00> : vector<2x512xf32>
    %404 = tpu.matmul %357, %403, %cst_125 {dimension_numbers = #tpu.dot_dimension_numbers<[1], [0], [0], [1], [0, 0, 1, 1], [], []>} : vector<2x128xf32>, vector<128x512xf32>, vector<2x512xf32> -> vector<2x512xf32>
    %405 = arith.addf %402, %404 : vector<2x512xf32>
    %406 = vector.extract_strided_slice %405 {offsets = [0, 0], sizes = [2, 384], strides = [1, 1]} : vector<2x512xf32> to vector<2x384xf32>
    %407 = arith.negf %406 : vector<2x384xf32>
    %408 = math.exp %407 : vector<2x384xf32>
    %cst_126 = arith.constant 1.000000e+00 : f32
    %409 = vector.broadcast %cst_126 : f32 to vector<2x384xf32>
    %410 = arith.addf %409, %408 : vector<2x384xf32>
    %411 = arith.divf %409, %410 : vector<2x384xf32>
    %412 = vector.extract_strided_slice %411 {offsets = [0, 0], sizes = [2, 128], strides = [1, 1]} : vector<2x384xf32> to vector<2x128xf32>
    %413 = vector.extract_strided_slice %411 {offsets = [0, 128], sizes = [2, 128], strides = [1, 1]} : vector<2x384xf32> to vector<2x128xf32>
    %414 = vector.extract_strided_slice %411 {offsets = [0, 256], sizes = [2, 128], strides = [1, 1]} : vector<2x384xf32> to vector<2x128xf32>
    %415 = vector.extract_strided_slice %405 {offsets = [0, 384], sizes = [2, 128], strides = [1, 1]} : vector<2x512xf32> to vector<2x128xf32>
    %416 = math.tanh %415 : vector<2x128xf32>
    %417 = arith.mulf %413, %355 : vector<2x128xf32>
    %418 = arith.mulf %412, %416 : vector<2x128xf32>
    %419 = arith.addf %417, %418 : vector<2x128xf32>
    %420 = math.tanh %419 : vector<2x128xf32>
    %421 = arith.mulf %414, %420 : vector<2x128xf32>
    %c0_127 = arith.constant 0 : index
    %c0_128 = arith.constant 0 : index
    %422 = vector.load %arg4[%c0_127, %c0_128] : memref<128x512xf32, #tpu.memory_space<vmem>>, vector<128x512xf32>
    %cst_129 = arith.constant dense<0.000000e+00> : vector<2x512xf32>
    %423 = tpu.matmul %421, %422, %cst_129 {dimension_numbers = #tpu.dot_dimension_numbers<[1], [0], [0], [1], [0, 0, 1, 1], [], []>} : vector<2x128xf32>, vector<128x512xf32>, vector<2x512xf32> -> vector<2x512xf32>
    %c0_130 = arith.constant 0 : index
    %c0_131 = arith.constant 0 : index
    %424 = vector.load %arg5[%c0_130, %c0_131] : memref<128x512xf32, #tpu.memory_space<vmem>>, vector<128x512xf32>
    %cst_132 = arith.constant dense<0.000000e+00> : vector<2x512xf32>
    %425 = tpu.matmul %379, %424, %cst_132 {dimension_numbers = #tpu.dot_dimension_numbers<[1], [0], [0], [1], [0, 0, 1, 1], [], []>} : vector<2x128xf32>, vector<128x512xf32>, vector<2x512xf32> -> vector<2x512xf32>
    %426 = arith.addf %423, %425 : vector<2x512xf32>
    %427 = arith.addf %426, %8 : vector<2x512xf32>
    %428 = vector.extract_strided_slice %427 {offsets = [0, 0], sizes = [2, 384], strides = [1, 1]} : vector<2x512xf32> to vector<2x384xf32>
    %429 = arith.negf %428 : vector<2x384xf32>
    %430 = math.exp %429 : vector<2x384xf32>
    %cst_133 = arith.constant 1.000000e+00 : f32
    %431 = vector.broadcast %cst_133 : f32 to vector<2x384xf32>
    %432 = arith.addf %431, %430 : vector<2x384xf32>
    %433 = arith.divf %431, %432 : vector<2x384xf32>
    %434 = vector.extract_strided_slice %433 {offsets = [0, 0], sizes = [2, 128], strides = [1, 1]} : vector<2x384xf32> to vector<2x128xf32>
    %435 = vector.extract_strided_slice %433 {offsets = [0, 128], sizes = [2, 128], strides = [1, 1]} : vector<2x384xf32> to vector<2x128xf32>
    %436 = vector.extract_strided_slice %433 {offsets = [0, 256], sizes = [2, 128], strides = [1, 1]} : vector<2x384xf32> to vector<2x128xf32>
    %437 = vector.extract_strided_slice %427 {offsets = [0, 384], sizes = [2, 128], strides = [1, 1]} : vector<2x512xf32> to vector<2x128xf32>
    %438 = math.tanh %437 : vector<2x128xf32>
    %439 = arith.mulf %435, %377 : vector<2x128xf32>
    %440 = arith.mulf %434, %438 : vector<2x128xf32>
    %441 = arith.addf %439, %440 : vector<2x128xf32>
    %442 = math.tanh %441 : vector<2x128xf32>
    %443 = arith.mulf %436, %442 : vector<2x128xf32>
    %c0_134 = arith.constant 0 : index
    %c0_135 = arith.constant 0 : index
    %444 = vector.load %arg7[%c0_134, %c0_135] : memref<128x512xf32, #tpu.memory_space<vmem>>, vector<128x512xf32>
    %cst_136 = arith.constant dense<0.000000e+00> : vector<2x512xf32>
    %445 = tpu.matmul %443, %444, %cst_136 {dimension_numbers = #tpu.dot_dimension_numbers<[1], [0], [0], [1], [0, 0, 1, 1], [], []>} : vector<2x128xf32>, vector<128x512xf32>, vector<2x512xf32> -> vector<2x512xf32>
    %c0_137 = arith.constant 0 : index
    %c0_138 = arith.constant 0 : index
    %446 = vector.load %arg8[%c0_137, %c0_138] : memref<128x512xf32, #tpu.memory_space<vmem>>, vector<128x512xf32>
    %cst_139 = arith.constant dense<0.000000e+00> : vector<2x512xf32>
    %447 = tpu.matmul %401, %446, %cst_139 {dimension_numbers = #tpu.dot_dimension_numbers<[1], [0], [0], [1], [0, 0, 1, 1], [], []>} : vector<2x128xf32>, vector<128x512xf32>, vector<2x512xf32> -> vector<2x512xf32>
    %448 = arith.addf %445, %447 : vector<2x512xf32>
    %449 = arith.addf %448, %11 : vector<2x512xf32>
    %450 = vector.extract_strided_slice %449 {offsets = [0, 0], sizes = [2, 384], strides = [1, 1]} : vector<2x512xf32> to vector<2x384xf32>
    %451 = arith.negf %450 : vector<2x384xf32>
    %452 = math.exp %451 : vector<2x384xf32>
    %cst_140 = arith.constant 1.000000e+00 : f32
    %453 = vector.broadcast %cst_140 : f32 to vector<2x384xf32>
    %454 = arith.addf %453, %452 : vector<2x384xf32>
    %455 = arith.divf %453, %454 : vector<2x384xf32>
    %456 = vector.extract_strided_slice %455 {offsets = [0, 0], sizes = [2, 128], strides = [1, 1]} : vector<2x384xf32> to vector<2x128xf32>
    %457 = vector.extract_strided_slice %455 {offsets = [0, 128], sizes = [2, 128], strides = [1, 1]} : vector<2x384xf32> to vector<2x128xf32>
    %458 = vector.extract_strided_slice %455 {offsets = [0, 256], sizes = [2, 128], strides = [1, 1]} : vector<2x384xf32> to vector<2x128xf32>
    %459 = vector.extract_strided_slice %449 {offsets = [0, 384], sizes = [2, 128], strides = [1, 1]} : vector<2x512xf32> to vector<2x128xf32>
    %460 = math.tanh %459 : vector<2x128xf32>
    %461 = arith.mulf %457, %399 : vector<2x128xf32>
    %462 = arith.mulf %456, %460 : vector<2x128xf32>
    %463 = arith.addf %461, %462 : vector<2x128xf32>
    %464 = math.tanh %463 : vector<2x128xf32>
    %465 = arith.mulf %458, %464 : vector<2x128xf32>
    %466 = vector.extract_strided_slice %5 {offsets = [14, 0], sizes = [2, 512], strides = [1, 1]} : vector<16x512xf32> to vector<2x512xf32>
    %c0_141 = arith.constant 0 : index
    %c0_142 = arith.constant 0 : index
    %467 = vector.load %arg2[%c0_141, %c0_142] : memref<128x512xf32, #tpu.memory_space<vmem>>, vector<128x512xf32>
    %cst_143 = arith.constant dense<0.000000e+00> : vector<2x512xf32>
    %468 = tpu.matmul %421, %467, %cst_143 {dimension_numbers = #tpu.dot_dimension_numbers<[1], [0], [0], [1], [0, 0, 1, 1], [], []>} : vector<2x128xf32>, vector<128x512xf32>, vector<2x512xf32> -> vector<2x512xf32>
    %469 = arith.addf %466, %468 : vector<2x512xf32>
    %470 = vector.extract_strided_slice %469 {offsets = [0, 0], sizes = [2, 384], strides = [1, 1]} : vector<2x512xf32> to vector<2x384xf32>
    %471 = arith.negf %470 : vector<2x384xf32>
    %472 = math.exp %471 : vector<2x384xf32>
    %cst_144 = arith.constant 1.000000e+00 : f32
    %473 = vector.broadcast %cst_144 : f32 to vector<2x384xf32>
    %474 = arith.addf %473, %472 : vector<2x384xf32>
    %475 = arith.divf %473, %474 : vector<2x384xf32>
    %476 = vector.extract_strided_slice %475 {offsets = [0, 0], sizes = [2, 128], strides = [1, 1]} : vector<2x384xf32> to vector<2x128xf32>
    %477 = vector.extract_strided_slice %475 {offsets = [0, 128], sizes = [2, 128], strides = [1, 1]} : vector<2x384xf32> to vector<2x128xf32>
    %478 = vector.extract_strided_slice %475 {offsets = [0, 256], sizes = [2, 128], strides = [1, 1]} : vector<2x384xf32> to vector<2x128xf32>
    %479 = vector.extract_strided_slice %469 {offsets = [0, 384], sizes = [2, 128], strides = [1, 1]} : vector<2x512xf32> to vector<2x128xf32>
    %480 = math.tanh %479 : vector<2x128xf32>
    %481 = arith.mulf %477, %419 : vector<2x128xf32>
    %482 = arith.mulf %476, %480 : vector<2x128xf32>
    %483 = arith.addf %481, %482 : vector<2x128xf32>
    %484 = math.tanh %483 : vector<2x128xf32>
    %485 = arith.mulf %478, %484 : vector<2x128xf32>
    %c0_145 = arith.constant 0 : index
    %c0_146 = arith.constant 0 : index
    %486 = vector.load %arg4[%c0_145, %c0_146] : memref<128x512xf32, #tpu.memory_space<vmem>>, vector<128x512xf32>
    %cst_147 = arith.constant dense<0.000000e+00> : vector<2x512xf32>
    %487 = tpu.matmul %485, %486, %cst_147 {dimension_numbers = #tpu.dot_dimension_numbers<[1], [0], [0], [1], [0, 0, 1, 1], [], []>} : vector<2x128xf32>, vector<128x512xf32>, vector<2x512xf32> -> vector<2x512xf32>
    %c0_148 = arith.constant 0 : index
    %c0_149 = arith.constant 0 : index
    %488 = vector.load %arg5[%c0_148, %c0_149] : memref<128x512xf32, #tpu.memory_space<vmem>>, vector<128x512xf32>
    %cst_150 = arith.constant dense<0.000000e+00> : vector<2x512xf32>
    %489 = tpu.matmul %443, %488, %cst_150 {dimension_numbers = #tpu.dot_dimension_numbers<[1], [0], [0], [1], [0, 0, 1, 1], [], []>} : vector<2x128xf32>, vector<128x512xf32>, vector<2x512xf32> -> vector<2x512xf32>
    %490 = arith.addf %487, %489 : vector<2x512xf32>
    %491 = arith.addf %490, %8 : vector<2x512xf32>
    %492 = vector.extract_strided_slice %491 {offsets = [0, 0], sizes = [2, 384], strides = [1, 1]} : vector<2x512xf32> to vector<2x384xf32>
    %493 = arith.negf %492 : vector<2x384xf32>
    %494 = math.exp %493 : vector<2x384xf32>
    %cst_151 = arith.constant 1.000000e+00 : f32
    %495 = vector.broadcast %cst_151 : f32 to vector<2x384xf32>
    %496 = arith.addf %495, %494 : vector<2x384xf32>
    %497 = arith.divf %495, %496 : vector<2x384xf32>
    %498 = vector.extract_strided_slice %497 {offsets = [0, 0], sizes = [2, 128], strides = [1, 1]} : vector<2x384xf32> to vector<2x128xf32>
    %499 = vector.extract_strided_slice %497 {offsets = [0, 128], sizes = [2, 128], strides = [1, 1]} : vector<2x384xf32> to vector<2x128xf32>
    %500 = vector.extract_strided_slice %497 {offsets = [0, 256], sizes = [2, 128], strides = [1, 1]} : vector<2x384xf32> to vector<2x128xf32>
    %501 = vector.extract_strided_slice %491 {offsets = [0, 384], sizes = [2, 128], strides = [1, 1]} : vector<2x512xf32> to vector<2x128xf32>
    %502 = math.tanh %501 : vector<2x128xf32>
    %503 = arith.mulf %499, %441 : vector<2x128xf32>
    %504 = arith.mulf %498, %502 : vector<2x128xf32>
    %505 = arith.addf %503, %504 : vector<2x128xf32>
    %506 = math.tanh %505 : vector<2x128xf32>
    %507 = arith.mulf %500, %506 : vector<2x128xf32>
    %c0_152 = arith.constant 0 : index
    %c0_153 = arith.constant 0 : index
    %508 = vector.load %arg7[%c0_152, %c0_153] : memref<128x512xf32, #tpu.memory_space<vmem>>, vector<128x512xf32>
    %cst_154 = arith.constant dense<0.000000e+00> : vector<2x512xf32>
    %509 = tpu.matmul %507, %508, %cst_154 {dimension_numbers = #tpu.dot_dimension_numbers<[1], [0], [0], [1], [0, 0, 1, 1], [], []>} : vector<2x128xf32>, vector<128x512xf32>, vector<2x512xf32> -> vector<2x512xf32>
    %c0_155 = arith.constant 0 : index
    %c0_156 = arith.constant 0 : index
    %510 = vector.load %arg8[%c0_155, %c0_156] : memref<128x512xf32, #tpu.memory_space<vmem>>, vector<128x512xf32>
    %cst_157 = arith.constant dense<0.000000e+00> : vector<2x512xf32>
    %511 = tpu.matmul %465, %510, %cst_157 {dimension_numbers = #tpu.dot_dimension_numbers<[1], [0], [0], [1], [0, 0, 1, 1], [], []>} : vector<2x128xf32>, vector<128x512xf32>, vector<2x512xf32> -> vector<2x512xf32>
    %512 = arith.addf %509, %511 : vector<2x512xf32>
    %513 = arith.addf %512, %11 : vector<2x512xf32>
    %514 = vector.extract_strided_slice %513 {offsets = [0, 0], sizes = [2, 384], strides = [1, 1]} : vector<2x512xf32> to vector<2x384xf32>
    %515 = arith.negf %514 : vector<2x384xf32>
    %516 = math.exp %515 : vector<2x384xf32>
    %cst_158 = arith.constant 1.000000e+00 : f32
    %517 = vector.broadcast %cst_158 : f32 to vector<2x384xf32>
    %518 = arith.addf %517, %516 : vector<2x384xf32>
    %519 = arith.divf %517, %518 : vector<2x384xf32>
    %520 = vector.extract_strided_slice %519 {offsets = [0, 0], sizes = [2, 128], strides = [1, 1]} : vector<2x384xf32> to vector<2x128xf32>
    %521 = vector.extract_strided_slice %519 {offsets = [0, 128], sizes = [2, 128], strides = [1, 1]} : vector<2x384xf32> to vector<2x128xf32>
    %522 = vector.extract_strided_slice %519 {offsets = [0, 256], sizes = [2, 128], strides = [1, 1]} : vector<2x384xf32> to vector<2x128xf32>
    %523 = vector.extract_strided_slice %513 {offsets = [0, 384], sizes = [2, 128], strides = [1, 1]} : vector<2x512xf32> to vector<2x128xf32>
    %524 = math.tanh %523 : vector<2x128xf32>
    %525 = arith.mulf %521, %463 : vector<2x128xf32>
    %526 = arith.mulf %520, %524 : vector<2x128xf32>
    %527 = arith.addf %525, %526 : vector<2x128xf32>
    %528 = math.tanh %527 : vector<2x128xf32>
    %529 = arith.mulf %522, %528 : vector<2x128xf32>
    %c0_159 = arith.constant 0 : index
    %c0_160 = arith.constant 0 : index
    %530 = vector.load %arg10[%c0_159, %c0_160] : memref<128x128xf32, #tpu.memory_space<vmem>>, vector<128x128xf32>
    %cst_161 = arith.constant dense<0.000000e+00> : vector<2x128xf32>
    %531 = tpu.matmul %529, %530, %cst_161 {dimension_numbers = #tpu.dot_dimension_numbers<[1], [0], [0], [1], [0, 0, 1, 1], [], []>} : vector<2x128xf32>, vector<128x128xf32>, vector<2x128xf32> -> vector<2x128xf32>
    %c0_162 = arith.constant 0 : index
    %c0_163 = arith.constant 0 : index
    %532 = vector.load %arg11[%c0_162, %c0_163] : memref<1x128xf32, #tpu.memory_space<vmem>>, vector<1x128xf32>
    %533 = vector.broadcast %532 : vector<1x128xf32> to vector<2x128xf32>
    %534 = arith.addf %531, %533 : vector<2x128xf32>
    %cst_164 = arith.constant 0.000000e+00 : f32
    %535 = vector.broadcast %cst_164 : f32 to vector<2x128xf32>
    %536 = arith.maximumf %534, %535 : vector<2x128xf32>
    %c0_165 = arith.constant 0 : index
    %c0_166 = arith.constant 0 : index
    %537 = vector.load %arg12[%c0_165, %c0_166] : memref<128x128xf32, #tpu.memory_space<vmem>>, vector<128x128xf32>
    %cst_167 = arith.constant dense<0.000000e+00> : vector<2x128xf32>
    %538 = tpu.matmul %536, %537, %cst_167 {dimension_numbers = #tpu.dot_dimension_numbers<[1], [0], [0], [1], [0, 0, 1, 1], [], []>} : vector<2x128xf32>, vector<128x128xf32>, vector<2x128xf32> -> vector<2x128xf32>
    %c0_168 = arith.constant 0 : index
    %c0_169 = arith.constant 0 : index
    %539 = vector.load %arg13[%c0_168, %c0_169] : memref<1x128xf32, #tpu.memory_space<vmem>>, vector<1x128xf32>
    %540 = vector.broadcast %539 : vector<1x128xf32> to vector<2x128xf32>
    %541 = arith.addf %538, %540 : vector<2x128xf32>
    %cst_170 = arith.constant 0.000000e+00 : f32
    %542 = vector.broadcast %cst_170 : f32 to vector<2x128xf32>
    %543 = arith.maximumf %541, %542 : vector<2x128xf32>
    %c0_171 = arith.constant 0 : index
    %c0_172 = arith.constant 0 : index
    %544 = vector.load %arg14[%c0_171, %c0_172] : memref<128x128xf32, #tpu.memory_space<vmem>>, vector<128x128xf32>
    %cst_173 = arith.constant dense<0.000000e+00> : vector<2x128xf32>
    %545 = tpu.matmul %543, %544, %cst_173 {dimension_numbers = #tpu.dot_dimension_numbers<[1], [0], [0], [1], [0, 0, 1, 1], [], []>} : vector<2x128xf32>, vector<128x128xf32>, vector<2x128xf32> -> vector<2x128xf32>
    %c0_174 = arith.constant 0 : index
    %c0_175 = arith.constant 0 : index
    %546 = vector.load %arg15[%c0_174, %c0_175] : memref<1x128xf32, #tpu.memory_space<vmem>>, vector<1x128xf32>
    %547 = vector.broadcast %546 : vector<1x128xf32> to vector<2x128xf32>
    %548 = arith.addf %545, %547 : vector<2x128xf32>
    %c0_176 = arith.constant 0 : index
    %c0_177 = arith.constant 0 : index
    %549 = vector.load %arg16[%c0_176, %c0_177] : memref<2x128xf32, #tpu.memory_space<vmem>>, vector<2x128xf32>
    tpu.vector_store %arg16[%c0_176, %c0_177], %548 {strides = array<i32>} : memref<2x128xf32, #tpu.memory_space<vmem>>, vector<2x128xf32>,
    return
  }
}

</mosaic_0001>

<llo_original>
// kernel: _lambda_.1
$region0: #{_lambda_.1}
  #allocation0 [shape = 'u32[]', space=smem, size = 0x4, offset = 0x4, fixed_abs, tag = 'smem constant byte address 0x4 - core index']
  #allocation1 [shape = 'u32[144,128]{1,0:T(1,128)}', space=vmem, size = 0x12000, scoped, tag = 'internal scratch']
  %s0 = inlined_call_operand.vmem [shape: f32[16,16], index: 0, kind: input, shape index: {}]
  %s1 = inlined_call_operand.hbm [shape: f32[16,512], index: 1, kind: input, shape index: {}]
  %s2 = inlined_call_operand.hbm [shape: f32[128,512], index: 2, kind: input, shape index: {}]
  %s3 = inlined_call_operand.vmem [shape: f32[1,512], index: 3, kind: input, shape index: {}]
  %s4 = inlined_call_operand.hbm [shape: f32[128,512], index: 4, kind: input, shape index: {}]
  %s5 = inlined_call_operand.hbm [shape: f32[128,512], index: 5, kind: input, shape index: {}]
  %s6 = inlined_call_operand.vmem [shape: f32[1,512], index: 6, kind: input, shape index: {}]
  %s7 = inlined_call_operand.hbm [shape: f32[128,512], index: 7, kind: input, shape index: {}]
  %s8 = inlined_call_operand.hbm [shape: f32[128,512], index: 8, kind: input, shape index: {}]
  %s9 = inlined_call_operand.vmem [shape: f32[1,512], index: 9, kind: input, shape index: {}]
  %s10 = inlined_call_operand.hbm [shape: f32[128,128], index: 10, kind: input, shape index: {}]
  %s11 = inlined_call_operand.vmem [shape: f32[1,128], index: 11, kind: input, shape index: {}]
  %s12 = inlined_call_operand.hbm [shape: f32[128,128], index: 12, kind: input, shape index: {}]
  %s13 = inlined_call_operand.vmem [shape: f32[1,128], index: 13, kind: input, shape index: {}]
  %s14 = inlined_call_operand.hbm [shape: f32[128,128], index: 14, kind: input, shape index: {}]
  %s15 = inlined_call_operand.vmem [shape: f32[1,128], index: 15, kind: input, shape index: {}]
  %s16 = inlined_call_operand.hbm [shape: f32[2,128], index: 16, kind: output, shape index: {}]
  %s17 = sld [smem:[#allocation0]]
  $region110: #{_lambda_.1} parent=0
    _
  %s19 = ssub.s32 1, %s17
  %s20 = scalar_select 0, %s19, %s17
  $region1: #{_lambda_.1} parent=0
    #allocation2 [shape = 'u8[32768]{0}', space=vmem, size = 0x8000, scoped, tag = 'input window, operand 1, single buffered']
    #allocation3 [shape = 's32[1]{0}', space=sflag, size = 0x4, scoped, tag = 'scoped memory for _lambda_.1']
    #allocation4 [shape = 's32[1]{0}', space=sflag, size = 0x4, scoped, tag = 'scoped memory for _lambda_.1']
    #allocation5 [shape = 'u8[262144]{0}', space=vmem, size = 0x40000, scoped, tag = 'input window, operand 2, single buffered']
    #allocation6 [shape = 's32[1]{0}', space=sflag, size = 0x4, scoped, tag = 'scoped memory for _lambda_.1']
    #allocation7 [shape = 'u8[262144]{0}', space=vmem, size = 0x40000, scoped, tag = 'input window, operand 4, single buffered']
    #allocation8 [shape = 'u8[262144]{0}', space=vmem, size = 0x40000, scoped, tag = 'input window, operand 5, single buffered']
    #allocation9 [shape = 's32[1]{0}', space=sflag, size = 0x4, scoped, tag = 'scoped memory for _lambda_.1']
    #allocation10 [shape = 'u8[262144]{0}', space=vmem, size = 0x40000, scoped, tag = 'input window, operand 7, single buffered']
    #allocation11 [shape = 'u8[262144]{0}', space=vmem, size = 0x40000, scoped, tag = 'input window, operand 8, single buffered']
    #allocation12 [shape = 's32[1]{0}', space=sflag, size = 0x4, scoped, tag = 'scoped memory for _lambda_.1']
    #allocation13 [shape = 'u8[65536]{0}', space=vmem, size = 0x10000, scoped, tag = 'input window, operand 10, single buffered']
    #allocation14 [shape = 'u8[65536]{0}', space=vmem, size = 0x10000, scoped, tag = 'input window, operand 12, single buffered']
    #allocation15 [shape = 's32[1]{0}', space=sflag, size = 0x4, scoped, tag = 'scoped memory for _lambda_.1']
    #allocation16 [shape = 'u8[65536]{0}', space=vmem, size = 0x10000, scoped, tag = 'input window, operand 14, single buffered']
    #allocation17 [shape = 'u8[1024]{0}', space=vmem, size = 0x400, scoped, tag = 'output window, operand 0, single buffered']
    %21 = vsyncpa [#allocation3], 0
    %22 = vsyncpa [#allocation6], 0
    %23 = vsyncpa [#allocation9], 0
    %24 = vsyncpa [#allocation12], 0
    %25 = vsyncpa [#allocation15], 0
    %26 = vsyncpa [#allocation4], 0
    // Predicated region
    $region2: #{_lambda_.1} parent=1 // pred_check
      _
    $region3: #{_lambda_.1} parent=1 // pred_check_branch
      %28 = sbr.rel (0) target = $region5
    $region4: #{_lambda_.1} parent=1 // pred_region
      _
    $region5: #{_lambda_.1} parent=1 // pred_fallthru
      _
    // Predicated region
    $region6: #{_lambda_.1} parent=1 // pred_check
      _
    $region7: #{_lambda_.1} parent=1 // pred_check_branch
      %30 = sbr.rel (0) target = $region9
    $region8: #{_lambda_.1} parent=1 // pred_region
      %s32 = ssub.s32 1024, 1024
      %33 = vsyncadd [#allocation3], %s32
      %s34 = sshll.u32 [#allocation2], 4
      %s35 = int_to_ptr.vmem [resolvable:$true] %s34
      %40 = dma.hbm_to_vmem [thread:$0]  %s1, 1024, %s35, [#allocation3], 512, 512, 32
    $region9: #{_lambda_.1} parent=1 // pred_fallthru
      _
    // Predicated region
    $region10: #{_lambda_.1} parent=1 // pred_check
      _
    $region11: #{_lambda_.1} parent=1 // pred_check_branch
      %42 = sbr.rel (0) target = $region13
    $region12: #{_lambda_.1} parent=1 // pred_region
      %s44 = ssub.s32 8192, 8192
      %45 = vsyncadd [#allocation6], %s44
      %s46 = sshll.u32 [#allocation5], 4
      %s47 = int_to_ptr.vmem [resolvable:$true] %s46
      %52 = dma.hbm_to_vmem [thread:$0]  %s2, 8192, %s47, [#allocation6], 512, 512, 32
    $region13: #{_lambda_.1} parent=1 // pred_fallthru
      _
    // Predicated region
    $region14: #{_lambda_.1} parent=1 // pred_check
      _
    $region15: #{_lambda_.1} parent=1 // pred_check_branch
      %54 = sbr.rel (0) target = $region17
    $region16: #{_lambda_.1} parent=1 // pred_region
      _
    $region17: #{_lambda_.1} parent=1 // pred_fallthru
      _
    // Predicated region
    $region18: #{_lambda_.1} parent=1 // pred_check
      _
    $region19: #{_lambda_.1} parent=1 // pred_check_branch
      %56 = sbr.rel (0) target = $region21
    $region20: #{_lambda_.1} parent=1 // pred_region
      %s58 = ssub.s32 8192, 8192
      %59 = vsyncadd [#allocation6], %s58
      %s60 = sshll.u32 [#allocation7], 4
      %s61 = int_to_ptr.vmem [resolvable:$true] %s60
      %66 = dma.hbm_to_vmem [thread:$0]  %s4, 8192, %s61, [#allocation6], 512, 512, 32
    $region21: #{_lambda_.1} parent=1 // pred_fallthru
      _
    // Predicated region
    $region22: #{_lambda_.1} parent=1 // pred_check
      _
    $region23: #{_lambda_.1} parent=1 // pred_check_branch
      %68 = sbr.rel (0) target = $region25
    $region24: #{_lambda_.1} parent=1 // pred_region
      %s70 = ssub.s32 8192, 8192
      %71 = vsyncadd [#allocation9], %s70
      %s72 = sshll.u32 [#allocation8], 4
      %s73 = int_to_ptr.vmem [resolvable:$true] %s72
      %78 = dma.hbm_to_vmem [thread:$0]  %s5, 8192, %s73, [#allocation9], 512, 512, 32
    $region25: #{_lambda_.1} parent=1 // pred_fallthru
      _
    // Predicated region
    $region26: #{_lambda_.1} parent=1 // pred_check
      _
    $region27: #{_lambda_.1} parent=1 // pred_check_branch
      %80 = sbr.rel (0) target = $region29
    $region28: #{_lambda_.1} parent=1 // pred_region
      _
    $region29: #{_lambda_.1} parent=1 // pred_fallthru
      _
    // Predicated region
    $region30: #{_lambda_.1} parent=1 // pred_check
      _
    $region31: #{_lambda_.1} parent=1 // pred_check_branch
      %82 = sbr.rel (0) target = $region33
    $region32: #{_lambda_.1} parent=1 // pred_region
      %s84 = ssub.s32 8192, 8192
      %85 = vsyncadd [#allocation9], %s84
      %s86 = sshll.u32 [#allocation10], 4
      %s87 = int_to_ptr.vmem [resolvable:$true] %s86
      %92 = dma.hbm_to_vmem [thread:$0]  %s7, 8192, %s87, [#allocation9], 512, 512, 32
    $region33: #{_lambda_.1} parent=1 // pred_fallthru
      _
    // Predicated region
    $region34: #{_lambda_.1} parent=1 // pred_check
      _
    $region35: #{_lambda_.1} parent=1 // pred_check_branch
      %94 = sbr.rel (0) target = $region37
    $region36: #{_lambda_.1} parent=1 // pred_region
      %s96 = ssub.s32 8192, 8192
      %97 = vsyncadd [#allocation12], %s96
      %s98 = sshll.u32 [#allocation11], 4
      %s99 = int_to_ptr.vmem [resolvable:$true] %s98
      %104 = dma.hbm_to_vmem [thread:$0]  %s8, 8192, %s99, [#allocation12], 512, 512, 32
    $region37: #{_lambda_.1} parent=1 // pred_fallthru
      _
    // Predicated region
    $region38: #{_lambda_.1} parent=1 // pred_check
      _
    $region39: #{_lambda_.1} parent=1 // pred_check_branch
      %106 = sbr.rel (0) target = $region41
    $region40: #{_lambda_.1} parent=1 // pred_region
      _
    $region41: #{_lambda_.1} parent=1 // pred_fallthru
      _
    // Predicated region
    $region42: #{_lambda_.1} parent=1 // pred_check
      _
    $region43: #{_lambda_.1} parent=1 // pred_check_branch
      %108 = sbr.rel (0) target = $region45
    $region44: #{_lambda_.1} parent=1 // pred_region
      %s110 = ssub.s32 2048, 2048
      %111 = vsyncadd [#allocation12], %s110
      %s112 = sshll.u32 [#allocation13], 4
      %s113 = int_to_ptr.vmem [resolvable:$true] %s112
      %118 = dma.hbm_to_vmem [thread:$0]  %s10, 2048, %s113, [#allocation12], 128, 128, 8
    $region45: #{_lambda_.1} parent=1 // pred_fallthru
      _
    // Predicated region
    $region46: #{_lambda_.1} parent=1 // pred_check
      _
    $region47: #{_lambda_.1} parent=1 // pred_check_branch
      %120 = sbr.rel (0) target = $region49
    $region48: #{_lambda_.1} parent=1 // pred_region
      _
    $region49: #{_lambda_.1} parent=1 // pred_fallthru
      _
    // Predicated region
    $region50: #{_lambda_.1} parent=1 // pred_check
      _
    $region51: #{_lambda_.1} parent=1 // pred_check_branch
      %122 = sbr.rel (0) target = $region53
    $region52: #{_lambda_.1} parent=1 // pred_region
      %s124 = ssub.s32 2048, 2048
      %125 = vsyncadd [#allocation15], %s124
      %s126 = sshll.u32 [#allocation14], 4
      %s127 = int_to_ptr.vmem [resolvable:$true] %s126
      %132 = dma.hbm_to_vmem [thread:$0]  %s12, 2048, %s127, [#allocation15], 128, 128, 8
    $region53: #{_lambda_.1} parent=1 // pred_fallthru
      _
    // Predicated region
    $region54: #{_lambda_.1} parent=1 // pred_check
      _
    $region55: #{_lambda_.1} parent=1 // pred_check_branch
      %134 = sbr.rel (0) target = $region57
    $region56: #{_lambda_.1} parent=1 // pred_region
      _
    $region57: #{_lambda_.1} parent=1 // pred_fallthru
      _
    // Predicated region
    $region58: #{_lambda_.1} parent=1 // pred_check
      _
    $region59: #{_lambda_.1} parent=1 // pred_check_branch
      %136 = sbr.rel (0) target = $region61
    $region60: #{_lambda_.1} parent=1 // pred_region
      %s138 = ssub.s32 2048, 2048
      %139 = vsyncadd [#allocation15], %s138
      %s140 = sshll.u32 [#allocation16], 4
      %s141 = int_to_ptr.vmem [resolvable:$true] %s140
      %146 = dma.hbm_to_vmem [thread:$0]  %s14, 2048, %s141, [#allocation15], 128, 128, 8
    $region61: #{_lambda_.1} parent=1 // pred_fallthru
      _
    // Predicated region
    $region62: #{_lambda_.1} parent=1 // pred_check
      _
    $region63: #{_lambda_.1} parent=1 // pred_check_branch
      %148 = sbr.rel (0) target = $region65
    $region64: #{_lambda_.1} parent=1 // pred_region
      _
    $region65: #{_lambda_.1} parent=1 // pred_fallthru
      _
    // Predicated region
    $region66: #{_lambda_.1} parent=1 // pred_check
      _
    $region67: #{_lambda_.1} parent=1 // pred_check_branch
      %150 = sbr.rel (0) target = $region69
    $region68: #{_lambda_.1} parent=1 // pred_region
      %151 = dma.done [#allocation3], 1024
    $region69: #{_lambda_.1} parent=1 // pred_fallthru
      _
    // Predicated region
    $region70: #{_lambda_.1} parent=1 // pred_check
      _
    $region71: #{_lambda_.1} parent=1 // pred_check_branch
      %153 = sbr.rel (0) target = $region73
    $region72: #{_lambda_.1} parent=1 // pred_region
      %154 = dma.done [#allocation6], 8192
    $region73: #{_lambda_.1} parent=1 // pred_fallthru
      _
    // Predicated region
    $region74: #{_lambda_.1} parent=1 // pred_check
      _
    $region75: #{_lambda_.1} parent=1 // pred_check_branch
      %156 = sbr.rel (0) target = $region77
    $region76: #{_lambda_.1} parent=1 // pred_region
      %157 = dma.done [#allocation6], 8192
    $region77: #{_lambda_.1} parent=1 // pred_fallthru
      _
    // Predicated region
    $region78: #{_lambda_.1} parent=1 // pred_check
      _
    $region79: #{_lambda_.1} parent=1 // pred_check_branch
      %159 = sbr.rel (0) target = $region81
    $region80: #{_lambda_.1} parent=1 // pred_region
      %160 = dma.done [#allocation9], 8192
    $region81: #{_lambda_.1} parent=1 // pred_fallthru
      _
    // Predicated region
    $region82: #{_lambda_.1} parent=1 // pred_check
      _
    $region83: #{_lambda_.1} parent=1 // pred_check_branch
      %162 = sbr.rel (0) target = $region85
    $region84: #{_lambda_.1} parent=1 // pred_region
      %163 = dma.done [#allocation9], 8192
    $region85: #{_lambda_.1} parent=1 // pred_fallthru
      _
    // Predicated region
    $region86: #{_lambda_.1} parent=1 // pred_check
      _
    $region87: #{_lambda_.1} parent=1 // pred_check_branch
      %165 = sbr.rel (0) target = $region89
    $region88: #{_lambda_.1} parent=1 // pred_region
      %166 = dma.done [#allocation12], 8192
    $region89: #{_lambda_.1} parent=1 // pred_fallthru
      _
    // Predicated region
    $region90: #{_lambda_.1} parent=1 // pred_check
      _
    $region91: #{_lambda_.1} parent=1 // pred_check_branch
      %168 = sbr.rel (0) target = $region93
    $region92: #{_lambda_.1} parent=1 // pred_region
      %169 = dma.done [#allocation12], 2048
    $region93: #{_lambda_.1} parent=1 // pred_fallthru
      _
    // Predicated region
    $region94: #{_lambda_.1} parent=1 // pred_check
      _
    $region95: #{_lambda_.1} parent=1 // pred_check_branch
      %171 = sbr.rel (0) target = $region97
    $region96: #{_lambda_.1} parent=1 // pred_region
      %172 = dma.done [#allocation15], 2048
    $region97: #{_lambda_.1} parent=1 // pred_fallthru
      _
    // Predicated region
    $region98: #{_lambda_.1} parent=1 // pred_check
      _
    $region99: #{_lambda_.1} parent=1 // pred_check_branch
      %174 = sbr.rel (0) target = $region101
    $region100: #{_lambda_.1} parent=1 // pred_region
      %175 = dma.done [#allocation15], 2048
    $region101: #{_lambda_.1} parent=1 // pred_fallthru
      _
    %v176 = vld [vmem:[%s0] sm:$0xff]
    %v177 = vld [vmem:[%s0 + $0x8] sm:$0xff]
    %v178 = vld [vmem:[#allocation2] sm:$0xff]
    %v179 = vld [vmem:[#allocation2 + $0x8] sm:$0xff]
    %v180 = vld [vmem:[#allocation2 + $0x10] sm:$0xff]
    %v181 = vld [vmem:[#allocation2 + $0x18] sm:$0xff]
    %v182 = vld [vmem:[#allocation2 + $0x20] sm:$0xff]
    %v183 = vld [vmem:[#allocation2 + $0x28] sm:$0xff]
    %v184 = vld [vmem:[#allocation2 + $0x30] sm:$0xff]
    %v185 = vld [vmem:[#allocation2 + $0x38] sm:$0xff]
    %v186 = vld [vmem:[%s3] sm:$0xf]
    %v188 = vlaneseq
    %v189 = vshrl.u32 %v188, 7
    %v190 = vsub.s32 0, %v189
    %v191 = vrot.slane %v186, %v190
    %v192 = vlaneseq
    %v193 = vshrl.u32 %v192, 7
    %v194 = vsub.s32 1, %v193
    %v195 = vrot.slane %v186, %v194
    %v196 = vlaneseq
    %v197 = vshrl.u32 %v196, 7
    %v198 = vsub.s32 2, %v197
    %v199 = vrot.slane %v186, %v198
    %v200 = vlaneseq
    %v201 = vshrl.u32 %v200, 7
    %v202 = vsub.s32 3, %v201
    %v203 = vrot.slane %v186, %v202
    %vm208 = vcmask 130048
    %v210 = vsel %vm208, %v176, 0
    %v213 = vsel %vm208, %v177, 0
    %215 = vmatprep.subr.mxu0 0.0
    %216 = vmatpush1.msra.mxu0 0.0
    %217 = vmatprep.subr.mxu0 0.0
    %218 = vmatpush1.msra.mxu0 0.0
    %219 = vmatprep.subr.mxu0 0.0
    %220 = vmatpush1.msra.mxu0 0.0
    %221 = vmatprep.subr.mxu0 0.0
    %222 = vmatpush1.msra.mxu0 0.0
    %223 = vmatprep.subr.mxu0 0.0
    %224 = vmatpush1.msra.mxu0 0.0
    %225 = vmatprep.subr.mxu0 0.0
    %226 = vmatpush1.msra.mxu0 0.0
    %227 = vmatprep.subr.mxu0 0.0
    %228 = vmatpush1.msra.mxu0 0.0
    %229 = vmatprep.subr.mxu0 0.0
    %230 = vmatpush1.msra.mxu0 0.0
    %231 = vmatprep.subr.mxu0 0.0
    %232 = vmatpush1.msra.mxu0 0.0
    %233 = vmatprep.subr.mxu0 0.0
    %234 = vmatpush1.msra.mxu0 0.0
    %235 = vmatprep.subr.mxu0 0.0
    %236 = vmatpush1.msra.mxu0 0.0
    %237 = vmatprep.subr.mxu0 0.0
    %238 = vmatpush1.msra.mxu0 0.0
    %239 = vmatprep.subr.mxu0 0.0
    %240 = vmatpush1.msra.mxu0 0.0
    %241 = vmatprep.subr.mxu0 0.0
    %242 = vmatpush1.msra.mxu0 0.0
    %243 = vmatprep.subr.mxu0 %v183
    %244 = vmatpush1.msra.mxu0 %v182
    %245 = vmatprep.subr.mxu0 %v179
    %246 = vmatpush1.msra.mxu0 %v178
    %247 = vmatprep.subr.mxu0 0.0
    %248 = vmatpush2.msra.mxu0 0.0
    %249 = vmatprep.subr.mxu0 0.0
    %250 = vmatpush2.msra.mxu0 0.0
    %251 = vmatprep.subr.mxu0 0.0
    %252 = vmatpush2.msra.mxu0 0.0
    %253 = vmatprep.subr.mxu0 0.0
    %254 = vmatpush2.msra.mxu0 0.0
    %255 = vmatprep.subr.mxu0 0.0
    %256 = vmatpush2.msra.mxu0 0.0
    %257 = vmatprep.subr.mxu0 0.0
    %258 = vmatpush2.msra.mxu0 0.0
    %259 = vmatprep.subr.mxu0 0.0
    %260 = vmatpush2.msra.mxu0 0.0
    %261 = vmatprep.subr.mxu0 0.0
    %262 = vmatpush2.msra.mxu0 0.0
    %263 = vmatprep.subr.mxu0 0.0
    %264 = vmatpush2.msra.mxu0 0.0
    %265 = vmatprep.subr.mxu0 0.0
    %266 = vmatpush2.msra.mxu0 0.0
    %267 = vmatprep.subr.mxu0 0.0
    %268 = vmatpush2.msra.mxu0 0.0
    %269 = vmatprep.subr.mxu0 0.0
    %270 = vmatpush2.msra.mxu0 0.0
    %271 = vmatprep.subr.mxu0 0.0
    %272 = vmatpush2.msra.mxu0 0.0
    %273 = vmatprep.subr.mxu0 0.0
    %274 = vmatpush2.msra.mxu0 0.0
    %275 = vmatprep.subr.mxu0 0.0
    %276 = vmatpush2.msra.mxu0 0.0
    %277 = vmatprep.subr.mxu0 0.0
    %278 = vmatpush2.msra.mxu0 0.0
    %279 = vmatprep.mubr.f32.mxu0 0.0
    %280 = vmatmul.mubr.f32.gmra.mxu0 %v210
    %v281 = vpop.f32.mrf.mxu0
    %v282 = vadd.f32 %v191, %v281
    %v283 = vpop.f32.mrf.mxu0
    %v284 = vadd.f32 %v195, %v283
    %285 = vmatprep.mubr.f32.mxu0 0.0
    %286 = vmatmul.mubr.f32.gmra.mxu0 %v213
    %v287 = vpop.f32.mrf.mxu0
    %v288 = vadd.f32 %v191, %v287
    %v289 = vpop.f32.mrf.mxu0
    %v290 = vadd.f32 %v195, %v289
    %291 = vdwg.mxu0
    %292 = vmatprep.subr.mxu0 0.0
    %293 = vmatpush1.msra.mxu0 0.0
    %294 = vmatprep.subr.mxu0 0.0
    %295 = vmatpush1.msra.mxu0 0.0
    %296 = vmatprep.subr.mxu0 0.0
    %297 = vmatpush1.msra.mxu0 0.0
    %298 = vmatprep.subr.mxu0 0.0
    %299 = vmatpush1.msra.mxu0 0.0
    %300 = vmatprep.subr.mxu0 0.0
    %301 = vmatpush1.msra.mxu0 0.0
    %302 = vmatprep.subr.mxu0 0.0
    %303 = vmatpush1.msra.mxu0 0.0
    %304 = vmatprep.subr.mxu0 0.0
    %305 = vmatpush1.msra.mxu0 0.0
    %306 = vmatprep.subr.mxu0 0.0
    %307 = vmatpush1.msra.mxu0 0.0
    %308 = vmatprep.subr.mxu0 0.0
    %309 = vmatpush1.msra.mxu0 0.0
    %310 = vmatprep.subr.mxu0 0.0
    %311 = vmatpush1.msra.mxu0 0.0
    %312 = vmatprep.subr.mxu0 0.0
    %313 = vmatpush1.msra.mxu0 0.0
    %314 = vmatprep.subr.mxu0 0.0
    %315 = vmatpush1.msra.mxu0 0.0
    %316 = vmatprep.subr.mxu0 0.0
    %317 = vmatpush1.msra.mxu0 0.0
    %318 = vmatprep.subr.mxu0 0.0
    %319 = vmatpush1.msra.mxu0 0.0
    %320 = vmatprep.subr.mxu0 %v185
    %321 = vmatpush1.msra.mxu0 %v184
    %322 = vmatprep.subr.mxu0 %v181
    %323 = vmatpush1.msra.mxu0 %v180
    %324 = vmatprep.subr.mxu0 0.0
    %325 = vmatpush2.msra.mxu0 0.0
    %326 = vmatprep.subr.mxu0 0.0
    %327 = vmatpush2.msra.mxu0 0.0
    %328 = vmatprep.subr.mxu0 0.0
    %329 = vmatpush2.msra.mxu0 0.0
    %330 = vmatprep.subr.mxu0 0.0
    %331 = vmatpush2.msra.mxu0 0.0
    %332 = vmatprep.subr.mxu0 0.0
    %333 = vmatpush2.msra.mxu0 0.0
    %334 = vmatprep.subr.mxu0 0.0
    %335 = vmatpush2.msra.mxu0 0.0
    %336 = vmatprep.subr.mxu0 0.0
    %337 = vmatpush2.msra.mxu0 0.0
    %338 = vmatprep.subr.mxu0 0.0
    %339 = vmatpush2.msra.mxu0 0.0
    %340 = vmatprep.subr.mxu0 0.0
    %341 = vmatpush2.msra.mxu0 0.0
    %342 = vmatprep.subr.mxu0 0.0
    %343 = vmatpush2.msra.mxu0 0.0
    %344 = vmatprep.subr.mxu0 0.0
    %345 = vmatpush2.msra.mxu0 0.0
    %346 = vmatprep.subr.mxu0 0.0
    %347 = vmatpush2.msra.mxu0 0.0
    %348 = vmatprep.subr.mxu0 0.0
    %349 = vmatpush2.msra.mxu0 0.0
    %350 = vmatprep.subr.mxu0 0.0
    %351 = vmatpush2.msra.mxu0 0.0
    %352 = vmatprep.subr.mxu0 0.0
    %353 = vmatpush2.msra.mxu0 0.0
    %354 = vmatprep.subr.mxu0 0.0
    %355 = vmatpush2.msra.mxu0 0.0
    %356 = vmatprep.mubr.f32.mxu0 0.0
    %357 = vmatmul.mubr.f32.gmra.mxu0 %v210
    %v358 = vpop.f32.mrf.mxu0
    %v359 = vadd.f32 %v199, %v358
    %v360 = vpop.f32.mrf.mxu0
    %v361 = vadd.f32 %v203, %v360
    %362 = vmatprep.mubr.f32.mxu0 0.0
    %363 = vmatmul.mubr.f32.gmra.mxu0 %v213
    %v364 = vpop.f32.mrf.mxu0
    %v365 = vadd.f32 %v199, %v364
    %v366 = vpop.f32.mrf.mxu0
    %v367 = vadd.f32 %v203, %v366
    %368 = vdwg.mxu0
    %v369 = vld [vmem:[%s6] sm:$0xf]
    %v371 = vlaneseq
    %v372 = vshrl.u32 %v371, 7
    %v373 = vsub.s32 0, %v372
    %v374 = vrot.slane %v369, %v373
    %v375 = vlaneseq
    %v376 = vshrl.u32 %v375, 7
    %v377 = vsub.s32 1, %v376
    %v378 = vrot.slane %v369, %v377
    %v379 = vlaneseq
    %v380 = vshrl.u32 %v379, 7
    %v381 = vsub.s32 2, %v380
    %v382 = vrot.slane %v369, %v381
    %v383 = vlaneseq
    %v384 = vshrl.u32 %v383, 7
    %v385 = vsub.s32 3, %v384
    %v386 = vrot.slane %v369, %v385
    %v391 = vld [vmem:[%s9] sm:$0xf]
    %v393 = vlaneseq
    %v394 = vshrl.u32 %v393, 7
    %v395 = vsub.s32 0, %v394
    %v396 = vrot.slane %v391, %v395
    %v397 = vlaneseq
    %v398 = vshrl.u32 %v397, 7
    %v399 = vsub.s32 1, %v398
    %v400 = vrot.slane %v391, %v399
    %v401 = vlaneseq
    %v402 = vshrl.u32 %v401, 7
    %v403 = vsub.s32 2, %v402
    %v404 = vrot.slane %v391, %v403
    %v405 = vlaneseq
    %v406 = vshrl.u32 %v405, 7
    %v407 = vsub.s32 3, %v406
    %v408 = vrot.slane %v391, %v407
    %v413 = vld [vmem:[#allocation5] sm:$0xff]
    %v414 = vld [vmem:[#allocation5 + $0x8] sm:$0xff]
    %v415 = vld [vmem:[#allocation5 + $0x10] sm:$0xff]
    %v416 = vld [vmem:[#allocation5 + $0x18] sm:$0xff]
    %v417 = vld [vmem:[#allocation5 + $0x20] sm:$0xff]
    %v418 = vld [vmem:[#allocation5 + $0x28] sm:$0xff]
    %v419 = vld [vmem:[#allocation5 + $0x30] sm:$0xff]
    %v420 = vld [vmem:[#allocation5 + $0x38] sm:$0xff]
    %v421 = vld [vmem:[#allocation5 + $0x40] sm:$0xff]
    %v422 = vld [vmem:[#allocation5 + $0x48] sm:$0xff]
    %v423 = vld [vmem:[#allocation5 + $0x50] sm:$0xff]
    %v424 = vld [vmem:[#allocation5 + $0x58] sm:$0xff]
    %v425 = vld [vmem:[#allocation5 + $0x60] sm:$0xff]
    %v426 = vld [vmem:[#allocation5 + $0x68] sm:$0xff]
    %v427 = vld [vmem:[#allocation5 + $0x70] sm:$0xff]
    %v428 = vld [vmem:[#allocation5 + $0x78] sm:$0xff]
    %v429 = vld [vmem:[#allocation5 + $0x80] sm:$0xff]
    %v430 = vld [vmem:[#allocation5 + $0x88] sm:$0xff]
    %v431 = vld [vmem:[#allocation5 + $0x90] sm:$0xff]
    %v432 = vld [vmem:[#allocation5 + $0x98] sm:$0xff]
    %v433 = vld [vmem:[#allocation5 + $0xa0] sm:$0xff]
    %v434 = vld [vmem:[#allocation5 + $0xa8] sm:$0xff]
    %v435 = vld [vmem:[#allocation5 + $0xb0] sm:$0xff]
    %v436 = vld [vmem:[#allocation5 + $0xb8] sm:$0xff]
    %v437 = vld [vmem:[#allocation5 + $0xc0] sm:$0xff]
    %v438 = vld [vmem:[#allocation5 + $0xc8] sm:$0xff]
    %v439 = vld [vmem:[#allocation5 + $0xd0] sm:$0xff]
    %v440 = vld [vmem:[#allocation5 + $0xd8] sm:$0xff]
    %v441 = vld [vmem:[#allocation5 + $0xe0] sm:$0xff]
    %v442 = vld [vmem:[#allocation5 + $0xe8] sm:$0xff]
    %v443 = vld [vmem:[#allocation5 + $0xf0] sm:$0xff]
    %v444 = vld [vmem:[#allocation5 + $0xf8] sm:$0xff]
    %v445 = vld [vmem:[#allocation5 + $0x100] sm:$0xff]
    %v446 = vld [vmem:[#allocation5 + $0x108] sm:$0xff]
    %v447 = vld [vmem:[#allocation5 + $0x110] sm:$0xff]
    %v448 = vld [vmem:[#allocation5 + $0x118] sm:$0xff]
    %v449 = vld [vmem:[#allocation5 + $0x120] sm:$0xff]
    %v450 = vld [vmem:[#allocation5 + $0x128] sm:$0xff]
    %v451 = vld [vmem:[#allocation5 + $0x130] sm:$0xff]
    %v452 = vld [vmem:[#allocation5 + $0x138] sm:$0xff]
    %v453 = vld [vmem:[#allocation5 + $0x140] sm:$0xff]
    %v454 = vld [vmem:[#allocation5 + $0x148] sm:$0xff]
    %v455 = vld [vmem:[#allocation5 + $0x150] sm:$0xff]
    %v456 = vld [vmem:[#allocation5 + $0x158] sm:$0xff]
    %v457 = vld [vmem:[#allocation5 + $0x160] sm:$0xff]
    %v458 = vld [vmem:[#allocation5 + $0x168] sm:$0xff]
    %v459 = vld [vmem:[#allocation5 + $0x170] sm:$0xff]
    %v460 = vld [vmem:[#allocation5 + $0x178] sm:$0xff]
    %v461 = vld [vmem:[#allocation5 + $0x180] sm:$0xff]
    %v462 = vld [vmem:[#allocation5 + $0x188] sm:$0xff]
    %v463 = vld [vmem:[#allocation5 + $0x190] sm:$0xff]
    %v464 = vld [vmem:[#allocation5 + $0x198] sm:$0xff]
    %v465 = vld [vmem:[#allocation5 + $0x1a0] sm:$0xff]
    %v466 = vld [vmem:[#allocation5 + $0x1a8] sm:$0xff]
    %v467 = vld [vmem:[#allocation5 + $0x1b0] sm:$0xff]
    %v468 = vld [vmem:[#allocation5 + $0x1b8] sm:$0xff]
    %v469 = vld [vmem:[#allocation5 + $0x1c0] sm:$0xff]
    %v470 = vld [vmem:[#allocation5 + $0x1c8] sm:$0xff]
    %v471 = vld [vmem:[#allocation5 + $0x1d0] sm:$0xff]
    %v472 = vld [vmem:[#allocation5 + $0x1d8] sm:$0xff]
    %v473 = vld [vmem:[#allocation5 + $0x1e0] sm:$0xff]
    %v474 = vld [vmem:[#allocation5 + $0x1e8] sm:$0xff]
    %v475 = vld [vmem:[#allocation5 + $0x1f0] sm:$0xff]
    %v476 = vld [vmem:[#allocation5 + $0x1f8] sm:$0xff]
    %477 = vmatprep.subr.mxu0 %v474
    %478 = vmatpush1.msra.mxu0 %v473
    %479 = vmatprep.subr.mxu0 %v470
    %480 = vmatpush1.msra.mxu0 %v469
    %481 = vmatprep.subr.mxu0 %v466
    %482 = vmatpush1.msra.mxu0 %v465
    %483 = vmatprep.subr.mxu0 %v462
    %484 = vmatpush1.msra.mxu0 %v461
    %485 = vmatprep.subr.mxu0 %v458
    %486 = vmatpush1.msra.mxu0 %v457
    %487 = vmatprep.subr.mxu0 %v454
    %488 = vmatpush1.msra.mxu0 %v453
    %489 = vmatprep.subr.mxu0 %v450
    %490 = vmatpush1.msra.mxu0 %v449
    %491 = vmatprep.subr.mxu0 %v446
    %492 = vmatpush1.msra.mxu0 %v445
    %493 = vmatprep.subr.mxu0 %v442
    %494 = vmatpush1.msra.mxu0 %v441
    %495 = vmatprep.subr.mxu0 %v438
    %496 = vmatpush1.msra.mxu0 %v437
    %497 = vmatprep.subr.mxu0 %v434
    %498 = vmatpush1.msra.mxu0 %v433
    %499 = vmatprep.subr.mxu0 %v430
    %500 = vmatpush1.msra.mxu0 %v429
    %501 = vmatprep.subr.mxu0 %v426
    %502 = vmatpush1.msra.mxu0 %v425
    %503 = vmatprep.subr.mxu0 %v422
    %504 = vmatpush1.msra.mxu0 %v421
    %505 = vmatprep.subr.mxu0 %v418
    %506 = vmatpush1.msra.mxu0 %v417
    %507 = vmatprep.subr.mxu0 %v414
    %508 = vmatpush1.msra.mxu0 %v413
    %509 = vmatprep.subr.mxu0 0.0
    %510 = vmatpush2.msra.mxu0 0.0
    %511 = vmatprep.subr.mxu0 0.0
    %512 = vmatpush2.msra.mxu0 0.0
    %513 = vmatprep.subr.mxu0 0.0
    %514 = vmatpush2.msra.mxu0 0.0
    %515 = vmatprep.subr.mxu0 0.0
    %516 = vmatpush2.msra.mxu0 0.0
    %517 = vmatprep.subr.mxu0 0.0
    %518 = vmatpush2.msra.mxu0 0.0
    %519 = vmatprep.subr.mxu0 0.0
    %520 = vmatpush2.msra.mxu0 0.0
    %521 = vmatprep.subr.mxu0 0.0
    %522 = vmatpush2.msra.mxu0 0.0
    %523 = vmatprep.subr.mxu0 0.0
    %524 = vmatpush2.msra.mxu0 0.0
    %525 = vmatprep.subr.mxu0 0.0
    %526 = vmatpush2.msra.mxu0 0.0
    %527 = vmatprep.subr.mxu0 0.0
    %528 = vmatpush2.msra.mxu0 0.0
    %529 = vmatprep.subr.mxu0 0.0
    %530 = vmatpush2.msra.mxu0 0.0
    %531 = vmatprep.subr.mxu0 0.0
    %532 = vmatpush2.msra.mxu0 0.0
    %533 = vmatprep.subr.mxu0 0.0
    %534 = vmatpush2.msra.mxu0 0.0
    %535 = vmatprep.subr.mxu0 0.0
    %536 = vmatpush2.msra.mxu0 0.0
    %537 = vmatprep.subr.mxu0 0.0
    %538 = vmatpush2.msra.mxu0 0.0
    %539 = vmatprep.subr.mxu0 0.0
    %540 = vmatpush2.msra.mxu0 0.0
    %541 = vmatprep.mubr.f32.mxu0 0.0
    %542 = vmatmul.mubr.f32.gmra.mxu0 0.0
    %v543 = vpop.f32.mrf.mxu0
    %v544 = vadd.f32 0.0, %v543
    %v545 = vpop.f32.mrf.mxu0
    %v546 = vadd.f32 0.0, %v545
    %547 = vdwg.mxu0
    %548 = vmatprep.subr.mxu0 %v476
    %549 = vmatpush1.msra.mxu0 %v475
    %550 = vmatprep.subr.mxu0 %v472
    %551 = vmatpush1.msra.mxu0 %v471
    %552 = vmatprep.subr.mxu0 %v468
    %553 = vmatpush1.msra.mxu0 %v467
    %554 = vmatprep.subr.mxu0 %v464
    %555 = vmatpush1.msra.mxu0 %v463
    %556 = vmatprep.subr.mxu0 %v460
    %557 = vmatpush1.msra.mxu0 %v459
    %558 = vmatprep.subr.mxu0 %v456
    %559 = vmatpush1.msra.mxu0 %v455
    %560 = vmatprep.subr.mxu0 %v452
    %561 = vmatpush1.msra.mxu0 %v451
    %562 = vmatprep.subr.mxu0 %v448
    %563 = vmatpush1.msra.mxu0 %v447
    %564 = vmatprep.subr.mxu0 %v444
    %565 = vmatpush1.msra.mxu0 %v443
    %566 = vmatprep.subr.mxu0 %v440
    %567 = vmatpush1.msra.mxu0 %v439
    %568 = vmatprep.subr.mxu0 %v436
    %569 = vmatpush1.msra.mxu0 %v435
    %570 = vmatprep.subr.mxu0 %v432
    %571 = vmatpush1.msra.mxu0 %v431
    %572 = vmatprep.subr.mxu0 %v428
    %573 = vmatpush1.msra.mxu0 %v427
    %574 = vmatprep.subr.mxu0 %v424
    %575 = vmatpush1.msra.mxu0 %v423
    %576 = vmatprep.subr.mxu0 %v420
    %577 = vmatpush1.msra.mxu0 %v419
    %578 = vmatprep.subr.mxu0 %v416
    %579 = vmatpush1.msra.mxu0 %v415
    %580 = vmatprep.subr.mxu0 0.0
    %581 = vmatpush2.msra.mxu0 0.0
    %582 = vmatprep.subr.mxu0 0.0
    %583 = vmatpush2.msra.mxu0 0.0
    %584 = vmatprep.subr.mxu0 0.0
    %585 = vmatpush2.msra.mxu0 0.0
    %586 = vmatprep.subr.mxu0 0.0
    %587 = vmatpush2.msra.mxu0 0.0
    %588 = vmatprep.subr.mxu0 0.0
    %589 = vmatpush2.msra.mxu0 0.0
    %590 = vmatprep.subr.mxu0 0.0
    %591 = vmatpush2.msra.mxu0 0.0
    %592 = vmatprep.subr.mxu0 0.0
    %593 = vmatpush2.msra.mxu0 0.0
    %594 = vmatprep.subr.mxu0 0.0
    %595 = vmatpush2.msra.mxu0 0.0
    %596 = vmatprep.subr.mxu0 0.0
    %597 = vmatpush2.msra.mxu0 0.0
    %598 = vmatprep.subr.mxu0 0.0
    %599 = vmatpush2.msra.mxu0 0.0
    %600 = vmatprep.subr.mxu0 0.0
    %601 = vmatpush2.msra.mxu0 0.0
    %602 = vmatprep.subr.mxu0 0.0
    %603 = vmatpush2.msra.mxu0 0.0
    %604 = vmatprep.subr.mxu0 0.0
    %605 = vmatpush2.msra.mxu0 0.0
    %606 = vmatprep.subr.mxu0 0.0
    %607 = vmatpush2.msra.mxu0 0.0
    %608 = vmatprep.subr.mxu0 0.0
    %609 = vmatpush2.msra.mxu0 0.0
    %610 = vmatprep.subr.mxu0 0.0
    %611 = vmatpush2.msra.mxu0 0.0
    %612 = vmatprep.mubr.f32.mxu0 0.0
    %613 = vmatmul.mubr.f32.gmra.mxu0 0.0
    %v614 = vpop.f32.mrf.mxu0
    %v615 = vadd.f32 0.0, %v614
    %v616 = vpop.f32.mrf.mxu0
    %v617 = vadd.f32 0.0, %v616
    %618 = vdwg.mxu0
    %v619 = vadd.f32 %v282, %v544
    %v620 = vadd.f32 %v284, %v546
    %v621 = vadd.f32 %v359, %v615
    %v622 = vadd.f32 %v361, %v617
    %v623 = vxor.u32 %v619, 2147483648
    %v624 = vxor.u32 %v620, 2147483648
    %v625 = vxor.u32 %v621, 2147483648
    %v626 = vmul.f32 %v623, 1.442695
    %v627 = vpow.pop %v626
    %v628 = vmul.f32 %v624, 1.442695
    %v629 = vpow.pop %v628
    %v630 = vmul.f32 %v625, 1.442695
    %v631 = vpow.pop %v630
    %v632 = vadd.f32 %v627, 1.0
    %v633 = vadd.f32 %v629, 1.0
    %v634 = vadd.f32 %v631, 1.0
    %v635 = vrcp.pop %v632
    %v636 = vmul.f32 1.0, %v635
    %v637 = vrcp.pop %v633
    %v638 = vmul.f32 1.0, %v637
    %v639 = vrcp.pop %v634
    %v640 = vmul.f32 1.0, %v639
    %v641 = vtanh.pop %v622
    %v642 = vmul.f32 %v638, 0.0
    %v643 = vmul.f32 %v636, %v641
    %v644 = vadd.f32 %v642, %v643
    %v645 = vtanh.pop %v644
    %v646 = vmul.f32 %v640, %v645
    %v647 = vld [vmem:[#allocation7] sm:$0xff]
    %v648 = vld [vmem:[#allocation7 + $0x8] sm:$0xff]
    %v649 = vld [vmem:[#allocation7 + $0x10] sm:$0xff]
    %v650 = vld [vmem:[#allocation7 + $0x18] sm:$0xff]
    %v651 = vld [vmem:[#allocation7 + $0x20] sm:$0xff]
    %v652 = vld [vmem:[#allocation7 + $0x28] sm:$0xff]
    %v653 = vld [vmem:[#allocation7 + $0x30] sm:$0xff]
    %v654 = vld [vmem:[#allocation7 + $0x38] sm:$0xff]
    %v655 = vld [vmem:[#allocation7 + $0x40] sm:$0xff]
    %v656 = vld [vmem:[#allocation7 + $0x48] sm:$0xff]
    %v657 = vld [vmem:[#allocation7 + $0x50] sm:$0xff]
    %v658 = vld [vmem:[#allocation7 + $0x58] sm:$0xff]
    %v659 = vld [vmem:[#allocation7 + $0x60] sm:$0xff]
    %v660 = vld [vmem:[#allocation7 + $0x68] sm:$0xff]
    %v661 = vld [vmem:[#allocation7 + $0x70] sm:$0xff]
    %v662 = vld [vmem:[#allocation7 + $0x78] sm:$0xff]
    %v663 = vld [vmem:[#allocation7 + $0x80] sm:$0xff]
    %v664 = vld [vmem:[#allocation7 + $0x88] sm:$0xff]
    %v665 = vld [vmem:[#allocation7 + $0x90] sm:$0xff]
    %v666 = vld [vmem:[#allocation7 + $0x98] sm:$0xff]
    %v667 = vld [vmem:[#allocation7 + $0xa0] sm:$0xff]
    %v668 = vld [vmem:[#allocation7 + $0xa8] sm:$0xff]
    %v669 = vld [vmem:[#allocation7 + $0xb0] sm:$0xff]
    %v670 = vld [vmem:[#allocation7 + $0xb8] sm:$0xff]
    %v671 = vld [vmem:[#allocation7 + $0xc0] sm:$0xff]
    %v672 = vld [vmem:[#allocation7 + $0xc8] sm:$0xff]
    %v673 = vld [vmem:[#allocation7 + $0xd0] sm:$0xff]
    %v674 = vld [vmem:[#allocation7 + $0xd8] sm:$0xff]
    %v675 = vld [vmem:[#allocation7 + $0xe0] sm:$0xff]
    %v676 = vld [vmem:[#allocation7 + $0xe8] sm:$0xff]
    %v677 = vld [vmem:[#allocation7 + $0xf0] sm:$0xff]
    %v678 = vld [vmem:[#allocation7 + $0xf8] sm:$0xff]
    %v679 = vld [vmem:[#allocation7 + $0x100] sm:$0xff]
    %v680 = vld [vmem:[#allocation7 + $0x108] sm:$0xff]
    %v681 = vld [vmem:[#allocation7 + $0x110] sm:$0xff]
    %v682 = vld [vmem:[#allocation7 + $0x118] sm:$0xff]
    %v683 = vld [vmem:[#allocation7 + $0x120] sm:$0xff]
    %v684 = vld [vmem:[#allocation7 + $0x128] sm:$0xff]
    %v685 = vld [vmem:[#allocation7 + $0x130] sm:$0xff]
    %v686 = vld [vmem:[#allocation7 + $0x138] sm:$0xff]
    %v687 = vld [vmem:[#allocation7 + $0x140] sm:$0xff]
    %v688 = vld [vmem:[#allocation7 + $0x148] sm:$0xff]
    %v689 = vld [vmem:[#allocation7 + $0x150] sm:$0xff]
    %v690 = vld [vmem:[#allocation7 + $0x158] sm:$0xff]
    %v691 = vld [vmem:[#allocation7 + $0x160] sm:$0xff]
    %v692 = vld [vmem:[#allocation7 + $0x168] sm:$0xff]
    %v693 = vld [vmem:[#allocation7 + $0x170] sm:$0xff]
    %v694 = vld [vmem:[#allocation7 + $0x178] sm:$0xff]
    %v695 = vld [vmem:[#allocation7 + $0x180] sm:$0xff]
    %v696 = vld [vmem:[#allocation7 + $0x188] sm:$0xff]
    %v697 = vld [vmem:[#allocation7 + $0x190] sm:$0xff]
    %v698 = vld [vmem:[#allocation7 + $0x198] sm:$0xff]
    %v699 = vld [vmem:[#allocation7 + $0x1a0] sm:$0xff]
    %v700 = vld [vmem:[#allocation7 + $0x1a8] sm:$0xff]
    %v701 = vld [vmem:[#allocation7 + $0x1b0] sm:$0xff]
    %v702 = vld [vmem:[#allocation7 + $0x1b8] sm:$0xff]
    %v703 = vld [vmem:[#allocation7 + $0x1c0] sm:$0xff]
    %v704 = vld [vmem:[#allocation7 + $0x1c8] sm:$0xff]
    %v705 = vld [vmem:[#allocation7 + $0x1d0] sm:$0xff]
    %v706 = vld [vmem:[#allocation7 + $0x1d8] sm:$0xff]
    %v707 = vld [vmem:[#allocation7 + $0x1e0] sm:$0xff]
    %v708 = vld [vmem:[#allocation7 + $0x1e8] sm:$0xff]
    %v709 = vld [vmem:[#allocation7 + $0x1f0] sm:$0xff]
    %v710 = vld [vmem:[#allocation7 + $0x1f8] sm:$0xff]
    %v711 = vld [vmem:[#allocation8] sm:$0xff]
    %v712 = vld [vmem:[#allocation8 + $0x8] sm:$0xff]
    %v713 = vld [vmem:[#allocation8 + $0x10] sm:$0xff]
    %v714 = vld [vmem:[#allocation8 + $0x18] sm:$0xff]
    %v715 = vld [vmem:[#allocation8 + $0x20] sm:$0xff]
    %v716 = vld [vmem:[#allocation8 + $0x28] sm:$0xff]
    %v717 = vld [vmem:[#allocation8 + $0x30] sm:$0xff]
    %v718 = vld [vmem:[#allocation8 + $0x38] sm:$0xff]
    %v719 = vld [vmem:[#allocation8 + $0x40] sm:$0xff]
    %v720 = vld [vmem:[#allocation8 + $0x48] sm:$0xff]
    %v721 = vld [vmem:[#allocation8 + $0x50] sm:$0xff]
    %v722 = vld [vmem:[#allocation8 + $0x58] sm:$0xff]
    %v723 = vld [vmem:[#allocation8 + $0x60] sm:$0xff]
    %v724 = vld [vmem:[#allocation8 + $0x68] sm:$0xff]
    %v725 = vld [vmem:[#allocation8 + $0x70] sm:$0xff]
    %v726 = vld [vmem:[#allocation8 + $0x78] sm:$0xff]
    %v727 = vld [vmem:[#allocation8 + $0x80] sm:$0xff]
    %v728 = vld [vmem:[#allocation8 + $0x88] sm:$0xff]
    %v729 = vld [vmem:[#allocation8 + $0x90] sm:$0xff]
    %v730 = vld [vmem:[#allocation8 + $0x98] sm:$0xff]
    %v731 = vld [vmem:[#allocation8 + $0xa0] sm:$0xff]
    %v732 = vld [vmem:[#allocation8 + $0xa8] sm:$0xff]
    %v733 = vld [vmem:[#allocation8 + $0xb0] sm:$0xff]
    %v734 = vld [vmem:[#allocation8 + $0xb8] sm:$0xff]
    %v735 = vld [vmem:[#allocation8 + $0xc0] sm:$0xff]
    %v736 = vld [vmem:[#allocation8 + $0xc8] sm:$0xff]
    %v737 = vld [vmem:[#allocation8 + $0xd0] sm:$0xff]
    %v738 = vld [vmem:[#allocation8 + $0xd8] sm:$0xff]
    %v739 = vld [vmem:[#allocation8 + $0xe0] sm:$0xff]
    %v740 = vld [vmem:[#allocation8 + $0xe8] sm:$0xff]
    %v741 = vld [vmem:[#allocation8 + $0xf0] sm:$0xff]
    %v742 = vld [vmem:[#allocation8 + $0xf8] sm:$0xff]
    %v743 = vld [vmem:[#allocation8 + $0x100] sm:$0xff]
    %v744 = vld [vmem:[#allocation8 + $0x108] sm:$0xff]
    %v745 = vld [vmem:[#allocation8 + $0x110] sm:$0xff]
    %v746 = vld [vmem:[#allocation8 + $0x118] sm:$0xff]
    %v747 = vld [vmem:[#allocation8 + $0x120] sm:$0xff]
    %v748 = vld [vmem:[#allocation8 + $0x128] sm:$0xff]
    %v749 = vld [vmem:[#allocation8 + $0x130] sm:$0xff]
    %v750 = vld [vmem:[#allocation8 + $0x138] sm:$0xff]
    %v751 = vld [vmem:[#allocation8 + $0x140] sm:$0xff]
    %v752 = vld [vmem:[#allocation8 + $0x148] sm:$0xff]
    %v753 = vld [vmem:[#allocation8 + $0x150] sm:$0xff]
    %v754 = vld [vmem:[#allocation8 + $0x158] sm:$0xff]
    %v755 = vld [vmem:[#allocation8 + $0x160] sm:$0xff]
    %v756 = vld [vmem:[#allocation8 + $0x168] sm:$0xff]
    %v757 = vld [vmem:[#allocation8 + $0x170] sm:$0xff]
    %v758 = vld [vmem:[#allocation8 + $0x178] sm:$0xff]
    %v759 = vld [vmem:[#allocation8 + $0x180] sm:$0xff]
    %v760 = vld [vmem:[#allocation8 + $0x188] sm:$0xff]
    %v761 = vld [vmem:[#allocation8 + $0x190] sm:$0xff]
    %v762 = vld [vmem:[#allocation8 + $0x198] sm:$0xff]
    %v763 = vld [vmem:[#allocation8 + $0x1a0] sm:$0xff]
    %v764 = vld [vmem:[#allocation8 + $0x1a8] sm:$0xff]
    %v765 = vld [vmem:[#allocation8 + $0x1b0] sm:$0xff]
    %v766 = vld [vmem:[#allocation8 + $0x1b8] sm:$0xff]
    %v767 = vld [vmem:[#allocation8 + $0x1c0] sm:$0xff]
    %v768 = vld [vmem:[#allocation8 + $0x1c8] sm:$0xff]
    %v769 = vld [vmem:[#allocation8 + $0x1d0] sm:$0xff]
    %v770 = vld [vmem:[#allocation8 + $0x1d8] sm:$0xff]
    %v771 = vld [vmem:[#allocation8 + $0x1e0] sm:$0xff]
    %v772 = vld [vmem:[#allocation8 + $0x1e8] sm:$0xff]
    %v773 = vld [vmem:[#allocation8 + $0x1f0] sm:$0xff]
    %v774 = vld [vmem:[#allocation8 + $0x1f8] sm:$0xff]
    %775 = vmatprep.subr.mxu0 %v772
    %776 = vmatpush1.msra.mxu0 %v771
    %777 = vmatprep.subr.mxu0 %v768
    %778 = vmatpush1.msra.mxu0 %v767
    %779 = vmatprep.subr.mxu0 %v764
    %780 = vmatpush1.msra.mxu0 %v763
    %781 = vmatprep.subr.mxu0 %v760
    %782 = vmatpush1.msra.mxu0 %v759
    %783 = vmatprep.subr.mxu0 %v756
    %784 = vmatpush1.msra.mxu0 %v755
    %785 = vmatprep.subr.mxu0 %v752
    %786 = vmatpush1.msra.mxu0 %v751
    %787 = vmatprep.subr.mxu0 %v748
    %788 = vmatpush1.msra.mxu0 %v747
    %789 = vmatprep.subr.mxu0 %v744
    %790 = vmatpush1.msra.mxu0 %v743
    %791 = vmatprep.subr.mxu0 %v740
    %792 = vmatpush1.msra.mxu0 %v739
    %793 = vmatprep.subr.mxu0 %v736
    %794 = vmatpush1.msra.mxu0 %v735
    %795 = vmatprep.subr.mxu0 %v732
    %796 = vmatpush1.msra.mxu0 %v731
    %797 = vmatprep.subr.mxu0 %v728
    %798 = vmatpush1.msra.mxu0 %v727
    %799 = vmatprep.subr.mxu0 %v724
    %800 = vmatpush1.msra.mxu0 %v723
    %801 = vmatprep.subr.mxu0 %v720
    %802 = vmatpush1.msra.mxu0 %v719
    %803 = vmatprep.subr.mxu0 %v716
    %804 = vmatpush1.msra.mxu0 %v715
    %805 = vmatprep.subr.mxu0 %v712
    %806 = vmatpush1.msra.mxu0 %v711
    %807 = vmatprep.subr.mxu0 0.0
    %808 = vmatpush2.msra.mxu0 0.0
    %809 = vmatprep.subr.mxu0 0.0
    %810 = vmatpush2.msra.mxu0 0.0
    %811 = vmatprep.subr.mxu0 0.0
    %812 = vmatpush2.msra.mxu0 0.0
    %813 = vmatprep.subr.mxu0 0.0
    %814 = vmatpush2.msra.mxu0 0.0
    %815 = vmatprep.subr.mxu0 0.0
    %816 = vmatpush2.msra.mxu0 0.0
    %817 = vmatprep.subr.mxu0 0.0
    %818 = vmatpush2.msra.mxu0 0.0
    %819 = vmatprep.subr.mxu0 0.0
    %820 = vmatpush2.msra.mxu0 0.0
    %821 = vmatprep.subr.mxu0 0.0
    %822 = vmatpush2.msra.mxu0 0.0
    %823 = vmatprep.subr.mxu0 0.0
    %824 = vmatpush2.msra.mxu0 0.0
    %825 = vmatprep.subr.mxu0 0.0
    %826 = vmatpush2.msra.mxu0 0.0
    %827 = vmatprep.subr.mxu0 0.0
    %828 = vmatpush2.msra.mxu0 0.0
    %829 = vmatprep.subr.mxu0 0.0
    %830 = vmatpush2.msra.mxu0 0.0
    %831 = vmatprep.subr.mxu0 0.0
    %832 = vmatpush2.msra.mxu0 0.0
    %833 = vmatprep.subr.mxu0 0.0
    %834 = vmatpush2.msra.mxu0 0.0
    %835 = vmatprep.subr.mxu0 0.0
    %836 = vmatpush2.msra.mxu0 0.0
    %837 = vmatprep.subr.mxu0 0.0
    %838 = vmatpush2.msra.mxu0 0.0
    %839 = vmatprep.mubr.f32.mxu0 0.0
    %840 = vmatmul.mubr.f32.gmra.mxu0 0.0
    %v841 = vpop.f32.mrf.mxu0
    %v842 = vadd.f32 0.0, %v841
    %v843 = vpop.f32.mrf.mxu0
    %v844 = vadd.f32 0.0, %v843
    %845 = vdwg.mxu0
    %846 = vmatprep.subr.mxu0 %v774
    %847 = vmatpush1.msra.mxu0 %v773
    %848 = vmatprep.subr.mxu0 %v770
    %849 = vmatpush1.msra.mxu0 %v769
    %850 = vmatprep.subr.mxu0 %v766
    %851 = vmatpush1.msra.mxu0 %v765
    %852 = vmatprep.subr.mxu0 %v762
    %853 = vmatpush1.msra.mxu0 %v761
    %854 = vmatprep.subr.mxu0 %v758
    %855 = vmatpush1.msra.mxu0 %v757
    %856 = vmatprep.subr.mxu0 %v754
    %857 = vmatpush1.msra.mxu0 %v753
    %858 = vmatprep.subr.mxu0 %v750
    %859 = vmatpush1.msra.mxu0 %v749
    %860 = vmatprep.subr.mxu0 %v746
    %861 = vmatpush1.msra.mxu0 %v745
    %862 = vmatprep.subr.mxu0 %v742
    %863 = vmatpush1.msra.mxu0 %v741
    %864 = vmatprep.subr.mxu0 %v738
    %865 = vmatpush1.msra.mxu0 %v737
    %866 = vmatprep.subr.mxu0 %v734
    %867 = vmatpush1.msra.mxu0 %v733
    %868 = vmatprep.subr.mxu0 %v730
    %869 = vmatpush1.msra.mxu0 %v729
    %870 = vmatprep.subr.mxu0 %v726
    %871 = vmatpush1.msra.mxu0 %v725
    %872 = vmatprep.subr.mxu0 %v722
    %873 = vmatpush1.msra.mxu0 %v721
    %874 = vmatprep.subr.mxu0 %v718
    %875 = vmatpush1.msra.mxu0 %v717
    %876 = vmatprep.subr.mxu0 %v714
    %877 = vmatpush1.msra.mxu0 %v713
    %878 = vmatprep.subr.mxu0 0.0
    %879 = vmatpush2.msra.mxu0 0.0
    %880 = vmatprep.subr.mxu0 0.0
    %881 = vmatpush2.msra.mxu0 0.0
    %882 = vmatprep.subr.mxu0 0.0
    %883 = vmatpush2.msra.mxu0 0.0
    %884 = vmatprep.subr.mxu0 0.0
    %885 = vmatpush2.msra.mxu0 0.0
    %886 = vmatprep.subr.mxu0 0.0
    %887 = vmatpush2.msra.mxu0 0.0
    %888 = vmatprep.subr.mxu0 0.0
    %889 = vmatpush2.msra.mxu0 0.0
    %890 = vmatprep.subr.mxu0 0.0
    %891 = vmatpush2.msra.mxu0 0.0
    %892 = vmatprep.subr.mxu0 0.0
    %893 = vmatpush2.msra.mxu0 0.0
    %894 = vmatprep.subr.mxu0 0.0
    %895 = vmatpush2.msra.mxu0 0.0
    %896 = vmatprep.subr.mxu0 0.0
    %897 = vmatpush2.msra.mxu0 0.0
    %898 = vmatprep.subr.mxu0 0.0
    %899 = vmatpush2.msra.mxu0 0.0
    %900 = vmatprep.subr.mxu0 0.0
    %901 = vmatpush2.msra.mxu0 0.0
    %902 = vmatprep.subr.mxu0 0.0
    %903 = vmatpush2.msra.mxu0 0.0
    %904 = vmatprep.subr.mxu0 0.0
    %905 = vmatpush2.msra.mxu0 0.0
    %906 = vmatprep.subr.mxu0 0.0
    %907 = vmatpush2.msra.mxu0 0.0
    %908 = vmatprep.subr.mxu0 0.0
    %909 = vmatpush2.msra.mxu0 0.0
    %910 = vmatprep.mubr.f32.mxu0 0.0
    %911 = vmatmul.mubr.f32.gmra.mxu0 0.0
    %v912 = vpop.f32.mrf.mxu0
    %v913 = vadd.f32 0.0, %v912
    %v914 = vpop.f32.mrf.mxu0
    %v915 = vadd.f32 0.0, %v914
    %916 = vdwg.mxu0
    %917 = vmatprep.subr.mxu0 %v708
    %918 = vmatpush1.msra.mxu0 %v707
    %919 = vmatprep.subr.mxu0 %v704
    %920 = vmatpush1.msra.mxu0 %v703
    %921 = vmatprep.subr.mxu0 %v700
    %922 = vmatpush1.msra.mxu0 %v699
    %923 = vmatprep.subr.mxu0 %v696
    %924 = vmatpush1.msra.mxu0 %v695
    %925 = vmatprep.subr.mxu0 %v692
    %926 = vmatpush1.msra.mxu0 %v691
    %927 = vmatprep.subr.mxu0 %v688
    %928 = vmatpush1.msra.mxu0 %v687
    %929 = vmatprep.subr.mxu0 %v684
    %930 = vmatpush1.msra.mxu0 %v683
    %931 = vmatprep.subr.mxu0 %v680
    %932 = vmatpush1.msra.mxu0 %v679
    %933 = vmatprep.subr.mxu0 %v676
    %934 = vmatpush1.msra.mxu0 %v675
    %935 = vmatprep.subr.mxu0 %v672
    %936 = vmatpush1.msra.mxu0 %v671
    %937 = vmatprep.subr.mxu0 %v668
    %938 = vmatpush1.msra.mxu0 %v667
    %939 = vmatprep.subr.mxu0 %v664
    %940 = vmatpush1.msra.mxu0 %v663
    %941 = vmatprep.subr.mxu0 %v660
    %942 = vmatpush1.msra.mxu0 %v659
    %943 = vmatprep.subr.mxu0 %v656
    %944 = vmatpush1.msra.mxu0 %v655
    %945 = vmatprep.subr.mxu0 %v652
    %946 = vmatpush1.msra.mxu0 %v651
    %947 = vmatprep.subr.mxu0 %v648
    %948 = vmatpush1.msra.mxu0 %v647
    %949 = vmatprep.subr.mxu0 0.0
    %950 = vmatpush2.msra.mxu0 0.0
    %951 = vmatprep.subr.mxu0 0.0
    %952 = vmatpush2.msra.mxu0 0.0
    %953 = vmatprep.subr.mxu0 0.0
    %954 = vmatpush2.msra.mxu0 0.0
    %955 = vmatprep.subr.mxu0 0.0
    %956 = vmatpush2.msra.mxu0 0.0
    %957 = vmatprep.subr.mxu0 0.0
    %958 = vmatpush2.msra.mxu0 0.0
    %959 = vmatprep.subr.mxu0 0.0
    %960 = vmatpush2.msra.mxu0 0.0
    %961 = vmatprep.subr.mxu0 0.0
    %962 = vmatpush2.msra.mxu0 0.0
    %963 = vmatprep.subr.mxu0 0.0
    %964 = vmatpush2.msra.mxu0 0.0
    %965 = vmatprep.subr.mxu0 0.0
    %966 = vmatpush2.msra.mxu0 0.0
    %967 = vmatprep.subr.mxu0 0.0
    %968 = vmatpush2.msra.mxu0 0.0
    %969 = vmatprep.subr.mxu0 0.0
    %970 = vmatpush2.msra.mxu0 0.0
    %971 = vmatprep.subr.mxu0 0.0
    %972 = vmatpush2.msra.mxu0 0.0
    %973 = vmatprep.subr.mxu0 0.0
    %974 = vmatpush2.msra.mxu0 0.0
    %975 = vmatprep.subr.mxu0 0.0
    %976 = vmatpush2.msra.mxu0 0.0
    %977 = vmatprep.subr.mxu0 0.0
    %978 = vmatpush2.msra.mxu0 0.0
    %979 = vmatprep.subr.mxu0 0.0
    %980 = vmatpush2.msra.mxu0 0.0
    %981 = vmatprep.mubr.f32.mxu0 0.0
    %982 = vmatmul.mubr.f32.gmra.mxu0 %v646
    %v983 = vpop.f32.mrf.mxu0
    %v984 = vadd.f32 %v842, %v983
    %v985 = vpop.f32.mrf.mxu0
    %v986 = vadd.f32 %v844, %v985
    %987 = vdwg.mxu0
    %988 = vmatprep.subr.mxu0 %v710
    %989 = vmatpush1.msra.mxu0 %v709
    %990 = vmatprep.subr.mxu0 %v706
    %991 = vmatpush1.msra.mxu0 %v705
    %992 = vmatprep.subr.mxu0 %v702
    %993 = vmatpush1.msra.mxu0 %v701
    %994 = vmatprep.subr.mxu0 %v698
    %995 = vmatpush1.msra.mxu0 %v697
    %996 = vmatprep.subr.mxu0 %v694
    %997 = vmatpush1.msra.mxu0 %v693
    %998 = vmatprep.subr.mxu0 %v690
    %999 = vmatpush1.msra.mxu0 %v689
    %1000 = vmatprep.subr.mxu0 %v686
    %1001 = vmatpush1.msra.mxu0 %v685
    %1002 = vmatprep.subr.mxu0 %v682
    %1003 = vmatpush1.msra.mxu0 %v681
    %1004 = vmatprep.subr.mxu0 %v678
    %1005 = vmatpush1.msra.mxu0 %v677
    %1006 = vmatprep.subr.mxu0 %v674
    %1007 = vmatpush1.msra.mxu0 %v673
    %1008 = vmatprep.subr.mxu0 %v670
    %1009 = vmatpush1.msra.mxu0 %v669
    %1010 = vmatprep.subr.mxu0 %v666
    %1011 = vmatpush1.msra.mxu0 %v665
    %1012 = vmatprep.subr.mxu0 %v662
    %1013 = vmatpush1.msra.mxu0 %v661
    %1014 = vmatprep.subr.mxu0 %v658
    %1015 = vmatpush1.msra.mxu0 %v657
    %1016 = vmatprep.subr.mxu0 %v654
    %1017 = vmatpush1.msra.mxu0 %v653
    %1018 = vmatprep.subr.mxu0 %v650
    %1019 = vmatpush1.msra.mxu0 %v649
    %1020 = vmatprep.subr.mxu0 0.0
    %1021 = vmatpush2.msra.mxu0 0.0
    %1022 = vmatprep.subr.mxu0 0.0
    %1023 = vmatpush2.msra.mxu0 0.0
    %1024 = vmatprep.subr.mxu0 0.0
    %1025 = vmatpush2.msra.mxu0 0.0
    %1026 = vmatprep.subr.mxu0 0.0
    %1027 = vmatpush2.msra.mxu0 0.0
    %1028 = vmatprep.subr.mxu0 0.0
    %1029 = vmatpush2.msra.mxu0 0.0
    %1030 = vmatprep.subr.mxu0 0.0
    %1031 = vmatpush2.msra.mxu0 0.0
    %1032 = vmatprep.subr.mxu0 0.0
    %1033 = vmatpush2.msra.mxu0 0.0
    %1034 = vmatprep.subr.mxu0 0.0
    %1035 = vmatpush2.msra.mxu0 0.0
    %1036 = vmatprep.subr.mxu0 0.0
    %1037 = vmatpush2.msra.mxu0 0.0
    %1038 = vmatprep.subr.mxu0 0.0
    %1039 = vmatpush2.msra.mxu0 0.0
    %1040 = vmatprep.subr.mxu0 0.0
    %1041 = vmatpush2.msra.mxu0 0.0
    %1042 = vmatprep.subr.mxu0 0.0
    %1043 = vmatpush2.msra.mxu0 0.0
    %1044 = vmatprep.subr.mxu0 0.0
    %1045 = vmatpush2.msra.mxu0 0.0
    %1046 = vmatprep.subr.mxu0 0.0
    %1047 = vmatpush2.msra.mxu0 0.0
    %1048 = vmatprep.subr.mxu0 0.0
    %1049 = vmatpush2.msra.mxu0 0.0
    %1050 = vmatprep.subr.mxu0 0.0
    %1051 = vmatpush2.msra.mxu0 0.0
    %1052 = vmatprep.mubr.f32.mxu0 0.0
    %1053 = vmatmul.mubr.f32.gmra.mxu0 %v646
    %v1054 = vpop.f32.mrf.mxu0
    %v1055 = vadd.f32 %v913, %v1054
    %v1056 = vpop.f32.mrf.mxu0
    %v1057 = vadd.f32 %v915, %v1056
    %1058 = vdwg.mxu0
    %v1059 = vadd.f32 %v984, %v374
    %v1060 = vadd.f32 %v986, %v378
    %v1061 = vadd.f32 %v1055, %v382
    %v1062 = vadd.f32 %v1057, %v386
    %v1063 = vxor.u32 %v1059, 2147483648
    %v1064 = vxor.u32 %v1060, 2147483648
    %v1065 = vxor.u32 %v1061, 2147483648
    %v1066 = vmul.f32 %v1063, 1.442695
    %v1067 = vpow.pop %v1066
    %v1068 = vmul.f32 %v1064, 1.442695
    %v1069 = vpow.pop %v1068
    %v1070 = vmul.f32 %v1065, 1.442695
    %v1071 = vpow.pop %v1070
    %v1072 = vadd.f32 %v1067, 1.0
    %v1073 = vadd.f32 %v1069, 1.0
    %v1074 = vadd.f32 %v1071, 1.0
    %v1075 = vrcp.pop %v1072
    %v1076 = vmul.f32 1.0, %v1075
    %v1077 = vrcp.pop %v1073
    %v1078 = vmul.f32 1.0, %v1077
    %v1079 = vrcp.pop %v1074
    %v1080 = vmul.f32 1.0, %v1079
    %v1081 = vtanh.pop %v1062
    %v1082 = vmul.f32 %v1078, 0.0
    %v1083 = vmul.f32 %v1076, %v1081
    %v1084 = vadd.f32 %v1082, %v1083
    %v1085 = vtanh.pop %v1084
    %v1086 = vmul.f32 %v1080, %v1085
    %v1087 = vld [vmem:[#allocation10] sm:$0xff]
    %v1088 = vld [vmem:[#allocation10 + $0x8] sm:$0xff]
    %v1089 = vld [vmem:[#allocation10 + $0x10] sm:$0xff]
    %v1090 = vld [vmem:[#allocation10 + $0x18] sm:$0xff]
    %v1091 = vld [vmem:[#allocation10 + $0x20] sm:$0xff]
    %v1092 = vld [vmem:[#allocation10 + $0x28] sm:$0xff]
    %v1093 = vld [vmem:[#allocation10 + $0x30] sm:$0xff]
    %v1094 = vld [vmem:[#allocation10 + $0x38] sm:$0xff]
    %v1095 = vld [vmem:[#allocation10 + $0x40] sm:$0xff]
    %v1096 = vld [vmem:[#allocation10 + $0x48] sm:$0xff]
    %v1097 = vld [vmem:[#allocation10 + $0x50] sm:$0xff]
    %v1098 = vld [vmem:[#allocation10 + $0x58] sm:$0xff]
    %v1099 = vld [vmem:[#allocation10 + $0x60] sm:$0xff]
    %v1100 = vld [vmem:[#allocation10 + $0x68] sm:$0xff]
    %v1101 = vld [vmem:[#allocation10 + $0x70] sm:$0xff]
    %v1102 = vld [vmem:[#allocation10 + $0x78] sm:$0xff]
    %v1103 = vld [vmem:[#allocation10 + $0x80] sm:$0xff]
    %v1104 = vld [vmem:[#allocation10 + $0x88] sm:$0xff]
    %v1105 = vld [vmem:[#allocation10 + $0x90] sm:$0xff]
    %v1106 = vld [vmem:[#allocation10 + $0x98] sm:$0xff]
    %v1107 = vld [vmem:[#allocation10 + $0xa0] sm:$0xff]
    %v1108 = vld [vmem:[#allocation10 + $0xa8] sm:$0xff]
    %v1109 = vld [vmem:[#allocation10 + $0xb0] sm:$0xff]
    %v1110 = vld [vmem:[#allocation10 + $0xb8] sm:$0xff]
    %v1111 = vld [vmem:[#allocation10 + $0xc0] sm:$0xff]
    %v1112 = vld [vmem:[#allocation10 + $0xc8] sm:$0xff]
    %v1113 = vld [vmem:[#allocation10 + $0xd0] sm:$0xff]
    %v1114 = vld [vmem:[#allocation10 + $0xd8] sm:$0xff]
    %v1115 = vld [vmem:[#allocation10 + $0xe0] sm:$0xff]
    %v1116 = vld [vmem:[#allocation10 + $0xe8] sm:$0xff]
    %v1117 = vld [vmem:[#allocation10 + $0xf0] sm:$0xff]
    %v1118 = vld [vmem:[#allocation10 + $0xf8] sm:$0xff]
    %v1119 = vld [vmem:[#allocation10 + $0x100] sm:$0xff]
    %v1120 = vld [vmem:[#allocation10 + $0x108] sm:$0xff]
    %v1121 = vld [vmem:[#allocation10 + $0x110] sm:$0xff]
    %v1122 = vld [vmem:[#allocation10 + $0x118] sm:$0xff]
    %v1123 = vld [vmem:[#allocation10 + $0x120] sm:$0xff]
    %v1124 = vld [vmem:[#allocation10 + $0x128] sm:$0xff]
    %v1125 = vld [vmem:[#allocation10 + $0x130] sm:$0xff]
    %v1126 = vld [vmem:[#allocation10 + $0x138] sm:$0xff]
    %v1127 = vld [vmem:[#allocation10 + $0x140] sm:$0xff]
    %v1128 = vld [vmem:[#allocation10 + $0x148] sm:$0xff]
    %v1129 = vld [vmem:[#allocation10 + $0x150] sm:$0xff]
    %v1130 = vld [vmem:[#allocation10 + $0x158] sm:$0xff]
    %v1131 = vld [vmem:[#allocation10 + $0x160] sm:$0xff]
    %v1132 = vld [vmem:[#allocation10 + $0x168] sm:$0xff]
    %v1133 = vld [vmem:[#allocation10 + $0x170] sm:$0xff]
    %v1134 = vld [vmem:[#allocation10 + $0x178] sm:$0xff]
    %v1135 = vld [vmem:[#allocation10 + $0x180] sm:$0xff]
    %v1136 = vld [vmem:[#allocation10 + $0x188] sm:$0xff]
    %v1137 = vld [vmem:[#allocation10 + $0x190] sm:$0xff]
    %v1138 = vld [vmem:[#allocation10 + $0x198] sm:$0xff]
    %v1139 = vld [vmem:[#allocation10 + $0x1a0] sm:$0xff]
    %v1140 = vld [vmem:[#allocation10 + $0x1a8] sm:$0xff]
    %v1141 = vld [vmem:[#allocation10 + $0x1b0] sm:$0xff]
    %v1142 = vld [vmem:[#allocation10 + $0x1b8] sm:$0xff]
    %v1143 = vld [vmem:[#allocation10 + $0x1c0] sm:$0xff]
    %v1144 = vld [vmem:[#allocation10 + $0x1c8] sm:$0xff]
    %v1145 = vld [vmem:[#allocation10 + $0x1d0] sm:$0xff]
    %v1146 = vld [vmem:[#allocation10 + $0x1d8] sm:$0xff]
    %v1147 = vld [vmem:[#allocation10 + $0x1e0] sm:$0xff]
    %v1148 = vld [vmem:[#allocation10 + $0x1e8] sm:$0xff]
    %v1149 = vld [vmem:[#allocation10 + $0x1f0] sm:$0xff]
    %v1150 = vld [vmem:[#allocation10 + $0x1f8] sm:$0xff]
    %v1151 = vld [vmem:[#allocation11] sm:$0xff]
    %v1152 = vld [vmem:[#allocation11 + $0x8] sm:$0xff]
    %v1153 = vld [vmem:[#allocation11 + $0x10] sm:$0xff]
    %v1154 = vld [vmem:[#allocation11 + $0x18] sm:$0xff]
    %v1155 = vld [vmem:[#allocation11 + $0x20] sm:$0xff]
    %v1156 = vld [vmem:[#allocation11 + $0x28] sm:$0xff]
    %v1157 = vld [vmem:[#allocation11 + $0x30] sm:$0xff]
    %v1158 = vld [vmem:[#allocation11 + $0x38] sm:$0xff]
    %v1159 = vld [vmem:[#allocation11 + $0x40] sm:$0xff]
    %v1160 = vld [vmem:[#allocation11 + $0x48] sm:$0xff]
    %v1161 = vld [vmem:[#allocation11 + $0x50] sm:$0xff]
    %v1162 = vld [vmem:[#allocation11 + $0x58] sm:$0xff]
    %v1163 = vld [vmem:[#allocation11 + $0x60] sm:$0xff]
    %v1164 = vld [vmem:[#allocation11 + $0x68] sm:$0xff]
    %v1165 = vld [vmem:[#allocation11 + $0x70] sm:$0xff]
    %v1166 = vld [vmem:[#allocation11 + $0x78] sm:$0xff]
    %v1167 = vld [vmem:[#allocation11 + $0x80] sm:$0xff]
    %v1168 = vld [vmem:[#allocation11 + $0x88] sm:$0xff]
    %v1169 = vld [vmem:[#allocation11 + $0x90] sm:$0xff]
    %v1170 = vld [vmem:[#allocation11 + $0x98] sm:$0xff]
    %v1171 = vld [vmem:[#allocation11 + $0xa0] sm:$0xff]
    %v1172 = vld [vmem:[#allocation11 + $0xa8] sm:$0xff]
    %v1173 = vld [vmem:[#allocation11 + $0xb0] sm:$0xff]
    %v1174 = vld [vmem:[#allocation11 + $0xb8] sm:$0xff]
    %v1175 = vld [vmem:[#allocation11 + $0xc0] sm:$0xff]
    %v1176 = vld [vmem:[#allocation11 + $0xc8] sm:$0xff]
    %v1177 = vld [vmem:[#allocation11 + $0xd0] sm:$0xff]
    %v1178 = vld [vmem:[#allocation11 + $0xd8] sm:$0xff]
    %v1179 = vld [vmem:[#allocation11 + $0xe0] sm:$0xff]
    %v1180 = vld [vmem:[#allocation11 + $0xe8] sm:$0xff]
    %v1181 = vld [vmem:[#allocation11 + $0xf0] sm:$0xff]
    %v1182 = vld [vmem:[#allocation11 + $0xf8] sm:$0xff]
    %v1183 = vld [vmem:[#allocation11 + $0x100] sm:$0xff]
    %v1184 = vld [vmem:[#allocation11 + $0x108] sm:$0xff]
    %v1185 = vld [vmem:[#allocation11 + $0x110] sm:$0xff]
    %v1186 = vld [vmem:[#allocation11 + $0x118] sm:$0xff]
    %v1187 = vld [vmem:[#allocation11 + $0x120] sm:$0xff]
    %v1188 = vld [vmem:[#allocation11 + $0x128] sm:$0xff]
    %v1189 = vld [vmem:[#allocation11 + $0x130] sm:$0xff]
    %v1190 = vld [vmem:[#allocation11 + $0x138] sm:$0xff]
    %v1191 = vld [vmem:[#allocation11 + $0x140] sm:$0xff]
    %v1192 = vld [vmem:[#allocation11 + $0x148] sm:$0xff]
    %v1193 = vld [vmem:[#allocation11 + $0x150] sm:$0xff]
    %v1194 = vld [vmem:[#allocation11 + $0x158] sm:$0xff]
    %v1195 = vld [vmem:[#allocation11 + $0x160] sm:$0xff]
    %v1196 = vld [vmem:[#allocation11 + $0x168] sm:$0xff]
    %v1197 = vld [vmem:[#allocation11 + $0x170] sm:$0xff]
    %v1198 = vld [vmem:[#allocation11 + $0x178] sm:$0xff]
    %v1199 = vld [vmem:[#allocation11 + $0x180] sm:$0xff]
    %v1200 = vld [vmem:[#allocation11 + $0x188] sm:$0xff]
    %v1201 = vld [vmem:[#allocation11 + $0x190] sm:$0xff]
    %v1202 = vld [vmem:[#allocation11 + $0x198] sm:$0xff]
    %v1203 = vld [vmem:[#allocation11 + $0x1a0] sm:$0xff]
    %v1204 = vld [vmem:[#allocation11 + $0x1a8] sm:$0xff]
    %v1205 = vld [vmem:[#allocation11 + $0x1b0] sm:$0xff]
    %v1206 = vld [vmem:[#allocation11 + $0x1b8] sm:$0xff]
    %v1207 = vld [vmem:[#allocation11 + $0x1c0] sm:$0xff]
    %v1208 = vld [vmem:[#allocation11 + $0x1c8] sm:$0xff]
    %v1209 = vld [vmem:[#allocation11 + $0x1d0] sm:$0xff]
    %v1210 = vld [vmem:[#allocation11 + $0x1d8] sm:$0xff]
    %v1211 = vld [vmem:[#allocation11 + $0x1e0] sm:$0xff]
    %v1212 = vld [vmem:[#allocation11 + $0x1e8] sm:$0xff]
    %v1213 = vld [vmem:[#allocation11 + $0x1f0] sm:$0xff]
    %v1214 = vld [vmem:[#allocation11 + $0x1f8] sm:$0xff]
    %1215 = vmatprep.subr.mxu0 %v1212
    %1216 = vmatpush1.msra.mxu0 %v1211
    %1217 = vmatprep.subr.mxu0 %v1208
    %1218 = vmatpush1.msra.mxu0 %v1207
    %1219 = vmatprep.subr.mxu0 %v1204
    %1220 = vmatpush1.msra.mxu0 %v1203
    %1221 = vmatprep.subr.mxu0 %v1200
    %1222 = vmatpush1.msra.mxu0 %v1199
    %1223 = vmatprep.subr.mxu0 %v1196
    %1224 = vmatpush1.msra.mxu0 %v1195
    %1225 = vmatprep.subr.mxu0 %v1192
    %1226 = vmatpush1.msra.mxu0 %v1191
    %1227 = vmatprep.subr.mxu0 %v1188
    %1228 = vmatpush1.msra.mxu0 %v1187
    %1229 = vmatprep.subr.mxu0 %v1184
    %1230 = vmatpush1.msra.mxu0 %v1183
    %1231 = vmatprep.subr.mxu0 %v1180
    %1232 = vmatpush1.msra.mxu0 %v1179
    %1233 = vmatprep.subr.mxu0 %v1176
    %1234 = vmatpush1.msra.mxu0 %v1175
    %1235 = vmatprep.subr.mxu0 %v1172
    %1236 = vmatpush1.msra.mxu0 %v1171
    %1237 = vmatprep.subr.mxu0 %v1168
    %1238 = vmatpush1.msra.mxu0 %v1167
    %1239 = vmatprep.subr.mxu0 %v1164
    %1240 = vmatpush1.msra.mxu0 %v1163
    %1241 = vmatprep.subr.mxu0 %v1160
    %1242 = vmatpush1.msra.mxu0 %v1159
    %1243 = vmatprep.subr.mxu0 %v1156
    %1244 = vmatpush1.msra.mxu0 %v1155
    %1245 = vmatprep.subr.mxu0 %v1152
    %1246 = vmatpush1.msra.mxu0 %v1151
    %1247 = vmatprep.subr.mxu0 0.0
    %1248 = vmatpush2.msra.mxu0 0.0
    %1249 = vmatprep.subr.mxu0 0.0
    %1250 = vmatpush2.msra.mxu0 0.0
    %1251 = vmatprep.subr.mxu0 0.0
    %1252 = vmatpush2.msra.mxu0 0.0
    %1253 = vmatprep.subr.mxu0 0.0
    %1254 = vmatpush2.msra.mxu0 0.0
    %1255 = vmatprep.subr.mxu0 0.0
    %1256 = vmatpush2.msra.mxu0 0.0
    %1257 = vmatprep.subr.mxu0 0.0
    %1258 = vmatpush2.msra.mxu0 0.0
    %1259 = vmatprep.subr.mxu0 0.0
    %1260 = vmatpush2.msra.mxu0 0.0
    %1261 = vmatprep.subr.mxu0 0.0
    %1262 = vmatpush2.msra.mxu0 0.0
    %1263 = vmatprep.subr.mxu0 0.0
    %1264 = vmatpush2.msra.mxu0 0.0
    %1265 = vmatprep.subr.mxu0 0.0
    %1266 = vmatpush2.msra.mxu0 0.0
    %1267 = vmatprep.subr.mxu0 0.0
    %1268 = vmatpush2.msra.mxu0 0.0
    %1269 = vmatprep.subr.mxu0 0.0
    %1270 = vmatpush2.msra.mxu0 0.0
    %1271 = vmatprep.subr.mxu0 0.0
    %1272 = vmatpush2.msra.mxu0 0.0
    %1273 = vmatprep.subr.mxu0 0.0
    %1274 = vmatpush2.msra.mxu0 0.0
    %1275 = vmatprep.subr.mxu0 0.0
    %1276 = vmatpush2.msra.mxu0 0.0
    %1277 = vmatprep.subr.mxu0 0.0
    %1278 = vmatpush2.msra.mxu0 0.0
    %1279 = vmatprep.mubr.f32.mxu0 0.0
    %1280 = vmatmul.mubr.f32.gmra.mxu0 0.0
    %v1281 = vpop.f32.mrf.mxu0
    %v1282 = vadd.f32 0.0, %v1281
    %v1283 = vpop.f32.mrf.mxu0
    %v1284 = vadd.f32 0.0, %v1283
    %1285 = vdwg.mxu0
    %1286 = vmatprep.subr.mxu0 %v1214
    %1287 = vmatpush1.msra.mxu0 %v1213
    %1288 = vmatprep.subr.mxu0 %v1210
    %1289 = vmatpush1.msra.mxu0 %v1209
    %1290 = vmatprep.subr.mxu0 %v1206
    %1291 = vmatpush1.msra.mxu0 %v1205
    %1292 = vmatprep.subr.mxu0 %v1202
    %1293 = vmatpush1.msra.mxu0 %v1201
    %1294 = vmatprep.subr.mxu0 %v1198
    %1295 = vmatpush1.msra.mxu0 %v1197
    %1296 = vmatprep.subr.mxu0 %v1194
    %1297 = vmatpush1.msra.mxu0 %v1193
    %1298 = vmatprep.subr.mxu0 %v1190
    %1299 = vmatpush1.msra.mxu0 %v1189
    %1300 = vmatprep.subr.mxu0 %v1186
    %1301 = vmatpush1.msra.mxu0 %v1185
    %1302 = vmatprep.subr.mxu0 %v1182
    %1303 = vmatpush1.msra.mxu0 %v1181
    %1304 = vmatprep.subr.mxu0 %v1178
    %1305 = vmatpush1.msra.mxu0 %v1177
    %1306 = vmatprep.subr.mxu0 %v1174
    %1307 = vmatpush1.msra.mxu0 %v1173
    %1308 = vmatprep.subr.mxu0 %v1170
    %1309 = vmatpush1.msra.mxu0 %v1169
    %1310 = vmatprep.subr.mxu0 %v1166
    %1311 = vmatpush1.msra.mxu0 %v1165
    %1312 = vmatprep.subr.mxu0 %v1162
    %1313 = vmatpush1.msra.mxu0 %v1161
    %1314 = vmatprep.subr.mxu0 %v1158
    %1315 = vmatpush1.msra.mxu0 %v1157
    %1316 = vmatprep.subr.mxu0 %v1154
    %1317 = vmatpush1.msra.mxu0 %v1153
    %1318 = vmatprep.subr.mxu0 0.0
    %1319 = vmatpush2.msra.mxu0 0.0
    %1320 = vmatprep.subr.mxu0 0.0
    %1321 = vmatpush2.msra.mxu0 0.0
    %1322 = vmatprep.subr.mxu0 0.0
    %1323 = vmatpush2.msra.mxu0 0.0
    %1324 = vmatprep.subr.mxu0 0.0
    %1325 = vmatpush2.msra.mxu0 0.0
    %1326 = vmatprep.subr.mxu0 0.0
    %1327 = vmatpush2.msra.mxu0 0.0
    %1328 = vmatprep.subr.mxu0 0.0
    %1329 = vmatpush2.msra.mxu0 0.0
    %1330 = vmatprep.subr.mxu0 0.0
    %1331 = vmatpush2.msra.mxu0 0.0
    %1332 = vmatprep.subr.mxu0 0.0
    %1333 = vmatpush2.msra.mxu0 0.0
    %1334 = vmatprep.subr.mxu0 0.0
    %1335 = vmatpush2.msra.mxu0 0.0
    %1336 = vmatprep.subr.mxu0 0.0
    %1337 = vmatpush2.msra.mxu0 0.0
    %1338 = vmatprep.subr.mxu0 0.0
    %1339 = vmatpush2.msra.mxu0 0.0
    %1340 = vmatprep.subr.mxu0 0.0
    %1341 = vmatpush2.msra.mxu0 0.0
    %1342 = vmatprep.subr.mxu0 0.0
    %1343 = vmatpush2.msra.mxu0 0.0
    %1344 = vmatprep.subr.mxu0 0.0
    %1345 = vmatpush2.msra.mxu0 0.0
    %1346 = vmatprep.subr.mxu0 0.0
    %1347 = vmatpush2.msra.mxu0 0.0
    %1348 = vmatprep.subr.mxu0 0.0
    %1349 = vmatpush2.msra.mxu0 0.0
    %1350 = vmatprep.mubr.f32.mxu0 0.0
    %1351 = vmatmul.mubr.f32.gmra.mxu0 0.0
    %v1352 = vpop.f32.mrf.mxu0
    %v1353 = vadd.f32 0.0, %v1352
    %v1354 = vpop.f32.mrf.mxu0
    %v1355 = vadd.f32 0.0, %v1354
    %1356 = vdwg.mxu0
    %1357 = vmatprep.subr.mxu0 %v1148
    %1358 = vmatpush1.msra.mxu0 %v1147
    %1359 = vmatprep.subr.mxu0 %v1144
    %1360 = vmatpush1.msra.mxu0 %v1143
    %1361 = vmatprep.subr.mxu0 %v1140
    %1362 = vmatpush1.msra.mxu0 %v1139
    %1363 = vmatprep.subr.mxu0 %v1136
    %1364 = vmatpush1.msra.mxu0 %v1135
    %1365 = vmatprep.subr.mxu0 %v1132
    %1366 = vmatpush1.msra.mxu0 %v1131
    %1367 = vmatprep.subr.mxu0 %v1128
    %1368 = vmatpush1.msra.mxu0 %v1127
    %1369 = vmatprep.subr.mxu0 %v1124
    %1370 = vmatpush1.msra.mxu0 %v1123
    %1371 = vmatprep.subr.mxu0 %v1120
    %1372 = vmatpush1.msra.mxu0 %v1119
    %1373 = vmatprep.subr.mxu0 %v1116
    %1374 = vmatpush1.msra.mxu0 %v1115
    %1375 = vmatprep.subr.mxu0 %v1112
    %1376 = vmatpush1.msra.mxu0 %v1111
    %1377 = vmatprep.subr.mxu0 %v1108
    %1378 = vmatpush1.msra.mxu0 %v1107
    %1379 = vmatprep.subr.mxu0 %v1104
    %1380 = vmatpush1.msra.mxu0 %v1103
    %1381 = vmatprep.subr.mxu0 %v1100
    %1382 = vmatpush1.msra.mxu0 %v1099
    %1383 = vmatprep.subr.mxu0 %v1096
    %1384 = vmatpush1.msra.mxu0 %v1095
    %1385 = vmatprep.subr.mxu0 %v1092
    %1386 = vmatpush1.msra.mxu0 %v1091
    %1387 = vmatprep.subr.mxu0 %v1088
    %1388 = vmatpush1.msra.mxu0 %v1087
    %1389 = vmatprep.subr.mxu0 0.0
    %1390 = vmatpush2.msra.mxu0 0.0
    %1391 = vmatprep.subr.mxu0 0.0
    %1392 = vmatpush2.msra.mxu0 0.0
    %1393 = vmatprep.subr.mxu0 0.0
    %1394 = vmatpush2.msra.mxu0 0.0
    %1395 = vmatprep.subr.mxu0 0.0
    %1396 = vmatpush2.msra.mxu0 0.0
    %1397 = vmatprep.subr.mxu0 0.0
    %1398 = vmatpush2.msra.mxu0 0.0
    %1399 = vmatprep.subr.mxu0 0.0
    %1400 = vmatpush2.msra.mxu0 0.0
    %1401 = vmatprep.subr.mxu0 0.0
    %1402 = vmatpush2.msra.mxu0 0.0
    %1403 = vmatprep.subr.mxu0 0.0
    %1404 = vmatpush2.msra.mxu0 0.0
    %1405 = vmatprep.subr.mxu0 0.0
    %1406 = vmatpush2.msra.mxu0 0.0
    %1407 = vmatprep.subr.mxu0 0.0
    %1408 = vmatpush2.msra.mxu0 0.0
    %1409 = vmatprep.subr.mxu0 0.0
    %1410 = vmatpush2.msra.mxu0 0.0
    %1411 = vmatprep.subr.mxu0 0.0
    %1412 = vmatpush2.msra.mxu0 0.0
    %1413 = vmatprep.subr.mxu0 0.0
    %1414 = vmatpush2.msra.mxu0 0.0
    %1415 = vmatprep.subr.mxu0 0.0
    %1416 = vmatpush2.msra.mxu0 0.0
    %1417 = vmatprep.subr.mxu0 0.0
    %1418 = vmatpush2.msra.mxu0 0.0
    %1419 = vmatprep.subr.mxu0 0.0
    %1420 = vmatpush2.msra.mxu0 0.0
    %1421 = vmatprep.mubr.f32.mxu0 0.0
    %1422 = vmatmul.mubr.f32.gmra.mxu0 %v1086
    %v1423 = vpop.f32.mrf.mxu0
    %v1424 = vadd.f32 %v1282, %v1423
    %v1425 = vpop.f32.mrf.mxu0
    %v1426 = vadd.f32 %v1284, %v1425
    %1427 = vdwg.mxu0
    %1428 = vmatprep.subr.mxu0 %v1150
    %1429 = vmatpush1.msra.mxu0 %v1149
    %1430 = vmatprep.subr.mxu0 %v1146
    %1431 = vmatpush1.msra.mxu0 %v1145
    %1432 = vmatprep.subr.mxu0 %v1142
    %1433 = vmatpush1.msra.mxu0 %v1141
    %1434 = vmatprep.subr.mxu0 %v1138
    %1435 = vmatpush1.msra.mxu0 %v1137
    %1436 = vmatprep.subr.mxu0 %v1134
    %1437 = vmatpush1.msra.mxu0 %v1133
    %1438 = vmatprep.subr.mxu0 %v1130
    %1439 = vmatpush1.msra.mxu0 %v1129
    %1440 = vmatprep.subr.mxu0 %v1126
    %1441 = vmatpush1.msra.mxu0 %v1125
    %1442 = vmatprep.subr.mxu0 %v1122
    %1443 = vmatpush1.msra.mxu0 %v1121
    %1444 = vmatprep.subr.mxu0 %v1118
    %1445 = vmatpush1.msra.mxu0 %v1117
    %1446 = vmatprep.subr.mxu0 %v1114
    %1447 = vmatpush1.msra.mxu0 %v1113
    %1448 = vmatprep.subr.mxu0 %v1110
    %1449 = vmatpush1.msra.mxu0 %v1109
    %1450 = vmatprep.subr.mxu0 %v1106
    %1451 = vmatpush1.msra.mxu0 %v1105
    %1452 = vmatprep.subr.mxu0 %v1102
    %1453 = vmatpush1.msra.mxu0 %v1101
    %1454 = vmatprep.subr.mxu0 %v1098
    %1455 = vmatpush1.msra.mxu0 %v1097
    %1456 = vmatprep.subr.mxu0 %v1094
    %1457 = vmatpush1.msra.mxu0 %v1093
    %1458 = vmatprep.subr.mxu0 %v1090
    %1459 = vmatpush1.msra.mxu0 %v1089
    %1460 = vmatprep.subr.mxu0 0.0
    %1461 = vmatpush2.msra.mxu0 0.0
    %1462 = vmatprep.subr.mxu0 0.0
    %1463 = vmatpush2.msra.mxu0 0.0
    %1464 = vmatprep.subr.mxu0 0.0
    %1465 = vmatpush2.msra.mxu0 0.0
    %1466 = vmatprep.subr.mxu0 0.0
    %1467 = vmatpush2.msra.mxu0 0.0
    %1468 = vmatprep.subr.mxu0 0.0
    %1469 = vmatpush2.msra.mxu0 0.0
    %1470 = vmatprep.subr.mxu0 0.0
    %1471 = vmatpush2.msra.mxu0 0.0
    %1472 = vmatprep.subr.mxu0 0.0
    %1473 = vmatpush2.msra.mxu0 0.0
    %1474 = vmatprep.subr.mxu0 0.0
    %1475 = vmatpush2.msra.mxu0 0.0
    %1476 = vmatprep.subr.mxu0 0.0
    %1477 = vmatpush2.msra.mxu0 0.0
    %1478 = vmatprep.subr.mxu0 0.0
    %1479 = vmatpush2.msra.mxu0 0.0
    %1480 = vmatprep.subr.mxu0 0.0
    %1481 = vmatpush2.msra.mxu0 0.0
    %1482 = vmatprep.subr.mxu0 0.0
    %1483 = vmatpush2.msra.mxu0 0.0
    %1484 = vmatprep.subr.mxu0 0.0
    %1485 = vmatpush2.msra.mxu0 0.0
    %1486 = vmatprep.subr.mxu0 0.0
    %1487 = vmatpush2.msra.mxu0 0.0
    %1488 = vmatprep.subr.mxu0 0.0
    %1489 = vmatpush2.msra.mxu0 0.0
    %1490 = vmatprep.subr.mxu0 0.0
    %1491 = vmatpush2.msra.mxu0 0.0
    %1492 = vmatprep.mubr.f32.mxu0 0.0
    %1493 = vmatmul.mubr.f32.gmra.mxu0 %v1086
    %v1494 = vpop.f32.mrf.mxu0
    %v1495 = vadd.f32 %v1353, %v1494
    %v1496 = vpop.f32.mrf.mxu0
    %v1497 = vadd.f32 %v1355, %v1496
    %1498 = vdwg.mxu0
    %v1499 = vadd.f32 %v1424, %v396
    %v1500 = vadd.f32 %v1426, %v400
    %v1501 = vadd.f32 %v1495, %v404
    %v1502 = vadd.f32 %v1497, %v408
    %v1503 = vxor.u32 %v1499, 2147483648
    %v1504 = vxor.u32 %v1500, 2147483648
    %v1505 = vxor.u32 %v1501, 2147483648
    %v1506 = vmul.f32 %v1503, 1.442695
    %v1507 = vpow.pop %v1506
    %v1508 = vmul.f32 %v1504, 1.442695
    %v1509 = vpow.pop %v1508
    %v1510 = vmul.f32 %v1505, 1.442695
    %v1511 = vpow.pop %v1510
    %v1512 = vadd.f32 %v1507, 1.0
    %v1513 = vadd.f32 %v1509, 1.0
    %v1514 = vadd.f32 %v1511, 1.0
    %v1515 = vrcp.pop %v1512
    %v1516 = vmul.f32 1.0, %v1515
    %v1517 = vrcp.pop %v1513
    %v1518 = vmul.f32 1.0, %v1517
    %v1519 = vrcp.pop %v1514
    %v1520 = vmul.f32 1.0, %v1519
    %v1521 = vtanh.pop %v1502
    %v1522 = vmul.f32 %v1518, 0.0
    %v1523 = vmul.f32 %v1516, %v1521
    %v1524 = vadd.f32 %v1522, %v1523
    %v1525 = vtanh.pop %v1524
    %v1526 = vmul.f32 %v1520, %v1525
    %1527 = vmatprep.subr.mxu0 %v474
    %1528 = vmatpush1.msra.mxu0 %v473
    %1529 = vmatprep.subr.mxu0 %v470
    %1530 = vmatpush1.msra.mxu0 %v469
    %1531 = vmatprep.subr.mxu0 %v466
    %1532 = vmatpush1.msra.mxu0 %v465
    %1533 = vmatprep.subr.mxu0 %v462
    %1534 = vmatpush1.msra.mxu0 %v461
    %1535 = vmatprep.subr.mxu0 %v458
    %1536 = vmatpush1.msra.mxu0 %v457
    %1537 = vmatprep.subr.mxu0 %v454
    %1538 = vmatpush1.msra.mxu0 %v453
    %1539 = vmatprep.subr.mxu0 %v450
    %1540 = vmatpush1.msra.mxu0 %v449
    %1541 = vmatprep.subr.mxu0 %v446
    %1542 = vmatpush1.msra.mxu0 %v445
    %1543 = vmatprep.subr.mxu0 %v442
    %1544 = vmatpush1.msra.mxu0 %v441
    %1545 = vmatprep.subr.mxu0 %v438
    %1546 = vmatpush1.msra.mxu0 %v437
    %1547 = vmatprep.subr.mxu0 %v434
    %1548 = vmatpush1.msra.mxu0 %v433
    %1549 = vmatprep.subr.mxu0 %v430
    %1550 = vmatpush1.msra.mxu0 %v429
    %1551 = vmatprep.subr.mxu0 %v426
    %1552 = vmatpush1.msra.mxu0 %v425
    %1553 = vmatprep.subr.mxu0 %v422
    %1554 = vmatpush1.msra.mxu0 %v421
    %1555 = vmatprep.subr.mxu0 %v418
    %1556 = vmatpush1.msra.mxu0 %v417
    %1557 = vmatprep.subr.mxu0 %v414
    %1558 = vmatpush1.msra.mxu0 %v413
    %1559 = vmatprep.subr.mxu0 0.0
    %1560 = vmatpush2.msra.mxu0 0.0
    %1561 = vmatprep.subr.mxu0 0.0
    %1562 = vmatpush2.msra.mxu0 0.0
    %1563 = vmatprep.subr.mxu0 0.0
    %1564 = vmatpush2.msra.mxu0 0.0
    %1565 = vmatprep.subr.mxu0 0.0
    %1566 = vmatpush2.msra.mxu0 0.0
    %1567 = vmatprep.subr.mxu0 0.0
    %1568 = vmatpush2.msra.mxu0 0.0
    %1569 = vmatprep.subr.mxu0 0.0
    %1570 = vmatpush2.msra.mxu0 0.0
    %1571 = vmatprep.subr.mxu0 0.0
    %1572 = vmatpush2.msra.mxu0 0.0
    %1573 = vmatprep.subr.mxu0 0.0
    %1574 = vmatpush2.msra.mxu0 0.0
    %1575 = vmatprep.subr.mxu0 0.0
    %1576 = vmatpush2.msra.mxu0 0.0
    %1577 = vmatprep.subr.mxu0 0.0
    %1578 = vmatpush2.msra.mxu0 0.0
    %1579 = vmatprep.subr.mxu0 0.0
    %1580 = vmatpush2.msra.mxu0 0.0
    %1581 = vmatprep.subr.mxu0 0.0
    %1582 = vmatpush2.msra.mxu0 0.0
    %1583 = vmatprep.subr.mxu0 0.0
    %1584 = vmatpush2.msra.mxu0 0.0
    %1585 = vmatprep.subr.mxu0 0.0
    %1586 = vmatpush2.msra.mxu0 0.0
    %1587 = vmatprep.subr.mxu0 0.0
    %1588 = vmatpush2.msra.mxu0 0.0
    %1589 = vmatprep.subr.mxu0 0.0
    %1590 = vmatpush2.msra.mxu0 0.0
    %1591 = vmatprep.mubr.f32.mxu0 0.0
    %1592 = vmatmul.mubr.f32.gmra.mxu0 %v646
    %v1593 = vpop.f32.mrf.mxu0
    %v1594 = vadd.f32 0.0, %v1593
    %v1595 = vpop.f32.mrf.mxu0
    %v1596 = vadd.f32 0.0, %v1595
    %1597 = vdwg.mxu0
    %1598 = vmatprep.subr.mxu0 %v476
    %1599 = vmatpush1.msra.mxu0 %v475
    %1600 = vmatprep.subr.mxu0 %v472
    %1601 = vmatpush1.msra.mxu0 %v471
    %1602 = vmatprep.subr.mxu0 %v468
    %1603 = vmatpush1.msra.mxu0 %v467
    %1604 = vmatprep.subr.mxu0 %v464
    %1605 = vmatpush1.msra.mxu0 %v463
    %1606 = vmatprep.subr.mxu0 %v460
    %1607 = vmatpush1.msra.mxu0 %v459
    %1608 = vmatprep.subr.mxu0 %v456
    %1609 = vmatpush1.msra.mxu0 %v455
    %1610 = vmatprep.subr.mxu0 %v452
    %1611 = vmatpush1.msra.mxu0 %v451
    %1612 = vmatprep.subr.mxu0 %v448
    %1613 = vmatpush1.msra.mxu0 %v447
    %1614 = vmatprep.subr.mxu0 %v444
    %1615 = vmatpush1.msra.mxu0 %v443
    %1616 = vmatprep.subr.mxu0 %v440
    %1617 = vmatpush1.msra.mxu0 %v439
    %1618 = vmatprep.subr.mxu0 %v436
    %1619 = vmatpush1.msra.mxu0 %v435
    %1620 = vmatprep.subr.mxu0 %v432
    %1621 = vmatpush1.msra.mxu0 %v431
    %1622 = vmatprep.subr.mxu0 %v428
    %1623 = vmatpush1.msra.mxu0 %v427
    %1624 = vmatprep.subr.mxu0 %v424
    %1625 = vmatpush1.msra.mxu0 %v423
    %1626 = vmatprep.subr.mxu0 %v420
    %1627 = vmatpush1.msra.mxu0 %v419
    %1628 = vmatprep.subr.mxu0 %v416
    %1629 = vmatpush1.msra.mxu0 %v415
    %1630 = vmatprep.subr.mxu0 0.0
    %1631 = vmatpush2.msra.mxu0 0.0
    %1632 = vmatprep.subr.mxu0 0.0
    %1633 = vmatpush2.msra.mxu0 0.0
    %1634 = vmatprep.subr.mxu0 0.0
    %1635 = vmatpush2.msra.mxu0 0.0
    %1636 = vmatprep.subr.mxu0 0.0
    %1637 = vmatpush2.msra.mxu0 0.0
    %1638 = vmatprep.subr.mxu0 0.0
    %1639 = vmatpush2.msra.mxu0 0.0
    %1640 = vmatprep.subr.mxu0 0.0
    %1641 = vmatpush2.msra.mxu0 0.0
    %1642 = vmatprep.subr.mxu0 0.0
    %1643 = vmatpush2.msra.mxu0 0.0
    %1644 = vmatprep.subr.mxu0 0.0
    %1645 = vmatpush2.msra.mxu0 0.0
    %1646 = vmatprep.subr.mxu0 0.0
    %1647 = vmatpush2.msra.mxu0 0.0
    %1648 = vmatprep.subr.mxu0 0.0
    %1649 = vmatpush2.msra.mxu0 0.0
    %1650 = vmatprep.subr.mxu0 0.0
    %1651 = vmatpush2.msra.mxu0 0.0
    %1652 = vmatprep.subr.mxu0 0.0
    %1653 = vmatpush2.msra.mxu0 0.0
    %1654 = vmatprep.subr.mxu0 0.0
    %1655 = vmatpush2.msra.mxu0 0.0
    %1656 = vmatprep.subr.mxu0 0.0
    %1657 = vmatpush2.msra.mxu0 0.0
    %1658 = vmatprep.subr.mxu0 0.0
    %1659 = vmatpush2.msra.mxu0 0.0
    %1660 = vmatprep.subr.mxu0 0.0
    %1661 = vmatpush2.msra.mxu0 0.0
    %1662 = vmatprep.mubr.f32.mxu0 0.0
    %1663 = vmatmul.mubr.f32.gmra.mxu0 %v646
    %v1664 = vpop.f32.mrf.mxu0
    %v1665 = vadd.f32 0.0, %v1664
    %v1666 = vpop.f32.mrf.mxu0
    %v1667 = vadd.f32 0.0, %v1666
    %1668 = vdwg.mxu0
    %v1673 = vrot.slane %v1594, 6
    %v1674 = vrot.slane %v1596, 6
    %v1675 = vrot.slane %v1665, 6
    %v1676 = vrot.slane %v1667, 6
    %v1681 = vadd.f32 %v282, %v1673
    %v1682 = vadd.f32 %v284, %v1674
    %v1683 = vadd.f32 %v359, %v1675
    %v1684 = vadd.f32 %v361, %v1676
    %v1685 = vxor.u32 %v1681, 2147483648
    %v1686 = vxor.u32 %v1682, 2147483648
    %v1687 = vxor.u32 %v1683, 2147483648
    %v1688 = vmul.f32 %v1685, 1.442695
    %v1689 = vpow.pop %v1688
    %v1690 = vmul.f32 %v1686, 1.442695
    %v1691 = vpow.pop %v1690
    %v1692 = vmul.f32 %v1687, 1.442695
    %v1693 = vpow.pop %v1692
    %v1694 = vadd.f32 %v1689, 1.0
    %v1695 = vadd.f32 %v1691, 1.0
    %v1696 = vadd.f32 %v1693, 1.0
    %v1697 = vrcp.pop %v1694
    %v1698 = vmul.f32 1.0, %v1697
    %v1699 = vrcp.pop %v1695
    %v1700 = vmul.f32 1.0, %v1699
    %v1701 = vrcp.pop %v1696
    %v1702 = vmul.f32 1.0, %v1701
    %v1703 = vtanh.pop %v1684
    %v1705 = vrot.slane %v644, 6
    %v1707 = vmul.f32 %v1700, %v1705
    %v1708 = vmul.f32 %v1698, %v1703
    %v1709 = vadd.f32 %v1707, %v1708
    %v1710 = vtanh.pop %v1709
    %v1711 = vmul.f32 %v1702, %v1710
    %1712 = vmatprep.subr.mxu0 %v772
    %1713 = vmatpush1.msra.mxu0 %v771
    %1714 = vmatprep.subr.mxu0 %v768
    %1715 = vmatpush1.msra.mxu0 %v767
    %1716 = vmatprep.subr.mxu0 %v764
    %1717 = vmatpush1.msra.mxu0 %v763
    %1718 = vmatprep.subr.mxu0 %v760
    %1719 = vmatpush1.msra.mxu0 %v759
    %1720 = vmatprep.subr.mxu0 %v756
    %1721 = vmatpush1.msra.mxu0 %v755
    %1722 = vmatprep.subr.mxu0 %v752
    %1723 = vmatpush1.msra.mxu0 %v751
    %1724 = vmatprep.subr.mxu0 %v748
    %1725 = vmatpush1.msra.mxu0 %v747
    %1726 = vmatprep.subr.mxu0 %v744
    %1727 = vmatpush1.msra.mxu0 %v743
    %1728 = vmatprep.subr.mxu0 %v740
    %1729 = vmatpush1.msra.mxu0 %v739
    %1730 = vmatprep.subr.mxu0 %v736
    %1731 = vmatpush1.msra.mxu0 %v735
    %1732 = vmatprep.subr.mxu0 %v732
    %1733 = vmatpush1.msra.mxu0 %v731
    %1734 = vmatprep.subr.mxu0 %v728
    %1735 = vmatpush1.msra.mxu0 %v727
    %1736 = vmatprep.subr.mxu0 %v724
    %1737 = vmatpush1.msra.mxu0 %v723
    %1738 = vmatprep.subr.mxu0 %v720
    %1739 = vmatpush1.msra.mxu0 %v719
    %1740 = vmatprep.subr.mxu0 %v716
    %1741 = vmatpush1.msra.mxu0 %v715
    %1742 = vmatprep.subr.mxu0 %v712
    %1743 = vmatpush1.msra.mxu0 %v711
    %1744 = vmatprep.subr.mxu0 0.0
    %1745 = vmatpush2.msra.mxu0 0.0
    %1746 = vmatprep.subr.mxu0 0.0
    %1747 = vmatpush2.msra.mxu0 0.0
    %1748 = vmatprep.subr.mxu0 0.0
    %1749 = vmatpush2.msra.mxu0 0.0
    %1750 = vmatprep.subr.mxu0 0.0
    %1751 = vmatpush2.msra.mxu0 0.0
    %1752 = vmatprep.subr.mxu0 0.0
    %1753 = vmatpush2.msra.mxu0 0.0
    %1754 = vmatprep.subr.mxu0 0.0
    %1755 = vmatpush2.msra.mxu0 0.0
    %1756 = vmatprep.subr.mxu0 0.0
    %1757 = vmatpush2.msra.mxu0 0.0
    %1758 = vmatprep.subr.mxu0 0.0
    %1759 = vmatpush2.msra.mxu0 0.0
    %1760 = vmatprep.subr.mxu0 0.0
    %1761 = vmatpush2.msra.mxu0 0.0
    %1762 = vmatprep.subr.mxu0 0.0
    %1763 = vmatpush2.msra.mxu0 0.0
    %1764 = vmatprep.subr.mxu0 0.0
    %1765 = vmatpush2.msra.mxu0 0.0
    %1766 = vmatprep.subr.mxu0 0.0
    %1767 = vmatpush2.msra.mxu0 0.0
    %1768 = vmatprep.subr.mxu0 0.0
    %1769 = vmatpush2.msra.mxu0 0.0
    %1770 = vmatprep.subr.mxu0 0.0
    %1771 = vmatpush2.msra.mxu0 0.0
    %1772 = vmatprep.subr.mxu0 0.0
    %1773 = vmatpush2.msra.mxu0 0.0
    %1774 = vmatprep.subr.mxu0 0.0
    %1775 = vmatpush2.msra.mxu0 0.0
    %1776 = vmatprep.mubr.f32.mxu0 0.0
    %1777 = vmatmul.mubr.f32.gmra.mxu0 %v1086
    %v1778 = vpop.f32.mrf.mxu0
    %v1779 = vadd.f32 0.0, %v1778
    %v1780 = vpop.f32.mrf.mxu0
    %v1781 = vadd.f32 0.0, %v1780
    %1782 = vdwg.mxu0
    %1783 = vmatprep.subr.mxu0 %v774
    %1784 = vmatpush1.msra.mxu0 %v773
    %1785 = vmatprep.subr.mxu0 %v770
    %1786 = vmatpush1.msra.mxu0 %v769
    %1787 = vmatprep.subr.mxu0 %v766
    %1788 = vmatpush1.msra.mxu0 %v765
    %1789 = vmatprep.subr.mxu0 %v762
    %1790 = vmatpush1.msra.mxu0 %v761
    %1791 = vmatprep.subr.mxu0 %v758
    %1792 = vmatpush1.msra.mxu0 %v757
    %1793 = vmatprep.subr.mxu0 %v754
    %1794 = vmatpush1.msra.mxu0 %v753
    %1795 = vmatprep.subr.mxu0 %v750
    %1796 = vmatpush1.msra.mxu0 %v749
    %1797 = vmatprep.subr.mxu0 %v746
    %1798 = vmatpush1.msra.mxu0 %v745
    %1799 = vmatprep.subr.mxu0 %v742
    %1800 = vmatpush1.msra.mxu0 %v741
    %1801 = vmatprep.subr.mxu0 %v738
    %1802 = vmatpush1.msra.mxu0 %v737
    %1803 = vmatprep.subr.mxu0 %v734
    %1804 = vmatpush1.msra.mxu0 %v733
    %1805 = vmatprep.subr.mxu0 %v730
    %1806 = vmatpush1.msra.mxu0 %v729
    %1807 = vmatprep.subr.mxu0 %v726
    %1808 = vmatpush1.msra.mxu0 %v725
    %1809 = vmatprep.subr.mxu0 %v722
    %1810 = vmatpush1.msra.mxu0 %v721
    %1811 = vmatprep.subr.mxu0 %v718
    %1812 = vmatpush1.msra.mxu0 %v717
    %1813 = vmatprep.subr.mxu0 %v714
    %1814 = vmatpush1.msra.mxu0 %v713
    %1815 = vmatprep.subr.mxu0 0.0
    %1816 = vmatpush2.msra.mxu0 0.0
    %1817 = vmatprep.subr.mxu0 0.0
    %1818 = vmatpush2.msra.mxu0 0.0
    %1819 = vmatprep.subr.mxu0 0.0
    %1820 = vmatpush2.msra.mxu0 0.0
    %1821 = vmatprep.subr.mxu0 0.0
    %1822 = vmatpush2.msra.mxu0 0.0
    %1823 = vmatprep.subr.mxu0 0.0
    %1824 = vmatpush2.msra.mxu0 0.0
    %1825 = vmatprep.subr.mxu0 0.0
    %1826 = vmatpush2.msra.mxu0 0.0
    %1827 = vmatprep.subr.mxu0 0.0
    %1828 = vmatpush2.msra.mxu0 0.0
    %1829 = vmatprep.subr.mxu0 0.0
    %1830 = vmatpush2.msra.mxu0 0.0
    %1831 = vmatprep.subr.mxu0 0.0
    %1832 = vmatpush2.msra.mxu0 0.0
    %1833 = vmatprep.subr.mxu0 0.0
    %1834 = vmatpush2.msra.mxu0 0.0
    %1835 = vmatprep.subr.mxu0 0.0
    %1836 = vmatpush2.msra.mxu0 0.0
    %1837 = vmatprep.subr.mxu0 0.0
    %1838 = vmatpush2.msra.mxu0 0.0
    %1839 = vmatprep.subr.mxu0 0.0
    %1840 = vmatpush2.msra.mxu0 0.0
    %1841 = vmatprep.subr.mxu0 0.0
    %1842 = vmatpush2.msra.mxu0 0.0
    %1843 = vmatprep.subr.mxu0 0.0
    %1844 = vmatpush2.msra.mxu0 0.0
    %1845 = vmatprep.subr.mxu0 0.0
    %1846 = vmatpush2.msra.mxu0 0.0
    %1847 = vmatprep.mubr.f32.mxu0 0.0
    %1848 = vmatmul.mubr.f32.gmra.mxu0 %v1086
    %v1849 = vpop.f32.mrf.mxu0
    %v1850 = vadd.f32 0.0, %v1849
    %v1851 = vpop.f32.mrf.mxu0
    %v1852 = vadd.f32 0.0, %v1851
    %1853 = vdwg.mxu0
    %v1855 = vrot.slane %v1711, 2
    %1857 = vmatprep.subr.mxu0 %v708
    %1858 = vmatpush1.msra.mxu0 %v707
    %1859 = vmatprep.subr.mxu0 %v704
    %1860 = vmatpush1.msra.mxu0 %v703
    %1861 = vmatprep.subr.mxu0 %v700
    %1862 = vmatpush1.msra.mxu0 %v699
    %1863 = vmatprep.subr.mxu0 %v696
    %1864 = vmatpush1.msra.mxu0 %v695
    %1865 = vmatprep.subr.mxu0 %v692
    %1866 = vmatpush1.msra.mxu0 %v691
    %1867 = vmatprep.subr.mxu0 %v688
    %1868 = vmatpush1.msra.mxu0 %v687
    %1869 = vmatprep.subr.mxu0 %v684
    %1870 = vmatpush1.msra.mxu0 %v683
    %1871 = vmatprep.subr.mxu0 %v680
    %1872 = vmatpush1.msra.mxu0 %v679
    %1873 = vmatprep.subr.mxu0 %v676
    %1874 = vmatpush1.msra.mxu0 %v675
    %1875 = vmatprep.subr.mxu0 %v672
    %1876 = vmatpush1.msra.mxu0 %v671
    %1877 = vmatprep.subr.mxu0 %v668
    %1878 = vmatpush1.msra.mxu0 %v667
    %1879 = vmatprep.subr.mxu0 %v664
    %1880 = vmatpush1.msra.mxu0 %v663
    %1881 = vmatprep.subr.mxu0 %v660
    %1882 = vmatpush1.msra.mxu0 %v659
    %1883 = vmatprep.subr.mxu0 %v656
    %1884 = vmatpush1.msra.mxu0 %v655
    %1885 = vmatprep.subr.mxu0 %v652
    %1886 = vmatpush1.msra.mxu0 %v651
    %1887 = vmatprep.subr.mxu0 %v648
    %1888 = vmatpush1.msra.mxu0 %v647
    %1889 = vmatprep.subr.mxu0 0.0
    %1890 = vmatpush2.msra.mxu0 0.0
    %1891 = vmatprep.subr.mxu0 0.0
    %1892 = vmatpush2.msra.mxu0 0.0
    %1893 = vmatprep.subr.mxu0 0.0
    %1894 = vmatpush2.msra.mxu0 0.0
    %1895 = vmatprep.subr.mxu0 0.0
    %1896 = vmatpush2.msra.mxu0 0.0
    %1897 = vmatprep.subr.mxu0 0.0
    %1898 = vmatpush2.msra.mxu0 0.0
    %1899 = vmatprep.subr.mxu0 0.0
    %1900 = vmatpush2.msra.mxu0 0.0
    %1901 = vmatprep.subr.mxu0 0.0
    %1902 = vmatpush2.msra.mxu0 0.0
    %1903 = vmatprep.subr.mxu0 0.0
    %1904 = vmatpush2.msra.mxu0 0.0
    %1905 = vmatprep.subr.mxu0 0.0
    %1906 = vmatpush2.msra.mxu0 0.0
    %1907 = vmatprep.subr.mxu0 0.0
    %1908 = vmatpush2.msra.mxu0 0.0
    %1909 = vmatprep.subr.mxu0 0.0
    %1910 = vmatpush2.msra.mxu0 0.0
    %1911 = vmatprep.subr.mxu0 0.0
    %1912 = vmatpush2.msra.mxu0 0.0
    %1913 = vmatprep.subr.mxu0 0.0
    %1914 = vmatpush2.msra.mxu0 0.0
    %1915 = vmatprep.subr.mxu0 0.0
    %1916 = vmatpush2.msra.mxu0 0.0
    %1917 = vmatprep.subr.mxu0 0.0
    %1918 = vmatpush2.msra.mxu0 0.0
    %1919 = vmatprep.subr.mxu0 0.0
    %1920 = vmatpush2.msra.mxu0 0.0
    %1921 = vmatprep.mubr.f32.mxu0 0.0
    %1922 = vmatmul.mubr.f32.gmra.mxu0 %v1855
    %v1923 = vpop.f32.mrf.mxu0
    %v1924 = vadd.f32 %v1779, %v1923
    %v1925 = vpop.f32.mrf.mxu0
    %v1926 = vadd.f32 %v1781, %v1925
    %1927 = vdwg.mxu0
    %1928 = vmatprep.subr.mxu0 %v710
    %1929 = vmatpush1.msra.mxu0 %v709
    %1930 = vmatprep.subr.mxu0 %v706
    %1931 = vmatpush1.msra.mxu0 %v705
    %1932 = vmatprep.subr.mxu0 %v702
    %1933 = vmatpush1.msra.mxu0 %v701
    %1934 = vmatprep.subr.mxu0 %v698
    %1935 = vmatpush1.msra.mxu0 %v697
    %1936 = vmatprep.subr.mxu0 %v694
    %1937 = vmatpush1.msra.mxu0 %v693
    %1938 = vmatprep.subr.mxu0 %v690
    %1939 = vmatpush1.msra.mxu0 %v689
    %1940 = vmatprep.subr.mxu0 %v686
    %1941 = vmatpush1.msra.mxu0 %v685
    %1942 = vmatprep.subr.mxu0 %v682
    %1943 = vmatpush1.msra.mxu0 %v681
    %1944 = vmatprep.subr.mxu0 %v678
    %1945 = vmatpush1.msra.mxu0 %v677
    %1946 = vmatprep.subr.mxu0 %v674
    %1947 = vmatpush1.msra.mxu0 %v673
    %1948 = vmatprep.subr.mxu0 %v670
    %1949 = vmatpush1.msra.mxu0 %v669
    %1950 = vmatprep.subr.mxu0 %v666
    %1951 = vmatpush1.msra.mxu0 %v665
    %1952 = vmatprep.subr.mxu0 %v662
    %1953 = vmatpush1.msra.mxu0 %v661
    %1954 = vmatprep.subr.mxu0 %v658
    %1955 = vmatpush1.msra.mxu0 %v657
    %1956 = vmatprep.subr.mxu0 %v654
    %1957 = vmatpush1.msra.mxu0 %v653
    %1958 = vmatprep.subr.mxu0 %v650
    %1959 = vmatpush1.msra.mxu0 %v649
    %1960 = vmatprep.subr.mxu0 0.0
    %1961 = vmatpush2.msra.mxu0 0.0
    %1962 = vmatprep.subr.mxu0 0.0
    %1963 = vmatpush2.msra.mxu0 0.0
    %1964 = vmatprep.subr.mxu0 0.0
    %1965 = vmatpush2.msra.mxu0 0.0
    %1966 = vmatprep.subr.mxu0 0.0
    %1967 = vmatpush2.msra.mxu0 0.0
    %1968 = vmatprep.subr.mxu0 0.0
    %1969 = vmatpush2.msra.mxu0 0.0
    %1970 = vmatprep.subr.mxu0 0.0
    %1971 = vmatpush2.msra.mxu0 0.0
    %1972 = vmatprep.subr.mxu0 0.0
    %1973 = vmatpush2.msra.mxu0 0.0
    %1974 = vmatprep.subr.mxu0 0.0
    %1975 = vmatpush2.msra.mxu0 0.0
    %1976 = vmatprep.subr.mxu0 0.0
    %1977 = vmatpush2.msra.mxu0 0.0
    %1978 = vmatprep.subr.mxu0 0.0
    %1979 = vmatpush2.msra.mxu0 0.0
    %1980 = vmatprep.subr.mxu0 0.0
    %1981 = vmatpush2.msra.mxu0 0.0
    %1982 = vmatprep.subr.mxu0 0.0
    %1983 = vmatpush2.msra.mxu0 0.0
    %1984 = vmatprep.subr.mxu0 0.0
    %1985 = vmatpush2.msra.mxu0 0.0
    %1986 = vmatprep.subr.mxu0 0.0
    %1987 = vmatpush2.msra.mxu0 0.0
    %1988 = vmatprep.subr.mxu0 0.0
    %1989 = vmatpush2.msra.mxu0 0.0
    %1990 = vmatprep.subr.mxu0 0.0
    %1991 = vmatpush2.msra.mxu0 0.0
    %1992 = vmatprep.mubr.f32.mxu0 0.0
    %1993 = vmatmul.mubr.f32.gmra.mxu0 %v1855
    %v1994 = vpop.f32.mrf.mxu0
    %v1995 = vadd.f32 %v1850, %v1994
    %v1996 = vpop.f32.mrf.mxu0
    %v1997 = vadd.f32 %v1852, %v1996
    %1998 = vdwg.mxu0
    %v1999 = vadd.f32 %v1924, %v374
    %v2000 = vadd.f32 %v1926, %v378
    %v2001 = vadd.f32 %v1995, %v382
    %v2002 = vadd.f32 %v1997, %v386
    %v2003 = vxor.u32 %v1999, 2147483648
    %v2004 = vxor.u32 %v2000, 2147483648
    %v2005 = vxor.u32 %v2001, 2147483648
    %v2006 = vmul.f32 %v2003, 1.442695
    %v2007 = vpow.pop %v2006
    %v2008 = vmul.f32 %v2004, 1.442695
    %v2009 = vpow.pop %v2008
    %v2010 = vmul.f32 %v2005, 1.442695
    %v2011 = vpow.pop %v2010
    %v2012 = vadd.f32 %v2007, 1.0
    %v2013 = vadd.f32 %v2009, 1.0
    %v2014 = vadd.f32 %v2011, 1.0
    %v2015 = vrcp.pop %v2012
    %v2016 = vmul.f32 1.0, %v2015
    %v2017 = vrcp.pop %v2013
    %v2018 = vmul.f32 1.0, %v2017
    %v2019 = vrcp.pop %v2014
    %v2020 = vmul.f32 1.0, %v2019
    %v2021 = vtanh.pop %v2002
    %v2022 = vmul.f32 %v2018, %v1084
    %v2023 = vmul.f32 %v2016, %v2021
    %v2024 = vadd.f32 %v2022, %v2023
    %v2025 = vtanh.pop %v2024
    %v2026 = vmul.f32 %v2020, %v2025
    %2027 = vmatprep.subr.mxu0 %v1212
    %2028 = vmatpush1.msra.mxu0 %v1211
    %2029 = vmatprep.subr.mxu0 %v1208
    %2030 = vmatpush1.msra.mxu0 %v1207
    %2031 = vmatprep.subr.mxu0 %v1204
    %2032 = vmatpush1.msra.mxu0 %v1203
    %2033 = vmatprep.subr.mxu0 %v1200
    %2034 = vmatpush1.msra.mxu0 %v1199
    %2035 = vmatprep.subr.mxu0 %v1196
    %2036 = vmatpush1.msra.mxu0 %v1195
    %2037 = vmatprep.subr.mxu0 %v1192
    %2038 = vmatpush1.msra.mxu0 %v1191
    %2039 = vmatprep.subr.mxu0 %v1188
    %2040 = vmatpush1.msra.mxu0 %v1187
    %2041 = vmatprep.subr.mxu0 %v1184
    %2042 = vmatpush1.msra.mxu0 %v1183
    %2043 = vmatprep.subr.mxu0 %v1180
    %2044 = vmatpush1.msra.mxu0 %v1179
    %2045 = vmatprep.subr.mxu0 %v1176
    %2046 = vmatpush1.msra.mxu0 %v1175
    %2047 = vmatprep.subr.mxu0 %v1172
    %2048 = vmatpush1.msra.mxu0 %v1171
    %2049 = vmatprep.subr.mxu0 %v1168
    %2050 = vmatpush1.msra.mxu0 %v1167
    %2051 = vmatprep.subr.mxu0 %v1164
    %2052 = vmatpush1.msra.mxu0 %v1163
    %2053 = vmatprep.subr.mxu0 %v1160
    %2054 = vmatpush1.msra.mxu0 %v1159
    %2055 = vmatprep.subr.mxu0 %v1156
    %2056 = vmatpush1.msra.mxu0 %v1155
    %2057 = vmatprep.subr.mxu0 %v1152
    %2058 = vmatpush1.msra.mxu0 %v1151
    %2059 = vmatprep.subr.mxu0 0.0
    %2060 = vmatpush2.msra.mxu0 0.0
    %2061 = vmatprep.subr.mxu0 0.0
    %2062 = vmatpush2.msra.mxu0 0.0
    %2063 = vmatprep.subr.mxu0 0.0
    %2064 = vmatpush2.msra.mxu0 0.0
    %2065 = vmatprep.subr.mxu0 0.0
    %2066 = vmatpush2.msra.mxu0 0.0
    %2067 = vmatprep.subr.mxu0 0.0
    %2068 = vmatpush2.msra.mxu0 0.0
    %2069 = vmatprep.subr.mxu0 0.0
    %2070 = vmatpush2.msra.mxu0 0.0
    %2071 = vmatprep.subr.mxu0 0.0
    %2072 = vmatpush2.msra.mxu0 0.0
    %2073 = vmatprep.subr.mxu0 0.0
    %2074 = vmatpush2.msra.mxu0 0.0
    %2075 = vmatprep.subr.mxu0 0.0
    %2076 = vmatpush2.msra.mxu0 0.0
    %2077 = vmatprep.subr.mxu0 0.0
    %2078 = vmatpush2.msra.mxu0 0.0
    %2079 = vmatprep.subr.mxu0 0.0
    %2080 = vmatpush2.msra.mxu0 0.0
    %2081 = vmatprep.subr.mxu0 0.0
    %2082 = vmatpush2.msra.mxu0 0.0
    %2083 = vmatprep.subr.mxu0 0.0
    %2084 = vmatpush2.msra.mxu0 0.0
    %2085 = vmatprep.subr.mxu0 0.0
    %2086 = vmatpush2.msra.mxu0 0.0
    %2087 = vmatprep.subr.mxu0 0.0
    %2088 = vmatpush2.msra.mxu0 0.0
    %2089 = vmatprep.subr.mxu0 0.0
    %2090 = vmatpush2.msra.mxu0 0.0
    %2091 = vmatprep.mubr.f32.mxu0 0.0
    %2092 = vmatmul.mubr.f32.gmra.mxu0 %v1526
    %v2093 = vpop.f32.mrf.mxu0
    %v2094 = vadd.f32 0.0, %v2093
    %v2095 = vpop.f32.mrf.mxu0
    %v2096 = vadd.f32 0.0, %v2095
    %2097 = vdwg.mxu0
    %2098 = vmatprep.subr.mxu0 %v1214
    %2099 = vmatpush1.msra.mxu0 %v1213
    %2100 = vmatprep.subr.mxu0 %v1210
    %2101 = vmatpush1.msra.mxu0 %v1209
    %2102 = vmatprep.subr.mxu0 %v1206
    %2103 = vmatpush1.msra.mxu0 %v1205
    %2104 = vmatprep.subr.mxu0 %v1202
    %2105 = vmatpush1.msra.mxu0 %v1201
    %2106 = vmatprep.subr.mxu0 %v1198
    %2107 = vmatpush1.msra.mxu0 %v1197
    %2108 = vmatprep.subr.mxu0 %v1194
    %2109 = vmatpush1.msra.mxu0 %v1193
    %2110 = vmatprep.subr.mxu0 %v1190
    %2111 = vmatpush1.msra.mxu0 %v1189
    %2112 = vmatprep.subr.mxu0 %v1186
    %2113 = vmatpush1.msra.mxu0 %v1185
    %2114 = vmatprep.subr.mxu0 %v1182
    %2115 = vmatpush1.msra.mxu0 %v1181
    %2116 = vmatprep.subr.mxu0 %v1178
    %2117 = vmatpush1.msra.mxu0 %v1177
    %2118 = vmatprep.subr.mxu0 %v1174
    %2119 = vmatpush1.msra.mxu0 %v1173
    %2120 = vmatprep.subr.mxu0 %v1170
    %2121 = vmatpush1.msra.mxu0 %v1169
    %2122 = vmatprep.subr.mxu0 %v1166
    %2123 = vmatpush1.msra.mxu0 %v1165
    %2124 = vmatprep.subr.mxu0 %v1162
    %2125 = vmatpush1.msra.mxu0 %v1161
    %2126 = vmatprep.subr.mxu0 %v1158
    %2127 = vmatpush1.msra.mxu0 %v1157
    %2128 = vmatprep.subr.mxu0 %v1154
    %2129 = vmatpush1.msra.mxu0 %v1153
    %2130 = vmatprep.subr.mxu0 0.0
    %2131 = vmatpush2.msra.mxu0 0.0
    %2132 = vmatprep.subr.mxu0 0.0
    %2133 = vmatpush2.msra.mxu0 0.0
    %2134 = vmatprep.subr.mxu0 0.0
    %2135 = vmatpush2.msra.mxu0 0.0
    %2136 = vmatprep.subr.mxu0 0.0
    %2137 = vmatpush2.msra.mxu0 0.0
    %2138 = vmatprep.subr.mxu0 0.0
    %2139 = vmatpush2.msra.mxu0 0.0
    %2140 = vmatprep.subr.mxu0 0.0
    %2141 = vmatpush2.msra.mxu0 0.0
    %2142 = vmatprep.subr.mxu0 0.0
    %2143 = vmatpush2.msra.mxu0 0.0
    %2144 = vmatprep.subr.mxu0 0.0
    %2145 = vmatpush2.msra.mxu0 0.0
    %2146 = vmatprep.subr.mxu0 0.0
    %2147 = vmatpush2.msra.mxu0 0.0
    %2148 = vmatprep.subr.mxu0 0.0
    %2149 = vmatpush2.msra.mxu0 0.0
    %2150 = vmatprep.subr.mxu0 0.0
    %2151 = vmatpush2.msra.mxu0 0.0
    %2152 = vmatprep.subr.mxu0 0.0
    %2153 = vmatpush2.msra.mxu0 0.0
    %2154 = vmatprep.subr.mxu0 0.0
    %2155 = vmatpush2.msra.mxu0 0.0
    %2156 = vmatprep.subr.mxu0 0.0
    %2157 = vmatpush2.msra.mxu0 0.0
    %2158 = vmatprep.subr.mxu0 0.0
    %2159 = vmatpush2.msra.mxu0 0.0
    %2160 = vmatprep.subr.mxu0 0.0
    %2161 = vmatpush2.msra.mxu0 0.0
    %2162 = vmatprep.mubr.f32.mxu0 0.0
    %2163 = vmatmul.mubr.f32.gmra.mxu0 %v1526
    %v2164 = vpop.f32.mrf.mxu0
    %v2165 = vadd.f32 0.0, %v2164
    %v2166 = vpop.f32.mrf.mxu0
    %v2167 = vadd.f32 0.0, %v2166
    %2168 = vdwg.mxu0
    %2169 = vmatprep.subr.mxu0 %v1148
    %2170 = vmatpush1.msra.mxu0 %v1147
    %2171 = vmatprep.subr.mxu0 %v1144
    %2172 = vmatpush1.msra.mxu0 %v1143
    %2173 = vmatprep.subr.mxu0 %v1140
    %2174 = vmatpush1.msra.mxu0 %v1139
    %2175 = vmatprep.subr.mxu0 %v1136
    %2176 = vmatpush1.msra.mxu0 %v1135
    %2177 = vmatprep.subr.mxu0 %v1132
    %2178 = vmatpush1.msra.mxu0 %v1131
    %2179 = vmatprep.subr.mxu0 %v1128
    %2180 = vmatpush1.msra.mxu0 %v1127
    %2181 = vmatprep.subr.mxu0 %v1124
    %2182 = vmatpush1.msra.mxu0 %v1123
    %2183 = vmatprep.subr.mxu0 %v1120
    %2184 = vmatpush1.msra.mxu0 %v1119
    %2185 = vmatprep.subr.mxu0 %v1116
    %2186 = vmatpush1.msra.mxu0 %v1115
    %2187 = vmatprep.subr.mxu0 %v1112
    %2188 = vmatpush1.msra.mxu0 %v1111
    %2189 = vmatprep.subr.mxu0 %v1108
    %2190 = vmatpush1.msra.mxu0 %v1107
    %2191 = vmatprep.subr.mxu0 %v1104
    %2192 = vmatpush1.msra.mxu0 %v1103
    %2193 = vmatprep.subr.mxu0 %v1100
    %2194 = vmatpush1.msra.mxu0 %v1099
    %2195 = vmatprep.subr.mxu0 %v1096
    %2196 = vmatpush1.msra.mxu0 %v1095
    %2197 = vmatprep.subr.mxu0 %v1092
    %2198 = vmatpush1.msra.mxu0 %v1091
    %2199 = vmatprep.subr.mxu0 %v1088
    %2200 = vmatpush1.msra.mxu0 %v1087
    %2201 = vmatprep.subr.mxu0 0.0
    %2202 = vmatpush2.msra.mxu0 0.0
    %2203 = vmatprep.subr.mxu0 0.0
    %2204 = vmatpush2.msra.mxu0 0.0
    %2205 = vmatprep.subr.mxu0 0.0
    %2206 = vmatpush2.msra.mxu0 0.0
    %2207 = vmatprep.subr.mxu0 0.0
    %2208 = vmatpush2.msra.mxu0 0.0
    %2209 = vmatprep.subr.mxu0 0.0
    %2210 = vmatpush2.msra.mxu0 0.0
    %2211 = vmatprep.subr.mxu0 0.0
    %2212 = vmatpush2.msra.mxu0 0.0
    %2213 = vmatprep.subr.mxu0 0.0
    %2214 = vmatpush2.msra.mxu0 0.0
    %2215 = vmatprep.subr.mxu0 0.0
    %2216 = vmatpush2.msra.mxu0 0.0
    %2217 = vmatprep.subr.mxu0 0.0
    %2218 = vmatpush2.msra.mxu0 0.0
    %2219 = vmatprep.subr.mxu0 0.0
    %2220 = vmatpush2.msra.mxu0 0.0
    %2221 = vmatprep.subr.mxu0 0.0
    %2222 = vmatpush2.msra.mxu0 0.0
    %2223 = vmatprep.subr.mxu0 0.0
    %2224 = vmatpush2.msra.mxu0 0.0
    %2225 = vmatprep.subr.mxu0 0.0
    %2226 = vmatpush2.msra.mxu0 0.0
    %2227 = vmatprep.subr.mxu0 0.0
    %2228 = vmatpush2.msra.mxu0 0.0
    %2229 = vmatprep.subr.mxu0 0.0
    %2230 = vmatpush2.msra.mxu0 0.0
    %2231 = vmatprep.subr.mxu0 0.0
    %2232 = vmatpush2.msra.mxu0 0.0
    %2233 = vmatprep.mubr.f32.mxu0 0.0
    %2234 = vmatmul.mubr.f32.gmra.mxu0 %v2026
    %v2235 = vpop.f32.mrf.mxu0
    %v2236 = vadd.f32 %v2094, %v2235
    %v2237 = vpop.f32.mrf.mxu0
    %v2238 = vadd.f32 %v2096, %v2237
    %2239 = vdwg.mxu0
    %2240 = vmatprep.subr.mxu0 %v1150
    %2241 = vmatpush1.msra.mxu0 %v1149
    %2242 = vmatprep.subr.mxu0 %v1146
    %2243 = vmatpush1.msra.mxu0 %v1145
    %2244 = vmatprep.subr.mxu0 %v1142
    %2245 = vmatpush1.msra.mxu0 %v1141
    %2246 = vmatprep.subr.mxu0 %v1138
    %2247 = vmatpush1.msra.mxu0 %v1137
    %2248 = vmatprep.subr.mxu0 %v1134
    %2249 = vmatpush1.msra.mxu0 %v1133
    %2250 = vmatprep.subr.mxu0 %v1130
    %2251 = vmatpush1.msra.mxu0 %v1129
    %2252 = vmatprep.subr.mxu0 %v1126
    %2253 = vmatpush1.msra.mxu0 %v1125
    %2254 = vmatprep.subr.mxu0 %v1122
    %2255 = vmatpush1.msra.mxu0 %v1121
    %2256 = vmatprep.subr.mxu0 %v1118
    %2257 = vmatpush1.msra.mxu0 %v1117
    %2258 = vmatprep.subr.mxu0 %v1114
    %2259 = vmatpush1.msra.mxu0 %v1113
    %2260 = vmatprep.subr.mxu0 %v1110
    %2261 = vmatpush1.msra.mxu0 %v1109
    %2262 = vmatprep.subr.mxu0 %v1106
    %2263 = vmatpush1.msra.mxu0 %v1105
    %2264 = vmatprep.subr.mxu0 %v1102
    %2265 = vmatpush1.msra.mxu0 %v1101
    %2266 = vmatprep.subr.mxu0 %v1098
    %2267 = vmatpush1.msra.mxu0 %v1097
    %2268 = vmatprep.subr.mxu0 %v1094
    %2269 = vmatpush1.msra.mxu0 %v1093
    %2270 = vmatprep.subr.mxu0 %v1090
    %2271 = vmatpush1.msra.mxu0 %v1089
    %2272 = vmatprep.subr.mxu0 0.0
    %2273 = vmatpush2.msra.mxu0 0.0
    %2274 = vmatprep.subr.mxu0 0.0
    %2275 = vmatpush2.msra.mxu0 0.0
    %2276 = vmatprep.subr.mxu0 0.0
    %2277 = vmatpush2.msra.mxu0 0.0
    %2278 = vmatprep.subr.mxu0 0.0
    %2279 = vmatpush2.msra.mxu0 0.0
    %2280 = vmatprep.subr.mxu0 0.0
    %2281 = vmatpush2.msra.mxu0 0.0
    %2282 = vmatprep.subr.mxu0 0.0
    %2283 = vmatpush2.msra.mxu0 0.0
    %2284 = vmatprep.subr.mxu0 0.0
    %2285 = vmatpush2.msra.mxu0 0.0
    %2286 = vmatprep.subr.mxu0 0.0
    %2287 = vmatpush2.msra.mxu0 0.0
    %2288 = vmatprep.subr.mxu0 0.0
    %2289 = vmatpush2.msra.mxu0 0.0
    %2290 = vmatprep.subr.mxu0 0.0
    %2291 = vmatpush2.msra.mxu0 0.0
    %2292 = vmatprep.subr.mxu0 0.0
    %2293 = vmatpush2.msra.mxu0 0.0
    %2294 = vmatprep.subr.mxu0 0.0
    %2295 = vmatpush2.msra.mxu0 0.0
    %2296 = vmatprep.subr.mxu0 0.0
    %2297 = vmatpush2.msra.mxu0 0.0
    %2298 = vmatprep.subr.mxu0 0.0
    %2299 = vmatpush2.msra.mxu0 0.0
    %2300 = vmatprep.subr.mxu0 0.0
    %2301 = vmatpush2.msra.mxu0 0.0
    %2302 = vmatprep.subr.mxu0 0.0
    %2303 = vmatpush2.msra.mxu0 0.0
    %2304 = vmatprep.mubr.f32.mxu0 0.0
    %2305 = vmatmul.mubr.f32.gmra.mxu0 %v2026
    %v2306 = vpop.f32.mrf.mxu0
    %v2307 = vadd.f32 %v2165, %v2306
    %v2308 = vpop.f32.mrf.mxu0
    %v2309 = vadd.f32 %v2167, %v2308
    %2310 = vdwg.mxu0
    %v2311 = vadd.f32 %v2236, %v396
    %v2312 = vadd.f32 %v2238, %v400
    %v2313 = vadd.f32 %v2307, %v404
    %v2314 = vadd.f32 %v2309, %v408
    %v2315 = vxor.u32 %v2311, 2147483648
    %v2316 = vxor.u32 %v2312, 2147483648
    %v2317 = vxor.u32 %v2313, 2147483648
    %v2318 = vmul.f32 %v2315, 1.442695
    %v2319 = vpow.pop %v2318
    %v2320 = vmul.f32 %v2316, 1.442695
    %v2321 = vpow.pop %v2320
    %v2322 = vmul.f32 %v2317, 1.442695
    %v2323 = vpow.pop %v2322
    %v2324 = vadd.f32 %v2319, 1.0
    %v2325 = vadd.f32 %v2321, 1.0
    %v2326 = vadd.f32 %v2323, 1.0
    %v2327 = vrcp.pop %v2324
    %v2328 = vmul.f32 1.0, %v2327
    %v2329 = vrcp.pop %v2325
    %v2330 = vmul.f32 1.0, %v2329
    %v2331 = vrcp.pop %v2326
    %v2332 = vmul.f32 1.0, %v2331
    %v2333 = vtanh.pop %v2314
    %v2334 = vmul.f32 %v2330, %v1524
    %v2335 = vmul.f32 %v2328, %v2333
    %v2336 = vadd.f32 %v2334, %v2335
    %v2337 = vtanh.pop %v2336
    %v2338 = vmul.f32 %v2332, %v2337
    %2339 = vmatprep.subr.mxu0 %v474
    %2340 = vmatpush1.msra.mxu0 %v473
    %2341 = vmatprep.subr.mxu0 %v470
    %2342 = vmatpush1.msra.mxu0 %v469
    %2343 = vmatprep.subr.mxu0 %v466
    %2344 = vmatpush1.msra.mxu0 %v465
    %2345 = vmatprep.subr.mxu0 %v462
    %2346 = vmatpush1.msra.mxu0 %v461
    %2347 = vmatprep.subr.mxu0 %v458
    %2348 = vmatpush1.msra.mxu0 %v457
    %2349 = vmatprep.subr.mxu0 %v454
    %2350 = vmatpush1.msra.mxu0 %v453
    %2351 = vmatprep.subr.mxu0 %v450
    %2352 = vmatpush1.msra.mxu0 %v449
    %2353 = vmatprep.subr.mxu0 %v446
    %2354 = vmatpush1.msra.mxu0 %v445
    %2355 = vmatprep.subr.mxu0 %v442
    %2356 = vmatpush1.msra.mxu0 %v441
    %2357 = vmatprep.subr.mxu0 %v438
    %2358 = vmatpush1.msra.mxu0 %v437
    %2359 = vmatprep.subr.mxu0 %v434
    %2360 = vmatpush1.msra.mxu0 %v433
    %2361 = vmatprep.subr.mxu0 %v430
    %2362 = vmatpush1.msra.mxu0 %v429
    %2363 = vmatprep.subr.mxu0 %v426
    %2364 = vmatpush1.msra.mxu0 %v425
    %2365 = vmatprep.subr.mxu0 %v422
    %2366 = vmatpush1.msra.mxu0 %v421
    %2367 = vmatprep.subr.mxu0 %v418
    %2368 = vmatpush1.msra.mxu0 %v417
    %2369 = vmatprep.subr.mxu0 %v414
    %2370 = vmatpush1.msra.mxu0 %v413
    %2371 = vmatprep.subr.mxu0 0.0
    %2372 = vmatpush2.msra.mxu0 0.0
    %2373 = vmatprep.subr.mxu0 0.0
    %2374 = vmatpush2.msra.mxu0 0.0
    %2375 = vmatprep.subr.mxu0 0.0
    %2376 = vmatpush2.msra.mxu0 0.0
    %2377 = vmatprep.subr.mxu0 0.0
    %2378 = vmatpush2.msra.mxu0 0.0
    %2379 = vmatprep.subr.mxu0 0.0
    %2380 = vmatpush2.msra.mxu0 0.0
    %2381 = vmatprep.subr.mxu0 0.0
    %2382 = vmatpush2.msra.mxu0 0.0
    %2383 = vmatprep.subr.mxu0 0.0
    %2384 = vmatpush2.msra.mxu0 0.0
    %2385 = vmatprep.subr.mxu0 0.0
    %2386 = vmatpush2.msra.mxu0 0.0
    %2387 = vmatprep.subr.mxu0 0.0
    %2388 = vmatpush2.msra.mxu0 0.0
    %2389 = vmatprep.subr.mxu0 0.0
    %2390 = vmatpush2.msra.mxu0 0.0
    %2391 = vmatprep.subr.mxu0 0.0
    %2392 = vmatpush2.msra.mxu0 0.0
    %2393 = vmatprep.subr.mxu0 0.0
    %2394 = vmatpush2.msra.mxu0 0.0
    %2395 = vmatprep.subr.mxu0 0.0
    %2396 = vmatpush2.msra.mxu0 0.0
    %2397 = vmatprep.subr.mxu0 0.0
    %2398 = vmatpush2.msra.mxu0 0.0
    %2399 = vmatprep.subr.mxu0 0.0
    %2400 = vmatpush2.msra.mxu0 0.0
    %2401 = vmatprep.subr.mxu0 0.0
    %2402 = vmatpush2.msra.mxu0 0.0
    %2403 = vmatprep.mubr.f32.mxu0 0.0
    %2404 = vmatmul.mubr.f32.gmra.mxu0 %v1855
    %v2405 = vpop.f32.mrf.mxu0
    %v2406 = vadd.f32 0.0, %v2405
    %v2407 = vpop.f32.mrf.mxu0
    %v2408 = vadd.f32 0.0, %v2407
    %2409 = vdwg.mxu0
    %2410 = vmatprep.subr.mxu0 %v476
    %2411 = vmatpush1.msra.mxu0 %v475
    %2412 = vmatprep.subr.mxu0 %v472
    %2413 = vmatpush1.msra.mxu0 %v471
    %2414 = vmatprep.subr.mxu0 %v468
    %2415 = vmatpush1.msra.mxu0 %v467
    %2416 = vmatprep.subr.mxu0 %v464
    %2417 = vmatpush1.msra.mxu0 %v463
    %2418 = vmatprep.subr.mxu0 %v460
    %2419 = vmatpush1.msra.mxu0 %v459
    %2420 = vmatprep.subr.mxu0 %v456
    %2421 = vmatpush1.msra.mxu0 %v455
    %2422 = vmatprep.subr.mxu0 %v452
    %2423 = vmatpush1.msra.mxu0 %v451
    %2424 = vmatprep.subr.mxu0 %v448
    %2425 = vmatpush1.msra.mxu0 %v447
    %2426 = vmatprep.subr.mxu0 %v444
    %2427 = vmatpush1.msra.mxu0 %v443
    %2428 = vmatprep.subr.mxu0 %v440
    %2429 = vmatpush1.msra.mxu0 %v439
    %2430 = vmatprep.subr.mxu0 %v436
    %2431 = vmatpush1.msra.mxu0 %v435
    %2432 = vmatprep.subr.mxu0 %v432
    %2433 = vmatpush1.msra.mxu0 %v431
    %2434 = vmatprep.subr.mxu0 %v428
    %2435 = vmatpush1.msra.mxu0 %v427
    %2436 = vmatprep.subr.mxu0 %v424
    %2437 = vmatpush1.msra.mxu0 %v423
    %2438 = vmatprep.subr.mxu0 %v420
    %2439 = vmatpush1.msra.mxu0 %v419
    %2440 = vmatprep.subr.mxu0 %v416
    %2441 = vmatpush1.msra.mxu0 %v415
    %2442 = vmatprep.subr.mxu0 0.0
    %2443 = vmatpush2.msra.mxu0 0.0
    %2444 = vmatprep.subr.mxu0 0.0
    %2445 = vmatpush2.msra.mxu0 0.0
    %2446 = vmatprep.subr.mxu0 0.0
    %2447 = vmatpush2.msra.mxu0 0.0
    %2448 = vmatprep.subr.mxu0 0.0
    %2449 = vmatpush2.msra.mxu0 0.0
    %2450 = vmatprep.subr.mxu0 0.0
    %2451 = vmatpush2.msra.mxu0 0.0
    %2452 = vmatprep.subr.mxu0 0.0
    %2453 = vmatpush2.msra.mxu0 0.0
    %2454 = vmatprep.subr.mxu0 0.0
    %2455 = vmatpush2.msra.mxu0 0.0
    %2456 = vmatprep.subr.mxu0 0.0
    %2457 = vmatpush2.msra.mxu0 0.0
    %2458 = vmatprep.subr.mxu0 0.0
    %2459 = vmatpush2.msra.mxu0 0.0
    %2460 = vmatprep.subr.mxu0 0.0
    %2461 = vmatpush2.msra.mxu0 0.0
    %2462 = vmatprep.subr.mxu0 0.0
    %2463 = vmatpush2.msra.mxu0 0.0
    %2464 = vmatprep.subr.mxu0 0.0
    %2465 = vmatpush2.msra.mxu0 0.0
    %2466 = vmatprep.subr.mxu0 0.0
    %2467 = vmatpush2.msra.mxu0 0.0
    %2468 = vmatprep.subr.mxu0 0.0
    %2469 = vmatpush2.msra.mxu0 0.0
    %2470 = vmatprep.subr.mxu0 0.0
    %2471 = vmatpush2.msra.mxu0 0.0
    %2472 = vmatprep.subr.mxu0 0.0
    %2473 = vmatpush2.msra.mxu0 0.0
    %2474 = vmatprep.mubr.f32.mxu0 0.0
    %2475 = vmatmul.mubr.f32.gmra.mxu0 %v1855
    %v2476 = vpop.f32.mrf.mxu0
    %v2477 = vadd.f32 0.0, %v2476
    %v2478 = vpop.f32.mrf.mxu0
    %v2479 = vadd.f32 0.0, %v2478
    %2480 = vdwg.mxu0
    %v2485 = vrot.slane %v2406, 4
    %v2486 = vrot.slane %v2408, 4
    %v2487 = vrot.slane %v2477, 4
    %v2488 = vrot.slane %v2479, 4
    %v2493 = vadd.f32 %v282, %v2485
    %v2494 = vadd.f32 %v284, %v2486
    %v2495 = vadd.f32 %v359, %v2487
    %v2496 = vadd.f32 %v361, %v2488
    %v2497 = vxor.u32 %v2493, 2147483648
    %v2498 = vxor.u32 %v2494, 2147483648
    %v2499 = vxor.u32 %v2495, 2147483648
    %v2500 = vmul.f32 %v2497, 1.442695
    %v2501 = vpow.pop %v2500
    %v2502 = vmul.f32 %v2498, 1.442695
    %v2503 = vpow.pop %v2502
    %v2504 = vmul.f32 %v2499, 1.442695
    %v2505 = vpow.pop %v2504
    %v2506 = vadd.f32 %v2501, 1.0
    %v2507 = vadd.f32 %v2503, 1.0
    %v2508 = vadd.f32 %v2505, 1.0
    %v2509 = vrcp.pop %v2506
    %v2510 = vmul.f32 1.0, %v2509
    %v2511 = vrcp.pop %v2507
    %v2512 = vmul.f32 1.0, %v2511
    %v2513 = vrcp.pop %v2508
    %v2514 = vmul.f32 1.0, %v2513
    %v2515 = vtanh.pop %v2496
    %v2517 = vrot.slane %v1709, 6
    %v2519 = vmul.f32 %v2512, %v2517
    %v2520 = vmul.f32 %v2510, %v2515
    %v2521 = vadd.f32 %v2519, %v2520
    %v2522 = vtanh.pop %v2521
    %v2523 = vmul.f32 %v2514, %v2522
    %2524 = vmatprep.subr.mxu0 %v772
    %2525 = vmatpush1.msra.mxu0 %v771
    %2526 = vmatprep.subr.mxu0 %v768
    %2527 = vmatpush1.msra.mxu0 %v767
    %2528 = vmatprep.subr.mxu0 %v764
    %2529 = vmatpush1.msra.mxu0 %v763
    %2530 = vmatprep.subr.mxu0 %v760
    %2531 = vmatpush1.msra.mxu0 %v759
    %2532 = vmatprep.subr.mxu0 %v756
    %2533 = vmatpush1.msra.mxu0 %v755
    %2534 = vmatprep.subr.mxu0 %v752
    %2535 = vmatpush1.msra.mxu0 %v751
    %2536 = vmatprep.subr.mxu0 %v748
    %2537 = vmatpush1.msra.mxu0 %v747
    %2538 = vmatprep.subr.mxu0 %v744
    %2539 = vmatpush1.msra.mxu0 %v743
    %2540 = vmatprep.subr.mxu0 %v740
    %2541 = vmatpush1.msra.mxu0 %v739
    %2542 = vmatprep.subr.mxu0 %v736
    %2543 = vmatpush1.msra.mxu0 %v735
    %2544 = vmatprep.subr.mxu0 %v732
    %2545 = vmatpush1.msra.mxu0 %v731
    %2546 = vmatprep.subr.mxu0 %v728
    %2547 = vmatpush1.msra.mxu0 %v727
    %2548 = vmatprep.subr.mxu0 %v724
    %2549 = vmatpush1.msra.mxu0 %v723
    %2550 = vmatprep.subr.mxu0 %v720
    %2551 = vmatpush1.msra.mxu0 %v719
    %2552 = vmatprep.subr.mxu0 %v716
    %2553 = vmatpush1.msra.mxu0 %v715
    %2554 = vmatprep.subr.mxu0 %v712
    %2555 = vmatpush1.msra.mxu0 %v711
    %2556 = vmatprep.subr.mxu0 0.0
    %2557 = vmatpush2.msra.mxu0 0.0
    %2558 = vmatprep.subr.mxu0 0.0
    %2559 = vmatpush2.msra.mxu0 0.0
    %2560 = vmatprep.subr.mxu0 0.0
    %2561 = vmatpush2.msra.mxu0 0.0
    %2562 = vmatprep.subr.mxu0 0.0
    %2563 = vmatpush2.msra.mxu0 0.0
    %2564 = vmatprep.subr.mxu0 0.0
    %2565 = vmatpush2.msra.mxu0 0.0
    %2566 = vmatprep.subr.mxu0 0.0
    %2567 = vmatpush2.msra.mxu0 0.0
    %2568 = vmatprep.subr.mxu0 0.0
    %2569 = vmatpush2.msra.mxu0 0.0
    %2570 = vmatprep.subr.mxu0 0.0
    %2571 = vmatpush2.msra.mxu0 0.0
    %2572 = vmatprep.subr.mxu0 0.0
    %2573 = vmatpush2.msra.mxu0 0.0
    %2574 = vmatprep.subr.mxu0 0.0
    %2575 = vmatpush2.msra.mxu0 0.0
    %2576 = vmatprep.subr.mxu0 0.0
    %2577 = vmatpush2.msra.mxu0 0.0
    %2578 = vmatprep.subr.mxu0 0.0
    %2579 = vmatpush2.msra.mxu0 0.0
    %2580 = vmatprep.subr.mxu0 0.0
    %2581 = vmatpush2.msra.mxu0 0.0
    %2582 = vmatprep.subr.mxu0 0.0
    %2583 = vmatpush2.msra.mxu0 0.0
    %2584 = vmatprep.subr.mxu0 0.0
    %2585 = vmatpush2.msra.mxu0 0.0
    %2586 = vmatprep.subr.mxu0 0.0
    %2587 = vmatpush2.msra.mxu0 0.0
    %2588 = vmatprep.mubr.f32.mxu0 0.0
    %2589 = vmatmul.mubr.f32.gmra.mxu0 %v2026
    %v2590 = vpop.f32.mrf.mxu0
    %v2591 = vadd.f32 0.0, %v2590
    %v2592 = vpop.f32.mrf.mxu0
    %v2593 = vadd.f32 0.0, %v2592
    %2594 = vdwg.mxu0
    %2595 = vmatprep.subr.mxu0 %v774
    %2596 = vmatpush1.msra.mxu0 %v773
    %2597 = vmatprep.subr.mxu0 %v770
    %2598 = vmatpush1.msra.mxu0 %v769
    %2599 = vmatprep.subr.mxu0 %v766
    %2600 = vmatpush1.msra.mxu0 %v765
    %2601 = vmatprep.subr.mxu0 %v762
    %2602 = vmatpush1.msra.mxu0 %v761
    %2603 = vmatprep.subr.mxu0 %v758
    %2604 = vmatpush1.msra.mxu0 %v757
    %2605 = vmatprep.subr.mxu0 %v754
    %2606 = vmatpush1.msra.mxu0 %v753
    %2607 = vmatprep.subr.mxu0 %v750
    %2608 = vmatpush1.msra.mxu0 %v749
    %2609 = vmatprep.subr.mxu0 %v746
    %2610 = vmatpush1.msra.mxu0 %v745
    %2611 = vmatprep.subr.mxu0 %v742
    %2612 = vmatpush1.msra.mxu0 %v741
    %2613 = vmatprep.subr.mxu0 %v738
    %2614 = vmatpush1.msra.mxu0 %v737
    %2615 = vmatprep.subr.mxu0 %v734
    %2616 = vmatpush1.msra.mxu0 %v733
    %2617 = vmatprep.subr.mxu0 %v730
    %2618 = vmatpush1.msra.mxu0 %v729
    %2619 = vmatprep.subr.mxu0 %v726
    %2620 = vmatpush1.msra.mxu0 %v725
    %2621 = vmatprep.subr.mxu0 %v722
    %2622 = vmatpush1.msra.mxu0 %v721
    %2623 = vmatprep.subr.mxu0 %v718
    %2624 = vmatpush1.msra.mxu0 %v717
    %2625 = vmatprep.subr.mxu0 %v714
    %2626 = vmatpush1.msra.mxu0 %v713
    %2627 = vmatprep.subr.mxu0 0.0
    %2628 = vmatpush2.msra.mxu0 0.0
    %2629 = vmatprep.subr.mxu0 0.0
    %2630 = vmatpush2.msra.mxu0 0.0
    %2631 = vmatprep.subr.mxu0 0.0
    %2632 = vmatpush2.msra.mxu0 0.0
    %2633 = vmatprep.subr.mxu0 0.0
    %2634 = vmatpush2.msra.mxu0 0.0
    %2635 = vmatprep.subr.mxu0 0.0
    %2636 = vmatpush2.msra.mxu0 0.0
    %2637 = vmatprep.subr.mxu0 0.0
    %2638 = vmatpush2.msra.mxu0 0.0
    %2639 = vmatprep.subr.mxu0 0.0
    %2640 = vmatpush2.msra.mxu0 0.0
    %2641 = vmatprep.subr.mxu0 0.0
    %2642 = vmatpush2.msra.mxu0 0.0
    %2643 = vmatprep.subr.mxu0 0.0
    %2644 = vmatpush2.msra.mxu0 0.0
    %2645 = vmatprep.subr.mxu0 0.0
    %2646 = vmatpush2.msra.mxu0 0.0
    %2647 = vmatprep.subr.mxu0 0.0
    %2648 = vmatpush2.msra.mxu0 0.0
    %2649 = vmatprep.subr.mxu0 0.0
    %2650 = vmatpush2.msra.mxu0 0.0
    %2651 = vmatprep.subr.mxu0 0.0
    %2652 = vmatpush2.msra.mxu0 0.0
    %2653 = vmatprep.subr.mxu0 0.0
    %2654 = vmatpush2.msra.mxu0 0.0
    %2655 = vmatprep.subr.mxu0 0.0
    %2656 = vmatpush2.msra.mxu0 0.0
    %2657 = vmatprep.subr.mxu0 0.0
    %2658 = vmatpush2.msra.mxu0 0.0
    %2659 = vmatprep.mubr.f32.mxu0 0.0
    %2660 = vmatmul.mubr.f32.gmra.mxu0 %v2026
    %v2661 = vpop.f32.mrf.mxu0
    %v2662 = vadd.f32 0.0, %v2661
    %v2663 = vpop.f32.mrf.mxu0
    %v2664 = vadd.f32 0.0, %v2663
    %2665 = vdwg.mxu0
    %v2667 = vrot.slane %v2523, 4
    %2669 = vmatprep.subr.mxu0 %v708
    %2670 = vmatpush1.msra.mxu0 %v707
    %2671 = vmatprep.subr.mxu0 %v704
    %2672 = vmatpush1.msra.mxu0 %v703
    %2673 = vmatprep.subr.mxu0 %v700
    %2674 = vmatpush1.msra.mxu0 %v699
    %2675 = vmatprep.subr.mxu0 %v696
    %2676 = vmatpush1.msra.mxu0 %v695
    %2677 = vmatprep.subr.mxu0 %v692
    %2678 = vmatpush1.msra.mxu0 %v691
    %2679 = vmatprep.subr.mxu0 %v688
    %2680 = vmatpush1.msra.mxu0 %v687
    %2681 = vmatprep.subr.mxu0 %v684
    %2682 = vmatpush1.msra.mxu0 %v683
    %2683 = vmatprep.subr.mxu0 %v680
    %2684 = vmatpush1.msra.mxu0 %v679
    %2685 = vmatprep.subr.mxu0 %v676
    %2686 = vmatpush1.msra.mxu0 %v675
    %2687 = vmatprep.subr.mxu0 %v672
    %2688 = vmatpush1.msra.mxu0 %v671
    %2689 = vmatprep.subr.mxu0 %v668
    %2690 = vmatpush1.msra.mxu0 %v667
    %2691 = vmatprep.subr.mxu0 %v664
    %2692 = vmatpush1.msra.mxu0 %v663
    %2693 = vmatprep.subr.mxu0 %v660
    %2694 = vmatpush1.msra.mxu0 %v659
    %2695 = vmatprep.subr.mxu0 %v656
    %2696 = vmatpush1.msra.mxu0 %v655
    %2697 = vmatprep.subr.mxu0 %v652
    %2698 = vmatpush1.msra.mxu0 %v651
    %2699 = vmatprep.subr.mxu0 %v648
    %2700 = vmatpush1.msra.mxu0 %v647
    %2701 = vmatprep.subr.mxu0 0.0
    %2702 = vmatpush2.msra.mxu0 0.0
    %2703 = vmatprep.subr.mxu0 0.0
    %2704 = vmatpush2.msra.mxu0 0.0
    %2705 = vmatprep.subr.mxu0 0.0
    %2706 = vmatpush2.msra.mxu0 0.0
    %2707 = vmatprep.subr.mxu0 0.0
    %2708 = vmatpush2.msra.mxu0 0.0
    %2709 = vmatprep.subr.mxu0 0.0
    %2710 = vmatpush2.msra.mxu0 0.0
    %2711 = vmatprep.subr.mxu0 0.0
    %2712 = vmatpush2.msra.mxu0 0.0
    %2713 = vmatprep.subr.mxu0 0.0
    %2714 = vmatpush2.msra.mxu0 0.0
    %2715 = vmatprep.subr.mxu0 0.0
    %2716 = vmatpush2.msra.mxu0 0.0
    %2717 = vmatprep.subr.mxu0 0.0
    %2718 = vmatpush2.msra.mxu0 0.0
    %2719 = vmatprep.subr.mxu0 0.0
    %2720 = vmatpush2.msra.mxu0 0.0
    %2721 = vmatprep.subr.mxu0 0.0
    %2722 = vmatpush2.msra.mxu0 0.0
    %2723 = vmatprep.subr.mxu0 0.0
    %2724 = vmatpush2.msra.mxu0 0.0
    %2725 = vmatprep.subr.mxu0 0.0
    %2726 = vmatpush2.msra.mxu0 0.0
    %2727 = vmatprep.subr.mxu0 0.0
    %2728 = vmatpush2.msra.mxu0 0.0
    %2729 = vmatprep.subr.mxu0 0.0
    %2730 = vmatpush2.msra.mxu0 0.0
    %2731 = vmatprep.subr.mxu0 0.0
    %2732 = vmatpush2.msra.mxu0 0.0
    %2733 = vmatprep.mubr.f32.mxu0 0.0
    %2734 = vmatmul.mubr.f32.gmra.mxu0 %v2667
    %v2735 = vpop.f32.mrf.mxu0
    %v2736 = vadd.f32 %v2591, %v2735
    %v2737 = vpop.f32.mrf.mxu0
    %v2738 = vadd.f32 %v2593, %v2737
    %2739 = vdwg.mxu0
    %2740 = vmatprep.subr.mxu0 %v710
    %2741 = vmatpush1.msra.mxu0 %v709
    %2742 = vmatprep.subr.mxu0 %v706
    %2743 = vmatpush1.msra.mxu0 %v705
    %2744 = vmatprep.subr.mxu0 %v702
    %2745 = vmatpush1.msra.mxu0 %v701
    %2746 = vmatprep.subr.mxu0 %v698
    %2747 = vmatpush1.msra.mxu0 %v697
    %2748 = vmatprep.subr.mxu0 %v694
    %2749 = vmatpush1.msra.mxu0 %v693
    %2750 = vmatprep.subr.mxu0 %v690
    %2751 = vmatpush1.msra.mxu0 %v689
    %2752 = vmatprep.subr.mxu0 %v686
    %2753 = vmatpush1.msra.mxu0 %v685
    %2754 = vmatprep.subr.mxu0 %v682
    %2755 = vmatpush1.msra.mxu0 %v681
    %2756 = vmatprep.subr.mxu0 %v678
    %2757 = vmatpush1.msra.mxu0 %v677
    %2758 = vmatprep.subr.mxu0 %v674
    %2759 = vmatpush1.msra.mxu0 %v673
    %2760 = vmatprep.subr.mxu0 %v670
    %2761 = vmatpush1.msra.mxu0 %v669
    %2762 = vmatprep.subr.mxu0 %v666
    %2763 = vmatpush1.msra.mxu0 %v665
    %2764 = vmatprep.subr.mxu0 %v662
    %2765 = vmatpush1.msra.mxu0 %v661
    %2766 = vmatprep.subr.mxu0 %v658
    %2767 = vmatpush1.msra.mxu0 %v657
    %2768 = vmatprep.subr.mxu0 %v654
    %2769 = vmatpush1.msra.mxu0 %v653
    %2770 = vmatprep.subr.mxu0 %v650
    %2771 = vmatpush1.msra.mxu0 %v649
    %2772 = vmatprep.subr.mxu0 0.0
    %2773 = vmatpush2.msra.mxu0 0.0
    %2774 = vmatprep.subr.mxu0 0.0
    %2775 = vmatpush2.msra.mxu0 0.0
    %2776 = vmatprep.subr.mxu0 0.0
    %2777 = vmatpush2.msra.mxu0 0.0
    %2778 = vmatprep.subr.mxu0 0.0
    %2779 = vmatpush2.msra.mxu0 0.0
    %2780 = vmatprep.subr.mxu0 0.0
    %2781 = vmatpush2.msra.mxu0 0.0
    %2782 = vmatprep.subr.mxu0 0.0
    %2783 = vmatpush2.msra.mxu0 0.0
    %2784 = vmatprep.subr.mxu0 0.0
    %2785 = vmatpush2.msra.mxu0 0.0
    %2786 = vmatprep.subr.mxu0 0.0
    %2787 = vmatpush2.msra.mxu0 0.0
    %2788 = vmatprep.subr.mxu0 0.0
    %2789 = vmatpush2.msra.mxu0 0.0
    %2790 = vmatprep.subr.mxu0 0.0
    %2791 = vmatpush2.msra.mxu0 0.0
    %2792 = vmatprep.subr.mxu0 0.0
    %2793 = vmatpush2.msra.mxu0 0.0
    %2794 = vmatprep.subr.mxu0 0.0
    %2795 = vmatpush2.msra.mxu0 0.0
    %2796 = vmatprep.subr.mxu0 0.0
    %2797 = vmatpush2.msra.mxu0 0.0
    %2798 = vmatprep.subr.mxu0 0.0
    %2799 = vmatpush2.msra.mxu0 0.0
    %2800 = vmatprep.subr.mxu0 0.0
    %2801 = vmatpush2.msra.mxu0 0.0
    %2802 = vmatprep.subr.mxu0 0.0
    %2803 = vmatpush2.msra.mxu0 0.0
    %2804 = vmatprep.mubr.f32.mxu0 0.0
    %2805 = vmatmul.mubr.f32.gmra.mxu0 %v2667
    %v2806 = vpop.f32.mrf.mxu0
    %v2807 = vadd.f32 %v2662, %v2806
    %v2808 = vpop.f32.mrf.mxu0
    %v2809 = vadd.f32 %v2664, %v2808
    %2810 = vdwg.mxu0
    %v2811 = vadd.f32 %v2736, %v374
    %v2812 = vadd.f32 %v2738, %v378
    %v2813 = vadd.f32 %v2807, %v382
    %v2814 = vadd.f32 %v2809, %v386
    %v2815 = vxor.u32 %v2811, 2147483648
    %v2816 = vxor.u32 %v2812, 2147483648
    %v2817 = vxor.u32 %v2813, 2147483648
    %v2818 = vmul.f32 %v2815, 1.442695
    %v2819 = vpow.pop %v2818
    %v2820 = vmul.f32 %v2816, 1.442695
    %v2821 = vpow.pop %v2820
    %v2822 = vmul.f32 %v2817, 1.442695
    %v2823 = vpow.pop %v2822
    %v2824 = vadd.f32 %v2819, 1.0
    %v2825 = vadd.f32 %v2821, 1.0
    %v2826 = vadd.f32 %v2823, 1.0
    %v2827 = vrcp.pop %v2824
    %v2828 = vmul.f32 1.0, %v2827
    %v2829 = vrcp.pop %v2825
    %v2830 = vmul.f32 1.0, %v2829
    %v2831 = vrcp.pop %v2826
    %v2832 = vmul.f32 1.0, %v2831
    %v2833 = vtanh.pop %v2814
    %v2834 = vmul.f32 %v2830, %v2024
    %v2835 = vmul.f32 %v2828, %v2833
    %v2836 = vadd.f32 %v2834, %v2835
    %v2837 = vtanh.pop %v2836
    %v2838 = vmul.f32 %v2832, %v2837
    %2839 = vmatprep.subr.mxu0 %v1212
    %2840 = vmatpush1.msra.mxu0 %v1211
    %2841 = vmatprep.subr.mxu0 %v1208
    %2842 = vmatpush1.msra.mxu0 %v1207
    %2843 = vmatprep.subr.mxu0 %v1204
    %2844 = vmatpush1.msra.mxu0 %v1203
    %2845 = vmatprep.subr.mxu0 %v1200
    %2846 = vmatpush1.msra.mxu0 %v1199
    %2847 = vmatprep.subr.mxu0 %v1196
    %2848 = vmatpush1.msra.mxu0 %v1195
    %2849 = vmatprep.subr.mxu0 %v1192
    %2850 = vmatpush1.msra.mxu0 %v1191
    %2851 = vmatprep.subr.mxu0 %v1188
    %2852 = vmatpush1.msra.mxu0 %v1187
    %2853 = vmatprep.subr.mxu0 %v1184
    %2854 = vmatpush1.msra.mxu0 %v1183
    %2855 = vmatprep.subr.mxu0 %v1180
    %2856 = vmatpush1.msra.mxu0 %v1179
    %2857 = vmatprep.subr.mxu0 %v1176
    %2858 = vmatpush1.msra.mxu0 %v1175
    %2859 = vmatprep.subr.mxu0 %v1172
    %2860 = vmatpush1.msra.mxu0 %v1171
    %2861 = vmatprep.subr.mxu0 %v1168
    %2862 = vmatpush1.msra.mxu0 %v1167
    %2863 = vmatprep.subr.mxu0 %v1164
    %2864 = vmatpush1.msra.mxu0 %v1163
    %2865 = vmatprep.subr.mxu0 %v1160
    %2866 = vmatpush1.msra.mxu0 %v1159
    %2867 = vmatprep.subr.mxu0 %v1156
    %2868 = vmatpush1.msra.mxu0 %v1155
    %2869 = vmatprep.subr.mxu0 %v1152
    %2870 = vmatpush1.msra.mxu0 %v1151
    %2871 = vmatprep.subr.mxu0 0.0
    %2872 = vmatpush2.msra.mxu0 0.0
    %2873 = vmatprep.subr.mxu0 0.0
    %2874 = vmatpush2.msra.mxu0 0.0
    %2875 = vmatprep.subr.mxu0 0.0
    %2876 = vmatpush2.msra.mxu0 0.0
    %2877 = vmatprep.subr.mxu0 0.0
    %2878 = vmatpush2.msra.mxu0 0.0
    %2879 = vmatprep.subr.mxu0 0.0
    %2880 = vmatpush2.msra.mxu0 0.0
    %2881 = vmatprep.subr.mxu0 0.0
    %2882 = vmatpush2.msra.mxu0 0.0
    %2883 = vmatprep.subr.mxu0 0.0
    %2884 = vmatpush2.msra.mxu0 0.0
    %2885 = vmatprep.subr.mxu0 0.0
    %2886 = vmatpush2.msra.mxu0 0.0
    %2887 = vmatprep.subr.mxu0 0.0
    %2888 = vmatpush2.msra.mxu0 0.0
    %2889 = vmatprep.subr.mxu0 0.0
    %2890 = vmatpush2.msra.mxu0 0.0
    %2891 = vmatprep.subr.mxu0 0.0
    %2892 = vmatpush2.msra.mxu0 0.0
    %2893 = vmatprep.subr.mxu0 0.0
    %2894 = vmatpush2.msra.mxu0 0.0
    %2895 = vmatprep.subr.mxu0 0.0
    %2896 = vmatpush2.msra.mxu0 0.0
    %2897 = vmatprep.subr.mxu0 0.0
    %2898 = vmatpush2.msra.mxu0 0.0
    %2899 = vmatprep.subr.mxu0 0.0
    %2900 = vmatpush2.msra.mxu0 0.0
    %2901 = vmatprep.subr.mxu0 0.0
    %2902 = vmatpush2.msra.mxu0 0.0
    %2903 = vmatprep.mubr.f32.mxu0 0.0
    %2904 = vmatmul.mubr.f32.gmra.mxu0 %v2338
    %v2905 = vpop.f32.mrf.mxu0
    %v2906 = vadd.f32 0.0, %v2905
    %v2907 = vpop.f32.mrf.mxu0
    %v2908 = vadd.f32 0.0, %v2907
    %2909 = vdwg.mxu0
    %2910 = vmatprep.subr.mxu0 %v1214
    %2911 = vmatpush1.msra.mxu0 %v1213
    %2912 = vmatprep.subr.mxu0 %v1210
    %2913 = vmatpush1.msra.mxu0 %v1209
    %2914 = vmatprep.subr.mxu0 %v1206
    %2915 = vmatpush1.msra.mxu0 %v1205
    %2916 = vmatprep.subr.mxu0 %v1202
    %2917 = vmatpush1.msra.mxu0 %v1201
    %2918 = vmatprep.subr.mxu0 %v1198
    %2919 = vmatpush1.msra.mxu0 %v1197
    %2920 = vmatprep.subr.mxu0 %v1194
    %2921 = vmatpush1.msra.mxu0 %v1193
    %2922 = vmatprep.subr.mxu0 %v1190
    %2923 = vmatpush1.msra.mxu0 %v1189
    %2924 = vmatprep.subr.mxu0 %v1186
    %2925 = vmatpush1.msra.mxu0 %v1185
    %2926 = vmatprep.subr.mxu0 %v1182
    %2927 = vmatpush1.msra.mxu0 %v1181
    %2928 = vmatprep.subr.mxu0 %v1178
    %2929 = vmatpush1.msra.mxu0 %v1177
    %2930 = vmatprep.subr.mxu0 %v1174
    %2931 = vmatpush1.msra.mxu0 %v1173
    %2932 = vmatprep.subr.mxu0 %v1170
    %2933 = vmatpush1.msra.mxu0 %v1169
    %2934 = vmatprep.subr.mxu0 %v1166
    %2935 = vmatpush1.msra.mxu0 %v1165
    %2936 = vmatprep.subr.mxu0 %v1162
    %2937 = vmatpush1.msra.mxu0 %v1161
    %2938 = vmatprep.subr.mxu0 %v1158
    %2939 = vmatpush1.msra.mxu0 %v1157
    %2940 = vmatprep.subr.mxu0 %v1154
    %2941 = vmatpush1.msra.mxu0 %v1153
    %2942 = vmatprep.subr.mxu0 0.0
    %2943 = vmatpush2.msra.mxu0 0.0
    %2944 = vmatprep.subr.mxu0 0.0
    %2945 = vmatpush2.msra.mxu0 0.0
    %2946 = vmatprep.subr.mxu0 0.0
    %2947 = vmatpush2.msra.mxu0 0.0
    %2948 = vmatprep.subr.mxu0 0.0
    %2949 = vmatpush2.msra.mxu0 0.0
    %2950 = vmatprep.subr.mxu0 0.0
    %2951 = vmatpush2.msra.mxu0 0.0
    %2952 = vmatprep.subr.mxu0 0.0
    %2953 = vmatpush2.msra.mxu0 0.0
    %2954 = vmatprep.subr.mxu0 0.0
    %2955 = vmatpush2.msra.mxu0 0.0
    %2956 = vmatprep.subr.mxu0 0.0
    %2957 = vmatpush2.msra.mxu0 0.0
    %2958 = vmatprep.subr.mxu0 0.0
    %2959 = vmatpush2.msra.mxu0 0.0
    %2960 = vmatprep.subr.mxu0 0.0
    %2961 = vmatpush2.msra.mxu0 0.0
    %2962 = vmatprep.subr.mxu0 0.0
    %2963 = vmatpush2.msra.mxu0 0.0
    %2964 = vmatprep.subr.mxu0 0.0
    %2965 = vmatpush2.msra.mxu0 0.0
    %2966 = vmatprep.subr.mxu0 0.0
    %2967 = vmatpush2.msra.mxu0 0.0
    %2968 = vmatprep.subr.mxu0 0.0
    %2969 = vmatpush2.msra.mxu0 0.0
    %2970 = vmatprep.subr.mxu0 0.0
    %2971 = vmatpush2.msra.mxu0 0.0
    %2972 = vmatprep.subr.mxu0 0.0
    %2973 = vmatpush2.msra.mxu0 0.0
    %2974 = vmatprep.mubr.f32.mxu0 0.0
    %2975 = vmatmul.mubr.f32.gmra.mxu0 %v2338
    %v2976 = vpop.f32.mrf.mxu0
    %v2977 = vadd.f32 0.0, %v2976
    %v2978 = vpop.f32.mrf.mxu0
    %v2979 = vadd.f32 0.0, %v2978
    %2980 = vdwg.mxu0
    %2981 = vmatprep.subr.mxu0 %v1148
    %2982 = vmatpush1.msra.mxu0 %v1147
    %2983 = vmatprep.subr.mxu0 %v1144
    %2984 = vmatpush1.msra.mxu0 %v1143
    %2985 = vmatprep.subr.mxu0 %v1140
    %2986 = vmatpush1.msra.mxu0 %v1139
    %2987 = vmatprep.subr.mxu0 %v1136
    %2988 = vmatpush1.msra.mxu0 %v1135
    %2989 = vmatprep.subr.mxu0 %v1132
    %2990 = vmatpush1.msra.mxu0 %v1131
    %2991 = vmatprep.subr.mxu0 %v1128
    %2992 = vmatpush1.msra.mxu0 %v1127
    %2993 = vmatprep.subr.mxu0 %v1124
    %2994 = vmatpush1.msra.mxu0 %v1123
    %2995 = vmatprep.subr.mxu0 %v1120
    %2996 = vmatpush1.msra.mxu0 %v1119
    %2997 = vmatprep.subr.mxu0 %v1116
    %2998 = vmatpush1.msra.mxu0 %v1115
    %2999 = vmatprep.subr.mxu0 %v1112
    %3000 = vmatpush1.msra.mxu0 %v1111
    %3001 = vmatprep.subr.mxu0 %v1108
    %3002 = vmatpush1.msra.mxu0 %v1107
    %3003 = vmatprep.subr.mxu0 %v1104
    %3004 = vmatpush1.msra.mxu0 %v1103
    %3005 = vmatprep.subr.mxu0 %v1100
    %3006 = vmatpush1.msra.mxu0 %v1099
    %3007 = vmatprep.subr.mxu0 %v1096
    %3008 = vmatpush1.msra.mxu0 %v1095
    %3009 = vmatprep.subr.mxu0 %v1092
    %3010 = vmatpush1.msra.mxu0 %v1091
    %3011 = vmatprep.subr.mxu0 %v1088
    %3012 = vmatpush1.msra.mxu0 %v1087
    %3013 = vmatprep.subr.mxu0 0.0
    %3014 = vmatpush2.msra.mxu0 0.0
    %3015 = vmatprep.subr.mxu0 0.0
    %3016 = vmatpush2.msra.mxu0 0.0
    %3017 = vmatprep.subr.mxu0 0.0
    %3018 = vmatpush2.msra.mxu0 0.0
    %3019 = vmatprep.subr.mxu0 0.0
    %3020 = vmatpush2.msra.mxu0 0.0
    %3021 = vmatprep.subr.mxu0 0.0
    %3022 = vmatpush2.msra.mxu0 0.0
    %3023 = vmatprep.subr.mxu0 0.0
    %3024 = vmatpush2.msra.mxu0 0.0
    %3025 = vmatprep.subr.mxu0 0.0
    %3026 = vmatpush2.msra.mxu0 0.0
    %3027 = vmatprep.subr.mxu0 0.0
    %3028 = vmatpush2.msra.mxu0 0.0
    %3029 = vmatprep.subr.mxu0 0.0
    %3030 = vmatpush2.msra.mxu0 0.0
    %3031 = vmatprep.subr.mxu0 0.0
    %3032 = vmatpush2.msra.mxu0 0.0
    %3033 = vmatprep.subr.mxu0 0.0
    %3034 = vmatpush2.msra.mxu0 0.0
    %3035 = vmatprep.subr.mxu0 0.0
    %3036 = vmatpush2.msra.mxu0 0.0
    %3037 = vmatprep.subr.mxu0 0.0
    %3038 = vmatpush2.msra.mxu0 0.0
    %3039 = vmatprep.subr.mxu0 0.0
    %3040 = vmatpush2.msra.mxu0 0.0
    %3041 = vmatprep.subr.mxu0 0.0
    %3042 = vmatpush2.msra.mxu0 0.0
    %3043 = vmatprep.subr.mxu0 0.0
    %3044 = vmatpush2.msra.mxu0 0.0
    %3045 = vmatprep.mubr.f32.mxu0 0.0
    %3046 = vmatmul.mubr.f32.gmra.mxu0 %v2838
    %v3047 = vpop.f32.mrf.mxu0
    %v3048 = vadd.f32 %v2906, %v3047
    %v3049 = vpop.f32.mrf.mxu0
    %v3050 = vadd.f32 %v2908, %v3049
    %3051 = vdwg.mxu0
    %3052 = vmatprep.subr.mxu0 %v1150
    %3053 = vmatpush1.msra.mxu0 %v1149
    %3054 = vmatprep.subr.mxu0 %v1146
    %3055 = vmatpush1.msra.mxu0 %v1145
    %3056 = vmatprep.subr.mxu0 %v1142
    %3057 = vmatpush1.msra.mxu0 %v1141
    %3058 = vmatprep.subr.mxu0 %v1138
    %3059 = vmatpush1.msra.mxu0 %v1137
    %3060 = vmatprep.subr.mxu0 %v1134
    %3061 = vmatpush1.msra.mxu0 %v1133
    %3062 = vmatprep.subr.mxu0 %v1130
    %3063 = vmatpush1.msra.mxu0 %v1129
    %3064 = vmatprep.subr.mxu0 %v1126
    %3065 = vmatpush1.msra.mxu0 %v1125
    %3066 = vmatprep.subr.mxu0 %v1122
    %3067 = vmatpush1.msra.mxu0 %v1121
    %3068 = vmatprep.subr.mxu0 %v1118
    %3069 = vmatpush1.msra.mxu0 %v1117
    %3070 = vmatprep.subr.mxu0 %v1114
    %3071 = vmatpush1.msra.mxu0 %v1113
    %3072 = vmatprep.subr.mxu0 %v1110
    %3073 = vmatpush1.msra.mxu0 %v1109
    %3074 = vmatprep.subr.mxu0 %v1106
    %3075 = vmatpush1.msra.mxu0 %v1105
    %3076 = vmatprep.subr.mxu0 %v1102
    %3077 = vmatpush1.msra.mxu0 %v1101
    %3078 = vmatprep.subr.mxu0 %v1098
    %3079 = vmatpush1.msra.mxu0 %v1097
    %3080 = vmatprep.subr.mxu0 %v1094
    %3081 = vmatpush1.msra.mxu0 %v1093
    %3082 = vmatprep.subr.mxu0 %v1090
    %3083 = vmatpush1.msra.mxu0 %v1089
    %3084 = vmatprep.subr.mxu0 0.0
    %3085 = vmatpush2.msra.mxu0 0.0
    %3086 = vmatprep.subr.mxu0 0.0
    %3087 = vmatpush2.msra.mxu0 0.0
    %3088 = vmatprep.subr.mxu0 0.0
    %3089 = vmatpush2.msra.mxu0 0.0
    %3090 = vmatprep.subr.mxu0 0.0
    %3091 = vmatpush2.msra.mxu0 0.0
    %3092 = vmatprep.subr.mxu0 0.0
    %3093 = vmatpush2.msra.mxu0 0.0
    %3094 = vmatprep.subr.mxu0 0.0
    %3095 = vmatpush2.msra.mxu0 0.0
    %3096 = vmatprep.subr.mxu0 0.0
    %3097 = vmatpush2.msra.mxu0 0.0
    %3098 = vmatprep.subr.mxu0 0.0
    %3099 = vmatpush2.msra.mxu0 0.0
    %3100 = vmatprep.subr.mxu0 0.0
    %3101 = vmatpush2.msra.mxu0 0.0
    %3102 = vmatprep.subr.mxu0 0.0
    %3103 = vmatpush2.msra.mxu0 0.0
    %3104 = vmatprep.subr.mxu0 0.0
    %3105 = vmatpush2.msra.mxu0 0.0
    %3106 = vmatprep.subr.mxu0 0.0
    %3107 = vmatpush2.msra.mxu0 0.0
    %3108 = vmatprep.subr.mxu0 0.0
    %3109 = vmatpush2.msra.mxu0 0.0
    %3110 = vmatprep.subr.mxu0 0.0
    %3111 = vmatpush2.msra.mxu0 0.0
    %3112 = vmatprep.subr.mxu0 0.0
    %3113 = vmatpush2.msra.mxu0 0.0
    %3114 = vmatprep.subr.mxu0 0.0
    %3115 = vmatpush2.msra.mxu0 0.0
    %3116 = vmatprep.mubr.f32.mxu0 0.0
    %3117 = vmatmul.mubr.f32.gmra.mxu0 %v2838
    %v3118 = vpop.f32.mrf.mxu0
    %v3119 = vadd.f32 %v2977, %v3118
    %v3120 = vpop.f32.mrf.mxu0
    %v3121 = vadd.f32 %v2979, %v3120
    %3122 = vdwg.mxu0
    %v3123 = vadd.f32 %v3048, %v396
    %v3124 = vadd.f32 %v3050, %v400
    %v3125 = vadd.f32 %v3119, %v404
    %v3126 = vadd.f32 %v3121, %v408
    %v3127 = vxor.u32 %v3123, 2147483648
    %v3128 = vxor.u32 %v3124, 2147483648
    %v3129 = vxor.u32 %v3125, 2147483648
    %v3130 = vmul.f32 %v3127, 1.442695
    %v3131 = vpow.pop %v3130
    %v3132 = vmul.f32 %v3128, 1.442695
    %v3133 = vpow.pop %v3132
    %v3134 = vmul.f32 %v3129, 1.442695
    %v3135 = vpow.pop %v3134
    %v3136 = vadd.f32 %v3131, 1.0
    %v3137 = vadd.f32 %v3133, 1.0
    %v3138 = vadd.f32 %v3135, 1.0
    %v3139 = vrcp.pop %v3136
    %v3140 = vmul.f32 1.0, %v3139
    %v3141 = vrcp.pop %v3137
    %v3142 = vmul.f32 1.0, %v3141
    %v3143 = vrcp.pop %v3138
    %v3144 = vmul.f32 1.0, %v3143
    %v3145 = vtanh.pop %v3126
    %v3146 = vmul.f32 %v3142, %v2336
    %v3147 = vmul.f32 %v3140, %v3145
    %v3148 = vadd.f32 %v3146, %v3147
    %v3149 = vtanh.pop %v3148
    %v3150 = vmul.f32 %v3144, %v3149
    %3151 = vmatprep.subr.mxu0 %v474
    %3152 = vmatpush1.msra.mxu0 %v473
    %3153 = vmatprep.subr.mxu0 %v470
    %3154 = vmatpush1.msra.mxu0 %v469
    %3155 = vmatprep.subr.mxu0 %v466
    %3156 = vmatpush1.msra.mxu0 %v465
    %3157 = vmatprep.subr.mxu0 %v462
    %3158 = vmatpush1.msra.mxu0 %v461
    %3159 = vmatprep.subr.mxu0 %v458
    %3160 = vmatpush1.msra.mxu0 %v457
    %3161 = vmatprep.subr.mxu0 %v454
    %3162 = vmatpush1.msra.mxu0 %v453
    %3163 = vmatprep.subr.mxu0 %v450
    %3164 = vmatpush1.msra.mxu0 %v449
    %3165 = vmatprep.subr.mxu0 %v446
    %3166 = vmatpush1.msra.mxu0 %v445
    %3167 = vmatprep.subr.mxu0 %v442
    %3168 = vmatpush1.msra.mxu0 %v441
    %3169 = vmatprep.subr.mxu0 %v438
    %3170 = vmatpush1.msra.mxu0 %v437
    %3171 = vmatprep.subr.mxu0 %v434
    %3172 = vmatpush1.msra.mxu0 %v433
    %3173 = vmatprep.subr.mxu0 %v430
    %3174 = vmatpush1.msra.mxu0 %v429
    %3175 = vmatprep.subr.mxu0 %v426
    %3176 = vmatpush1.msra.mxu0 %v425
    %3177 = vmatprep.subr.mxu0 %v422
    %3178 = vmatpush1.msra.mxu0 %v421
    %3179 = vmatprep.subr.mxu0 %v418
    %3180 = vmatpush1.msra.mxu0 %v417
    %3181 = vmatprep.subr.mxu0 %v414
    %3182 = vmatpush1.msra.mxu0 %v413
    %3183 = vmatprep.subr.mxu0 0.0
    %3184 = vmatpush2.msra.mxu0 0.0
    %3185 = vmatprep.subr.mxu0 0.0
    %3186 = vmatpush2.msra.mxu0 0.0
    %3187 = vmatprep.subr.mxu0 0.0
    %3188 = vmatpush2.msra.mxu0 0.0
    %3189 = vmatprep.subr.mxu0 0.0
    %3190 = vmatpush2.msra.mxu0 0.0
    %3191 = vmatprep.subr.mxu0 0.0
    %3192 = vmatpush2.msra.mxu0 0.0
    %3193 = vmatprep.subr.mxu0 0.0
    %3194 = vmatpush2.msra.mxu0 0.0
    %3195 = vmatprep.subr.mxu0 0.0
    %3196 = vmatpush2.msra.mxu0 0.0
    %3197 = vmatprep.subr.mxu0 0.0
    %3198 = vmatpush2.msra.mxu0 0.0
    %3199 = vmatprep.subr.mxu0 0.0
    %3200 = vmatpush2.msra.mxu0 0.0
    %3201 = vmatprep.subr.mxu0 0.0
    %3202 = vmatpush2.msra.mxu0 0.0
    %3203 = vmatprep.subr.mxu0 0.0
    %3204 = vmatpush2.msra.mxu0 0.0
    %3205 = vmatprep.subr.mxu0 0.0
    %3206 = vmatpush2.msra.mxu0 0.0
    %3207 = vmatprep.subr.mxu0 0.0
    %3208 = vmatpush2.msra.mxu0 0.0
    %3209 = vmatprep.subr.mxu0 0.0
    %3210 = vmatpush2.msra.mxu0 0.0
    %3211 = vmatprep.subr.mxu0 0.0
    %3212 = vmatpush2.msra.mxu0 0.0
    %3213 = vmatprep.subr.mxu0 0.0
    %3214 = vmatpush2.msra.mxu0 0.0
    %3215 = vmatprep.mubr.f32.mxu0 0.0
    %3216 = vmatmul.mubr.f32.gmra.mxu0 %v2667
    %v3217 = vpop.f32.mrf.mxu0
    %v3218 = vadd.f32 0.0, %v3217
    %v3219 = vpop.f32.mrf.mxu0
    %v3220 = vadd.f32 0.0, %v3219
    %3221 = vdwg.mxu0
    %3222 = vmatprep.subr.mxu0 %v476
    %3223 = vmatpush1.msra.mxu0 %v475
    %3224 = vmatprep.subr.mxu0 %v472
    %3225 = vmatpush1.msra.mxu0 %v471
    %3226 = vmatprep.subr.mxu0 %v468
    %3227 = vmatpush1.msra.mxu0 %v467
    %3228 = vmatprep.subr.mxu0 %v464
    %3229 = vmatpush1.msra.mxu0 %v463
    %3230 = vmatprep.subr.mxu0 %v460
    %3231 = vmatpush1.msra.mxu0 %v459
    %3232 = vmatprep.subr.mxu0 %v456
    %3233 = vmatpush1.msra.mxu0 %v455
    %3234 = vmatprep.subr.mxu0 %v452
    %3235 = vmatpush1.msra.mxu0 %v451
    %3236 = vmatprep.subr.mxu0 %v448
    %3237 = vmatpush1.msra.mxu0 %v447
    %3238 = vmatprep.subr.mxu0 %v444
    %3239 = vmatpush1.msra.mxu0 %v443
    %3240 = vmatprep.subr.mxu0 %v440
    %3241 = vmatpush1.msra.mxu0 %v439
    %3242 = vmatprep.subr.mxu0 %v436
    %3243 = vmatpush1.msra.mxu0 %v435
    %3244 = vmatprep.subr.mxu0 %v432
    %3245 = vmatpush1.msra.mxu0 %v431
    %3246 = vmatprep.subr.mxu0 %v428
    %3247 = vmatpush1.msra.mxu0 %v427
    %3248 = vmatprep.subr.mxu0 %v424
    %3249 = vmatpush1.msra.mxu0 %v423
    %3250 = vmatprep.subr.mxu0 %v420
    %3251 = vmatpush1.msra.mxu0 %v419
    %3252 = vmatprep.subr.mxu0 %v416
    %3253 = vmatpush1.msra.mxu0 %v415
    %3254 = vmatprep.subr.mxu0 0.0
    %3255 = vmatpush2.msra.mxu0 0.0
    %3256 = vmatprep.subr.mxu0 0.0
    %3257 = vmatpush2.msra.mxu0 0.0
    %3258 = vmatprep.subr.mxu0 0.0
    %3259 = vmatpush2.msra.mxu0 0.0
    %3260 = vmatprep.subr.mxu0 0.0
    %3261 = vmatpush2.msra.mxu0 0.0
    %3262 = vmatprep.subr.mxu0 0.0
    %3263 = vmatpush2.msra.mxu0 0.0
    %3264 = vmatprep.subr.mxu0 0.0
    %3265 = vmatpush2.msra.mxu0 0.0
    %3266 = vmatprep.subr.mxu0 0.0
    %3267 = vmatpush2.msra.mxu0 0.0
    %3268 = vmatprep.subr.mxu0 0.0
    %3269 = vmatpush2.msra.mxu0 0.0
    %3270 = vmatprep.subr.mxu0 0.0
    %3271 = vmatpush2.msra.mxu0 0.0
    %3272 = vmatprep.subr.mxu0 0.0
    %3273 = vmatpush2.msra.mxu0 0.0
    %3274 = vmatprep.subr.mxu0 0.0
    %3275 = vmatpush2.msra.mxu0 0.0
    %3276 = vmatprep.subr.mxu0 0.0
    %3277 = vmatpush2.msra.mxu0 0.0
    %3278 = vmatprep.subr.mxu0 0.0
    %3279 = vmatpush2.msra.mxu0 0.0
    %3280 = vmatprep.subr.mxu0 0.0
    %3281 = vmatpush2.msra.mxu0 0.0
    %3282 = vmatprep.subr.mxu0 0.0
    %3283 = vmatpush2.msra.mxu0 0.0
    %3284 = vmatprep.subr.mxu0 0.0
    %3285 = vmatpush2.msra.mxu0 0.0
    %3286 = vmatprep.mubr.f32.mxu0 0.0
    %3287 = vmatmul.mubr.f32.gmra.mxu0 %v2667
    %v3288 = vpop.f32.mrf.mxu0
    %v3289 = vadd.f32 0.0, %v3288
    %v3290 = vpop.f32.mrf.mxu0
    %v3291 = vadd.f32 0.0, %v3290
    %3292 = vdwg.mxu0
    %v3297 = vrot.slane %v3218, 2
    %v3298 = vrot.slane %v3220, 2
    %v3299 = vrot.slane %v3289, 2
    %v3300 = vrot.slane %v3291, 2
    %v3305 = vadd.f32 %v282, %v3297
    %v3306 = vadd.f32 %v284, %v3298
    %v3307 = vadd.f32 %v359, %v3299
    %v3308 = vadd.f32 %v361, %v3300
    %v3309 = vxor.u32 %v3305, 2147483648
    %v3310 = vxor.u32 %v3306, 2147483648
    %v3311 = vxor.u32 %v3307, 2147483648
    %v3312 = vmul.f32 %v3309, 1.442695
    %v3313 = vpow.pop %v3312
    %v3314 = vmul.f32 %v3310, 1.442695
    %v3315 = vpow.pop %v3314
    %v3316 = vmul.f32 %v3311, 1.442695
    %v3317 = vpow.pop %v3316
    %v3318 = vadd.f32 %v3313, 1.0
    %v3319 = vadd.f32 %v3315, 1.0
    %v3320 = vadd.f32 %v3317, 1.0
    %v3321 = vrcp.pop %v3318
    %v3322 = vmul.f32 1.0, %v3321
    %v3323 = vrcp.pop %v3319
    %v3324 = vmul.f32 1.0, %v3323
    %v3325 = vrcp.pop %v3320
    %v3326 = vmul.f32 1.0, %v3325
    %v3327 = vtanh.pop %v3308
    %v3329 = vrot.slane %v2521, 6
    %v3331 = vmul.f32 %v3324, %v3329
    %v3332 = vmul.f32 %v3322, %v3327
    %v3333 = vadd.f32 %v3331, %v3332
    %v3334 = vtanh.pop %v3333
    %v3335 = vmul.f32 %v3326, %v3334
    %3336 = vmatprep.subr.mxu0 %v772
    %3337 = vmatpush1.msra.mxu0 %v771
    %3338 = vmatprep.subr.mxu0 %v768
    %3339 = vmatpush1.msra.mxu0 %v767
    %3340 = vmatprep.subr.mxu0 %v764
    %3341 = vmatpush1.msra.mxu0 %v763
    %3342 = vmatprep.subr.mxu0 %v760
    %3343 = vmatpush1.msra.mxu0 %v759
    %3344 = vmatprep.subr.mxu0 %v756
    %3345 = vmatpush1.msra.mxu0 %v755
    %3346 = vmatprep.subr.mxu0 %v752
    %3347 = vmatpush1.msra.mxu0 %v751
    %3348 = vmatprep.subr.mxu0 %v748
    %3349 = vmatpush1.msra.mxu0 %v747
    %3350 = vmatprep.subr.mxu0 %v744
    %3351 = vmatpush1.msra.mxu0 %v743
    %3352 = vmatprep.subr.mxu0 %v740
    %3353 = vmatpush1.msra.mxu0 %v739
    %3354 = vmatprep.subr.mxu0 %v736
    %3355 = vmatpush1.msra.mxu0 %v735
    %3356 = vmatprep.subr.mxu0 %v732
    %3357 = vmatpush1.msra.mxu0 %v731
    %3358 = vmatprep.subr.mxu0 %v728
    %3359 = vmatpush1.msra.mxu0 %v727
    %3360 = vmatprep.subr.mxu0 %v724
    %3361 = vmatpush1.msra.mxu0 %v723
    %3362 = vmatprep.subr.mxu0 %v720
    %3363 = vmatpush1.msra.mxu0 %v719
    %3364 = vmatprep.subr.mxu0 %v716
    %3365 = vmatpush1.msra.mxu0 %v715
    %3366 = vmatprep.subr.mxu0 %v712
    %3367 = vmatpush1.msra.mxu0 %v711
    %3368 = vmatprep.subr.mxu0 0.0
    %3369 = vmatpush2.msra.mxu0 0.0
    %3370 = vmatprep.subr.mxu0 0.0
    %3371 = vmatpush2.msra.mxu0 0.0
    %3372 = vmatprep.subr.mxu0 0.0
    %3373 = vmatpush2.msra.mxu0 0.0
    %3374 = vmatprep.subr.mxu0 0.0
    %3375 = vmatpush2.msra.mxu0 0.0
    %3376 = vmatprep.subr.mxu0 0.0
    %3377 = vmatpush2.msra.mxu0 0.0
    %3378 = vmatprep.subr.mxu0 0.0
    %3379 = vmatpush2.msra.mxu0 0.0
    %3380 = vmatprep.subr.mxu0 0.0
    %3381 = vmatpush2.msra.mxu0 0.0
    %3382 = vmatprep.subr.mxu0 0.0
    %3383 = vmatpush2.msra.mxu0 0.0
    %3384 = vmatprep.subr.mxu0 0.0
    %3385 = vmatpush2.msra.mxu0 0.0
    %3386 = vmatprep.subr.mxu0 0.0
    %3387 = vmatpush2.msra.mxu0 0.0
    %3388 = vmatprep.subr.mxu0 0.0
    %3389 = vmatpush2.msra.mxu0 0.0
    %3390 = vmatprep.subr.mxu0 0.0
    %3391 = vmatpush2.msra.mxu0 0.0
    %3392 = vmatprep.subr.mxu0 0.0
    %3393 = vmatpush2.msra.mxu0 0.0
    %3394 = vmatprep.subr.mxu0 0.0
    %3395 = vmatpush2.msra.mxu0 0.0
    %3396 = vmatprep.subr.mxu0 0.0
    %3397 = vmatpush2.msra.mxu0 0.0
    %3398 = vmatprep.subr.mxu0 0.0
    %3399 = vmatpush2.msra.mxu0 0.0
    %3400 = vmatprep.mubr.f32.mxu0 0.0
    %3401 = vmatmul.mubr.f32.gmra.mxu0 %v2838
    %v3402 = vpop.f32.mrf.mxu0
    %v3403 = vadd.f32 0.0, %v3402
    %v3404 = vpop.f32.mrf.mxu0
    %v3405 = vadd.f32 0.0, %v3404
    %3406 = vdwg.mxu0
    %3407 = vmatprep.subr.mxu0 %v774
    %3408 = vmatpush1.msra.mxu0 %v773
    %3409 = vmatprep.subr.mxu0 %v770
    %3410 = vmatpush1.msra.mxu0 %v769
    %3411 = vmatprep.subr.mxu0 %v766
    %3412 = vmatpush1.msra.mxu0 %v765
    %3413 = vmatprep.subr.mxu0 %v762
    %3414 = vmatpush1.msra.mxu0 %v761
    %3415 = vmatprep.subr.mxu0 %v758
    %3416 = vmatpush1.msra.mxu0 %v757
    %3417 = vmatprep.subr.mxu0 %v754
    %3418 = vmatpush1.msra.mxu0 %v753
    %3419 = vmatprep.subr.mxu0 %v750
    %3420 = vmatpush1.msra.mxu0 %v749
    %3421 = vmatprep.subr.mxu0 %v746
    %3422 = vmatpush1.msra.mxu0 %v745
    %3423 = vmatprep.subr.mxu0 %v742
    %3424 = vmatpush1.msra.mxu0 %v741
    %3425 = vmatprep.subr.mxu0 %v738
    %3426 = vmatpush1.msra.mxu0 %v737
    %3427 = vmatprep.subr.mxu0 %v734
    %3428 = vmatpush1.msra.mxu0 %v733
    %3429 = vmatprep.subr.mxu0 %v730
    %3430 = vmatpush1.msra.mxu0 %v729
    %3431 = vmatprep.subr.mxu0 %v726
    %3432 = vmatpush1.msra.mxu0 %v725
    %3433 = vmatprep.subr.mxu0 %v722
    %3434 = vmatpush1.msra.mxu0 %v721
    %3435 = vmatprep.subr.mxu0 %v718
    %3436 = vmatpush1.msra.mxu0 %v717
    %3437 = vmatprep.subr.mxu0 %v714
    %3438 = vmatpush1.msra.mxu0 %v713
    %3439 = vmatprep.subr.mxu0 0.0
    %3440 = vmatpush2.msra.mxu0 0.0
    %3441 = vmatprep.subr.mxu0 0.0
    %3442 = vmatpush2.msra.mxu0 0.0
    %3443 = vmatprep.subr.mxu0 0.0
    %3444 = vmatpush2.msra.mxu0 0.0
    %3445 = vmatprep.subr.mxu0 0.0
    %3446 = vmatpush2.msra.mxu0 0.0
    %3447 = vmatprep.subr.mxu0 0.0
    %3448 = vmatpush2.msra.mxu0 0.0
    %3449 = vmatprep.subr.mxu0 0.0
    %3450 = vmatpush2.msra.mxu0 0.0
    %3451 = vmatprep.subr.mxu0 0.0
    %3452 = vmatpush2.msra.mxu0 0.0
    %3453 = vmatprep.subr.mxu0 0.0
    %3454 = vmatpush2.msra.mxu0 0.0
    %3455 = vmatprep.subr.mxu0 0.0
    %3456 = vmatpush2.msra.mxu0 0.0
    %3457 = vmatprep.subr.mxu0 0.0
    %3458 = vmatpush2.msra.mxu0 0.0
    %3459 = vmatprep.subr.mxu0 0.0
    %3460 = vmatpush2.msra.mxu0 0.0
    %3461 = vmatprep.subr.mxu0 0.0
    %3462 = vmatpush2.msra.mxu0 0.0
    %3463 = vmatprep.subr.mxu0 0.0
    %3464 = vmatpush2.msra.mxu0 0.0
    %3465 = vmatprep.subr.mxu0 0.0
    %3466 = vmatpush2.msra.mxu0 0.0
    %3467 = vmatprep.subr.mxu0 0.0
    %3468 = vmatpush2.msra.mxu0 0.0
    %3469 = vmatprep.subr.mxu0 0.0
    %3470 = vmatpush2.msra.mxu0 0.0
    %3471 = vmatprep.mubr.f32.mxu0 0.0
    %3472 = vmatmul.mubr.f32.gmra.mxu0 %v2838
    %v3473 = vpop.f32.mrf.mxu0
    %v3474 = vadd.f32 0.0, %v3473
    %v3475 = vpop.f32.mrf.mxu0
    %v3476 = vadd.f32 0.0, %v3475
    %3477 = vdwg.mxu0
    %v3479 = vrot.slane %v3335, 6
    %3481 = vmatprep.subr.mxu0 %v708
    %3482 = vmatpush1.msra.mxu0 %v707
    %3483 = vmatprep.subr.mxu0 %v704
    %3484 = vmatpush1.msra.mxu0 %v703
    %3485 = vmatprep.subr.mxu0 %v700
    %3486 = vmatpush1.msra.mxu0 %v699
    %3487 = vmatprep.subr.mxu0 %v696
    %3488 = vmatpush1.msra.mxu0 %v695
    %3489 = vmatprep.subr.mxu0 %v692
    %3490 = vmatpush1.msra.mxu0 %v691
    %3491 = vmatprep.subr.mxu0 %v688
    %3492 = vmatpush1.msra.mxu0 %v687
    %3493 = vmatprep.subr.mxu0 %v684
    %3494 = vmatpush1.msra.mxu0 %v683
    %3495 = vmatprep.subr.mxu0 %v680
    %3496 = vmatpush1.msra.mxu0 %v679
    %3497 = vmatprep.subr.mxu0 %v676
    %3498 = vmatpush1.msra.mxu0 %v675
    %3499 = vmatprep.subr.mxu0 %v672
    %3500 = vmatpush1.msra.mxu0 %v671
    %3501 = vmatprep.subr.mxu0 %v668
    %3502 = vmatpush1.msra.mxu0 %v667
    %3503 = vmatprep.subr.mxu0 %v664
    %3504 = vmatpush1.msra.mxu0 %v663
    %3505 = vmatprep.subr.mxu0 %v660
    %3506 = vmatpush1.msra.mxu0 %v659
    %3507 = vmatprep.subr.mxu0 %v656
    %3508 = vmatpush1.msra.mxu0 %v655
    %3509 = vmatprep.subr.mxu0 %v652
    %3510 = vmatpush1.msra.mxu0 %v651
    %3511 = vmatprep.subr.mxu0 %v648
    %3512 = vmatpush1.msra.mxu0 %v647
    %3513 = vmatprep.subr.mxu0 0.0
    %3514 = vmatpush2.msra.mxu0 0.0
    %3515 = vmatprep.subr.mxu0 0.0
    %3516 = vmatpush2.msra.mxu0 0.0
    %3517 = vmatprep.subr.mxu0 0.0
    %3518 = vmatpush2.msra.mxu0 0.0
    %3519 = vmatprep.subr.mxu0 0.0
    %3520 = vmatpush2.msra.mxu0 0.0
    %3521 = vmatprep.subr.mxu0 0.0
    %3522 = vmatpush2.msra.mxu0 0.0
    %3523 = vmatprep.subr.mxu0 0.0
    %3524 = vmatpush2.msra.mxu0 0.0
    %3525 = vmatprep.subr.mxu0 0.0
    %3526 = vmatpush2.msra.mxu0 0.0
    %3527 = vmatprep.subr.mxu0 0.0
    %3528 = vmatpush2.msra.mxu0 0.0
    %3529 = vmatprep.subr.mxu0 0.0
    %3530 = vmatpush2.msra.mxu0 0.0
    %3531 = vmatprep.subr.mxu0 0.0
    %3532 = vmatpush2.msra.mxu0 0.0
    %3533 = vmatprep.subr.mxu0 0.0
    %3534 = vmatpush2.msra.mxu0 0.0
    %3535 = vmatprep.subr.mxu0 0.0
    %3536 = vmatpush2.msra.mxu0 0.0
    %3537 = vmatprep.subr.mxu0 0.0
    %3538 = vmatpush2.msra.mxu0 0.0
    %3539 = vmatprep.subr.mxu0 0.0
    %3540 = vmatpush2.msra.mxu0 0.0
    %3541 = vmatprep.subr.mxu0 0.0
    %3542 = vmatpush2.msra.mxu0 0.0
    %3543 = vmatprep.subr.mxu0 0.0
    %3544 = vmatpush2.msra.mxu0 0.0
    %3545 = vmatprep.mubr.f32.mxu0 0.0
    %3546 = vmatmul.mubr.f32.gmra.mxu0 %v3479
    %v3547 = vpop.f32.mrf.mxu0
    %v3548 = vadd.f32 %v3403, %v3547
    %v3549 = vpop.f32.mrf.mxu0
    %v3550 = vadd.f32 %v3405, %v3549
    %3551 = vdwg.mxu0
    %3552 = vmatprep.subr.mxu0 %v710
    %3553 = vmatpush1.msra.mxu0 %v709
    %3554 = vmatprep.subr.mxu0 %v706
    %3555 = vmatpush1.msra.mxu0 %v705
    %3556 = vmatprep.subr.mxu0 %v702
    %3557 = vmatpush1.msra.mxu0 %v701
    %3558 = vmatprep.subr.mxu0 %v698
    %3559 = vmatpush1.msra.mxu0 %v697
    %3560 = vmatprep.subr.mxu0 %v694
    %3561 = vmatpush1.msra.mxu0 %v693
    %3562 = vmatprep.subr.mxu0 %v690
    %3563 = vmatpush1.msra.mxu0 %v689
    %3564 = vmatprep.subr.mxu0 %v686
    %3565 = vmatpush1.msra.mxu0 %v685
    %3566 = vmatprep.subr.mxu0 %v682
    %3567 = vmatpush1.msra.mxu0 %v681
    %3568 = vmatprep.subr.mxu0 %v678
    %3569 = vmatpush1.msra.mxu0 %v677
    %3570 = vmatprep.subr.mxu0 %v674
    %3571 = vmatpush1.msra.mxu0 %v673
    %3572 = vmatprep.subr.mxu0 %v670
    %3573 = vmatpush1.msra.mxu0 %v669
    %3574 = vmatprep.subr.mxu0 %v666
    %3575 = vmatpush1.msra.mxu0 %v665
    %3576 = vmatprep.subr.mxu0 %v662
    %3577 = vmatpush1.msra.mxu0 %v661
    %3578 = vmatprep.subr.mxu0 %v658
    %3579 = vmatpush1.msra.mxu0 %v657
    %3580 = vmatprep.subr.mxu0 %v654
    %3581 = vmatpush1.msra.mxu0 %v653
    %3582 = vmatprep.subr.mxu0 %v650
    %3583 = vmatpush1.msra.mxu0 %v649
    %3584 = vmatprep.subr.mxu0 0.0
    %3585 = vmatpush2.msra.mxu0 0.0
    %3586 = vmatprep.subr.mxu0 0.0
    %3587 = vmatpush2.msra.mxu0 0.0
    %3588 = vmatprep.subr.mxu0 0.0
    %3589 = vmatpush2.msra.mxu0 0.0
    %3590 = vmatprep.subr.mxu0 0.0
    %3591 = vmatpush2.msra.mxu0 0.0
    %3592 = vmatprep.subr.mxu0 0.0
    %3593 = vmatpush2.msra.mxu0 0.0
    %3594 = vmatprep.subr.mxu0 0.0
    %3595 = vmatpush2.msra.mxu0 0.0
    %3596 = vmatprep.subr.mxu0 0.0
    %3597 = vmatpush2.msra.mxu0 0.0
    %3598 = vmatprep.subr.mxu0 0.0
    %3599 = vmatpush2.msra.mxu0 0.0
    %3600 = vmatprep.subr.mxu0 0.0
    %3601 = vmatpush2.msra.mxu0 0.0
    %3602 = vmatprep.subr.mxu0 0.0
    %3603 = vmatpush2.msra.mxu0 0.0
    %3604 = vmatprep.subr.mxu0 0.0
    %3605 = vmatpush2.msra.mxu0 0.0
    %3606 = vmatprep.subr.mxu0 0.0
    %3607 = vmatpush2.msra.mxu0 0.0
    %3608 = vmatprep.subr.mxu0 0.0
    %3609 = vmatpush2.msra.mxu0 0.0
    %3610 = vmatprep.subr.mxu0 0.0
    %3611 = vmatpush2.msra.mxu0 0.0
    %3612 = vmatprep.subr.mxu0 0.0
    %3613 = vmatpush2.msra.mxu0 0.0
    %3614 = vmatprep.subr.mxu0 0.0
    %3615 = vmatpush2.msra.mxu0 0.0
    %3616 = vmatprep.mubr.f32.mxu0 0.0
    %3617 = vmatmul.mubr.f32.gmra.mxu0 %v3479
    %v3618 = vpop.f32.mrf.mxu0
    %v3619 = vadd.f32 %v3474, %v3618
    %v3620 = vpop.f32.mrf.mxu0
    %v3621 = vadd.f32 %v3476, %v3620
    %3622 = vdwg.mxu0
    %v3623 = vadd.f32 %v3548, %v374
    %v3624 = vadd.f32 %v3550, %v378
    %v3625 = vadd.f32 %v3619, %v382
    %v3626 = vadd.f32 %v3621, %v386
    %v3627 = vxor.u32 %v3623, 2147483648
    %v3628 = vxor.u32 %v3624, 2147483648
    %v3629 = vxor.u32 %v3625, 2147483648
    %v3630 = vmul.f32 %v3627, 1.442695
    %v3631 = vpow.pop %v3630
    %v3632 = vmul.f32 %v3628, 1.442695
    %v3633 = vpow.pop %v3632
    %v3634 = vmul.f32 %v3629, 1.442695
    %v3635 = vpow.pop %v3634
    %v3636 = vadd.f32 %v3631, 1.0
    %v3637 = vadd.f32 %v3633, 1.0
    %v3638 = vadd.f32 %v3635, 1.0
    %v3639 = vrcp.pop %v3636
    %v3640 = vmul.f32 1.0, %v3639
    %v3641 = vrcp.pop %v3637
    %v3642 = vmul.f32 1.0, %v3641
    %v3643 = vrcp.pop %v3638
    %v3644 = vmul.f32 1.0, %v3643
    %v3645 = vtanh.pop %v3626
    %v3646 = vmul.f32 %v3642, %v2836
    %v3647 = vmul.f32 %v3640, %v3645
    %v3648 = vadd.f32 %v3646, %v3647
    %v3649 = vtanh.pop %v3648
    %v3650 = vmul.f32 %v3644, %v3649
    %3651 = vmatprep.subr.mxu0 %v1212
    %3652 = vmatpush1.msra.mxu0 %v1211
    %3653 = vmatprep.subr.mxu0 %v1208
    %3654 = vmatpush1.msra.mxu0 %v1207
    %3655 = vmatprep.subr.mxu0 %v1204
    %3656 = vmatpush1.msra.mxu0 %v1203
    %3657 = vmatprep.subr.mxu0 %v1200
    %3658 = vmatpush1.msra.mxu0 %v1199
    %3659 = vmatprep.subr.mxu0 %v1196
    %3660 = vmatpush1.msra.mxu0 %v1195
    %3661 = vmatprep.subr.mxu0 %v1192
    %3662 = vmatpush1.msra.mxu0 %v1191
    %3663 = vmatprep.subr.mxu0 %v1188
    %3664 = vmatpush1.msra.mxu0 %v1187
    %3665 = vmatprep.subr.mxu0 %v1184
    %3666 = vmatpush1.msra.mxu0 %v1183
    %3667 = vmatprep.subr.mxu0 %v1180
    %3668 = vmatpush1.msra.mxu0 %v1179
    %3669 = vmatprep.subr.mxu0 %v1176
    %3670 = vmatpush1.msra.mxu0 %v1175
    %3671 = vmatprep.subr.mxu0 %v1172
    %3672 = vmatpush1.msra.mxu0 %v1171
    %3673 = vmatprep.subr.mxu0 %v1168
    %3674 = vmatpush1.msra.mxu0 %v1167
    %3675 = vmatprep.subr.mxu0 %v1164
    %3676 = vmatpush1.msra.mxu0 %v1163
    %3677 = vmatprep.subr.mxu0 %v1160
    %3678 = vmatpush1.msra.mxu0 %v1159
    %3679 = vmatprep.subr.mxu0 %v1156
    %3680 = vmatpush1.msra.mxu0 %v1155
    %3681 = vmatprep.subr.mxu0 %v1152
    %3682 = vmatpush1.msra.mxu0 %v1151
    %3683 = vmatprep.subr.mxu0 0.0
    %3684 = vmatpush2.msra.mxu0 0.0
    %3685 = vmatprep.subr.mxu0 0.0
    %3686 = vmatpush2.msra.mxu0 0.0
    %3687 = vmatprep.subr.mxu0 0.0
    %3688 = vmatpush2.msra.mxu0 0.0
    %3689 = vmatprep.subr.mxu0 0.0
    %3690 = vmatpush2.msra.mxu0 0.0
    %3691 = vmatprep.subr.mxu0 0.0
    %3692 = vmatpush2.msra.mxu0 0.0
    %3693 = vmatprep.subr.mxu0 0.0
    %3694 = vmatpush2.msra.mxu0 0.0
    %3695 = vmatprep.subr.mxu0 0.0
    %3696 = vmatpush2.msra.mxu0 0.0
    %3697 = vmatprep.subr.mxu0 0.0
    %3698 = vmatpush2.msra.mxu0 0.0
    %3699 = vmatprep.subr.mxu0 0.0
    %3700 = vmatpush2.msra.mxu0 0.0
    %3701 = vmatprep.subr.mxu0 0.0
    %3702 = vmatpush2.msra.mxu0 0.0
    %3703 = vmatprep.subr.mxu0 0.0
    %3704 = vmatpush2.msra.mxu0 0.0
    %3705 = vmatprep.subr.mxu0 0.0
    %3706 = vmatpush2.msra.mxu0 0.0
    %3707 = vmatprep.subr.mxu0 0.0
    %3708 = vmatpush2.msra.mxu0 0.0
    %3709 = vmatprep.subr.mxu0 0.0
    %3710 = vmatpush2.msra.mxu0 0.0
    %3711 = vmatprep.subr.mxu0 0.0
    %3712 = vmatpush2.msra.mxu0 0.0
    %3713 = vmatprep.subr.mxu0 0.0
    %3714 = vmatpush2.msra.mxu0 0.0
    %3715 = vmatprep.mubr.f32.mxu0 0.0
    %3716 = vmatmul.mubr.f32.gmra.mxu0 %v3150
    %v3717 = vpop.f32.mrf.mxu0
    %v3718 = vadd.f32 0.0, %v3717
    %v3719 = vpop.f32.mrf.mxu0
    %v3720 = vadd.f32 0.0, %v3719
    %3721 = vdwg.mxu0
    %3722 = vmatprep.subr.mxu0 %v1214
    %3723 = vmatpush1.msra.mxu0 %v1213
    %3724 = vmatprep.subr.mxu0 %v1210
    %3725 = vmatpush1.msra.mxu0 %v1209
    %3726 = vmatprep.subr.mxu0 %v1206
    %3727 = vmatpush1.msra.mxu0 %v1205
    %3728 = vmatprep.subr.mxu0 %v1202
    %3729 = vmatpush1.msra.mxu0 %v1201
    %3730 = vmatprep.subr.mxu0 %v1198
    %3731 = vmatpush1.msra.mxu0 %v1197
    %3732 = vmatprep.subr.mxu0 %v1194
    %3733 = vmatpush1.msra.mxu0 %v1193
    %3734 = vmatprep.subr.mxu0 %v1190
    %3735 = vmatpush1.msra.mxu0 %v1189
    %3736 = vmatprep.subr.mxu0 %v1186
    %3737 = vmatpush1.msra.mxu0 %v1185
    %3738 = vmatprep.subr.mxu0 %v1182
    %3739 = vmatpush1.msra.mxu0 %v1181
    %3740 = vmatprep.subr.mxu0 %v1178
    %3741 = vmatpush1.msra.mxu0 %v1177
    %3742 = vmatprep.subr.mxu0 %v1174
    %3743 = vmatpush1.msra.mxu0 %v1173
    %3744 = vmatprep.subr.mxu0 %v1170
    %3745 = vmatpush1.msra.mxu0 %v1169
    %3746 = vmatprep.subr.mxu0 %v1166
    %3747 = vmatpush1.msra.mxu0 %v1165
    %3748 = vmatprep.subr.mxu0 %v1162
    %3749 = vmatpush1.msra.mxu0 %v1161
    %3750 = vmatprep.subr.mxu0 %v1158
    %3751 = vmatpush1.msra.mxu0 %v1157
    %3752 = vmatprep.subr.mxu0 %v1154
    %3753 = vmatpush1.msra.mxu0 %v1153
    %3754 = vmatprep.subr.mxu0 0.0
    %3755 = vmatpush2.msra.mxu0 0.0
    %3756 = vmatprep.subr.mxu0 0.0
    %3757 = vmatpush2.msra.mxu0 0.0
    %3758 = vmatprep.subr.mxu0 0.0
    %3759 = vmatpush2.msra.mxu0 0.0
    %3760 = vmatprep.subr.mxu0 0.0
    %3761 = vmatpush2.msra.mxu0 0.0
    %3762 = vmatprep.subr.mxu0 0.0
    %3763 = vmatpush2.msra.mxu0 0.0
    %3764 = vmatprep.subr.mxu0 0.0
    %3765 = vmatpush2.msra.mxu0 0.0
    %3766 = vmatprep.subr.mxu0 0.0
    %3767 = vmatpush2.msra.mxu0 0.0
    %3768 = vmatprep.subr.mxu0 0.0
    %3769 = vmatpush2.msra.mxu0 0.0
    %3770 = vmatprep.subr.mxu0 0.0
    %3771 = vmatpush2.msra.mxu0 0.0
    %3772 = vmatprep.subr.mxu0 0.0
    %3773 = vmatpush2.msra.mxu0 0.0
    %3774 = vmatprep.subr.mxu0 0.0
    %3775 = vmatpush2.msra.mxu0 0.0
    %3776 = vmatprep.subr.mxu0 0.0
    %3777 = vmatpush2.msra.mxu0 0.0
    %3778 = vmatprep.subr.mxu0 0.0
    %3779 = vmatpush2.msra.mxu0 0.0
    %3780 = vmatprep.subr.mxu0 0.0
    %3781 = vmatpush2.msra.mxu0 0.0
    %3782 = vmatprep.subr.mxu0 0.0
    %3783 = vmatpush2.msra.mxu0 0.0
    %3784 = vmatprep.subr.mxu0 0.0
    %3785 = vmatpush2.msra.mxu0 0.0
    %3786 = vmatprep.mubr.f32.mxu0 0.0
    %3787 = vmatmul.mubr.f32.gmra.mxu0 %v3150
    %v3788 = vpop.f32.mrf.mxu0
    %v3789 = vadd.f32 0.0, %v3788
    %v3790 = vpop.f32.mrf.mxu0
    %v3791 = vadd.f32 0.0, %v3790
    %3792 = vdwg.mxu0
    %3793 = vmatprep.subr.mxu0 %v1148
    %3794 = vmatpush1.msra.mxu0 %v1147
    %3795 = vmatprep.subr.mxu0 %v1144
    %3796 = vmatpush1.msra.mxu0 %v1143
    %3797 = vmatprep.subr.mxu0 %v1140
    %3798 = vmatpush1.msra.mxu0 %v1139
    %3799 = vmatprep.subr.mxu0 %v1136
    %3800 = vmatpush1.msra.mxu0 %v1135
    %3801 = vmatprep.subr.mxu0 %v1132
    %3802 = vmatpush1.msra.mxu0 %v1131
    %3803 = vmatprep.subr.mxu0 %v1128
    %3804 = vmatpush1.msra.mxu0 %v1127
    %3805 = vmatprep.subr.mxu0 %v1124
    %3806 = vmatpush1.msra.mxu0 %v1123
    %3807 = vmatprep.subr.mxu0 %v1120
    %3808 = vmatpush1.msra.mxu0 %v1119
    %3809 = vmatprep.subr.mxu0 %v1116
    %3810 = vmatpush1.msra.mxu0 %v1115
    %3811 = vmatprep.subr.mxu0 %v1112
    %3812 = vmatpush1.msra.mxu0 %v1111
    %3813 = vmatprep.subr.mxu0 %v1108
    %3814 = vmatpush1.msra.mxu0 %v1107
    %3815 = vmatprep.subr.mxu0 %v1104
    %3816 = vmatpush1.msra.mxu0 %v1103
    %3817 = vmatprep.subr.mxu0 %v1100
    %3818 = vmatpush1.msra.mxu0 %v1099
    %3819 = vmatprep.subr.mxu0 %v1096
    %3820 = vmatpush1.msra.mxu0 %v1095
    %3821 = vmatprep.subr.mxu0 %v1092
    %3822 = vmatpush1.msra.mxu0 %v1091
    %3823 = vmatprep.subr.mxu0 %v1088
    %3824 = vmatpush1.msra.mxu0 %v1087
    %3825 = vmatprep.subr.mxu0 0.0
    %3826 = vmatpush2.msra.mxu0 0.0
    %3827 = vmatprep.subr.mxu0 0.0
    %3828 = vmatpush2.msra.mxu0 0.0
    %3829 = vmatprep.subr.mxu0 0.0
    %3830 = vmatpush2.msra.mxu0 0.0
    %3831 = vmatprep.subr.mxu0 0.0
    %3832 = vmatpush2.msra.mxu0 0.0
    %3833 = vmatprep.subr.mxu0 0.0
    %3834 = vmatpush2.msra.mxu0 0.0
    %3835 = vmatprep.subr.mxu0 0.0
    %3836 = vmatpush2.msra.mxu0 0.0
    %3837 = vmatprep.subr.mxu0 0.0
    %3838 = vmatpush2.msra.mxu0 0.0
    %3839 = vmatprep.subr.mxu0 0.0
    %3840 = vmatpush2.msra.mxu0 0.0
    %3841 = vmatprep.subr.mxu0 0.0
    %3842 = vmatpush2.msra.mxu0 0.0
    %3843 = vmatprep.subr.mxu0 0.0
    %3844 = vmatpush2.msra.mxu0 0.0
    %3845 = vmatprep.subr.mxu0 0.0
    %3846 = vmatpush2.msra.mxu0 0.0
    %3847 = vmatprep.subr.mxu0 0.0
    %3848 = vmatpush2.msra.mxu0 0.0
    %3849 = vmatprep.subr.mxu0 0.0
    %3850 = vmatpush2.msra.mxu0 0.0
    %3851 = vmatprep.subr.mxu0 0.0
    %3852 = vmatpush2.msra.mxu0 0.0
    %3853 = vmatprep.subr.mxu0 0.0
    %3854 = vmatpush2.msra.mxu0 0.0
    %3855 = vmatprep.subr.mxu0 0.0
    %3856 = vmatpush2.msra.mxu0 0.0
    %3857 = vmatprep.mubr.f32.mxu0 0.0
    %3858 = vmatmul.mubr.f32.gmra.mxu0 %v3650
    %v3859 = vpop.f32.mrf.mxu0
    %v3860 = vadd.f32 %v3718, %v3859
    %v3861 = vpop.f32.mrf.mxu0
    %v3862 = vadd.f32 %v3720, %v3861
    %3863 = vdwg.mxu0
    %3864 = vmatprep.subr.mxu0 %v1150
    %3865 = vmatpush1.msra.mxu0 %v1149
    %3866 = vmatprep.subr.mxu0 %v1146
    %3867 = vmatpush1.msra.mxu0 %v1145
    %3868 = vmatprep.subr.mxu0 %v1142
    %3869 = vmatpush1.msra.mxu0 %v1141
    %3870 = vmatprep.subr.mxu0 %v1138
    %3871 = vmatpush1.msra.mxu0 %v1137
    %3872 = vmatprep.subr.mxu0 %v1134
    %3873 = vmatpush1.msra.mxu0 %v1133
    %3874 = vmatprep.subr.mxu0 %v1130
    %3875 = vmatpush1.msra.mxu0 %v1129
    %3876 = vmatprep.subr.mxu0 %v1126
    %3877 = vmatpush1.msra.mxu0 %v1125
    %3878 = vmatprep.subr.mxu0 %v1122
    %3879 = vmatpush1.msra.mxu0 %v1121
    %3880 = vmatprep.subr.mxu0 %v1118
    %3881 = vmatpush1.msra.mxu0 %v1117
    %3882 = vmatprep.subr.mxu0 %v1114
    %3883 = vmatpush1.msra.mxu0 %v1113
    %3884 = vmatprep.subr.mxu0 %v1110
    %3885 = vmatpush1.msra.mxu0 %v1109
    %3886 = vmatprep.subr.mxu0 %v1106
    %3887 = vmatpush1.msra.mxu0 %v1105
    %3888 = vmatprep.subr.mxu0 %v1102
    %3889 = vmatpush1.msra.mxu0 %v1101
    %3890 = vmatprep.subr.mxu0 %v1098
    %3891 = vmatpush1.msra.mxu0 %v1097
    %3892 = vmatprep.subr.mxu0 %v1094
    %3893 = vmatpush1.msra.mxu0 %v1093
    %3894 = vmatprep.subr.mxu0 %v1090
    %3895 = vmatpush1.msra.mxu0 %v1089
    %3896 = vmatprep.subr.mxu0 0.0
    %3897 = vmatpush2.msra.mxu0 0.0
    %3898 = vmatprep.subr.mxu0 0.0
    %3899 = vmatpush2.msra.mxu0 0.0
    %3900 = vmatprep.subr.mxu0 0.0
    %3901 = vmatpush2.msra.mxu0 0.0
    %3902 = vmatprep.subr.mxu0 0.0
    %3903 = vmatpush2.msra.mxu0 0.0
    %3904 = vmatprep.subr.mxu0 0.0
    %3905 = vmatpush2.msra.mxu0 0.0
    %3906 = vmatprep.subr.mxu0 0.0
    %3907 = vmatpush2.msra.mxu0 0.0
    %3908 = vmatprep.subr.mxu0 0.0
    %3909 = vmatpush2.msra.mxu0 0.0
    %3910 = vmatprep.subr.mxu0 0.0
    %3911 = vmatpush2.msra.mxu0 0.0
    %3912 = vmatprep.subr.mxu0 0.0
    %3913 = vmatpush2.msra.mxu0 0.0
    %3914 = vmatprep.subr.mxu0 0.0
    %3915 = vmatpush2.msra.mxu0 0.0
    %3916 = vmatprep.subr.mxu0 0.0
    %3917 = vmatpush2.msra.mxu0 0.0
    %3918 = vmatprep.subr.mxu0 0.0
    %3919 = vmatpush2.msra.mxu0 0.0
    %3920 = vmatprep.subr.mxu0 0.0
    %3921 = vmatpush2.msra.mxu0 0.0
    %3922 = vmatprep.subr.mxu0 0.0
    %3923 = vmatpush2.msra.mxu0 0.0
    %3924 = vmatprep.subr.mxu0 0.0
    %3925 = vmatpush2.msra.mxu0 0.0
    %3926 = vmatprep.subr.mxu0 0.0
    %3927 = vmatpush2.msra.mxu0 0.0
    %3928 = vmatprep.mubr.f32.mxu0 0.0
    %3929 = vmatmul.mubr.f32.gmra.mxu0 %v3650
    %v3930 = vpop.f32.mrf.mxu0
    %v3931 = vadd.f32 %v3789, %v3930
    %v3932 = vpop.f32.mrf.mxu0
    %v3933 = vadd.f32 %v3791, %v3932
    %3934 = vdwg.mxu0
    %v3935 = vadd.f32 %v3860, %v396
    %v3936 = vadd.f32 %v3862, %v400
    %v3937 = vadd.f32 %v3931, %v404
    %v3938 = vadd.f32 %v3933, %v408
    %v3939 = vxor.u32 %v3935, 2147483648
    %v3940 = vxor.u32 %v3936, 2147483648
    %v3941 = vxor.u32 %v3937, 2147483648
    %v3942 = vmul.f32 %v3939, 1.442695
    %v3943 = vpow.pop %v3942
    %v3944 = vmul.f32 %v3940, 1.442695
    %v3945 = vpow.pop %v3944
    %v3946 = vmul.f32 %v3941, 1.442695
    %v3947 = vpow.pop %v3946
    %v3948 = vadd.f32 %v3943, 1.0
    %v3949 = vadd.f32 %v3945, 1.0
    %v3950 = vadd.f32 %v3947, 1.0
    %v3951 = vrcp.pop %v3948
    %v3952 = vmul.f32 1.0, %v3951
    %v3953 = vrcp.pop %v3949
    %v3954 = vmul.f32 1.0, %v3953
    %v3955 = vrcp.pop %v3950
    %v3956 = vmul.f32 1.0, %v3955
    %v3957 = vtanh.pop %v3938
    %v3958 = vmul.f32 %v3954, %v3148
    %v3959 = vmul.f32 %v3952, %v3957
    %v3960 = vadd.f32 %v3958, %v3959
    %v3961 = vtanh.pop %v3960
    %v3962 = vmul.f32 %v3956, %v3961
    %3963 = vmatprep.subr.mxu0 %v474
    %3964 = vmatpush1.msra.mxu0 %v473
    %3965 = vmatprep.subr.mxu0 %v470
    %3966 = vmatpush1.msra.mxu0 %v469
    %3967 = vmatprep.subr.mxu0 %v466
    %3968 = vmatpush1.msra.mxu0 %v465
    %3969 = vmatprep.subr.mxu0 %v462
    %3970 = vmatpush1.msra.mxu0 %v461
    %3971 = vmatprep.subr.mxu0 %v458
    %3972 = vmatpush1.msra.mxu0 %v457
    %3973 = vmatprep.subr.mxu0 %v454
    %3974 = vmatpush1.msra.mxu0 %v453
    %3975 = vmatprep.subr.mxu0 %v450
    %3976 = vmatpush1.msra.mxu0 %v449
    %3977 = vmatprep.subr.mxu0 %v446
    %3978 = vmatpush1.msra.mxu0 %v445
    %3979 = vmatprep.subr.mxu0 %v442
    %3980 = vmatpush1.msra.mxu0 %v441
    %3981 = vmatprep.subr.mxu0 %v438
    %3982 = vmatpush1.msra.mxu0 %v437
    %3983 = vmatprep.subr.mxu0 %v434
    %3984 = vmatpush1.msra.mxu0 %v433
    %3985 = vmatprep.subr.mxu0 %v430
    %3986 = vmatpush1.msra.mxu0 %v429
    %3987 = vmatprep.subr.mxu0 %v426
    %3988 = vmatpush1.msra.mxu0 %v425
    %3989 = vmatprep.subr.mxu0 %v422
    %3990 = vmatpush1.msra.mxu0 %v421
    %3991 = vmatprep.subr.mxu0 %v418
    %3992 = vmatpush1.msra.mxu0 %v417
    %3993 = vmatprep.subr.mxu0 %v414
    %3994 = vmatpush1.msra.mxu0 %v413
    %3995 = vmatprep.subr.mxu0 0.0
    %3996 = vmatpush2.msra.mxu0 0.0
    %3997 = vmatprep.subr.mxu0 0.0
    %3998 = vmatpush2.msra.mxu0 0.0
    %3999 = vmatprep.subr.mxu0 0.0
    %4000 = vmatpush2.msra.mxu0 0.0
    %4001 = vmatprep.subr.mxu0 0.0
    %4002 = vmatpush2.msra.mxu0 0.0
    %4003 = vmatprep.subr.mxu0 0.0
    %4004 = vmatpush2.msra.mxu0 0.0
    %4005 = vmatprep.subr.mxu0 0.0
    %4006 = vmatpush2.msra.mxu0 0.0
    %4007 = vmatprep.subr.mxu0 0.0
    %4008 = vmatpush2.msra.mxu0 0.0
    %4009 = vmatprep.subr.mxu0 0.0
    %4010 = vmatpush2.msra.mxu0 0.0
    %4011 = vmatprep.subr.mxu0 0.0
    %4012 = vmatpush2.msra.mxu0 0.0
    %4013 = vmatprep.subr.mxu0 0.0
    %4014 = vmatpush2.msra.mxu0 0.0
    %4015 = vmatprep.subr.mxu0 0.0
    %4016 = vmatpush2.msra.mxu0 0.0
    %4017 = vmatprep.subr.mxu0 0.0
    %4018 = vmatpush2.msra.mxu0 0.0
    %4019 = vmatprep.subr.mxu0 0.0
    %4020 = vmatpush2.msra.mxu0 0.0
    %4021 = vmatprep.subr.mxu0 0.0
    %4022 = vmatpush2.msra.mxu0 0.0
    %4023 = vmatprep.subr.mxu0 0.0
    %4024 = vmatpush2.msra.mxu0 0.0
    %4025 = vmatprep.subr.mxu0 0.0
    %4026 = vmatpush2.msra.mxu0 0.0
    %4027 = vmatprep.mubr.f32.mxu0 0.0
    %4028 = vmatmul.mubr.f32.gmra.mxu0 %v3479
    %v4029 = vpop.f32.mrf.mxu0
    %v4030 = vadd.f32 0.0, %v4029
    %v4031 = vpop.f32.mrf.mxu0
    %v4032 = vadd.f32 0.0, %v4031
    %4033 = vdwg.mxu0
    %4034 = vmatprep.subr.mxu0 %v476
    %4035 = vmatpush1.msra.mxu0 %v475
    %4036 = vmatprep.subr.mxu0 %v472
    %4037 = vmatpush1.msra.mxu0 %v471
    %4038 = vmatprep.subr.mxu0 %v468
    %4039 = vmatpush1.msra.mxu0 %v467
    %4040 = vmatprep.subr.mxu0 %v464
    %4041 = vmatpush1.msra.mxu0 %v463
    %4042 = vmatprep.subr.mxu0 %v460
    %4043 = vmatpush1.msra.mxu0 %v459
    %4044 = vmatprep.subr.mxu0 %v456
    %4045 = vmatpush1.msra.mxu0 %v455
    %4046 = vmatprep.subr.mxu0 %v452
    %4047 = vmatpush1.msra.mxu0 %v451
    %4048 = vmatprep.subr.mxu0 %v448
    %4049 = vmatpush1.msra.mxu0 %v447
    %4050 = vmatprep.subr.mxu0 %v444
    %4051 = vmatpush1.msra.mxu0 %v443
    %4052 = vmatprep.subr.mxu0 %v440
    %4053 = vmatpush1.msra.mxu0 %v439
    %4054 = vmatprep.subr.mxu0 %v436
    %4055 = vmatpush1.msra.mxu0 %v435
    %4056 = vmatprep.subr.mxu0 %v432
    %4057 = vmatpush1.msra.mxu0 %v431
    %4058 = vmatprep.subr.mxu0 %v428
    %4059 = vmatpush1.msra.mxu0 %v427
    %4060 = vmatprep.subr.mxu0 %v424
    %4061 = vmatpush1.msra.mxu0 %v423
    %4062 = vmatprep.subr.mxu0 %v420
    %4063 = vmatpush1.msra.mxu0 %v419
    %4064 = vmatprep.subr.mxu0 %v416
    %4065 = vmatpush1.msra.mxu0 %v415
    %4066 = vmatprep.subr.mxu0 0.0
    %4067 = vmatpush2.msra.mxu0 0.0
    %4068 = vmatprep.subr.mxu0 0.0
    %4069 = vmatpush2.msra.mxu0 0.0
    %4070 = vmatprep.subr.mxu0 0.0
    %4071 = vmatpush2.msra.mxu0 0.0
    %4072 = vmatprep.subr.mxu0 0.0
    %4073 = vmatpush2.msra.mxu0 0.0
    %4074 = vmatprep.subr.mxu0 0.0
    %4075 = vmatpush2.msra.mxu0 0.0
    %4076 = vmatprep.subr.mxu0 0.0
    %4077 = vmatpush2.msra.mxu0 0.0
    %4078 = vmatprep.subr.mxu0 0.0
    %4079 = vmatpush2.msra.mxu0 0.0
    %4080 = vmatprep.subr.mxu0 0.0
    %4081 = vmatpush2.msra.mxu0 0.0
    %4082 = vmatprep.subr.mxu0 0.0
    %4083 = vmatpush2.msra.mxu0 0.0
    %4084 = vmatprep.subr.mxu0 0.0
    %4085 = vmatpush2.msra.mxu0 0.0
    %4086 = vmatprep.subr.mxu0 0.0
    %4087 = vmatpush2.msra.mxu0 0.0
    %4088 = vmatprep.subr.mxu0 0.0
    %4089 = vmatpush2.msra.mxu0 0.0
    %4090 = vmatprep.subr.mxu0 0.0
    %4091 = vmatpush2.msra.mxu0 0.0
    %4092 = vmatprep.subr.mxu0 0.0
    %4093 = vmatpush2.msra.mxu0 0.0
    %4094 = vmatprep.subr.mxu0 0.0
    %4095 = vmatpush2.msra.mxu0 0.0
    %4096 = vmatprep.subr.mxu0 0.0
    %4097 = vmatpush2.msra.mxu0 0.0
    %4098 = vmatprep.mubr.f32.mxu0 0.0
    %4099 = vmatmul.mubr.f32.gmra.mxu0 %v3479
    %v4100 = vpop.f32.mrf.mxu0
    %v4101 = vadd.f32 0.0, %v4100
    %v4102 = vpop.f32.mrf.mxu0
    %v4103 = vadd.f32 0.0, %v4102
    %4104 = vdwg.mxu0
    %v4105 = vadd.f32 %v288, %v4030
    %v4106 = vadd.f32 %v290, %v4032
    %v4107 = vadd.f32 %v365, %v4101
    %v4108 = vadd.f32 %v367, %v4103
    %v4109 = vxor.u32 %v4105, 2147483648
    %v4110 = vxor.u32 %v4106, 2147483648
    %v4111 = vxor.u32 %v4107, 2147483648
    %v4112 = vmul.f32 %v4109, 1.442695
    %v4113 = vpow.pop %v4112
    %v4114 = vmul.f32 %v4110, 1.442695
    %v4115 = vpow.pop %v4114
    %v4116 = vmul.f32 %v4111, 1.442695
    %v4117 = vpow.pop %v4116
    %v4118 = vadd.f32 %v4113, 1.0
    %v4119 = vadd.f32 %v4115, 1.0
    %v4120 = vadd.f32 %v4117, 1.0
    %v4121 = vrcp.pop %v4118
    %v4122 = vmul.f32 1.0, %v4121
    %v4123 = vrcp.pop %v4119
    %v4124 = vmul.f32 1.0, %v4123
    %v4125 = vrcp.pop %v4120
    %v4126 = vmul.f32 1.0, %v4125
    %v4127 = vtanh.pop %v4108
    %v4129 = vrot.slane %v3333, 6
    %v4131 = vmul.f32 %v4124, %v4129
    %v4132 = vmul.f32 %v4122, %v4127
    %v4133 = vadd.f32 %v4131, %v4132
    %v4134 = vtanh.pop %v4133
    %v4135 = vmul.f32 %v4126, %v4134
    %4136 = vmatprep.subr.mxu0 %v772
    %4137 = vmatpush1.msra.mxu0 %v771
    %4138 = vmatprep.subr.mxu0 %v768
    %4139 = vmatpush1.msra.mxu0 %v767
    %4140 = vmatprep.subr.mxu0 %v764
    %4141 = vmatpush1.msra.mxu0 %v763
    %4142 = vmatprep.subr.mxu0 %v760
    %4143 = vmatpush1.msra.mxu0 %v759
    %4144 = vmatprep.subr.mxu0 %v756
    %4145 = vmatpush1.msra.mxu0 %v755
    %4146 = vmatprep.subr.mxu0 %v752
    %4147 = vmatpush1.msra.mxu0 %v751
    %4148 = vmatprep.subr.mxu0 %v748
    %4149 = vmatpush1.msra.mxu0 %v747
    %4150 = vmatprep.subr.mxu0 %v744
    %4151 = vmatpush1.msra.mxu0 %v743
    %4152 = vmatprep.subr.mxu0 %v740
    %4153 = vmatpush1.msra.mxu0 %v739
    %4154 = vmatprep.subr.mxu0 %v736
    %4155 = vmatpush1.msra.mxu0 %v735
    %4156 = vmatprep.subr.mxu0 %v732
    %4157 = vmatpush1.msra.mxu0 %v731
    %4158 = vmatprep.subr.mxu0 %v728
    %4159 = vmatpush1.msra.mxu0 %v727
    %4160 = vmatprep.subr.mxu0 %v724
    %4161 = vmatpush1.msra.mxu0 %v723
    %4162 = vmatprep.subr.mxu0 %v720
    %4163 = vmatpush1.msra.mxu0 %v719
    %4164 = vmatprep.subr.mxu0 %v716
    %4165 = vmatpush1.msra.mxu0 %v715
    %4166 = vmatprep.subr.mxu0 %v712
    %4167 = vmatpush1.msra.mxu0 %v711
    %4168 = vmatprep.subr.mxu0 0.0
    %4169 = vmatpush2.msra.mxu0 0.0
    %4170 = vmatprep.subr.mxu0 0.0
    %4171 = vmatpush2.msra.mxu0 0.0
    %4172 = vmatprep.subr.mxu0 0.0
    %4173 = vmatpush2.msra.mxu0 0.0
    %4174 = vmatprep.subr.mxu0 0.0
    %4175 = vmatpush2.msra.mxu0 0.0
    %4176 = vmatprep.subr.mxu0 0.0
    %4177 = vmatpush2.msra.mxu0 0.0
    %4178 = vmatprep.subr.mxu0 0.0
    %4179 = vmatpush2.msra.mxu0 0.0
    %4180 = vmatprep.subr.mxu0 0.0
    %4181 = vmatpush2.msra.mxu0 0.0
    %4182 = vmatprep.subr.mxu0 0.0
    %4183 = vmatpush2.msra.mxu0 0.0
    %4184 = vmatprep.subr.mxu0 0.0
    %4185 = vmatpush2.msra.mxu0 0.0
    %4186 = vmatprep.subr.mxu0 0.0
    %4187 = vmatpush2.msra.mxu0 0.0
    %4188 = vmatprep.subr.mxu0 0.0
    %4189 = vmatpush2.msra.mxu0 0.0
    %4190 = vmatprep.subr.mxu0 0.0
    %4191 = vmatpush2.msra.mxu0 0.0
    %4192 = vmatprep.subr.mxu0 0.0
    %4193 = vmatpush2.msra.mxu0 0.0
    %4194 = vmatprep.subr.mxu0 0.0
    %4195 = vmatpush2.msra.mxu0 0.0
    %4196 = vmatprep.subr.mxu0 0.0
    %4197 = vmatpush2.msra.mxu0 0.0
    %4198 = vmatprep.subr.mxu0 0.0
    %4199 = vmatpush2.msra.mxu0 0.0
    %4200 = vmatprep.mubr.f32.mxu0 0.0
    %4201 = vmatmul.mubr.f32.gmra.mxu0 %v3650
    %v4202 = vpop.f32.mrf.mxu0
    %v4203 = vadd.f32 0.0, %v4202
    %v4204 = vpop.f32.mrf.mxu0
    %v4205 = vadd.f32 0.0, %v4204
    %4206 = vdwg.mxu0
    %4207 = vmatprep.subr.mxu0 %v774
    %4208 = vmatpush1.msra.mxu0 %v773
    %4209 = vmatprep.subr.mxu0 %v770
    %4210 = vmatpush1.msra.mxu0 %v769
    %4211 = vmatprep.subr.mxu0 %v766
    %4212 = vmatpush1.msra.mxu0 %v765
    %4213 = vmatprep.subr.mxu0 %v762
    %4214 = vmatpush1.msra.mxu0 %v761
    %4215 = vmatprep.subr.mxu0 %v758
    %4216 = vmatpush1.msra.mxu0 %v757
    %4217 = vmatprep.subr.mxu0 %v754
    %4218 = vmatpush1.msra.mxu0 %v753
    %4219 = vmatprep.subr.mxu0 %v750
    %4220 = vmatpush1.msra.mxu0 %v749
    %4221 = vmatprep.subr.mxu0 %v746
    %4222 = vmatpush1.msra.mxu0 %v745
    %4223 = vmatprep.subr.mxu0 %v742
    %4224 = vmatpush1.msra.mxu0 %v741
    %4225 = vmatprep.subr.mxu0 %v738
    %4226 = vmatpush1.msra.mxu0 %v737
    %4227 = vmatprep.subr.mxu0 %v734
    %4228 = vmatpush1.msra.mxu0 %v733
    %4229 = vmatprep.subr.mxu0 %v730
    %4230 = vmatpush1.msra.mxu0 %v729
    %4231 = vmatprep.subr.mxu0 %v726
    %4232 = vmatpush1.msra.mxu0 %v725
    %4233 = vmatprep.subr.mxu0 %v722
    %4234 = vmatpush1.msra.mxu0 %v721
    %4235 = vmatprep.subr.mxu0 %v718
    %4236 = vmatpush1.msra.mxu0 %v717
    %4237 = vmatprep.subr.mxu0 %v714
    %4238 = vmatpush1.msra.mxu0 %v713
    %4239 = vmatprep.subr.mxu0 0.0
    %4240 = vmatpush2.msra.mxu0 0.0
    %4241 = vmatprep.subr.mxu0 0.0
    %4242 = vmatpush2.msra.mxu0 0.0
    %4243 = vmatprep.subr.mxu0 0.0
    %4244 = vmatpush2.msra.mxu0 0.0
    %4245 = vmatprep.subr.mxu0 0.0
    %4246 = vmatpush2.msra.mxu0 0.0
    %4247 = vmatprep.subr.mxu0 0.0
    %4248 = vmatpush2.msra.mxu0 0.0
    %4249 = vmatprep.subr.mxu0 0.0
    %4250 = vmatpush2.msra.mxu0 0.0
    %4251 = vmatprep.subr.mxu0 0.0
    %4252 = vmatpush2.msra.mxu0 0.0
    %4253 = vmatprep.subr.mxu0 0.0
    %4254 = vmatpush2.msra.mxu0 0.0
    %4255 = vmatprep.subr.mxu0 0.0
    %4256 = vmatpush2.msra.mxu0 0.0
    %4257 = vmatprep.subr.mxu0 0.0
    %4258 = vmatpush2.msra.mxu0 0.0
    %4259 = vmatprep.subr.mxu0 0.0
    %4260 = vmatpush2.msra.mxu0 0.0
    %4261 = vmatprep.subr.mxu0 0.0
    %4262 = vmatpush2.msra.mxu0 0.0
    %4263 = vmatprep.subr.mxu0 0.0
    %4264 = vmatpush2.msra.mxu0 0.0
    %4265 = vmatprep.subr.mxu0 0.0
    %4266 = vmatpush2.msra.mxu0 0.0
    %4267 = vmatprep.subr.mxu0 0.0
    %4268 = vmatpush2.msra.mxu0 0.0
    %4269 = vmatprep.subr.mxu0 0.0
    %4270 = vmatpush2.msra.mxu0 0.0
    %4271 = vmatprep.mubr.f32.mxu0 0.0
    %4272 = vmatmul.mubr.f32.gmra.mxu0 %v3650
    %v4273 = vpop.f32.mrf.mxu0
    %v4274 = vadd.f32 0.0, %v4273
    %v4275 = vpop.f32.mrf.mxu0
    %v4276 = vadd.f32 0.0, %v4275
    %4277 = vdwg.mxu0
    %4278 = vmatprep.subr.mxu0 %v708
    %4279 = vmatpush1.msra.mxu0 %v707
    %4280 = vmatprep.subr.mxu0 %v704
    %4281 = vmatpush1.msra.mxu0 %v703
    %4282 = vmatprep.subr.mxu0 %v700
    %4283 = vmatpush1.msra.mxu0 %v699
    %4284 = vmatprep.subr.mxu0 %v696
    %4285 = vmatpush1.msra.mxu0 %v695
    %4286 = vmatprep.subr.mxu0 %v692
    %4287 = vmatpush1.msra.mxu0 %v691
    %4288 = vmatprep.subr.mxu0 %v688
    %4289 = vmatpush1.msra.mxu0 %v687
    %4290 = vmatprep.subr.mxu0 %v684
    %4291 = vmatpush1.msra.mxu0 %v683
    %4292 = vmatprep.subr.mxu0 %v680
    %4293 = vmatpush1.msra.mxu0 %v679
    %4294 = vmatprep.subr.mxu0 %v676
    %4295 = vmatpush1.msra.mxu0 %v675
    %4296 = vmatprep.subr.mxu0 %v672
    %4297 = vmatpush1.msra.mxu0 %v671
    %4298 = vmatprep.subr.mxu0 %v668
    %4299 = vmatpush1.msra.mxu0 %v667
    %4300 = vmatprep.subr.mxu0 %v664
    %4301 = vmatpush1.msra.mxu0 %v663
    %4302 = vmatprep.subr.mxu0 %v660
    %4303 = vmatpush1.msra.mxu0 %v659
    %4304 = vmatprep.subr.mxu0 %v656
    %4305 = vmatpush1.msra.mxu0 %v655
    %4306 = vmatprep.subr.mxu0 %v652
    %4307 = vmatpush1.msra.mxu0 %v651
    %4308 = vmatprep.subr.mxu0 %v648
    %4309 = vmatpush1.msra.mxu0 %v647
    %4310 = vmatprep.subr.mxu0 0.0
    %4311 = vmatpush2.msra.mxu0 0.0
    %4312 = vmatprep.subr.mxu0 0.0
    %4313 = vmatpush2.msra.mxu0 0.0
    %4314 = vmatprep.subr.mxu0 0.0
    %4315 = vmatpush2.msra.mxu0 0.0
    %4316 = vmatprep.subr.mxu0 0.0
    %4317 = vmatpush2.msra.mxu0 0.0
    %4318 = vmatprep.subr.mxu0 0.0
    %4319 = vmatpush2.msra.mxu0 0.0
    %4320 = vmatprep.subr.mxu0 0.0
    %4321 = vmatpush2.msra.mxu0 0.0
    %4322 = vmatprep.subr.mxu0 0.0
    %4323 = vmatpush2.msra.mxu0 0.0
    %4324 = vmatprep.subr.mxu0 0.0
    %4325 = vmatpush2.msra.mxu0 0.0
    %4326 = vmatprep.subr.mxu0 0.0
    %4327 = vmatpush2.msra.mxu0 0.0
    %4328 = vmatprep.subr.mxu0 0.0
    %4329 = vmatpush2.msra.mxu0 0.0
    %4330 = vmatprep.subr.mxu0 0.0
    %4331 = vmatpush2.msra.mxu0 0.0
    %4332 = vmatprep.subr.mxu0 0.0
    %4333 = vmatpush2.msra.mxu0 0.0
    %4334 = vmatprep.subr.mxu0 0.0
    %4335 = vmatpush2.msra.mxu0 0.0
    %4336 = vmatprep.subr.mxu0 0.0
    %4337 = vmatpush2.msra.mxu0 0.0
    %4338 = vmatprep.subr.mxu0 0.0
    %4339 = vmatpush2.msra.mxu0 0.0
    %4340 = vmatprep.subr.mxu0 0.0
    %4341 = vmatpush2.msra.mxu0 0.0
    %4342 = vmatprep.mubr.f32.mxu0 0.0
    %4343 = vmatmul.mubr.f32.gmra.mxu0 %v4135
    %v4344 = vpop.f32.mrf.mxu0
    %v4345 = vadd.f32 %v4203, %v4344
    %v4346 = vpop.f32.mrf.mxu0
    %v4347 = vadd.f32 %v4205, %v4346
    %4348 = vdwg.mxu0
    %4349 = vmatprep.subr.mxu0 %v710
    %4350 = vmatpush1.msra.mxu0 %v709
    %4351 = vmatprep.subr.mxu0 %v706
    %4352 = vmatpush1.msra.mxu0 %v705
    %4353 = vmatprep.subr.mxu0 %v702
    %4354 = vmatpush1.msra.mxu0 %v701
    %4355 = vmatprep.subr.mxu0 %v698
    %4356 = vmatpush1.msra.mxu0 %v697
    %4357 = vmatprep.subr.mxu0 %v694
    %4358 = vmatpush1.msra.mxu0 %v693
    %4359 = vmatprep.subr.mxu0 %v690
    %4360 = vmatpush1.msra.mxu0 %v689
    %4361 = vmatprep.subr.mxu0 %v686
    %4362 = vmatpush1.msra.mxu0 %v685
    %4363 = vmatprep.subr.mxu0 %v682
    %4364 = vmatpush1.msra.mxu0 %v681
    %4365 = vmatprep.subr.mxu0 %v678
    %4366 = vmatpush1.msra.mxu0 %v677
    %4367 = vmatprep.subr.mxu0 %v674
    %4368 = vmatpush1.msra.mxu0 %v673
    %4369 = vmatprep.subr.mxu0 %v670
    %4370 = vmatpush1.msra.mxu0 %v669
    %4371 = vmatprep.subr.mxu0 %v666
    %4372 = vmatpush1.msra.mxu0 %v665
    %4373 = vmatprep.subr.mxu0 %v662
    %4374 = vmatpush1.msra.mxu0 %v661
    %4375 = vmatprep.subr.mxu0 %v658
    %4376 = vmatpush1.msra.mxu0 %v657
    %4377 = vmatprep.subr.mxu0 %v654
    %4378 = vmatpush1.msra.mxu0 %v653
    %4379 = vmatprep.subr.mxu0 %v650
    %4380 = vmatpush1.msra.mxu0 %v649
    %4381 = vmatprep.subr.mxu0 0.0
    %4382 = vmatpush2.msra.mxu0 0.0
    %4383 = vmatprep.subr.mxu0 0.0
    %4384 = vmatpush2.msra.mxu0 0.0
    %4385 = vmatprep.subr.mxu0 0.0
    %4386 = vmatpush2.msra.mxu0 0.0
    %4387 = vmatprep.subr.mxu0 0.0
    %4388 = vmatpush2.msra.mxu0 0.0
    %4389 = vmatprep.subr.mxu0 0.0
    %4390 = vmatpush2.msra.mxu0 0.0
    %4391 = vmatprep.subr.mxu0 0.0
    %4392 = vmatpush2.msra.mxu0 0.0
    %4393 = vmatprep.subr.mxu0 0.0
    %4394 = vmatpush2.msra.mxu0 0.0
    %4395 = vmatprep.subr.mxu0 0.0
    %4396 = vmatpush2.msra.mxu0 0.0
    %4397 = vmatprep.subr.mxu0 0.0
    %4398 = vmatpush2.msra.mxu0 0.0
    %4399 = vmatprep.subr.mxu0 0.0
    %4400 = vmatpush2.msra.mxu0 0.0
    %4401 = vmatprep.subr.mxu0 0.0
    %4402 = vmatpush2.msra.mxu0 0.0
    %4403 = vmatprep.subr.mxu0 0.0
    %4404 = vmatpush2.msra.mxu0 0.0
    %4405 = vmatprep.subr.mxu0 0.0
    %4406 = vmatpush2.msra.mxu0 0.0
    %4407 = vmatprep.subr.mxu0 0.0
    %4408 = vmatpush2.msra.mxu0 0.0
    %4409 = vmatprep.subr.mxu0 0.0
    %4410 = vmatpush2.msra.mxu0 0.0
    %4411 = vmatprep.subr.mxu0 0.0
    %4412 = vmatpush2.msra.mxu0 0.0
    %4413 = vmatprep.mubr.f32.mxu0 0.0
    %4414 = vmatmul.mubr.f32.gmra.mxu0 %v4135
    %v4415 = vpop.f32.mrf.mxu0
    %v4416 = vadd.f32 %v4274, %v4415
    %v4417 = vpop.f32.mrf.mxu0
    %v4418 = vadd.f32 %v4276, %v4417
    %4419 = vdwg.mxu0
    %v4420 = vadd.f32 %v4345, %v374
    %v4421 = vadd.f32 %v4347, %v378
    %v4422 = vadd.f32 %v4416, %v382
    %v4423 = vadd.f32 %v4418, %v386
    %v4424 = vxor.u32 %v4420, 2147483648
    %v4425 = vxor.u32 %v4421, 2147483648
    %v4426 = vxor.u32 %v4422, 2147483648
    %v4427 = vmul.f32 %v4424, 1.442695
    %v4428 = vpow.pop %v4427
    %v4429 = vmul.f32 %v4425, 1.442695
    %v4430 = vpow.pop %v4429
    %v4431 = vmul.f32 %v4426, 1.442695
    %v4432 = vpow.pop %v4431
    %v4433 = vadd.f32 %v4428, 1.0
    %v4434 = vadd.f32 %v4430, 1.0
    %v4435 = vadd.f32 %v4432, 1.0
    %v4436 = vrcp.pop %v4433
    %v4437 = vmul.f32 1.0, %v4436
    %v4438 = vrcp.pop %v4434
    %v4439 = vmul.f32 1.0, %v4438
    %v4440 = vrcp.pop %v4435
    %v4441 = vmul.f32 1.0, %v4440
    %v4442 = vtanh.pop %v4423
    %v4443 = vmul.f32 %v4439, %v3648
    %v4444 = vmul.f32 %v4437, %v4442
    %v4445 = vadd.f32 %v4443, %v4444
    %v4446 = vtanh.pop %v4445
    %v4447 = vmul.f32 %v4441, %v4446
    %4448 = vmatprep.subr.mxu0 %v1212
    %4449 = vmatpush1.msra.mxu0 %v1211
    %4450 = vmatprep.subr.mxu0 %v1208
    %4451 = vmatpush1.msra.mxu0 %v1207
    %4452 = vmatprep.subr.mxu0 %v1204
    %4453 = vmatpush1.msra.mxu0 %v1203
    %4454 = vmatprep.subr.mxu0 %v1200
    %4455 = vmatpush1.msra.mxu0 %v1199
    %4456 = vmatprep.subr.mxu0 %v1196
    %4457 = vmatpush1.msra.mxu0 %v1195
    %4458 = vmatprep.subr.mxu0 %v1192
    %4459 = vmatpush1.msra.mxu0 %v1191
    %4460 = vmatprep.subr.mxu0 %v1188
    %4461 = vmatpush1.msra.mxu0 %v1187
    %4462 = vmatprep.subr.mxu0 %v1184
    %4463 = vmatpush1.msra.mxu0 %v1183
    %4464 = vmatprep.subr.mxu0 %v1180
    %4465 = vmatpush1.msra.mxu0 %v1179
    %4466 = vmatprep.subr.mxu0 %v1176
    %4467 = vmatpush1.msra.mxu0 %v1175
    %4468 = vmatprep.subr.mxu0 %v1172
    %4469 = vmatpush1.msra.mxu0 %v1171
    %4470 = vmatprep.subr.mxu0 %v1168
    %4471 = vmatpush1.msra.mxu0 %v1167
    %4472 = vmatprep.subr.mxu0 %v1164
    %4473 = vmatpush1.msra.mxu0 %v1163
    %4474 = vmatprep.subr.mxu0 %v1160
    %4475 = vmatpush1.msra.mxu0 %v1159
    %4476 = vmatprep.subr.mxu0 %v1156
    %4477 = vmatpush1.msra.mxu0 %v1155
    %4478 = vmatprep.subr.mxu0 %v1152
    %4479 = vmatpush1.msra.mxu0 %v1151
    %4480 = vmatprep.subr.mxu0 0.0
    %4481 = vmatpush2.msra.mxu0 0.0
    %4482 = vmatprep.subr.mxu0 0.0
    %4483 = vmatpush2.msra.mxu0 0.0
    %4484 = vmatprep.subr.mxu0 0.0
    %4485 = vmatpush2.msra.mxu0 0.0
    %4486 = vmatprep.subr.mxu0 0.0
    %4487 = vmatpush2.msra.mxu0 0.0
    %4488 = vmatprep.subr.mxu0 0.0
    %4489 = vmatpush2.msra.mxu0 0.0
    %4490 = vmatprep.subr.mxu0 0.0
    %4491 = vmatpush2.msra.mxu0 0.0
    %4492 = vmatprep.subr.mxu0 0.0
    %4493 = vmatpush2.msra.mxu0 0.0
    %4494 = vmatprep.subr.mxu0 0.0
    %4495 = vmatpush2.msra.mxu0 0.0
    %4496 = vmatprep.subr.mxu0 0.0
    %4497 = vmatpush2.msra.mxu0 0.0
    %4498 = vmatprep.subr.mxu0 0.0
    %4499 = vmatpush2.msra.mxu0 0.0
    %4500 = vmatprep.subr.mxu0 0.0
    %4501 = vmatpush2.msra.mxu0 0.0
    %4502 = vmatprep.subr.mxu0 0.0
    %4503 = vmatpush2.msra.mxu0 0.0
    %4504 = vmatprep.subr.mxu0 0.0
    %4505 = vmatpush2.msra.mxu0 0.0
    %4506 = vmatprep.subr.mxu0 0.0
    %4507 = vmatpush2.msra.mxu0 0.0
    %4508 = vmatprep.subr.mxu0 0.0
    %4509 = vmatpush2.msra.mxu0 0.0
    %4510 = vmatprep.subr.mxu0 0.0
    %4511 = vmatpush2.msra.mxu0 0.0
    %4512 = vmatprep.mubr.f32.mxu0 0.0
    %4513 = vmatmul.mubr.f32.gmra.mxu0 %v3962
    %v4514 = vpop.f32.mrf.mxu0
    %v4515 = vadd.f32 0.0, %v4514
    %v4516 = vpop.f32.mrf.mxu0
    %v4517 = vadd.f32 0.0, %v4516
    %4518 = vdwg.mxu0
    %4519 = vmatprep.subr.mxu0 %v1214
    %4520 = vmatpush1.msra.mxu0 %v1213
    %4521 = vmatprep.subr.mxu0 %v1210
    %4522 = vmatpush1.msra.mxu0 %v1209
    %4523 = vmatprep.subr.mxu0 %v1206
    %4524 = vmatpush1.msra.mxu0 %v1205
    %4525 = vmatprep.subr.mxu0 %v1202
    %4526 = vmatpush1.msra.mxu0 %v1201
    %4527 = vmatprep.subr.mxu0 %v1198
    %4528 = vmatpush1.msra.mxu0 %v1197
    %4529 = vmatprep.subr.mxu0 %v1194
    %4530 = vmatpush1.msra.mxu0 %v1193
    %4531 = vmatprep.subr.mxu0 %v1190
    %4532 = vmatpush1.msra.mxu0 %v1189
    %4533 = vmatprep.subr.mxu0 %v1186
    %4534 = vmatpush1.msra.mxu0 %v1185
    %4535 = vmatprep.subr.mxu0 %v1182
    %4536 = vmatpush1.msra.mxu0 %v1181
    %4537 = vmatprep.subr.mxu0 %v1178
    %4538 = vmatpush1.msra.mxu0 %v1177
    %4539 = vmatprep.subr.mxu0 %v1174
    %4540 = vmatpush1.msra.mxu0 %v1173
    %4541 = vmatprep.subr.mxu0 %v1170
    %4542 = vmatpush1.msra.mxu0 %v1169
    %4543 = vmatprep.subr.mxu0 %v1166
    %4544 = vmatpush1.msra.mxu0 %v1165
    %4545 = vmatprep.subr.mxu0 %v1162
    %4546 = vmatpush1.msra.mxu0 %v1161
    %4547 = vmatprep.subr.mxu0 %v1158
    %4548 = vmatpush1.msra.mxu0 %v1157
    %4549 = vmatprep.subr.mxu0 %v1154
    %4550 = vmatpush1.msra.mxu0 %v1153
    %4551 = vmatprep.subr.mxu0 0.0
    %4552 = vmatpush2.msra.mxu0 0.0
    %4553 = vmatprep.subr.mxu0 0.0
    %4554 = vmatpush2.msra.mxu0 0.0
    %4555 = vmatprep.subr.mxu0 0.0
    %4556 = vmatpush2.msra.mxu0 0.0
    %4557 = vmatprep.subr.mxu0 0.0
    %4558 = vmatpush2.msra.mxu0 0.0
    %4559 = vmatprep.subr.mxu0 0.0
    %4560 = vmatpush2.msra.mxu0 0.0
    %4561 = vmatprep.subr.mxu0 0.0
    %4562 = vmatpush2.msra.mxu0 0.0
    %4563 = vmatprep.subr.mxu0 0.0
    %4564 = vmatpush2.msra.mxu0 0.0
    %4565 = vmatprep.subr.mxu0 0.0
    %4566 = vmatpush2.msra.mxu0 0.0
    %4567 = vmatprep.subr.mxu0 0.0
    %4568 = vmatpush2.msra.mxu0 0.0
    %4569 = vmatprep.subr.mxu0 0.0
    %4570 = vmatpush2.msra.mxu0 0.0
    %4571 = vmatprep.subr.mxu0 0.0
    %4572 = vmatpush2.msra.mxu0 0.0
    %4573 = vmatprep.subr.mxu0 0.0
    %4574 = vmatpush2.msra.mxu0 0.0
    %4575 = vmatprep.subr.mxu0 0.0
    %4576 = vmatpush2.msra.mxu0 0.0
    %4577 = vmatprep.subr.mxu0 0.0
    %4578 = vmatpush2.msra.mxu0 0.0
    %4579 = vmatprep.subr.mxu0 0.0
    %4580 = vmatpush2.msra.mxu0 0.0
    %4581 = vmatprep.subr.mxu0 0.0
    %4582 = vmatpush2.msra.mxu0 0.0
    %4583 = vmatprep.mubr.f32.mxu0 0.0
    %4584 = vmatmul.mubr.f32.gmra.mxu0 %v3962
    %v4585 = vpop.f32.mrf.mxu0
    %v4586 = vadd.f32 0.0, %v4585
    %v4587 = vpop.f32.mrf.mxu0
    %v4588 = vadd.f32 0.0, %v4587
    %4589 = vdwg.mxu0
    %4590 = vmatprep.subr.mxu0 %v1148
    %4591 = vmatpush1.msra.mxu0 %v1147
    %4592 = vmatprep.subr.mxu0 %v1144
    %4593 = vmatpush1.msra.mxu0 %v1143
    %4594 = vmatprep.subr.mxu0 %v1140
    %4595 = vmatpush1.msra.mxu0 %v1139
    %4596 = vmatprep.subr.mxu0 %v1136
    %4597 = vmatpush1.msra.mxu0 %v1135
    %4598 = vmatprep.subr.mxu0 %v1132
    %4599 = vmatpush1.msra.mxu0 %v1131
    %4600 = vmatprep.subr.mxu0 %v1128
    %4601 = vmatpush1.msra.mxu0 %v1127
    %4602 = vmatprep.subr.mxu0 %v1124
    %4603 = vmatpush1.msra.mxu0 %v1123
    %4604 = vmatprep.subr.mxu0 %v1120
    %4605 = vmatpush1.msra.mxu0 %v1119
    %4606 = vmatprep.subr.mxu0 %v1116
    %4607 = vmatpush1.msra.mxu0 %v1115
    %4608 = vmatprep.subr.mxu0 %v1112
    %4609 = vmatpush1.msra.mxu0 %v1111
    %4610 = vmatprep.subr.mxu0 %v1108
    %4611 = vmatpush1.msra.mxu0 %v1107
    %4612 = vmatprep.subr.mxu0 %v1104
    %4613 = vmatpush1.msra.mxu0 %v1103
    %4614 = vmatprep.subr.mxu0 %v1100
    %4615 = vmatpush1.msra.mxu0 %v1099
    %4616 = vmatprep.subr.mxu0 %v1096
    %4617 = vmatpush1.msra.mxu0 %v1095
    %4618 = vmatprep.subr.mxu0 %v1092
    %4619 = vmatpush1.msra.mxu0 %v1091
    %4620 = vmatprep.subr.mxu0 %v1088
    %4621 = vmatpush1.msra.mxu0 %v1087
    %4622 = vmatprep.subr.mxu0 0.0
    %4623 = vmatpush2.msra.mxu0 0.0
    %4624 = vmatprep.subr.mxu0 0.0
    %4625 = vmatpush2.msra.mxu0 0.0
    %4626 = vmatprep.subr.mxu0 0.0
    %4627 = vmatpush2.msra.mxu0 0.0
    %4628 = vmatprep.subr.mxu0 0.0
    %4629 = vmatpush2.msra.mxu0 0.0
    %4630 = vmatprep.subr.mxu0 0.0
    %4631 = vmatpush2.msra.mxu0 0.0
    %4632 = vmatprep.subr.mxu0 0.0
    %4633 = vmatpush2.msra.mxu0 0.0
    %4634 = vmatprep.subr.mxu0 0.0
    %4635 = vmatpush2.msra.mxu0 0.0
    %4636 = vmatprep.subr.mxu0 0.0
    %4637 = vmatpush2.msra.mxu0 0.0
    %4638 = vmatprep.subr.mxu0 0.0
    %4639 = vmatpush2.msra.mxu0 0.0
    %4640 = vmatprep.subr.mxu0 0.0
    %4641 = vmatpush2.msra.mxu0 0.0
    %4642 = vmatprep.subr.mxu0 0.0
    %4643 = vmatpush2.msra.mxu0 0.0
    %4644 = vmatprep.subr.mxu0 0.0
    %4645 = vmatpush2.msra.mxu0 0.0
    %4646 = vmatprep.subr.mxu0 0.0
    %4647 = vmatpush2.msra.mxu0 0.0
    %4648 = vmatprep.subr.mxu0 0.0
    %4649 = vmatpush2.msra.mxu0 0.0
    %4650 = vmatprep.subr.mxu0 0.0
    %4651 = vmatpush2.msra.mxu0 0.0
    %4652 = vmatprep.subr.mxu0 0.0
    %4653 = vmatpush2.msra.mxu0 0.0
    %4654 = vmatprep.mubr.f32.mxu0 0.0
    %4655 = vmatmul.mubr.f32.gmra.mxu0 %v4447
    %v4656 = vpop.f32.mrf.mxu0
    %v4657 = vadd.f32 %v4515, %v4656
    %v4658 = vpop.f32.mrf.mxu0
    %v4659 = vadd.f32 %v4517, %v4658
    %4660 = vdwg.mxu0
    %4661 = vmatprep.subr.mxu0 %v1150
    %4662 = vmatpush1.msra.mxu0 %v1149
    %4663 = vmatprep.subr.mxu0 %v1146
    %4664 = vmatpush1.msra.mxu0 %v1145
    %4665 = vmatprep.subr.mxu0 %v1142
    %4666 = vmatpush1.msra.mxu0 %v1141
    %4667 = vmatprep.subr.mxu0 %v1138
    %4668 = vmatpush1.msra.mxu0 %v1137
    %4669 = vmatprep.subr.mxu0 %v1134
    %4670 = vmatpush1.msra.mxu0 %v1133
    %4671 = vmatprep.subr.mxu0 %v1130
    %4672 = vmatpush1.msra.mxu0 %v1129
    %4673 = vmatprep.subr.mxu0 %v1126
    %4674 = vmatpush1.msra.mxu0 %v1125
    %4675 = vmatprep.subr.mxu0 %v1122
    %4676 = vmatpush1.msra.mxu0 %v1121
    %4677 = vmatprep.subr.mxu0 %v1118
    %4678 = vmatpush1.msra.mxu0 %v1117
    %4679 = vmatprep.subr.mxu0 %v1114
    %4680 = vmatpush1.msra.mxu0 %v1113
    %4681 = vmatprep.subr.mxu0 %v1110
    %4682 = vmatpush1.msra.mxu0 %v1109
    %4683 = vmatprep.subr.mxu0 %v1106
    %4684 = vmatpush1.msra.mxu0 %v1105
    %4685 = vmatprep.subr.mxu0 %v1102
    %4686 = vmatpush1.msra.mxu0 %v1101
    %4687 = vmatprep.subr.mxu0 %v1098
    %4688 = vmatpush1.msra.mxu0 %v1097
    %4689 = vmatprep.subr.mxu0 %v1094
    %4690 = vmatpush1.msra.mxu0 %v1093
    %4691 = vmatprep.subr.mxu0 %v1090
    %4692 = vmatpush1.msra.mxu0 %v1089
    %4693 = vmatprep.subr.mxu0 0.0
    %4694 = vmatpush2.msra.mxu0 0.0
    %4695 = vmatprep.subr.mxu0 0.0
    %4696 = vmatpush2.msra.mxu0 0.0
    %4697 = vmatprep.subr.mxu0 0.0
    %4698 = vmatpush2.msra.mxu0 0.0
    %4699 = vmatprep.subr.mxu0 0.0
    %4700 = vmatpush2.msra.mxu0 0.0
    %4701 = vmatprep.subr.mxu0 0.0
    %4702 = vmatpush2.msra.mxu0 0.0
    %4703 = vmatprep.subr.mxu0 0.0
    %4704 = vmatpush2.msra.mxu0 0.0
    %4705 = vmatprep.subr.mxu0 0.0
    %4706 = vmatpush2.msra.mxu0 0.0
    %4707 = vmatprep.subr.mxu0 0.0
    %4708 = vmatpush2.msra.mxu0 0.0
    %4709 = vmatprep.subr.mxu0 0.0
    %4710 = vmatpush2.msra.mxu0 0.0
    %4711 = vmatprep.subr.mxu0 0.0
    %4712 = vmatpush2.msra.mxu0 0.0
    %4713 = vmatprep.subr.mxu0 0.0
    %4714 = vmatpush2.msra.mxu0 0.0
    %4715 = vmatprep.subr.mxu0 0.0
    %4716 = vmatpush2.msra.mxu0 0.0
    %4717 = vmatprep.subr.mxu0 0.0
    %4718 = vmatpush2.msra.mxu0 0.0
    %4719 = vmatprep.subr.mxu0 0.0
    %4720 = vmatpush2.msra.mxu0 0.0
    %4721 = vmatprep.subr.mxu0 0.0
    %4722 = vmatpush2.msra.mxu0 0.0
    %4723 = vmatprep.subr.mxu0 0.0
    %4724 = vmatpush2.msra.mxu0 0.0
    %4725 = vmatprep.mubr.f32.mxu0 0.0
    %4726 = vmatmul.mubr.f32.gmra.mxu0 %v4447
    %v4727 = vpop.f32.mrf.mxu0
    %v4728 = vadd.f32 %v4586, %v4727
    %v4729 = vpop.f32.mrf.mxu0
    %v4730 = vadd.f32 %v4588, %v4729
    %4731 = vdwg.mxu0
    %v4732 = vadd.f32 %v4657, %v396
    %v4733 = vadd.f32 %v4659, %v400
    %v4734 = vadd.f32 %v4728, %v404
    %v4735 = vadd.f32 %v4730, %v408
    %v4736 = vxor.u32 %v4732, 2147483648
    %v4737 = vxor.u32 %v4733, 2147483648
    %v4738 = vxor.u32 %v4734, 2147483648
    %v4739 = vmul.f32 %v4736, 1.442695
    %v4740 = vpow.pop %v4739
    %v4741 = vmul.f32 %v4737, 1.442695
    %v4742 = vpow.pop %v4741
    %v4743 = vmul.f32 %v4738, 1.442695
    %v4744 = vpow.pop %v4743
    %v4745 = vadd.f32 %v4740, 1.0
    %v4746 = vadd.f32 %v4742, 1.0
    %v4747 = vadd.f32 %v4744, 1.0
    %v4748 = vrcp.pop %v4745
    %v4749 = vmul.f32 1.0, %v4748
    %v4750 = vrcp.pop %v4746
    %v4751 = vmul.f32 1.0, %v4750
    %v4752 = vrcp.pop %v4747
    %v4753 = vmul.f32 1.0, %v4752
    %v4754 = vtanh.pop %v4735
    %v4755 = vmul.f32 %v4751, %v3960
    %v4756 = vmul.f32 %v4749, %v4754
    %v4757 = vadd.f32 %v4755, %v4756
    %v4758 = vtanh.pop %v4757
    %v4759 = vmul.f32 %v4753, %v4758
    %4760 = vmatprep.subr.mxu0 %v474
    %4761 = vmatpush1.msra.mxu0 %v473
    %4762 = vmatprep.subr.mxu0 %v470
    %4763 = vmatpush1.msra.mxu0 %v469
    %4764 = vmatprep.subr.mxu0 %v466
    %4765 = vmatpush1.msra.mxu0 %v465
    %4766 = vmatprep.subr.mxu0 %v462
    %4767 = vmatpush1.msra.mxu0 %v461
    %4768 = vmatprep.subr.mxu0 %v458
    %4769 = vmatpush1.msra.mxu0 %v457
    %4770 = vmatprep.subr.mxu0 %v454
    %4771 = vmatpush1.msra.mxu0 %v453
    %4772 = vmatprep.subr.mxu0 %v450
    %4773 = vmatpush1.msra.mxu0 %v449
    %4774 = vmatprep.subr.mxu0 %v446
    %4775 = vmatpush1.msra.mxu0 %v445
    %4776 = vmatprep.subr.mxu0 %v442
    %4777 = vmatpush1.msra.mxu0 %v441
    %4778 = vmatprep.subr.mxu0 %v438
    %4779 = vmatpush1.msra.mxu0 %v437
    %4780 = vmatprep.subr.mxu0 %v434
    %4781 = vmatpush1.msra.mxu0 %v433
    %4782 = vmatprep.subr.mxu0 %v430
    %4783 = vmatpush1.msra.mxu0 %v429
    %4784 = vmatprep.subr.mxu0 %v426
    %4785 = vmatpush1.msra.mxu0 %v425
    %4786 = vmatprep.subr.mxu0 %v422
    %4787 = vmatpush1.msra.mxu0 %v421
    %4788 = vmatprep.subr.mxu0 %v418
    %4789 = vmatpush1.msra.mxu0 %v417
    %4790 = vmatprep.subr.mxu0 %v414
    %4791 = vmatpush1.msra.mxu0 %v413
    %4792 = vmatprep.subr.mxu0 0.0
    %4793 = vmatpush2.msra.mxu0 0.0
    %4794 = vmatprep.subr.mxu0 0.0
    %4795 = vmatpush2.msra.mxu0 0.0
    %4796 = vmatprep.subr.mxu0 0.0
    %4797 = vmatpush2.msra.mxu0 0.0
    %4798 = vmatprep.subr.mxu0 0.0
    %4799 = vmatpush2.msra.mxu0 0.0
    %4800 = vmatprep.subr.mxu0 0.0
    %4801 = vmatpush2.msra.mxu0 0.0
    %4802 = vmatprep.subr.mxu0 0.0
    %4803 = vmatpush2.msra.mxu0 0.0
    %4804 = vmatprep.subr.mxu0 0.0
    %4805 = vmatpush2.msra.mxu0 0.0
    %4806 = vmatprep.subr.mxu0 0.0
    %4807 = vmatpush2.msra.mxu0 0.0
    %4808 = vmatprep.subr.mxu0 0.0
    %4809 = vmatpush2.msra.mxu0 0.0
    %4810 = vmatprep.subr.mxu0 0.0
    %4811 = vmatpush2.msra.mxu0 0.0
    %4812 = vmatprep.subr.mxu0 0.0
    %4813 = vmatpush2.msra.mxu0 0.0
    %4814 = vmatprep.subr.mxu0 0.0
    %4815 = vmatpush2.msra.mxu0 0.0
    %4816 = vmatprep.subr.mxu0 0.0
    %4817 = vmatpush2.msra.mxu0 0.0
    %4818 = vmatprep.subr.mxu0 0.0
    %4819 = vmatpush2.msra.mxu0 0.0
    %4820 = vmatprep.subr.mxu0 0.0
    %4821 = vmatpush2.msra.mxu0 0.0
    %4822 = vmatprep.subr.mxu0 0.0
    %4823 = vmatpush2.msra.mxu0 0.0
    %4824 = vmatprep.mubr.f32.mxu0 0.0
    %4825 = vmatmul.mubr.f32.gmra.mxu0 %v4135
    %v4826 = vpop.f32.mrf.mxu0
    %v4827 = vadd.f32 0.0, %v4826
    %v4828 = vpop.f32.mrf.mxu0
    %v4829 = vadd.f32 0.0, %v4828
    %4830 = vdwg.mxu0
    %4831 = vmatprep.subr.mxu0 %v476
    %4832 = vmatpush1.msra.mxu0 %v475
    %4833 = vmatprep.subr.mxu0 %v472
    %4834 = vmatpush1.msra.mxu0 %v471
    %4835 = vmatprep.subr.mxu0 %v468
    %4836 = vmatpush1.msra.mxu0 %v467
    %4837 = vmatprep.subr.mxu0 %v464
    %4838 = vmatpush1.msra.mxu0 %v463
    %4839 = vmatprep.subr.mxu0 %v460
    %4840 = vmatpush1.msra.mxu0 %v459
    %4841 = vmatprep.subr.mxu0 %v456
    %4842 = vmatpush1.msra.mxu0 %v455
    %4843 = vmatprep.subr.mxu0 %v452
    %4844 = vmatpush1.msra.mxu0 %v451
    %4845 = vmatprep.subr.mxu0 %v448
    %4846 = vmatpush1.msra.mxu0 %v447
    %4847 = vmatprep.subr.mxu0 %v444
    %4848 = vmatpush1.msra.mxu0 %v443
    %4849 = vmatprep.subr.mxu0 %v440
    %4850 = vmatpush1.msra.mxu0 %v439
    %4851 = vmatprep.subr.mxu0 %v436
    %4852 = vmatpush1.msra.mxu0 %v435
    %4853 = vmatprep.subr.mxu0 %v432
    %4854 = vmatpush1.msra.mxu0 %v431
    %4855 = vmatprep.subr.mxu0 %v428
    %4856 = vmatpush1.msra.mxu0 %v427
    %4857 = vmatprep.subr.mxu0 %v424
    %4858 = vmatpush1.msra.mxu0 %v423
    %4859 = vmatprep.subr.mxu0 %v420
    %4860 = vmatpush1.msra.mxu0 %v419
    %4861 = vmatprep.subr.mxu0 %v416
    %4862 = vmatpush1.msra.mxu0 %v415
    %4863 = vmatprep.subr.mxu0 0.0
    %4864 = vmatpush2.msra.mxu0 0.0
    %4865 = vmatprep.subr.mxu0 0.0
    %4866 = vmatpush2.msra.mxu0 0.0
    %4867 = vmatprep.subr.mxu0 0.0
    %4868 = vmatpush2.msra.mxu0 0.0
    %4869 = vmatprep.subr.mxu0 0.0
    %4870 = vmatpush2.msra.mxu0 0.0
    %4871 = vmatprep.subr.mxu0 0.0
    %4872 = vmatpush2.msra.mxu0 0.0
    %4873 = vmatprep.subr.mxu0 0.0
    %4874 = vmatpush2.msra.mxu0 0.0
    %4875 = vmatprep.subr.mxu0 0.0
    %4876 = vmatpush2.msra.mxu0 0.0
    %4877 = vmatprep.subr.mxu0 0.0
    %4878 = vmatpush2.msra.mxu0 0.0
    %4879 = vmatprep.subr.mxu0 0.0
    %4880 = vmatpush2.msra.mxu0 0.0
    %4881 = vmatprep.subr.mxu0 0.0
    %4882 = vmatpush2.msra.mxu0 0.0
    %4883 = vmatprep.subr.mxu0 0.0
    %4884 = vmatpush2.msra.mxu0 0.0
    %4885 = vmatprep.subr.mxu0 0.0
    %4886 = vmatpush2.msra.mxu0 0.0
    %4887 = vmatprep.subr.mxu0 0.0
    %4888 = vmatpush2.msra.mxu0 0.0
    %4889 = vmatprep.subr.mxu0 0.0
    %4890 = vmatpush2.msra.mxu0 0.0
    %4891 = vmatprep.subr.mxu0 0.0
    %4892 = vmatpush2.msra.mxu0 0.0
    %4893 = vmatprep.subr.mxu0 0.0
    %4894 = vmatpush2.msra.mxu0 0.0
    %4895 = vmatprep.mubr.f32.mxu0 0.0
    %4896 = vmatmul.mubr.f32.gmra.mxu0 %v4135
    %v4897 = vpop.f32.mrf.mxu0
    %v4898 = vadd.f32 0.0, %v4897
    %v4899 = vpop.f32.mrf.mxu0
    %v4900 = vadd.f32 0.0, %v4899
    %4901 = vdwg.mxu0
    %v4906 = vrot.slane %v4827, 6
    %v4907 = vrot.slane %v4829, 6
    %v4908 = vrot.slane %v4898, 6
    %v4909 = vrot.slane %v4900, 6
    %v4914 = vadd.f32 %v288, %v4906
    %v4915 = vadd.f32 %v290, %v4907
    %v4916 = vadd.f32 %v365, %v4908
    %v4917 = vadd.f32 %v367, %v4909
    %v4918 = vxor.u32 %v4914, 2147483648
    %v4919 = vxor.u32 %v4915, 2147483648
    %v4920 = vxor.u32 %v4916, 2147483648
    %v4921 = vmul.f32 %v4918, 1.442695
    %v4922 = vpow.pop %v4921
    %v4923 = vmul.f32 %v4919, 1.442695
    %v4924 = vpow.pop %v4923
    %v4925 = vmul.f32 %v4920, 1.442695
    %v4926 = vpow.pop %v4925
    %v4927 = vadd.f32 %v4922, 1.0
    %v4928 = vadd.f32 %v4924, 1.0
    %v4929 = vadd.f32 %v4926, 1.0
    %v4930 = vrcp.pop %v4927
    %v4931 = vmul.f32 1.0, %v4930
    %v4932 = vrcp.pop %v4928
    %v4933 = vmul.f32 1.0, %v4932
    %v4934 = vrcp.pop %v4929
    %v4935 = vmul.f32 1.0, %v4934
    %v4936 = vtanh.pop %v4917
    %v4938 = vrot.slane %v4133, 6
    %v4940 = vmul.f32 %v4933, %v4938
    %v4941 = vmul.f32 %v4931, %v4936
    %v4942 = vadd.f32 %v4940, %v4941
    %v4943 = vtanh.pop %v4942
    %v4944 = vmul.f32 %v4935, %v4943
    %4945 = vmatprep.subr.mxu0 %v772
    %4946 = vmatpush1.msra.mxu0 %v771
    %4947 = vmatprep.subr.mxu0 %v768
    %4948 = vmatpush1.msra.mxu0 %v767
    %4949 = vmatprep.subr.mxu0 %v764
    %4950 = vmatpush1.msra.mxu0 %v763
    %4951 = vmatprep.subr.mxu0 %v760
    %4952 = vmatpush1.msra.mxu0 %v759
    %4953 = vmatprep.subr.mxu0 %v756
    %4954 = vmatpush1.msra.mxu0 %v755
    %4955 = vmatprep.subr.mxu0 %v752
    %4956 = vmatpush1.msra.mxu0 %v751
    %4957 = vmatprep.subr.mxu0 %v748
    %4958 = vmatpush1.msra.mxu0 %v747
    %4959 = vmatprep.subr.mxu0 %v744
    %4960 = vmatpush1.msra.mxu0 %v743
    %4961 = vmatprep.subr.mxu0 %v740
    %4962 = vmatpush1.msra.mxu0 %v739
    %4963 = vmatprep.subr.mxu0 %v736
    %4964 = vmatpush1.msra.mxu0 %v735
    %4965 = vmatprep.subr.mxu0 %v732
    %4966 = vmatpush1.msra.mxu0 %v731
    %4967 = vmatprep.subr.mxu0 %v728
    %4968 = vmatpush1.msra.mxu0 %v727
    %4969 = vmatprep.subr.mxu0 %v724
    %4970 = vmatpush1.msra.mxu0 %v723
    %4971 = vmatprep.subr.mxu0 %v720
    %4972 = vmatpush1.msra.mxu0 %v719
    %4973 = vmatprep.subr.mxu0 %v716
    %4974 = vmatpush1.msra.mxu0 %v715
    %4975 = vmatprep.subr.mxu0 %v712
    %4976 = vmatpush1.msra.mxu0 %v711
    %4977 = vmatprep.subr.mxu0 0.0
    %4978 = vmatpush2.msra.mxu0 0.0
    %4979 = vmatprep.subr.mxu0 0.0
    %4980 = vmatpush2.msra.mxu0 0.0
    %4981 = vmatprep.subr.mxu0 0.0
    %4982 = vmatpush2.msra.mxu0 0.0
    %4983 = vmatprep.subr.mxu0 0.0
    %4984 = vmatpush2.msra.mxu0 0.0
    %4985 = vmatprep.subr.mxu0 0.0
    %4986 = vmatpush2.msra.mxu0 0.0
    %4987 = vmatprep.subr.mxu0 0.0
    %4988 = vmatpush2.msra.mxu0 0.0
    %4989 = vmatprep.subr.mxu0 0.0
    %4990 = vmatpush2.msra.mxu0 0.0
    %4991 = vmatprep.subr.mxu0 0.0
    %4992 = vmatpush2.msra.mxu0 0.0
    %4993 = vmatprep.subr.mxu0 0.0
    %4994 = vmatpush2.msra.mxu0 0.0
    %4995 = vmatprep.subr.mxu0 0.0
    %4996 = vmatpush2.msra.mxu0 0.0
    %4997 = vmatprep.subr.mxu0 0.0
    %4998 = vmatpush2.msra.mxu0 0.0
    %4999 = vmatprep.subr.mxu0 0.0
    %5000 = vmatpush2.msra.mxu0 0.0
    %5001 = vmatprep.subr.mxu0 0.0
    %5002 = vmatpush2.msra.mxu0 0.0
    %5003 = vmatprep.subr.mxu0 0.0
    %5004 = vmatpush2.msra.mxu0 0.0
    %5005 = vmatprep.subr.mxu0 0.0
    %5006 = vmatpush2.msra.mxu0 0.0
    %5007 = vmatprep.subr.mxu0 0.0
    %5008 = vmatpush2.msra.mxu0 0.0
    %5009 = vmatprep.mubr.f32.mxu0 0.0
    %5010 = vmatmul.mubr.f32.gmra.mxu0 %v4447
    %v5011 = vpop.f32.mrf.mxu0
    %v5012 = vadd.f32 0.0, %v5011
    %v5013 = vpop.f32.mrf.mxu0
    %v5014 = vadd.f32 0.0, %v5013
    %5015 = vdwg.mxu0
    %5016 = vmatprep.subr.mxu0 %v774
    %5017 = vmatpush1.msra.mxu0 %v773
    %5018 = vmatprep.subr.mxu0 %v770
    %5019 = vmatpush1.msra.mxu0 %v769
    %5020 = vmatprep.subr.mxu0 %v766
    %5021 = vmatpush1.msra.mxu0 %v765
    %5022 = vmatprep.subr.mxu0 %v762
    %5023 = vmatpush1.msra.mxu0 %v761
    %5024 = vmatprep.subr.mxu0 %v758
    %5025 = vmatpush1.msra.mxu0 %v757
    %5026 = vmatprep.subr.mxu0 %v754
    %5027 = vmatpush1.msra.mxu0 %v753
    %5028 = vmatprep.subr.mxu0 %v750
    %5029 = vmatpush1.msra.mxu0 %v749
    %5030 = vmatprep.subr.mxu0 %v746
    %5031 = vmatpush1.msra.mxu0 %v745
    %5032 = vmatprep.subr.mxu0 %v742
    %5033 = vmatpush1.msra.mxu0 %v741
    %5034 = vmatprep.subr.mxu0 %v738
    %5035 = vmatpush1.msra.mxu0 %v737
    %5036 = vmatprep.subr.mxu0 %v734
    %5037 = vmatpush1.msra.mxu0 %v733
    %5038 = vmatprep.subr.mxu0 %v730
    %5039 = vmatpush1.msra.mxu0 %v729
    %5040 = vmatprep.subr.mxu0 %v726
    %5041 = vmatpush1.msra.mxu0 %v725
    %5042 = vmatprep.subr.mxu0 %v722
    %5043 = vmatpush1.msra.mxu0 %v721
    %5044 = vmatprep.subr.mxu0 %v718
    %5045 = vmatpush1.msra.mxu0 %v717
    %5046 = vmatprep.subr.mxu0 %v714
    %5047 = vmatpush1.msra.mxu0 %v713
    %5048 = vmatprep.subr.mxu0 0.0
    %5049 = vmatpush2.msra.mxu0 0.0
    %5050 = vmatprep.subr.mxu0 0.0
    %5051 = vmatpush2.msra.mxu0 0.0
    %5052 = vmatprep.subr.mxu0 0.0
    %5053 = vmatpush2.msra.mxu0 0.0
    %5054 = vmatprep.subr.mxu0 0.0
    %5055 = vmatpush2.msra.mxu0 0.0
    %5056 = vmatprep.subr.mxu0 0.0
    %5057 = vmatpush2.msra.mxu0 0.0
    %5058 = vmatprep.subr.mxu0 0.0
    %5059 = vmatpush2.msra.mxu0 0.0
    %5060 = vmatprep.subr.mxu0 0.0
    %5061 = vmatpush2.msra.mxu0 0.0
    %5062 = vmatprep.subr.mxu0 0.0
    %5063 = vmatpush2.msra.mxu0 0.0
    %5064 = vmatprep.subr.mxu0 0.0
    %5065 = vmatpush2.msra.mxu0 0.0
    %5066 = vmatprep.subr.mxu0 0.0
    %5067 = vmatpush2.msra.mxu0 0.0
    %5068 = vmatprep.subr.mxu0 0.0
    %5069 = vmatpush2.msra.mxu0 0.0
    %5070 = vmatprep.subr.mxu0 0.0
    %5071 = vmatpush2.msra.mxu0 0.0
    %5072 = vmatprep.subr.mxu0 0.0
    %5073 = vmatpush2.msra.mxu0 0.0
    %5074 = vmatprep.subr.mxu0 0.0
    %5075 = vmatpush2.msra.mxu0 0.0
    %5076 = vmatprep.subr.mxu0 0.0
    %5077 = vmatpush2.msra.mxu0 0.0
    %5078 = vmatprep.subr.mxu0 0.0
    %5079 = vmatpush2.msra.mxu0 0.0
    %5080 = vmatprep.mubr.f32.mxu0 0.0
    %5081 = vmatmul.mubr.f32.gmra.mxu0 %v4447
    %v5082 = vpop.f32.mrf.mxu0
    %v5083 = vadd.f32 0.0, %v5082
    %v5084 = vpop.f32.mrf.mxu0
    %v5085 = vadd.f32 0.0, %v5084
    %5086 = vdwg.mxu0
    %v5088 = vrot.slane %v4944, 2
    %5090 = vmatprep.subr.mxu0 %v708
    %5091 = vmatpush1.msra.mxu0 %v707
    %5092 = vmatprep.subr.mxu0 %v704
    %5093 = vmatpush1.msra.mxu0 %v703
    %5094 = vmatprep.subr.mxu0 %v700
    %5095 = vmatpush1.msra.mxu0 %v699
    %5096 = vmatprep.subr.mxu0 %v696
    %5097 = vmatpush1.msra.mxu0 %v695
    %5098 = vmatprep.subr.mxu0 %v692
    %5099 = vmatpush1.msra.mxu0 %v691
    %5100 = vmatprep.subr.mxu0 %v688
    %5101 = vmatpush1.msra.mxu0 %v687
    %5102 = vmatprep.subr.mxu0 %v684
    %5103 = vmatpush1.msra.mxu0 %v683
    %5104 = vmatprep.subr.mxu0 %v680
    %5105 = vmatpush1.msra.mxu0 %v679
    %5106 = vmatprep.subr.mxu0 %v676
    %5107 = vmatpush1.msra.mxu0 %v675
    %5108 = vmatprep.subr.mxu0 %v672
    %5109 = vmatpush1.msra.mxu0 %v671
    %5110 = vmatprep.subr.mxu0 %v668
    %5111 = vmatpush1.msra.mxu0 %v667
    %5112 = vmatprep.subr.mxu0 %v664
    %5113 = vmatpush1.msra.mxu0 %v663
    %5114 = vmatprep.subr.mxu0 %v660
    %5115 = vmatpush1.msra.mxu0 %v659
    %5116 = vmatprep.subr.mxu0 %v656
    %5117 = vmatpush1.msra.mxu0 %v655
    %5118 = vmatprep.subr.mxu0 %v652
    %5119 = vmatpush1.msra.mxu0 %v651
    %5120 = vmatprep.subr.mxu0 %v648
    %5121 = vmatpush1.msra.mxu0 %v647
    %5122 = vmatprep.subr.mxu0 0.0
    %5123 = vmatpush2.msra.mxu0 0.0
    %5124 = vmatprep.subr.mxu0 0.0
    %5125 = vmatpush2.msra.mxu0 0.0
    %5126 = vmatprep.subr.mxu0 0.0
    %5127 = vmatpush2.msra.mxu0 0.0
    %5128 = vmatprep.subr.mxu0 0.0
    %5129 = vmatpush2.msra.mxu0 0.0
    %5130 = vmatprep.subr.mxu0 0.0
    %5131 = vmatpush2.msra.mxu0 0.0
    %5132 = vmatprep.subr.mxu0 0.0
    %5133 = vmatpush2.msra.mxu0 0.0
    %5134 = vmatprep.subr.mxu0 0.0
    %5135 = vmatpush2.msra.mxu0 0.0
    %5136 = vmatprep.subr.mxu0 0.0
    %5137 = vmatpush2.msra.mxu0 0.0
    %5138 = vmatprep.subr.mxu0 0.0
    %5139 = vmatpush2.msra.mxu0 0.0
    %5140 = vmatprep.subr.mxu0 0.0
    %5141 = vmatpush2.msra.mxu0 0.0
    %5142 = vmatprep.subr.mxu0 0.0
    %5143 = vmatpush2.msra.mxu0 0.0
    %5144 = vmatprep.subr.mxu0 0.0
    %5145 = vmatpush2.msra.mxu0 0.0
    %5146 = vmatprep.subr.mxu0 0.0
    %5147 = vmatpush2.msra.mxu0 0.0
    %5148 = vmatprep.subr.mxu0 0.0
    %5149 = vmatpush2.msra.mxu0 0.0
    %5150 = vmatprep.subr.mxu0 0.0
    %5151 = vmatpush2.msra.mxu0 0.0
    %5152 = vmatprep.subr.mxu0 0.0
    %5153 = vmatpush2.msra.mxu0 0.0
    %5154 = vmatprep.mubr.f32.mxu0 0.0
    %5155 = vmatmul.mubr.f32.gmra.mxu0 %v5088
    %v5156 = vpop.f32.mrf.mxu0
    %v5157 = vadd.f32 %v5012, %v5156
    %v5158 = vpop.f32.mrf.mxu0
    %v5159 = vadd.f32 %v5014, %v5158
    %5160 = vdwg.mxu0
    %5161 = vmatprep.subr.mxu0 %v710
    %5162 = vmatpush1.msra.mxu0 %v709
    %5163 = vmatprep.subr.mxu0 %v706
    %5164 = vmatpush1.msra.mxu0 %v705
    %5165 = vmatprep.subr.mxu0 %v702
    %5166 = vmatpush1.msra.mxu0 %v701
    %5167 = vmatprep.subr.mxu0 %v698
    %5168 = vmatpush1.msra.mxu0 %v697
    %5169 = vmatprep.subr.mxu0 %v694
    %5170 = vmatpush1.msra.mxu0 %v693
    %5171 = vmatprep.subr.mxu0 %v690
    %5172 = vmatpush1.msra.mxu0 %v689
    %5173 = vmatprep.subr.mxu0 %v686
    %5174 = vmatpush1.msra.mxu0 %v685
    %5175 = vmatprep.subr.mxu0 %v682
    %5176 = vmatpush1.msra.mxu0 %v681
    %5177 = vmatprep.subr.mxu0 %v678
    %5178 = vmatpush1.msra.mxu0 %v677
    %5179 = vmatprep.subr.mxu0 %v674
    %5180 = vmatpush1.msra.mxu0 %v673
    %5181 = vmatprep.subr.mxu0 %v670
    %5182 = vmatpush1.msra.mxu0 %v669
    %5183 = vmatprep.subr.mxu0 %v666
    %5184 = vmatpush1.msra.mxu0 %v665
    %5185 = vmatprep.subr.mxu0 %v662
    %5186 = vmatpush1.msra.mxu0 %v661
    %5187 = vmatprep.subr.mxu0 %v658
    %5188 = vmatpush1.msra.mxu0 %v657
    %5189 = vmatprep.subr.mxu0 %v654
    %5190 = vmatpush1.msra.mxu0 %v653
    %5191 = vmatprep.subr.mxu0 %v650
    %5192 = vmatpush1.msra.mxu0 %v649
    %5193 = vmatprep.subr.mxu0 0.0
    %5194 = vmatpush2.msra.mxu0 0.0
    %5195 = vmatprep.subr.mxu0 0.0
    %5196 = vmatpush2.msra.mxu0 0.0
    %5197 = vmatprep.subr.mxu0 0.0
    %5198 = vmatpush2.msra.mxu0 0.0
    %5199 = vmatprep.subr.mxu0 0.0
    %5200 = vmatpush2.msra.mxu0 0.0
    %5201 = vmatprep.subr.mxu0 0.0
    %5202 = vmatpush2.msra.mxu0 0.0
    %5203 = vmatprep.subr.mxu0 0.0
    %5204 = vmatpush2.msra.mxu0 0.0
    %5205 = vmatprep.subr.mxu0 0.0
    %5206 = vmatpush2.msra.mxu0 0.0
    %5207 = vmatprep.subr.mxu0 0.0
    %5208 = vmatpush2.msra.mxu0 0.0
    %5209 = vmatprep.subr.mxu0 0.0
    %5210 = vmatpush2.msra.mxu0 0.0
    %5211 = vmatprep.subr.mxu0 0.0
    %5212 = vmatpush2.msra.mxu0 0.0
    %5213 = vmatprep.subr.mxu0 0.0
    %5214 = vmatpush2.msra.mxu0 0.0
    %5215 = vmatprep.subr.mxu0 0.0
    %5216 = vmatpush2.msra.mxu0 0.0
    %5217 = vmatprep.subr.mxu0 0.0
    %5218 = vmatpush2.msra.mxu0 0.0
    %5219 = vmatprep.subr.mxu0 0.0
    %5220 = vmatpush2.msra.mxu0 0.0
    %5221 = vmatprep.subr.mxu0 0.0
    %5222 = vmatpush2.msra.mxu0 0.0
    %5223 = vmatprep.subr.mxu0 0.0
    %5224 = vmatpush2.msra.mxu0 0.0
    %5225 = vmatprep.mubr.f32.mxu0 0.0
    %5226 = vmatmul.mubr.f32.gmra.mxu0 %v5088
    %v5227 = vpop.f32.mrf.mxu0
    %v5228 = vadd.f32 %v5083, %v5227
    %v5229 = vpop.f32.mrf.mxu0
    %v5230 = vadd.f32 %v5085, %v5229
    %5231 = vdwg.mxu0
    %v5232 = vadd.f32 %v5157, %v374
    %v5233 = vadd.f32 %v5159, %v378
    %v5234 = vadd.f32 %v5228, %v382
    %v5235 = vadd.f32 %v5230, %v386
    %v5236 = vxor.u32 %v5232, 2147483648
    %v5237 = vxor.u32 %v5233, 2147483648
    %v5238 = vxor.u32 %v5234, 2147483648
    %v5239 = vmul.f32 %v5236, 1.442695
    %v5240 = vpow.pop %v5239
    %v5241 = vmul.f32 %v5237, 1.442695
    %v5242 = vpow.pop %v5241
    %v5243 = vmul.f32 %v5238, 1.442695
    %v5244 = vpow.pop %v5243
    %v5245 = vadd.f32 %v5240, 1.0
    %v5246 = vadd.f32 %v5242, 1.0
    %v5247 = vadd.f32 %v5244, 1.0
    %v5248 = vrcp.pop %v5245
    %v5249 = vmul.f32 1.0, %v5248
    %v5250 = vrcp.pop %v5246
    %v5251 = vmul.f32 1.0, %v5250
    %v5252 = vrcp.pop %v5247
    %v5253 = vmul.f32 1.0, %v5252
    %v5254 = vtanh.pop %v5235
    %v5255 = vmul.f32 %v5251, %v4445
    %v5256 = vmul.f32 %v5249, %v5254
    %v5257 = vadd.f32 %v5255, %v5256
    %v5258 = vtanh.pop %v5257
    %v5259 = vmul.f32 %v5253, %v5258
    %5260 = vmatprep.subr.mxu0 %v1212
    %5261 = vmatpush1.msra.mxu0 %v1211
    %5262 = vmatprep.subr.mxu0 %v1208
    %5263 = vmatpush1.msra.mxu0 %v1207
    %5264 = vmatprep.subr.mxu0 %v1204
    %5265 = vmatpush1.msra.mxu0 %v1203
    %5266 = vmatprep.subr.mxu0 %v1200
    %5267 = vmatpush1.msra.mxu0 %v1199
    %5268 = vmatprep.subr.mxu0 %v1196
    %5269 = vmatpush1.msra.mxu0 %v1195
    %5270 = vmatprep.subr.mxu0 %v1192
    %5271 = vmatpush1.msra.mxu0 %v1191
    %5272 = vmatprep.subr.mxu0 %v1188
    %5273 = vmatpush1.msra.mxu0 %v1187
    %5274 = vmatprep.subr.mxu0 %v1184
    %5275 = vmatpush1.msra.mxu0 %v1183
    %5276 = vmatprep.subr.mxu0 %v1180
    %5277 = vmatpush1.msra.mxu0 %v1179
    %5278 = vmatprep.subr.mxu0 %v1176
    %5279 = vmatpush1.msra.mxu0 %v1175
    %5280 = vmatprep.subr.mxu0 %v1172
    %5281 = vmatpush1.msra.mxu0 %v1171
    %5282 = vmatprep.subr.mxu0 %v1168
    %5283 = vmatpush1.msra.mxu0 %v1167
    %5284 = vmatprep.subr.mxu0 %v1164
    %5285 = vmatpush1.msra.mxu0 %v1163
    %5286 = vmatprep.subr.mxu0 %v1160
    %5287 = vmatpush1.msra.mxu0 %v1159
    %5288 = vmatprep.subr.mxu0 %v1156
    %5289 = vmatpush1.msra.mxu0 %v1155
    %5290 = vmatprep.subr.mxu0 %v1152
    %5291 = vmatpush1.msra.mxu0 %v1151
    %5292 = vmatprep.subr.mxu0 0.0
    %5293 = vmatpush2.msra.mxu0 0.0
    %5294 = vmatprep.subr.mxu0 0.0
    %5295 = vmatpush2.msra.mxu0 0.0
    %5296 = vmatprep.subr.mxu0 0.0
    %5297 = vmatpush2.msra.mxu0 0.0
    %5298 = vmatprep.subr.mxu0 0.0
    %5299 = vmatpush2.msra.mxu0 0.0
    %5300 = vmatprep.subr.mxu0 0.0
    %5301 = vmatpush2.msra.mxu0 0.0
    %5302 = vmatprep.subr.mxu0 0.0
    %5303 = vmatpush2.msra.mxu0 0.0
    %5304 = vmatprep.subr.mxu0 0.0
    %5305 = vmatpush2.msra.mxu0 0.0
    %5306 = vmatprep.subr.mxu0 0.0
    %5307 = vmatpush2.msra.mxu0 0.0
    %5308 = vmatprep.subr.mxu0 0.0
    %5309 = vmatpush2.msra.mxu0 0.0
    %5310 = vmatprep.subr.mxu0 0.0
    %5311 = vmatpush2.msra.mxu0 0.0
    %5312 = vmatprep.subr.mxu0 0.0
    %5313 = vmatpush2.msra.mxu0 0.0
    %5314 = vmatprep.subr.mxu0 0.0
    %5315 = vmatpush2.msra.mxu0 0.0
    %5316 = vmatprep.subr.mxu0 0.0
    %5317 = vmatpush2.msra.mxu0 0.0
    %5318 = vmatprep.subr.mxu0 0.0
    %5319 = vmatpush2.msra.mxu0 0.0
    %5320 = vmatprep.subr.mxu0 0.0
    %5321 = vmatpush2.msra.mxu0 0.0
    %5322 = vmatprep.subr.mxu0 0.0
    %5323 = vmatpush2.msra.mxu0 0.0
    %5324 = vmatprep.mubr.f32.mxu0 0.0
    %5325 = vmatmul.mubr.f32.gmra.mxu0 %v4759
    %v5326 = vpop.f32.mrf.mxu0
    %v5327 = vadd.f32 0.0, %v5326
    %v5328 = vpop.f32.mrf.mxu0
    %v5329 = vadd.f32 0.0, %v5328
    %5330 = vdwg.mxu0
    %5331 = vmatprep.subr.mxu0 %v1214
    %5332 = vmatpush1.msra.mxu0 %v1213
    %5333 = vmatprep.subr.mxu0 %v1210
    %5334 = vmatpush1.msra.mxu0 %v1209
    %5335 = vmatprep.subr.mxu0 %v1206
    %5336 = vmatpush1.msra.mxu0 %v1205
    %5337 = vmatprep.subr.mxu0 %v1202
    %5338 = vmatpush1.msra.mxu0 %v1201
    %5339 = vmatprep.subr.mxu0 %v1198
    %5340 = vmatpush1.msra.mxu0 %v1197
    %5341 = vmatprep.subr.mxu0 %v1194
    %5342 = vmatpush1.msra.mxu0 %v1193
    %5343 = vmatprep.subr.mxu0 %v1190
    %5344 = vmatpush1.msra.mxu0 %v1189
    %5345 = vmatprep.subr.mxu0 %v1186
    %5346 = vmatpush1.msra.mxu0 %v1185
    %5347 = vmatprep.subr.mxu0 %v1182
    %5348 = vmatpush1.msra.mxu0 %v1181
    %5349 = vmatprep.subr.mxu0 %v1178
    %5350 = vmatpush1.msra.mxu0 %v1177
    %5351 = vmatprep.subr.mxu0 %v1174
    %5352 = vmatpush1.msra.mxu0 %v1173
    %5353 = vmatprep.subr.mxu0 %v1170
    %5354 = vmatpush1.msra.mxu0 %v1169
    %5355 = vmatprep.subr.mxu0 %v1166
    %5356 = vmatpush1.msra.mxu0 %v1165
    %5357 = vmatprep.subr.mxu0 %v1162
    %5358 = vmatpush1.msra.mxu0 %v1161
    %5359 = vmatprep.subr.mxu0 %v1158
    %5360 = vmatpush1.msra.mxu0 %v1157
    %5361 = vmatprep.subr.mxu0 %v1154
    %5362 = vmatpush1.msra.mxu0 %v1153
    %5363 = vmatprep.subr.mxu0 0.0
    %5364 = vmatpush2.msra.mxu0 0.0
    %5365 = vmatprep.subr.mxu0 0.0
    %5366 = vmatpush2.msra.mxu0 0.0
    %5367 = vmatprep.subr.mxu0 0.0
    %5368 = vmatpush2.msra.mxu0 0.0
    %5369 = vmatprep.subr.mxu0 0.0
    %5370 = vmatpush2.msra.mxu0 0.0
    %5371 = vmatprep.subr.mxu0 0.0
    %5372 = vmatpush2.msra.mxu0 0.0
    %5373 = vmatprep.subr.mxu0 0.0
    %5374 = vmatpush2.msra.mxu0 0.0
    %5375 = vmatprep.subr.mxu0 0.0
    %5376 = vmatpush2.msra.mxu0 0.0
    %5377 = vmatprep.subr.mxu0 0.0
    %5378 = vmatpush2.msra.mxu0 0.0
    %5379 = vmatprep.subr.mxu0 0.0
    %5380 = vmatpush2.msra.mxu0 0.0
    %5381 = vmatprep.subr.mxu0 0.0
    %5382 = vmatpush2.msra.mxu0 0.0
    %5383 = vmatprep.subr.mxu0 0.0
    %5384 = vmatpush2.msra.mxu0 0.0
    %5385 = vmatprep.subr.mxu0 0.0
    %5386 = vmatpush2.msra.mxu0 0.0
    %5387 = vmatprep.subr.mxu0 0.0
    %5388 = vmatpush2.msra.mxu0 0.0
    %5389 = vmatprep.subr.mxu0 0.0
    %5390 = vmatpush2.msra.mxu0 0.0
    %5391 = vmatprep.subr.mxu0 0.0
    %5392 = vmatpush2.msra.mxu0 0.0
    %5393 = vmatprep.subr.mxu0 0.0
    %5394 = vmatpush2.msra.mxu0 0.0
    %5395 = vmatprep.mubr.f32.mxu0 0.0
    %5396 = vmatmul.mubr.f32.gmra.mxu0 %v4759
    %v5397 = vpop.f32.mrf.mxu0
    %v5398 = vadd.f32 0.0, %v5397
    %v5399 = vpop.f32.mrf.mxu0
    %v5400 = vadd.f32 0.0, %v5399
    %5401 = vdwg.mxu0
    %5402 = vmatprep.subr.mxu0 %v1148
    %5403 = vmatpush1.msra.mxu0 %v1147
    %5404 = vmatprep.subr.mxu0 %v1144
    %5405 = vmatpush1.msra.mxu0 %v1143
    %5406 = vmatprep.subr.mxu0 %v1140
    %5407 = vmatpush1.msra.mxu0 %v1139
    %5408 = vmatprep.subr.mxu0 %v1136
    %5409 = vmatpush1.msra.mxu0 %v1135
    %5410 = vmatprep.subr.mxu0 %v1132
    %5411 = vmatpush1.msra.mxu0 %v1131
    %5412 = vmatprep.subr.mxu0 %v1128
    %5413 = vmatpush1.msra.mxu0 %v1127
    %5414 = vmatprep.subr.mxu0 %v1124
    %5415 = vmatpush1.msra.mxu0 %v1123
    %5416 = vmatprep.subr.mxu0 %v1120
    %5417 = vmatpush1.msra.mxu0 %v1119
    %5418 = vmatprep.subr.mxu0 %v1116
    %5419 = vmatpush1.msra.mxu0 %v1115
    %5420 = vmatprep.subr.mxu0 %v1112
    %5421 = vmatpush1.msra.mxu0 %v1111
    %5422 = vmatprep.subr.mxu0 %v1108
    %5423 = vmatpush1.msra.mxu0 %v1107
    %5424 = vmatprep.subr.mxu0 %v1104
    %5425 = vmatpush1.msra.mxu0 %v1103
    %5426 = vmatprep.subr.mxu0 %v1100
    %5427 = vmatpush1.msra.mxu0 %v1099
    %5428 = vmatprep.subr.mxu0 %v1096
    %5429 = vmatpush1.msra.mxu0 %v1095
    %5430 = vmatprep.subr.mxu0 %v1092
    %5431 = vmatpush1.msra.mxu0 %v1091
    %5432 = vmatprep.subr.mxu0 %v1088
    %5433 = vmatpush1.msra.mxu0 %v1087
    %5434 = vmatprep.subr.mxu0 0.0
    %5435 = vmatpush2.msra.mxu0 0.0
    %5436 = vmatprep.subr.mxu0 0.0
    %5437 = vmatpush2.msra.mxu0 0.0
    %5438 = vmatprep.subr.mxu0 0.0
    %5439 = vmatpush2.msra.mxu0 0.0
    %5440 = vmatprep.subr.mxu0 0.0
    %5441 = vmatpush2.msra.mxu0 0.0
    %5442 = vmatprep.subr.mxu0 0.0
    %5443 = vmatpush2.msra.mxu0 0.0
    %5444 = vmatprep.subr.mxu0 0.0
    %5445 = vmatpush2.msra.mxu0 0.0
    %5446 = vmatprep.subr.mxu0 0.0
    %5447 = vmatpush2.msra.mxu0 0.0
    %5448 = vmatprep.subr.mxu0 0.0
    %5449 = vmatpush2.msra.mxu0 0.0
    %5450 = vmatprep.subr.mxu0 0.0
    %5451 = vmatpush2.msra.mxu0 0.0
    %5452 = vmatprep.subr.mxu0 0.0
    %5453 = vmatpush2.msra.mxu0 0.0
    %5454 = vmatprep.subr.mxu0 0.0
    %5455 = vmatpush2.msra.mxu0 0.0
    %5456 = vmatprep.subr.mxu0 0.0
    %5457 = vmatpush2.msra.mxu0 0.0
    %5458 = vmatprep.subr.mxu0 0.0
    %5459 = vmatpush2.msra.mxu0 0.0
    %5460 = vmatprep.subr.mxu0 0.0
    %5461 = vmatpush2.msra.mxu0 0.0
    %5462 = vmatprep.subr.mxu0 0.0
    %5463 = vmatpush2.msra.mxu0 0.0
    %5464 = vmatprep.subr.mxu0 0.0
    %5465 = vmatpush2.msra.mxu0 0.0
    %5466 = vmatprep.mubr.f32.mxu0 0.0
    %5467 = vmatmul.mubr.f32.gmra.mxu0 %v5259
    %v5468 = vpop.f32.mrf.mxu0
    %v5469 = vadd.f32 %v5327, %v5468
    %v5470 = vpop.f32.mrf.mxu0
    %v5471 = vadd.f32 %v5329, %v5470
    %5472 = vdwg.mxu0
    %5473 = vmatprep.subr.mxu0 %v1150
    %5474 = vmatpush1.msra.mxu0 %v1149
    %5475 = vmatprep.subr.mxu0 %v1146
    %5476 = vmatpush1.msra.mxu0 %v1145
    %5477 = vmatprep.subr.mxu0 %v1142
    %5478 = vmatpush1.msra.mxu0 %v1141
    %5479 = vmatprep.subr.mxu0 %v1138
    %5480 = vmatpush1.msra.mxu0 %v1137
    %5481 = vmatprep.subr.mxu0 %v1134
    %5482 = vmatpush1.msra.mxu0 %v1133
    %5483 = vmatprep.subr.mxu0 %v1130
    %5484 = vmatpush1.msra.mxu0 %v1129
    %5485 = vmatprep.subr.mxu0 %v1126
    %5486 = vmatpush1.msra.mxu0 %v1125
    %5487 = vmatprep.subr.mxu0 %v1122
    %5488 = vmatpush1.msra.mxu0 %v1121
    %5489 = vmatprep.subr.mxu0 %v1118
    %5490 = vmatpush1.msra.mxu0 %v1117
    %5491 = vmatprep.subr.mxu0 %v1114
    %5492 = vmatpush1.msra.mxu0 %v1113
    %5493 = vmatprep.subr.mxu0 %v1110
    %5494 = vmatpush1.msra.mxu0 %v1109
    %5495 = vmatprep.subr.mxu0 %v1106
    %5496 = vmatpush1.msra.mxu0 %v1105
    %5497 = vmatprep.subr.mxu0 %v1102
    %5498 = vmatpush1.msra.mxu0 %v1101
    %5499 = vmatprep.subr.mxu0 %v1098
    %5500 = vmatpush1.msra.mxu0 %v1097
    %5501 = vmatprep.subr.mxu0 %v1094
    %5502 = vmatpush1.msra.mxu0 %v1093
    %5503 = vmatprep.subr.mxu0 %v1090
    %5504 = vmatpush1.msra.mxu0 %v1089
    %5505 = vmatprep.subr.mxu0 0.0
    %5506 = vmatpush2.msra.mxu0 0.0
    %5507 = vmatprep.subr.mxu0 0.0
    %5508 = vmatpush2.msra.mxu0 0.0
    %5509 = vmatprep.subr.mxu0 0.0
    %5510 = vmatpush2.msra.mxu0 0.0
    %5511 = vmatprep.subr.mxu0 0.0
    %5512 = vmatpush2.msra.mxu0 0.0
    %5513 = vmatprep.subr.mxu0 0.0
    %5514 = vmatpush2.msra.mxu0 0.0
    %5515 = vmatprep.subr.mxu0 0.0
    %5516 = vmatpush2.msra.mxu0 0.0
    %5517 = vmatprep.subr.mxu0 0.0
    %5518 = vmatpush2.msra.mxu0 0.0
    %5519 = vmatprep.subr.mxu0 0.0
    %5520 = vmatpush2.msra.mxu0 0.0
    %5521 = vmatprep.subr.mxu0 0.0
    %5522 = vmatpush2.msra.mxu0 0.0
    %5523 = vmatprep.subr.mxu0 0.0
    %5524 = vmatpush2.msra.mxu0 0.0
    %5525 = vmatprep.subr.mxu0 0.0
    %5526 = vmatpush2.msra.mxu0 0.0
    %5527 = vmatprep.subr.mxu0 0.0
    %5528 = vmatpush2.msra.mxu0 0.0
    %5529 = vmatprep.subr.mxu0 0.0
    %5530 = vmatpush2.msra.mxu0 0.0
    %5531 = vmatprep.subr.mxu0 0.0
    %5532 = vmatpush2.msra.mxu0 0.0
    %5533 = vmatprep.subr.mxu0 0.0
    %5534 = vmatpush2.msra.mxu0 0.0
    %5535 = vmatprep.subr.mxu0 0.0
    %5536 = vmatpush2.msra.mxu0 0.0
    %5537 = vmatprep.mubr.f32.mxu0 0.0
    %5538 = vmatmul.mubr.f32.gmra.mxu0 %v5259
    %v5539 = vpop.f32.mrf.mxu0
    %v5540 = vadd.f32 %v5398, %v5539
    %v5541 = vpop.f32.mrf.mxu0
    %v5542 = vadd.f32 %v5400, %v5541
    %5543 = vdwg.mxu0
    %v5544 = vadd.f32 %v5469, %v396
    %v5545 = vadd.f32 %v5471, %v400
    %v5546 = vadd.f32 %v5540, %v404
    %v5547 = vadd.f32 %v5542, %v408
    %v5548 = vxor.u32 %v5544, 2147483648
    %v5549 = vxor.u32 %v5545, 2147483648
    %v5550 = vxor.u32 %v5546, 2147483648
    %v5551 = vmul.f32 %v5548, 1.442695
    %v5552 = vpow.pop %v5551
    %v5553 = vmul.f32 %v5549, 1.442695
    %v5554 = vpow.pop %v5553
    %v5555 = vmul.f32 %v5550, 1.442695
    %v5556 = vpow.pop %v5555
    %v5557 = vadd.f32 %v5552, 1.0
    %v5558 = vadd.f32 %v5554, 1.0
    %v5559 = vadd.f32 %v5556, 1.0
    %v5560 = vrcp.pop %v5557
    %v5561 = vmul.f32 1.0, %v5560
    %v5562 = vrcp.pop %v5558
    %v5563 = vmul.f32 1.0, %v5562
    %v5564 = vrcp.pop %v5559
    %v5565 = vmul.f32 1.0, %v5564
    %v5566 = vtanh.pop %v5547
    %v5567 = vmul.f32 %v5563, %v4757
    %v5568 = vmul.f32 %v5561, %v5566
    %v5569 = vadd.f32 %v5567, %v5568
    %v5570 = vtanh.pop %v5569
    %v5571 = vmul.f32 %v5565, %v5570
    %5572 = vmatprep.subr.mxu0 %v474
    %5573 = vmatpush1.msra.mxu0 %v473
    %5574 = vmatprep.subr.mxu0 %v470
    %5575 = vmatpush1.msra.mxu0 %v469
    %5576 = vmatprep.subr.mxu0 %v466
    %5577 = vmatpush1.msra.mxu0 %v465
    %5578 = vmatprep.subr.mxu0 %v462
    %5579 = vmatpush1.msra.mxu0 %v461
    %5580 = vmatprep.subr.mxu0 %v458
    %5581 = vmatpush1.msra.mxu0 %v457
    %5582 = vmatprep.subr.mxu0 %v454
    %5583 = vmatpush1.msra.mxu0 %v453
    %5584 = vmatprep.subr.mxu0 %v450
    %5585 = vmatpush1.msra.mxu0 %v449
    %5586 = vmatprep.subr.mxu0 %v446
    %5587 = vmatpush1.msra.mxu0 %v445
    %5588 = vmatprep.subr.mxu0 %v442
    %5589 = vmatpush1.msra.mxu0 %v441
    %5590 = vmatprep.subr.mxu0 %v438
    %5591 = vmatpush1.msra.mxu0 %v437
    %5592 = vmatprep.subr.mxu0 %v434
    %5593 = vmatpush1.msra.mxu0 %v433
    %5594 = vmatprep.subr.mxu0 %v430
    %5595 = vmatpush1.msra.mxu0 %v429
    %5596 = vmatprep.subr.mxu0 %v426
    %5597 = vmatpush1.msra.mxu0 %v425
    %5598 = vmatprep.subr.mxu0 %v422
    %5599 = vmatpush1.msra.mxu0 %v421
    %5600 = vmatprep.subr.mxu0 %v418
    %5601 = vmatpush1.msra.mxu0 %v417
    %5602 = vmatprep.subr.mxu0 %v414
    %5603 = vmatpush1.msra.mxu0 %v413
    %5604 = vmatprep.subr.mxu0 0.0
    %5605 = vmatpush2.msra.mxu0 0.0
    %5606 = vmatprep.subr.mxu0 0.0
    %5607 = vmatpush2.msra.mxu0 0.0
    %5608 = vmatprep.subr.mxu0 0.0
    %5609 = vmatpush2.msra.mxu0 0.0
    %5610 = vmatprep.subr.mxu0 0.0
    %5611 = vmatpush2.msra.mxu0 0.0
    %5612 = vmatprep.subr.mxu0 0.0
    %5613 = vmatpush2.msra.mxu0 0.0
    %5614 = vmatprep.subr.mxu0 0.0
    %5615 = vmatpush2.msra.mxu0 0.0
    %5616 = vmatprep.subr.mxu0 0.0
    %5617 = vmatpush2.msra.mxu0 0.0
    %5618 = vmatprep.subr.mxu0 0.0
    %5619 = vmatpush2.msra.mxu0 0.0
    %5620 = vmatprep.subr.mxu0 0.0
    %5621 = vmatpush2.msra.mxu0 0.0
    %5622 = vmatprep.subr.mxu0 0.0
    %5623 = vmatpush2.msra.mxu0 0.0
    %5624 = vmatprep.subr.mxu0 0.0
    %5625 = vmatpush2.msra.mxu0 0.0
    %5626 = vmatprep.subr.mxu0 0.0
    %5627 = vmatpush2.msra.mxu0 0.0
    %5628 = vmatprep.subr.mxu0 0.0
    %5629 = vmatpush2.msra.mxu0 0.0
    %5630 = vmatprep.subr.mxu0 0.0
    %5631 = vmatpush2.msra.mxu0 0.0
    %5632 = vmatprep.subr.mxu0 0.0
    %5633 = vmatpush2.msra.mxu0 0.0
    %5634 = vmatprep.subr.mxu0 0.0
    %5635 = vmatpush2.msra.mxu0 0.0
    %5636 = vmatprep.mubr.f32.mxu0 0.0
    %5637 = vmatmul.mubr.f32.gmra.mxu0 %v5088
    %v5638 = vpop.f32.mrf.mxu0
    %v5639 = vadd.f32 0.0, %v5638
    %v5640 = vpop.f32.mrf.mxu0
    %v5641 = vadd.f32 0.0, %v5640
    %5642 = vdwg.mxu0
    %5643 = vmatprep.subr.mxu0 %v476
    %5644 = vmatpush1.msra.mxu0 %v475
    %5645 = vmatprep.subr.mxu0 %v472
    %5646 = vmatpush1.msra.mxu0 %v471
    %5647 = vmatprep.subr.mxu0 %v468
    %5648 = vmatpush1.msra.mxu0 %v467
    %5649 = vmatprep.subr.mxu0 %v464
    %5650 = vmatpush1.msra.mxu0 %v463
    %5651 = vmatprep.subr.mxu0 %v460
    %5652 = vmatpush1.msra.mxu0 %v459
    %5653 = vmatprep.subr.mxu0 %v456
    %5654 = vmatpush1.msra.mxu0 %v455
    %5655 = vmatprep.subr.mxu0 %v452
    %5656 = vmatpush1.msra.mxu0 %v451
    %5657 = vmatprep.subr.mxu0 %v448
    %5658 = vmatpush1.msra.mxu0 %v447
    %5659 = vmatprep.subr.mxu0 %v444
    %5660 = vmatpush1.msra.mxu0 %v443
    %5661 = vmatprep.subr.mxu0 %v440
    %5662 = vmatpush1.msra.mxu0 %v439
    %5663 = vmatprep.subr.mxu0 %v436
    %5664 = vmatpush1.msra.mxu0 %v435
    %5665 = vmatprep.subr.mxu0 %v432
    %5666 = vmatpush1.msra.mxu0 %v431
    %5667 = vmatprep.subr.mxu0 %v428
    %5668 = vmatpush1.msra.mxu0 %v427
    %5669 = vmatprep.subr.mxu0 %v424
    %5670 = vmatpush1.msra.mxu0 %v423
    %5671 = vmatprep.subr.mxu0 %v420
    %5672 = vmatpush1.msra.mxu0 %v419
    %5673 = vmatprep.subr.mxu0 %v416
    %5674 = vmatpush1.msra.mxu0 %v415
    %5675 = vmatprep.subr.mxu0 0.0
    %5676 = vmatpush2.msra.mxu0 0.0
    %5677 = vmatprep.subr.mxu0 0.0
    %5678 = vmatpush2.msra.mxu0 0.0
    %5679 = vmatprep.subr.mxu0 0.0
    %5680 = vmatpush2.msra.mxu0 0.0
    %5681 = vmatprep.subr.mxu0 0.0
    %5682 = vmatpush2.msra.mxu0 0.0
    %5683 = vmatprep.subr.mxu0 0.0
    %5684 = vmatpush2.msra.mxu0 0.0
    %5685 = vmatprep.subr.mxu0 0.0
    %5686 = vmatpush2.msra.mxu0 0.0
    %5687 = vmatprep.subr.mxu0 0.0
    %5688 = vmatpush2.msra.mxu0 0.0
    %5689 = vmatprep.subr.mxu0 0.0
    %5690 = vmatpush2.msra.mxu0 0.0
    %5691 = vmatprep.subr.mxu0 0.0
    %5692 = vmatpush2.msra.mxu0 0.0
    %5693 = vmatprep.subr.mxu0 0.0
    %5694 = vmatpush2.msra.mxu0 0.0
    %5695 = vmatprep.subr.mxu0 0.0
    %5696 = vmatpush2.msra.mxu0 0.0
    %5697 = vmatprep.subr.mxu0 0.0
    %5698 = vmatpush2.msra.mxu0 0.0
    %5699 = vmatprep.subr.mxu0 0.0
    %5700 = vmatpush2.msra.mxu0 0.0
    %5701 = vmatprep.subr.mxu0 0.0
    %5702 = vmatpush2.msra.mxu0 0.0
    %5703 = vmatprep.subr.mxu0 0.0
    %5704 = vmatpush2.msra.mxu0 0.0
    %5705 = vmatprep.subr.mxu0 0.0
    %5706 = vmatpush2.msra.mxu0 0.0
    %5707 = vmatprep.mubr.f32.mxu0 0.0
    %5708 = vmatmul.mubr.f32.gmra.mxu0 %v5088
    %v5709 = vpop.f32.mrf.mxu0
    %v5710 = vadd.f32 0.0, %v5709
    %v5711 = vpop.f32.mrf.mxu0
    %v5712 = vadd.f32 0.0, %v5711
    %5713 = vdwg.mxu0
    %v5718 = vrot.slane %v5639, 4
    %v5719 = vrot.slane %v5641, 4
    %v5720 = vrot.slane %v5710, 4
    %v5721 = vrot.slane %v5712, 4
    %v5726 = vadd.f32 %v288, %v5718
    %v5727 = vadd.f32 %v290, %v5719
    %v5728 = vadd.f32 %v365, %v5720
    %v5729 = vadd.f32 %v367, %v5721
    %v5730 = vxor.u32 %v5726, 2147483648
    %v5731 = vxor.u32 %v5727, 2147483648
    %v5732 = vxor.u32 %v5728, 2147483648
    %v5733 = vmul.f32 %v5730, 1.442695
    %v5734 = vpow.pop %v5733
    %v5735 = vmul.f32 %v5731, 1.442695
    %v5736 = vpow.pop %v5735
    %v5737 = vmul.f32 %v5732, 1.442695
    %v5738 = vpow.pop %v5737
    %v5739 = vadd.f32 %v5734, 1.0
    %v5740 = vadd.f32 %v5736, 1.0
    %v5741 = vadd.f32 %v5738, 1.0
    %v5742 = vrcp.pop %v5739
    %v5743 = vmul.f32 1.0, %v5742
    %v5744 = vrcp.pop %v5740
    %v5745 = vmul.f32 1.0, %v5744
    %v5746 = vrcp.pop %v5741
    %v5747 = vmul.f32 1.0, %v5746
    %v5748 = vtanh.pop %v5729
    %v5750 = vrot.slane %v4942, 6
    %v5752 = vmul.f32 %v5745, %v5750
    %v5753 = vmul.f32 %v5743, %v5748
    %v5754 = vadd.f32 %v5752, %v5753
    %v5755 = vtanh.pop %v5754
    %v5756 = vmul.f32 %v5747, %v5755
    %5757 = vmatprep.subr.mxu0 %v772
    %5758 = vmatpush1.msra.mxu0 %v771
    %5759 = vmatprep.subr.mxu0 %v768
    %5760 = vmatpush1.msra.mxu0 %v767
    %5761 = vmatprep.subr.mxu0 %v764
    %5762 = vmatpush1.msra.mxu0 %v763
    %5763 = vmatprep.subr.mxu0 %v760
    %5764 = vmatpush1.msra.mxu0 %v759
    %5765 = vmatprep.subr.mxu0 %v756
    %5766 = vmatpush1.msra.mxu0 %v755
    %5767 = vmatprep.subr.mxu0 %v752
    %5768 = vmatpush1.msra.mxu0 %v751
    %5769 = vmatprep.subr.mxu0 %v748
    %5770 = vmatpush1.msra.mxu0 %v747
    %5771 = vmatprep.subr.mxu0 %v744
    %5772 = vmatpush1.msra.mxu0 %v743
    %5773 = vmatprep.subr.mxu0 %v740
    %5774 = vmatpush1.msra.mxu0 %v739
    %5775 = vmatprep.subr.mxu0 %v736
    %5776 = vmatpush1.msra.mxu0 %v735
    %5777 = vmatprep.subr.mxu0 %v732
    %5778 = vmatpush1.msra.mxu0 %v731
    %5779 = vmatprep.subr.mxu0 %v728
    %5780 = vmatpush1.msra.mxu0 %v727
    %5781 = vmatprep.subr.mxu0 %v724
    %5782 = vmatpush1.msra.mxu0 %v723
    %5783 = vmatprep.subr.mxu0 %v720
    %5784 = vmatpush1.msra.mxu0 %v719
    %5785 = vmatprep.subr.mxu0 %v716
    %5786 = vmatpush1.msra.mxu0 %v715
    %5787 = vmatprep.subr.mxu0 %v712
    %5788 = vmatpush1.msra.mxu0 %v711
    %5789 = vmatprep.subr.mxu0 0.0
    %5790 = vmatpush2.msra.mxu0 0.0
    %5791 = vmatprep.subr.mxu0 0.0
    %5792 = vmatpush2.msra.mxu0 0.0
    %5793 = vmatprep.subr.mxu0 0.0
    %5794 = vmatpush2.msra.mxu0 0.0
    %5795 = vmatprep.subr.mxu0 0.0
    %5796 = vmatpush2.msra.mxu0 0.0
    %5797 = vmatprep.subr.mxu0 0.0
    %5798 = vmatpush2.msra.mxu0 0.0
    %5799 = vmatprep.subr.mxu0 0.0
    %5800 = vmatpush2.msra.mxu0 0.0
    %5801 = vmatprep.subr.mxu0 0.0
    %5802 = vmatpush2.msra.mxu0 0.0
    %5803 = vmatprep.subr.mxu0 0.0
    %5804 = vmatpush2.msra.mxu0 0.0
    %5805 = vmatprep.subr.mxu0 0.0
    %5806 = vmatpush2.msra.mxu0 0.0
    %5807 = vmatprep.subr.mxu0 0.0
    %5808 = vmatpush2.msra.mxu0 0.0
    %5809 = vmatprep.subr.mxu0 0.0
    %5810 = vmatpush2.msra.mxu0 0.0
    %5811 = vmatprep.subr.mxu0 0.0
    %5812 = vmatpush2.msra.mxu0 0.0
    %5813 = vmatprep.subr.mxu0 0.0
    %5814 = vmatpush2.msra.mxu0 0.0
    %5815 = vmatprep.subr.mxu0 0.0
    %5816 = vmatpush2.msra.mxu0 0.0
    %5817 = vmatprep.subr.mxu0 0.0
    %5818 = vmatpush2.msra.mxu0 0.0
    %5819 = vmatprep.subr.mxu0 0.0
    %5820 = vmatpush2.msra.mxu0 0.0
    %5821 = vmatprep.mubr.f32.mxu0 0.0
    %5822 = vmatmul.mubr.f32.gmra.mxu0 %v5259
    %v5823 = vpop.f32.mrf.mxu0
    %v5824 = vadd.f32 0.0, %v5823
    %v5825 = vpop.f32.mrf.mxu0
    %v5826 = vadd.f32 0.0, %v5825
    %5827 = vdwg.mxu0
    %5828 = vmatprep.subr.mxu0 %v774
    %5829 = vmatpush1.msra.mxu0 %v773
    %5830 = vmatprep.subr.mxu0 %v770
    %5831 = vmatpush1.msra.mxu0 %v769
    %5832 = vmatprep.subr.mxu0 %v766
    %5833 = vmatpush1.msra.mxu0 %v765
    %5834 = vmatprep.subr.mxu0 %v762
    %5835 = vmatpush1.msra.mxu0 %v761
    %5836 = vmatprep.subr.mxu0 %v758
    %5837 = vmatpush1.msra.mxu0 %v757
    %5838 = vmatprep.subr.mxu0 %v754
    %5839 = vmatpush1.msra.mxu0 %v753
    %5840 = vmatprep.subr.mxu0 %v750
    %5841 = vmatpush1.msra.mxu0 %v749
    %5842 = vmatprep.subr.mxu0 %v746
    %5843 = vmatpush1.msra.mxu0 %v745
    %5844 = vmatprep.subr.mxu0 %v742
    %5845 = vmatpush1.msra.mxu0 %v741
    %5846 = vmatprep.subr.mxu0 %v738
    %5847 = vmatpush1.msra.mxu0 %v737
    %5848 = vmatprep.subr.mxu0 %v734
    %5849 = vmatpush1.msra.mxu0 %v733
    %5850 = vmatprep.subr.mxu0 %v730
    %5851 = vmatpush1.msra.mxu0 %v729
    %5852 = vmatprep.subr.mxu0 %v726
    %5853 = vmatpush1.msra.mxu0 %v725
    %5854 = vmatprep.subr.mxu0 %v722
    %5855 = vmatpush1.msra.mxu0 %v721
    %5856 = vmatprep.subr.mxu0 %v718
    %5857 = vmatpush1.msra.mxu0 %v717
    %5858 = vmatprep.subr.mxu0 %v714
    %5859 = vmatpush1.msra.mxu0 %v713
    %5860 = vmatprep.subr.mxu0 0.0
    %5861 = vmatpush2.msra.mxu0 0.0
    %5862 = vmatprep.subr.mxu0 0.0
    %5863 = vmatpush2.msra.mxu0 0.0
    %5864 = vmatprep.subr.mxu0 0.0
    %5865 = vmatpush2.msra.mxu0 0.0
    %5866 = vmatprep.subr.mxu0 0.0
    %5867 = vmatpush2.msra.mxu0 0.0
    %5868 = vmatprep.subr.mxu0 0.0
    %5869 = vmatpush2.msra.mxu0 0.0
    %5870 = vmatprep.subr.mxu0 0.0
    %5871 = vmatpush2.msra.mxu0 0.0
    %5872 = vmatprep.subr.mxu0 0.0
    %5873 = vmatpush2.msra.mxu0 0.0
    %5874 = vmatprep.subr.mxu0 0.0
    %5875 = vmatpush2.msra.mxu0 0.0
    %5876 = vmatprep.subr.mxu0 0.0
    %5877 = vmatpush2.msra.mxu0 0.0
    %5878 = vmatprep.subr.mxu0 0.0
    %5879 = vmatpush2.msra.mxu0 0.0
    %5880 = vmatprep.subr.mxu0 0.0
    %5881 = vmatpush2.msra.mxu0 0.0
    %5882 = vmatprep.subr.mxu0 0.0
    %5883 = vmatpush2.msra.mxu0 0.0
    %5884 = vmatprep.subr.mxu0 0.0
    %5885 = vmatpush2.msra.mxu0 0.0
    %5886 = vmatprep.subr.mxu0 0.0
    %5887 = vmatpush2.msra.mxu0 0.0
    %5888 = vmatprep.subr.mxu0 0.0
    %5889 = vmatpush2.msra.mxu0 0.0
    %5890 = vmatprep.subr.mxu0 0.0
    %5891 = vmatpush2.msra.mxu0 0.0
    %5892 = vmatprep.mubr.f32.mxu0 0.0
    %5893 = vmatmul.mubr.f32.gmra.mxu0 %v5259
    %v5894 = vpop.f32.mrf.mxu0
    %v5895 = vadd.f32 0.0, %v5894
    %v5896 = vpop.f32.mrf.mxu0
    %v5897 = vadd.f32 0.0, %v5896
    %5898 = vdwg.mxu0
    %v5900 = vrot.slane %v5756, 4
    %5902 = vmatprep.subr.mxu0 %v708
    %5903 = vmatpush1.msra.mxu0 %v707
    %5904 = vmatprep.subr.mxu0 %v704
    %5905 = vmatpush1.msra.mxu0 %v703
    %5906 = vmatprep.subr.mxu0 %v700
    %5907 = vmatpush1.msra.mxu0 %v699
    %5908 = vmatprep.subr.mxu0 %v696
    %5909 = vmatpush1.msra.mxu0 %v695
    %5910 = vmatprep.subr.mxu0 %v692
    %5911 = vmatpush1.msra.mxu0 %v691
    %5912 = vmatprep.subr.mxu0 %v688
    %5913 = vmatpush1.msra.mxu0 %v687
    %5914 = vmatprep.subr.mxu0 %v684
    %5915 = vmatpush1.msra.mxu0 %v683
    %5916 = vmatprep.subr.mxu0 %v680
    %5917 = vmatpush1.msra.mxu0 %v679
    %5918 = vmatprep.subr.mxu0 %v676
    %5919 = vmatpush1.msra.mxu0 %v675
    %5920 = vmatprep.subr.mxu0 %v672
    %5921 = vmatpush1.msra.mxu0 %v671
    %5922 = vmatprep.subr.mxu0 %v668
    %5923 = vmatpush1.msra.mxu0 %v667
    %5924 = vmatprep.subr.mxu0 %v664
    %5925 = vmatpush1.msra.mxu0 %v663
    %5926 = vmatprep.subr.mxu0 %v660
    %5927 = vmatpush1.msra.mxu0 %v659
    %5928 = vmatprep.subr.mxu0 %v656
    %5929 = vmatpush1.msra.mxu0 %v655
    %5930 = vmatprep.subr.mxu0 %v652
    %5931 = vmatpush1.msra.mxu0 %v651
    %5932 = vmatprep.subr.mxu0 %v648
    %5933 = vmatpush1.msra.mxu0 %v647
    %5934 = vmatprep.subr.mxu0 0.0
    %5935 = vmatpush2.msra.mxu0 0.0
    %5936 = vmatprep.subr.mxu0 0.0
    %5937 = vmatpush2.msra.mxu0 0.0
    %5938 = vmatprep.subr.mxu0 0.0
    %5939 = vmatpush2.msra.mxu0 0.0
    %5940 = vmatprep.subr.mxu0 0.0
    %5941 = vmatpush2.msra.mxu0 0.0
    %5942 = vmatprep.subr.mxu0 0.0
    %5943 = vmatpush2.msra.mxu0 0.0
    %5944 = vmatprep.subr.mxu0 0.0
    %5945 = vmatpush2.msra.mxu0 0.0
    %5946 = vmatprep.subr.mxu0 0.0
    %5947 = vmatpush2.msra.mxu0 0.0
    %5948 = vmatprep.subr.mxu0 0.0
    %5949 = vmatpush2.msra.mxu0 0.0
    %5950 = vmatprep.subr.mxu0 0.0
    %5951 = vmatpush2.msra.mxu0 0.0
    %5952 = vmatprep.subr.mxu0 0.0
    %5953 = vmatpush2.msra.mxu0 0.0
    %5954 = vmatprep.subr.mxu0 0.0
    %5955 = vmatpush2.msra.mxu0 0.0
    %5956 = vmatprep.subr.mxu0 0.0
    %5957 = vmatpush2.msra.mxu0 0.0
    %5958 = vmatprep.subr.mxu0 0.0
    %5959 = vmatpush2.msra.mxu0 0.0
    %5960 = vmatprep.subr.mxu0 0.0
    %5961 = vmatpush2.msra.mxu0 0.0
    %5962 = vmatprep.subr.mxu0 0.0
    %5963 = vmatpush2.msra.mxu0 0.0
    %5964 = vmatprep.subr.mxu0 0.0
    %5965 = vmatpush2.msra.mxu0 0.0
    %5966 = vmatprep.mubr.f32.mxu0 0.0
    %5967 = vmatmul.mubr.f32.gmra.mxu0 %v5900
    %v5968 = vpop.f32.mrf.mxu0
    %v5969 = vadd.f32 %v5824, %v5968
    %v5970 = vpop.f32.mrf.mxu0
    %v5971 = vadd.f32 %v5826, %v5970
    %5972 = vdwg.mxu0
    %5973 = vmatprep.subr.mxu0 %v710
    %5974 = vmatpush1.msra.mxu0 %v709
    %5975 = vmatprep.subr.mxu0 %v706
    %5976 = vmatpush1.msra.mxu0 %v705
    %5977 = vmatprep.subr.mxu0 %v702
    %5978 = vmatpush1.msra.mxu0 %v701
    %5979 = vmatprep.subr.mxu0 %v698
    %5980 = vmatpush1.msra.mxu0 %v697
    %5981 = vmatprep.subr.mxu0 %v694
    %5982 = vmatpush1.msra.mxu0 %v693
    %5983 = vmatprep.subr.mxu0 %v690
    %5984 = vmatpush1.msra.mxu0 %v689
    %5985 = vmatprep.subr.mxu0 %v686
    %5986 = vmatpush1.msra.mxu0 %v685
    %5987 = vmatprep.subr.mxu0 %v682
    %5988 = vmatpush1.msra.mxu0 %v681
    %5989 = vmatprep.subr.mxu0 %v678
    %5990 = vmatpush1.msra.mxu0 %v677
    %5991 = vmatprep.subr.mxu0 %v674
    %5992 = vmatpush1.msra.mxu0 %v673
    %5993 = vmatprep.subr.mxu0 %v670
    %5994 = vmatpush1.msra.mxu0 %v669
    %5995 = vmatprep.subr.mxu0 %v666
    %5996 = vmatpush1.msra.mxu0 %v665
    %5997 = vmatprep.subr.mxu0 %v662
    %5998 = vmatpush1.msra.mxu0 %v661
    %5999 = vmatprep.subr.mxu0 %v658
    %6000 = vmatpush1.msra.mxu0 %v657
    %6001 = vmatprep.subr.mxu0 %v654
    %6002 = vmatpush1.msra.mxu0 %v653
    %6003 = vmatprep.subr.mxu0 %v650
    %6004 = vmatpush1.msra.mxu0 %v649
    %6005 = vmatprep.subr.mxu0 0.0
    %6006 = vmatpush2.msra.mxu0 0.0
    %6007 = vmatprep.subr.mxu0 0.0
    %6008 = vmatpush2.msra.mxu0 0.0
    %6009 = vmatprep.subr.mxu0 0.0
    %6010 = vmatpush2.msra.mxu0 0.0
    %6011 = vmatprep.subr.mxu0 0.0
    %6012 = vmatpush2.msra.mxu0 0.0
    %6013 = vmatprep.subr.mxu0 0.0
    %6014 = vmatpush2.msra.mxu0 0.0
    %6015 = vmatprep.subr.mxu0 0.0
    %6016 = vmatpush2.msra.mxu0 0.0
    %6017 = vmatprep.subr.mxu0 0.0
    %6018 = vmatpush2.msra.mxu0 0.0
    %6019 = vmatprep.subr.mxu0 0.0
    %6020 = vmatpush2.msra.mxu0 0.0
    %6021 = vmatprep.subr.mxu0 0.0
    %6022 = vmatpush2.msra.mxu0 0.0
    %6023 = vmatprep.subr.mxu0 0.0
    %6024 = vmatpush2.msra.mxu0 0.0
    %6025 = vmatprep.subr.mxu0 0.0
    %6026 = vmatpush2.msra.mxu0 0.0
    %6027 = vmatprep.subr.mxu0 0.0
    %6028 = vmatpush2.msra.mxu0 0.0
    %6029 = vmatprep.subr.mxu0 0.0
    %6030 = vmatpush2.msra.mxu0 0.0
    %6031 = vmatprep.subr.mxu0 0.0
    %6032 = vmatpush2.msra.mxu0 0.0
    %6033 = vmatprep.subr.mxu0 0.0
    %6034 = vmatpush2.msra.mxu0 0.0
    %6035 = vmatprep.subr.mxu0 0.0
    %6036 = vmatpush2.msra.mxu0 0.0
    %6037 = vmatprep.mubr.f32.mxu0 0.0
    %6038 = vmatmul.mubr.f32.gmra.mxu0 %v5900
    %v6039 = vpop.f32.mrf.mxu0
    %v6040 = vadd.f32 %v5895, %v6039
    %v6041 = vpop.f32.mrf.mxu0
    %v6042 = vadd.f32 %v5897, %v6041
    %6043 = vdwg.mxu0
    %v6044 = vadd.f32 %v5969, %v374
    %v6045 = vadd.f32 %v5971, %v378
    %v6046 = vadd.f32 %v6040, %v382
    %v6047 = vadd.f32 %v6042, %v386
    %v6048 = vxor.u32 %v6044, 2147483648
    %v6049 = vxor.u32 %v6045, 2147483648
    %v6050 = vxor.u32 %v6046, 2147483648
    %v6051 = vmul.f32 %v6048, 1.442695
    %v6052 = vpow.pop %v6051
    %v6053 = vmul.f32 %v6049, 1.442695
    %v6054 = vpow.pop %v6053
    %v6055 = vmul.f32 %v6050, 1.442695
    %v6056 = vpow.pop %v6055
    %v6057 = vadd.f32 %v6052, 1.0
    %v6058 = vadd.f32 %v6054, 1.0
    %v6059 = vadd.f32 %v6056, 1.0
    %v6060 = vrcp.pop %v6057
    %v6061 = vmul.f32 1.0, %v6060
    %v6062 = vrcp.pop %v6058
    %v6063 = vmul.f32 1.0, %v6062
    %v6064 = vrcp.pop %v6059
    %v6065 = vmul.f32 1.0, %v6064
    %v6066 = vtanh.pop %v6047
    %v6067 = vmul.f32 %v6063, %v5257
    %v6068 = vmul.f32 %v6061, %v6066
    %v6069 = vadd.f32 %v6067, %v6068
    %v6070 = vtanh.pop %v6069
    %v6071 = vmul.f32 %v6065, %v6070
    %6072 = vmatprep.subr.mxu0 %v1212
    %6073 = vmatpush1.msra.mxu0 %v1211
    %6074 = vmatprep.subr.mxu0 %v1208
    %6075 = vmatpush1.msra.mxu0 %v1207
    %6076 = vmatprep.subr.mxu0 %v1204
    %6077 = vmatpush1.msra.mxu0 %v1203
    %6078 = vmatprep.subr.mxu0 %v1200
    %6079 = vmatpush1.msra.mxu0 %v1199
    %6080 = vmatprep.subr.mxu0 %v1196
    %6081 = vmatpush1.msra.mxu0 %v1195
    %6082 = vmatprep.subr.mxu0 %v1192
    %6083 = vmatpush1.msra.mxu0 %v1191
    %6084 = vmatprep.subr.mxu0 %v1188
    %6085 = vmatpush1.msra.mxu0 %v1187
    %6086 = vmatprep.subr.mxu0 %v1184
    %6087 = vmatpush1.msra.mxu0 %v1183
    %6088 = vmatprep.subr.mxu0 %v1180
    %6089 = vmatpush1.msra.mxu0 %v1179
    %6090 = vmatprep.subr.mxu0 %v1176
    %6091 = vmatpush1.msra.mxu0 %v1175
    %6092 = vmatprep.subr.mxu0 %v1172
    %6093 = vmatpush1.msra.mxu0 %v1171
    %6094 = vmatprep.subr.mxu0 %v1168
    %6095 = vmatpush1.msra.mxu0 %v1167
    %6096 = vmatprep.subr.mxu0 %v1164
    %6097 = vmatpush1.msra.mxu0 %v1163
    %6098 = vmatprep.subr.mxu0 %v1160
    %6099 = vmatpush1.msra.mxu0 %v1159
    %6100 = vmatprep.subr.mxu0 %v1156
    %6101 = vmatpush1.msra.mxu0 %v1155
    %6102 = vmatprep.subr.mxu0 %v1152
    %6103 = vmatpush1.msra.mxu0 %v1151
    %6104 = vmatprep.subr.mxu0 0.0
    %6105 = vmatpush2.msra.mxu0 0.0
    %6106 = vmatprep.subr.mxu0 0.0
    %6107 = vmatpush2.msra.mxu0 0.0
    %6108 = vmatprep.subr.mxu0 0.0
    %6109 = vmatpush2.msra.mxu0 0.0
    %6110 = vmatprep.subr.mxu0 0.0
    %6111 = vmatpush2.msra.mxu0 0.0
    %6112 = vmatprep.subr.mxu0 0.0
    %6113 = vmatpush2.msra.mxu0 0.0
    %6114 = vmatprep.subr.mxu0 0.0
    %6115 = vmatpush2.msra.mxu0 0.0
    %6116 = vmatprep.subr.mxu0 0.0
    %6117 = vmatpush2.msra.mxu0 0.0
    %6118 = vmatprep.subr.mxu0 0.0
    %6119 = vmatpush2.msra.mxu0 0.0
    %6120 = vmatprep.subr.mxu0 0.0
    %6121 = vmatpush2.msra.mxu0 0.0
    %6122 = vmatprep.subr.mxu0 0.0
    %6123 = vmatpush2.msra.mxu0 0.0
    %6124 = vmatprep.subr.mxu0 0.0
    %6125 = vmatpush2.msra.mxu0 0.0
    %6126 = vmatprep.subr.mxu0 0.0
    %6127 = vmatpush2.msra.mxu0 0.0
    %6128 = vmatprep.subr.mxu0 0.0
    %6129 = vmatpush2.msra.mxu0 0.0
    %6130 = vmatprep.subr.mxu0 0.0
    %6131 = vmatpush2.msra.mxu0 0.0
    %6132 = vmatprep.subr.mxu0 0.0
    %6133 = vmatpush2.msra.mxu0 0.0
    %6134 = vmatprep.subr.mxu0 0.0
    %6135 = vmatpush2.msra.mxu0 0.0
    %6136 = vmatprep.mubr.f32.mxu0 0.0
    %6137 = vmatmul.mubr.f32.gmra.mxu0 %v5571
    %v6138 = vpop.f32.mrf.mxu0
    %v6139 = vadd.f32 0.0, %v6138
    %v6140 = vpop.f32.mrf.mxu0
    %v6141 = vadd.f32 0.0, %v6140
    %6142 = vdwg.mxu0
    %6143 = vmatprep.subr.mxu0 %v1214
    %6144 = vmatpush1.msra.mxu0 %v1213
    %6145 = vmatprep.subr.mxu0 %v1210
    %6146 = vmatpush1.msra.mxu0 %v1209
    %6147 = vmatprep.subr.mxu0 %v1206
    %6148 = vmatpush1.msra.mxu0 %v1205
    %6149 = vmatprep.subr.mxu0 %v1202
    %6150 = vmatpush1.msra.mxu0 %v1201
    %6151 = vmatprep.subr.mxu0 %v1198
    %6152 = vmatpush1.msra.mxu0 %v1197
    %6153 = vmatprep.subr.mxu0 %v1194
    %6154 = vmatpush1.msra.mxu0 %v1193
    %6155 = vmatprep.subr.mxu0 %v1190
    %6156 = vmatpush1.msra.mxu0 %v1189
    %6157 = vmatprep.subr.mxu0 %v1186
    %6158 = vmatpush1.msra.mxu0 %v1185
    %6159 = vmatprep.subr.mxu0 %v1182
    %6160 = vmatpush1.msra.mxu0 %v1181
    %6161 = vmatprep.subr.mxu0 %v1178
    %6162 = vmatpush1.msra.mxu0 %v1177
    %6163 = vmatprep.subr.mxu0 %v1174
    %6164 = vmatpush1.msra.mxu0 %v1173
    %6165 = vmatprep.subr.mxu0 %v1170
    %6166 = vmatpush1.msra.mxu0 %v1169
    %6167 = vmatprep.subr.mxu0 %v1166
    %6168 = vmatpush1.msra.mxu0 %v1165
    %6169 = vmatprep.subr.mxu0 %v1162
    %6170 = vmatpush1.msra.mxu0 %v1161
    %6171 = vmatprep.subr.mxu0 %v1158
    %6172 = vmatpush1.msra.mxu0 %v1157
    %6173 = vmatprep.subr.mxu0 %v1154
    %6174 = vmatpush1.msra.mxu0 %v1153
    %6175 = vmatprep.subr.mxu0 0.0
    %6176 = vmatpush2.msra.mxu0 0.0
    %6177 = vmatprep.subr.mxu0 0.0
    %6178 = vmatpush2.msra.mxu0 0.0
    %6179 = vmatprep.subr.mxu0 0.0
    %6180 = vmatpush2.msra.mxu0 0.0
    %6181 = vmatprep.subr.mxu0 0.0
    %6182 = vmatpush2.msra.mxu0 0.0
    %6183 = vmatprep.subr.mxu0 0.0
    %6184 = vmatpush2.msra.mxu0 0.0
    %6185 = vmatprep.subr.mxu0 0.0
    %6186 = vmatpush2.msra.mxu0 0.0
    %6187 = vmatprep.subr.mxu0 0.0
    %6188 = vmatpush2.msra.mxu0 0.0
    %6189 = vmatprep.subr.mxu0 0.0
    %6190 = vmatpush2.msra.mxu0 0.0
    %6191 = vmatprep.subr.mxu0 0.0
    %6192 = vmatpush2.msra.mxu0 0.0
    %6193 = vmatprep.subr.mxu0 0.0
    %6194 = vmatpush2.msra.mxu0 0.0
    %6195 = vmatprep.subr.mxu0 0.0
    %6196 = vmatpush2.msra.mxu0 0.0
    %6197 = vmatprep.subr.mxu0 0.0
    %6198 = vmatpush2.msra.mxu0 0.0
    %6199 = vmatprep.subr.mxu0 0.0
    %6200 = vmatpush2.msra.mxu0 0.0
    %6201 = vmatprep.subr.mxu0 0.0
    %6202 = vmatpush2.msra.mxu0 0.0
    %6203 = vmatprep.subr.mxu0 0.0
    %6204 = vmatpush2.msra.mxu0 0.0
    %6205 = vmatprep.subr.mxu0 0.0
    %6206 = vmatpush2.msra.mxu0 0.0
    %6207 = vmatprep.mubr.f32.mxu0 0.0
    %6208 = vmatmul.mubr.f32.gmra.mxu0 %v5571
    %v6209 = vpop.f32.mrf.mxu0
    %v6210 = vadd.f32 0.0, %v6209
    %v6211 = vpop.f32.mrf.mxu0
    %v6212 = vadd.f32 0.0, %v6211
    %6213 = vdwg.mxu0
    %6214 = vmatprep.subr.mxu0 %v1148
    %6215 = vmatpush1.msra.mxu0 %v1147
    %6216 = vmatprep.subr.mxu0 %v1144
    %6217 = vmatpush1.msra.mxu0 %v1143
    %6218 = vmatprep.subr.mxu0 %v1140
    %6219 = vmatpush1.msra.mxu0 %v1139
    %6220 = vmatprep.subr.mxu0 %v1136
    %6221 = vmatpush1.msra.mxu0 %v1135
    %6222 = vmatprep.subr.mxu0 %v1132
    %6223 = vmatpush1.msra.mxu0 %v1131
    %6224 = vmatprep.subr.mxu0 %v1128
    %6225 = vmatpush1.msra.mxu0 %v1127
    %6226 = vmatprep.subr.mxu0 %v1124
    %6227 = vmatpush1.msra.mxu0 %v1123
    %6228 = vmatprep.subr.mxu0 %v1120
    %6229 = vmatpush1.msra.mxu0 %v1119
    %6230 = vmatprep.subr.mxu0 %v1116
    %6231 = vmatpush1.msra.mxu0 %v1115
    %6232 = vmatprep.subr.mxu0 %v1112
    %6233 = vmatpush1.msra.mxu0 %v1111
    %6234 = vmatprep.subr.mxu0 %v1108
    %6235 = vmatpush1.msra.mxu0 %v1107
    %6236 = vmatprep.subr.mxu0 %v1104
    %6237 = vmatpush1.msra.mxu0 %v1103
    %6238 = vmatprep.subr.mxu0 %v1100
    %6239 = vmatpush1.msra.mxu0 %v1099
    %6240 = vmatprep.subr.mxu0 %v1096
    %6241 = vmatpush1.msra.mxu0 %v1095
    %6242 = vmatprep.subr.mxu0 %v1092
    %6243 = vmatpush1.msra.mxu0 %v1091
    %6244 = vmatprep.subr.mxu0 %v1088
    %6245 = vmatpush1.msra.mxu0 %v1087
    %6246 = vmatprep.subr.mxu0 0.0
    %6247 = vmatpush2.msra.mxu0 0.0
    %6248 = vmatprep.subr.mxu0 0.0
    %6249 = vmatpush2.msra.mxu0 0.0
    %6250 = vmatprep.subr.mxu0 0.0
    %6251 = vmatpush2.msra.mxu0 0.0
    %6252 = vmatprep.subr.mxu0 0.0
    %6253 = vmatpush2.msra.mxu0 0.0
    %6254 = vmatprep.subr.mxu0 0.0
    %6255 = vmatpush2.msra.mxu0 0.0
    %6256 = vmatprep.subr.mxu0 0.0
    %6257 = vmatpush2.msra.mxu0 0.0
    %6258 = vmatprep.subr.mxu0 0.0
    %6259 = vmatpush2.msra.mxu0 0.0
    %6260 = vmatprep.subr.mxu0 0.0
    %6261 = vmatpush2.msra.mxu0 0.0
    %6262 = vmatprep.subr.mxu0 0.0
    %6263 = vmatpush2.msra.mxu0 0.0
    %6264 = vmatprep.subr.mxu0 0.0
    %6265 = vmatpush2.msra.mxu0 0.0
    %6266 = vmatprep.subr.mxu0 0.0
    %6267 = vmatpush2.msra.mxu0 0.0
    %6268 = vmatprep.subr.mxu0 0.0
    %6269 = vmatpush2.msra.mxu0 0.0
    %6270 = vmatprep.subr.mxu0 0.0
    %6271 = vmatpush2.msra.mxu0 0.0
    %6272 = vmatprep.subr.mxu0 0.0
    %6273 = vmatpush2.msra.mxu0 0.0
    %6274 = vmatprep.subr.mxu0 0.0
    %6275 = vmatpush2.msra.mxu0 0.0
    %6276 = vmatprep.subr.mxu0 0.0
    %6277 = vmatpush2.msra.mxu0 0.0
    %6278 = vmatprep.mubr.f32.mxu0 0.0
    %6279 = vmatmul.mubr.f32.gmra.mxu0 %v6071
    %v6280 = vpop.f32.mrf.mxu0
    %v6281 = vadd.f32 %v6139, %v6280
    %v6282 = vpop.f32.mrf.mxu0
    %v6283 = vadd.f32 %v6141, %v6282
    %6284 = vdwg.mxu0
    %6285 = vmatprep.subr.mxu0 %v1150
    %6286 = vmatpush1.msra.mxu0 %v1149
    %6287 = vmatprep.subr.mxu0 %v1146
    %6288 = vmatpush1.msra.mxu0 %v1145
    %6289 = vmatprep.subr.mxu0 %v1142
    %6290 = vmatpush1.msra.mxu0 %v1141
    %6291 = vmatprep.subr.mxu0 %v1138
    %6292 = vmatpush1.msra.mxu0 %v1137
    %6293 = vmatprep.subr.mxu0 %v1134
    %6294 = vmatpush1.msra.mxu0 %v1133
    %6295 = vmatprep.subr.mxu0 %v1130
    %6296 = vmatpush1.msra.mxu0 %v1129
    %6297 = vmatprep.subr.mxu0 %v1126
    %6298 = vmatpush1.msra.mxu0 %v1125
    %6299 = vmatprep.subr.mxu0 %v1122
    %6300 = vmatpush1.msra.mxu0 %v1121
    %6301 = vmatprep.subr.mxu0 %v1118
    %6302 = vmatpush1.msra.mxu0 %v1117
    %6303 = vmatprep.subr.mxu0 %v1114
    %6304 = vmatpush1.msra.mxu0 %v1113
    %6305 = vmatprep.subr.mxu0 %v1110
    %6306 = vmatpush1.msra.mxu0 %v1109
    %6307 = vmatprep.subr.mxu0 %v1106
    %6308 = vmatpush1.msra.mxu0 %v1105
    %6309 = vmatprep.subr.mxu0 %v1102
    %6310 = vmatpush1.msra.mxu0 %v1101
    %6311 = vmatprep.subr.mxu0 %v1098
    %6312 = vmatpush1.msra.mxu0 %v1097
    %6313 = vmatprep.subr.mxu0 %v1094
    %6314 = vmatpush1.msra.mxu0 %v1093
    %6315 = vmatprep.subr.mxu0 %v1090
    %6316 = vmatpush1.msra.mxu0 %v1089
    %6317 = vmatprep.subr.mxu0 0.0
    %6318 = vmatpush2.msra.mxu0 0.0
    %6319 = vmatprep.subr.mxu0 0.0
    %6320 = vmatpush2.msra.mxu0 0.0
    %6321 = vmatprep.subr.mxu0 0.0
    %6322 = vmatpush2.msra.mxu0 0.0
    %6323 = vmatprep.subr.mxu0 0.0
    %6324 = vmatpush2.msra.mxu0 0.0
    %6325 = vmatprep.subr.mxu0 0.0
    %6326 = vmatpush2.msra.mxu0 0.0
    %6327 = vmatprep.subr.mxu0 0.0
    %6328 = vmatpush2.msra.mxu0 0.0
    %6329 = vmatprep.subr.mxu0 0.0
    %6330 = vmatpush2.msra.mxu0 0.0
    %6331 = vmatprep.subr.mxu0 0.0
    %6332 = vmatpush2.msra.mxu0 0.0
    %6333 = vmatprep.subr.mxu0 0.0
    %6334 = vmatpush2.msra.mxu0 0.0
    %6335 = vmatprep.subr.mxu0 0.0
    %6336 = vmatpush2.msra.mxu0 0.0
    %6337 = vmatprep.subr.mxu0 0.0
    %6338 = vmatpush2.msra.mxu0 0.0
    %6339 = vmatprep.subr.mxu0 0.0
    %6340 = vmatpush2.msra.mxu0 0.0
    %6341 = vmatprep.subr.mxu0 0.0
    %6342 = vmatpush2.msra.mxu0 0.0
    %6343 = vmatprep.subr.mxu0 0.0
    %6344 = vmatpush2.msra.mxu0 0.0
    %6345 = vmatprep.subr.mxu0 0.0
    %6346 = vmatpush2.msra.mxu0 0.0
    %6347 = vmatprep.subr.mxu0 0.0
    %6348 = vmatpush2.msra.mxu0 0.0
    %6349 = vmatprep.mubr.f32.mxu0 0.0
    %6350 = vmatmul.mubr.f32.gmra.mxu0 %v6071
    %v6351 = vpop.f32.mrf.mxu0
    %v6352 = vadd.f32 %v6210, %v6351
    %v6353 = vpop.f32.mrf.mxu0
    %v6354 = vadd.f32 %v6212, %v6353
    %6355 = vdwg.mxu0
    %v6356 = vadd.f32 %v6281, %v396
    %v6357 = vadd.f32 %v6283, %v400
    %v6358 = vadd.f32 %v6352, %v404
    %v6359 = vadd.f32 %v6354, %v408
    %v6360 = vxor.u32 %v6356, 2147483648
    %v6361 = vxor.u32 %v6357, 2147483648
    %v6362 = vxor.u32 %v6358, 2147483648
    %v6363 = vmul.f32 %v6360, 1.442695
    %v6364 = vpow.pop %v6363
    %v6365 = vmul.f32 %v6361, 1.442695
    %v6366 = vpow.pop %v6365
    %v6367 = vmul.f32 %v6362, 1.442695
    %v6368 = vpow.pop %v6367
    %v6369 = vadd.f32 %v6364, 1.0
    %v6370 = vadd.f32 %v6366, 1.0
    %v6371 = vadd.f32 %v6368, 1.0
    %v6372 = vrcp.pop %v6369
    %v6373 = vmul.f32 1.0, %v6372
    %v6374 = vrcp.pop %v6370
    %v6375 = vmul.f32 1.0, %v6374
    %v6376 = vrcp.pop %v6371
    %v6377 = vmul.f32 1.0, %v6376
    %v6378 = vtanh.pop %v6359
    %v6379 = vmul.f32 %v6375, %v5569
    %v6380 = vmul.f32 %v6373, %v6378
    %v6381 = vadd.f32 %v6379, %v6380
    %v6382 = vtanh.pop %v6381
    %v6383 = vmul.f32 %v6377, %v6382
    %6384 = vmatprep.subr.mxu0 %v474
    %6385 = vmatpush1.msra.mxu0 %v473
    %6386 = vmatprep.subr.mxu0 %v470
    %6387 = vmatpush1.msra.mxu0 %v469
    %6388 = vmatprep.subr.mxu0 %v466
    %6389 = vmatpush1.msra.mxu0 %v465
    %6390 = vmatprep.subr.mxu0 %v462
    %6391 = vmatpush1.msra.mxu0 %v461
    %6392 = vmatprep.subr.mxu0 %v458
    %6393 = vmatpush1.msra.mxu0 %v457
    %6394 = vmatprep.subr.mxu0 %v454
    %6395 = vmatpush1.msra.mxu0 %v453
    %6396 = vmatprep.subr.mxu0 %v450
    %6397 = vmatpush1.msra.mxu0 %v449
    %6398 = vmatprep.subr.mxu0 %v446
    %6399 = vmatpush1.msra.mxu0 %v445
    %6400 = vmatprep.subr.mxu0 %v442
    %6401 = vmatpush1.msra.mxu0 %v441
    %6402 = vmatprep.subr.mxu0 %v438
    %6403 = vmatpush1.msra.mxu0 %v437
    %6404 = vmatprep.subr.mxu0 %v434
    %6405 = vmatpush1.msra.mxu0 %v433
    %6406 = vmatprep.subr.mxu0 %v430
    %6407 = vmatpush1.msra.mxu0 %v429
    %6408 = vmatprep.subr.mxu0 %v426
    %6409 = vmatpush1.msra.mxu0 %v425
    %6410 = vmatprep.subr.mxu0 %v422
    %6411 = vmatpush1.msra.mxu0 %v421
    %6412 = vmatprep.subr.mxu0 %v418
    %6413 = vmatpush1.msra.mxu0 %v417
    %6414 = vmatprep.subr.mxu0 %v414
    %6415 = vmatpush1.msra.mxu0 %v413
    %6416 = vmatprep.subr.mxu0 0.0
    %6417 = vmatpush2.msra.mxu0 0.0
    %6418 = vmatprep.subr.mxu0 0.0
    %6419 = vmatpush2.msra.mxu0 0.0
    %6420 = vmatprep.subr.mxu0 0.0
    %6421 = vmatpush2.msra.mxu0 0.0
    %6422 = vmatprep.subr.mxu0 0.0
    %6423 = vmatpush2.msra.mxu0 0.0
    %6424 = vmatprep.subr.mxu0 0.0
    %6425 = vmatpush2.msra.mxu0 0.0
    %6426 = vmatprep.subr.mxu0 0.0
    %6427 = vmatpush2.msra.mxu0 0.0
    %6428 = vmatprep.subr.mxu0 0.0
    %6429 = vmatpush2.msra.mxu0 0.0
    %6430 = vmatprep.subr.mxu0 0.0
    %6431 = vmatpush2.msra.mxu0 0.0
    %6432 = vmatprep.subr.mxu0 0.0
    %6433 = vmatpush2.msra.mxu0 0.0
    %6434 = vmatprep.subr.mxu0 0.0
    %6435 = vmatpush2.msra.mxu0 0.0
    %6436 = vmatprep.subr.mxu0 0.0
    %6437 = vmatpush2.msra.mxu0 0.0
    %6438 = vmatprep.subr.mxu0 0.0
    %6439 = vmatpush2.msra.mxu0 0.0
    %6440 = vmatprep.subr.mxu0 0.0
    %6441 = vmatpush2.msra.mxu0 0.0
    %6442 = vmatprep.subr.mxu0 0.0
    %6443 = vmatpush2.msra.mxu0 0.0
    %6444 = vmatprep.subr.mxu0 0.0
    %6445 = vmatpush2.msra.mxu0 0.0
    %6446 = vmatprep.subr.mxu0 0.0
    %6447 = vmatpush2.msra.mxu0 0.0
    %6448 = vmatprep.mubr.f32.mxu0 0.0
    %6449 = vmatmul.mubr.f32.gmra.mxu0 %v5900
    %v6450 = vpop.f32.mrf.mxu0
    %v6451 = vadd.f32 0.0, %v6450
    %v6452 = vpop.f32.mrf.mxu0
    %v6453 = vadd.f32 0.0, %v6452
    %6454 = vdwg.mxu0
    %6455 = vmatprep.subr.mxu0 %v476
    %6456 = vmatpush1.msra.mxu0 %v475
    %6457 = vmatprep.subr.mxu0 %v472
    %6458 = vmatpush1.msra.mxu0 %v471
    %6459 = vmatprep.subr.mxu0 %v468
    %6460 = vmatpush1.msra.mxu0 %v467
    %6461 = vmatprep.subr.mxu0 %v464
    %6462 = vmatpush1.msra.mxu0 %v463
    %6463 = vmatprep.subr.mxu0 %v460
    %6464 = vmatpush1.msra.mxu0 %v459
    %6465 = vmatprep.subr.mxu0 %v456
    %6466 = vmatpush1.msra.mxu0 %v455
    %6467 = vmatprep.subr.mxu0 %v452
    %6468 = vmatpush1.msra.mxu0 %v451
    %6469 = vmatprep.subr.mxu0 %v448
    %6470 = vmatpush1.msra.mxu0 %v447
    %6471 = vmatprep.subr.mxu0 %v444
    %6472 = vmatpush1.msra.mxu0 %v443
    %6473 = vmatprep.subr.mxu0 %v440
    %6474 = vmatpush1.msra.mxu0 %v439
    %6475 = vmatprep.subr.mxu0 %v436
    %6476 = vmatpush1.msra.mxu0 %v435
    %6477 = vmatprep.subr.mxu0 %v432
    %6478 = vmatpush1.msra.mxu0 %v431
    %6479 = vmatprep.subr.mxu0 %v428
    %6480 = vmatpush1.msra.mxu0 %v427
    %6481 = vmatprep.subr.mxu0 %v424
    %6482 = vmatpush1.msra.mxu0 %v423
    %6483 = vmatprep.subr.mxu0 %v420
    %6484 = vmatpush1.msra.mxu0 %v419
    %6485 = vmatprep.subr.mxu0 %v416
    %6486 = vmatpush1.msra.mxu0 %v415
    %6487 = vmatprep.subr.mxu0 0.0
    %6488 = vmatpush2.msra.mxu0 0.0
    %6489 = vmatprep.subr.mxu0 0.0
    %6490 = vmatpush2.msra.mxu0 0.0
    %6491 = vmatprep.subr.mxu0 0.0
    %6492 = vmatpush2.msra.mxu0 0.0
    %6493 = vmatprep.subr.mxu0 0.0
    %6494 = vmatpush2.msra.mxu0 0.0
    %6495 = vmatprep.subr.mxu0 0.0
    %6496 = vmatpush2.msra.mxu0 0.0
    %6497 = vmatprep.subr.mxu0 0.0
    %6498 = vmatpush2.msra.mxu0 0.0
    %6499 = vmatprep.subr.mxu0 0.0
    %6500 = vmatpush2.msra.mxu0 0.0
    %6501 = vmatprep.subr.mxu0 0.0
    %6502 = vmatpush2.msra.mxu0 0.0
    %6503 = vmatprep.subr.mxu0 0.0
    %6504 = vmatpush2.msra.mxu0 0.0
    %6505 = vmatprep.subr.mxu0 0.0
    %6506 = vmatpush2.msra.mxu0 0.0
    %6507 = vmatprep.subr.mxu0 0.0
    %6508 = vmatpush2.msra.mxu0 0.0
    %6509 = vmatprep.subr.mxu0 0.0
    %6510 = vmatpush2.msra.mxu0 0.0
    %6511 = vmatprep.subr.mxu0 0.0
    %6512 = vmatpush2.msra.mxu0 0.0
    %6513 = vmatprep.subr.mxu0 0.0
    %6514 = vmatpush2.msra.mxu0 0.0
    %6515 = vmatprep.subr.mxu0 0.0
    %6516 = vmatpush2.msra.mxu0 0.0
    %6517 = vmatprep.subr.mxu0 0.0
    %6518 = vmatpush2.msra.mxu0 0.0
    %6519 = vmatprep.mubr.f32.mxu0 0.0
    %6520 = vmatmul.mubr.f32.gmra.mxu0 %v5900
    %v6521 = vpop.f32.mrf.mxu0
    %v6522 = vadd.f32 0.0, %v6521
    %v6523 = vpop.f32.mrf.mxu0
    %v6524 = vadd.f32 0.0, %v6523
    %6525 = vdwg.mxu0
    %v6530 = vrot.slane %v6451, 2
    %v6531 = vrot.slane %v6453, 2
    %v6532 = vrot.slane %v6522, 2
    %v6533 = vrot.slane %v6524, 2
    %v6538 = vadd.f32 %v288, %v6530
    %v6539 = vadd.f32 %v290, %v6531
    %v6540 = vadd.f32 %v365, %v6532
    %v6541 = vadd.f32 %v367, %v6533
    %v6542 = vxor.u32 %v6538, 2147483648
    %v6543 = vxor.u32 %v6539, 2147483648
    %v6544 = vxor.u32 %v6540, 2147483648
    %v6545 = vmul.f32 %v6542, 1.442695
    %v6546 = vpow.pop %v6545
    %v6547 = vmul.f32 %v6543, 1.442695
    %v6548 = vpow.pop %v6547
    %v6549 = vmul.f32 %v6544, 1.442695
    %v6550 = vpow.pop %v6549
    %v6551 = vadd.f32 %v6546, 1.0
    %v6552 = vadd.f32 %v6548, 1.0
    %v6553 = vadd.f32 %v6550, 1.0
    %v6554 = vrcp.pop %v6551
    %v6555 = vmul.f32 1.0, %v6554
    %v6556 = vrcp.pop %v6552
    %v6557 = vmul.f32 1.0, %v6556
    %v6558 = vrcp.pop %v6553
    %v6559 = vmul.f32 1.0, %v6558
    %v6560 = vtanh.pop %v6541
    %v6562 = vrot.slane %v5754, 6
    %v6564 = vmul.f32 %v6557, %v6562
    %v6565 = vmul.f32 %v6555, %v6560
    %v6566 = vadd.f32 %v6564, %v6565
    %v6567 = vtanh.pop %v6566
    %v6568 = vmul.f32 %v6559, %v6567
    %6569 = vmatprep.subr.mxu0 %v772
    %6570 = vmatpush1.msra.mxu0 %v771
    %6571 = vmatprep.subr.mxu0 %v768
    %6572 = vmatpush1.msra.mxu0 %v767
    %6573 = vmatprep.subr.mxu0 %v764
    %6574 = vmatpush1.msra.mxu0 %v763
    %6575 = vmatprep.subr.mxu0 %v760
    %6576 = vmatpush1.msra.mxu0 %v759
    %6577 = vmatprep.subr.mxu0 %v756
    %6578 = vmatpush1.msra.mxu0 %v755
    %6579 = vmatprep.subr.mxu0 %v752
    %6580 = vmatpush1.msra.mxu0 %v751
    %6581 = vmatprep.subr.mxu0 %v748
    %6582 = vmatpush1.msra.mxu0 %v747
    %6583 = vmatprep.subr.mxu0 %v744
    %6584 = vmatpush1.msra.mxu0 %v743
    %6585 = vmatprep.subr.mxu0 %v740
    %6586 = vmatpush1.msra.mxu0 %v739
    %6587 = vmatprep.subr.mxu0 %v736
    %6588 = vmatpush1.msra.mxu0 %v735
    %6589 = vmatprep.subr.mxu0 %v732
    %6590 = vmatpush1.msra.mxu0 %v731
    %6591 = vmatprep.subr.mxu0 %v728
    %6592 = vmatpush1.msra.mxu0 %v727
    %6593 = vmatprep.subr.mxu0 %v724
    %6594 = vmatpush1.msra.mxu0 %v723
    %6595 = vmatprep.subr.mxu0 %v720
    %6596 = vmatpush1.msra.mxu0 %v719
    %6597 = vmatprep.subr.mxu0 %v716
    %6598 = vmatpush1.msra.mxu0 %v715
    %6599 = vmatprep.subr.mxu0 %v712
    %6600 = vmatpush1.msra.mxu0 %v711
    %6601 = vmatprep.subr.mxu0 0.0
    %6602 = vmatpush2.msra.mxu0 0.0
    %6603 = vmatprep.subr.mxu0 0.0
    %6604 = vmatpush2.msra.mxu0 0.0
    %6605 = vmatprep.subr.mxu0 0.0
    %6606 = vmatpush2.msra.mxu0 0.0
    %6607 = vmatprep.subr.mxu0 0.0
    %6608 = vmatpush2.msra.mxu0 0.0
    %6609 = vmatprep.subr.mxu0 0.0
    %6610 = vmatpush2.msra.mxu0 0.0
    %6611 = vmatprep.subr.mxu0 0.0
    %6612 = vmatpush2.msra.mxu0 0.0
    %6613 = vmatprep.subr.mxu0 0.0
    %6614 = vmatpush2.msra.mxu0 0.0
    %6615 = vmatprep.subr.mxu0 0.0
    %6616 = vmatpush2.msra.mxu0 0.0
    %6617 = vmatprep.subr.mxu0 0.0
    %6618 = vmatpush2.msra.mxu0 0.0
    %6619 = vmatprep.subr.mxu0 0.0
    %6620 = vmatpush2.msra.mxu0 0.0
    %6621 = vmatprep.subr.mxu0 0.0
    %6622 = vmatpush2.msra.mxu0 0.0
    %6623 = vmatprep.subr.mxu0 0.0
    %6624 = vmatpush2.msra.mxu0 0.0
    %6625 = vmatprep.subr.mxu0 0.0
    %6626 = vmatpush2.msra.mxu0 0.0
    %6627 = vmatprep.subr.mxu0 0.0
    %6628 = vmatpush2.msra.mxu0 0.0
    %6629 = vmatprep.subr.mxu0 0.0
    %6630 = vmatpush2.msra.mxu0 0.0
    %6631 = vmatprep.subr.mxu0 0.0
    %6632 = vmatpush2.msra.mxu0 0.0
    %6633 = vmatprep.mubr.f32.mxu0 0.0
    %6634 = vmatmul.mubr.f32.gmra.mxu0 %v6071
    %v6635 = vpop.f32.mrf.mxu0
    %v6636 = vadd.f32 0.0, %v6635
    %v6637 = vpop.f32.mrf.mxu0
    %v6638 = vadd.f32 0.0, %v6637
    %6639 = vdwg.mxu0
    %6640 = vmatprep.subr.mxu0 %v774
    %6641 = vmatpush1.msra.mxu0 %v773
    %6642 = vmatprep.subr.mxu0 %v770
    %6643 = vmatpush1.msra.mxu0 %v769
    %6644 = vmatprep.subr.mxu0 %v766
    %6645 = vmatpush1.msra.mxu0 %v765
    %6646 = vmatprep.subr.mxu0 %v762
    %6647 = vmatpush1.msra.mxu0 %v761
    %6648 = vmatprep.subr.mxu0 %v758
    %6649 = vmatpush1.msra.mxu0 %v757
    %6650 = vmatprep.subr.mxu0 %v754
    %6651 = vmatpush1.msra.mxu0 %v753
    %6652 = vmatprep.subr.mxu0 %v750
    %6653 = vmatpush1.msra.mxu0 %v749
    %6654 = vmatprep.subr.mxu0 %v746
    %6655 = vmatpush1.msra.mxu0 %v745
    %6656 = vmatprep.subr.mxu0 %v742
    %6657 = vmatpush1.msra.mxu0 %v741
    %6658 = vmatprep.subr.mxu0 %v738
    %6659 = vmatpush1.msra.mxu0 %v737
    %6660 = vmatprep.subr.mxu0 %v734
    %6661 = vmatpush1.msra.mxu0 %v733
    %6662 = vmatprep.subr.mxu0 %v730
    %6663 = vmatpush1.msra.mxu0 %v729
    %6664 = vmatprep.subr.mxu0 %v726
    %6665 = vmatpush1.msra.mxu0 %v725
    %6666 = vmatprep.subr.mxu0 %v722
    %6667 = vmatpush1.msra.mxu0 %v721
    %6668 = vmatprep.subr.mxu0 %v718
    %6669 = vmatpush1.msra.mxu0 %v717
    %6670 = vmatprep.subr.mxu0 %v714
    %6671 = vmatpush1.msra.mxu0 %v713
    %6672 = vmatprep.subr.mxu0 0.0
    %6673 = vmatpush2.msra.mxu0 0.0
    %6674 = vmatprep.subr.mxu0 0.0
    %6675 = vmatpush2.msra.mxu0 0.0
    %6676 = vmatprep.subr.mxu0 0.0
    %6677 = vmatpush2.msra.mxu0 0.0
    %6678 = vmatprep.subr.mxu0 0.0
    %6679 = vmatpush2.msra.mxu0 0.0
    %6680 = vmatprep.subr.mxu0 0.0
    %6681 = vmatpush2.msra.mxu0 0.0
    %6682 = vmatprep.subr.mxu0 0.0
    %6683 = vmatpush2.msra.mxu0 0.0
    %6684 = vmatprep.subr.mxu0 0.0
    %6685 = vmatpush2.msra.mxu0 0.0
    %6686 = vmatprep.subr.mxu0 0.0
    %6687 = vmatpush2.msra.mxu0 0.0
    %6688 = vmatprep.subr.mxu0 0.0
    %6689 = vmatpush2.msra.mxu0 0.0
    %6690 = vmatprep.subr.mxu0 0.0
    %6691 = vmatpush2.msra.mxu0 0.0
    %6692 = vmatprep.subr.mxu0 0.0
    %6693 = vmatpush2.msra.mxu0 0.0
    %6694 = vmatprep.subr.mxu0 0.0
    %6695 = vmatpush2.msra.mxu0 0.0
    %6696 = vmatprep.subr.mxu0 0.0
    %6697 = vmatpush2.msra.mxu0 0.0
    %6698 = vmatprep.subr.mxu0 0.0
    %6699 = vmatpush2.msra.mxu0 0.0
    %6700 = vmatprep.subr.mxu0 0.0
    %6701 = vmatpush2.msra.mxu0 0.0
    %6702 = vmatprep.subr.mxu0 0.0
    %6703 = vmatpush2.msra.mxu0 0.0
    %6704 = vmatprep.mubr.f32.mxu0 0.0
    %6705 = vmatmul.mubr.f32.gmra.mxu0 %v6071
    %v6706 = vpop.f32.mrf.mxu0
    %v6707 = vadd.f32 0.0, %v6706
    %v6708 = vpop.f32.mrf.mxu0
    %v6709 = vadd.f32 0.0, %v6708
    %6710 = vdwg.mxu0
    %v6712 = vrot.slane %v6568, 6
    %6714 = vmatprep.subr.mxu0 %v708
    %6715 = vmatpush1.msra.mxu0 %v707
    %6716 = vmatprep.subr.mxu0 %v704
    %6717 = vmatpush1.msra.mxu0 %v703
    %6718 = vmatprep.subr.mxu0 %v700
    %6719 = vmatpush1.msra.mxu0 %v699
    %6720 = vmatprep.subr.mxu0 %v696
    %6721 = vmatpush1.msra.mxu0 %v695
    %6722 = vmatprep.subr.mxu0 %v692
    %6723 = vmatpush1.msra.mxu0 %v691
    %6724 = vmatprep.subr.mxu0 %v688
    %6725 = vmatpush1.msra.mxu0 %v687
    %6726 = vmatprep.subr.mxu0 %v684
    %6727 = vmatpush1.msra.mxu0 %v683
    %6728 = vmatprep.subr.mxu0 %v680
    %6729 = vmatpush1.msra.mxu0 %v679
    %6730 = vmatprep.subr.mxu0 %v676
    %6731 = vmatpush1.msra.mxu0 %v675
    %6732 = vmatprep.subr.mxu0 %v672
    %6733 = vmatpush1.msra.mxu0 %v671
    %6734 = vmatprep.subr.mxu0 %v668
    %6735 = vmatpush1.msra.mxu0 %v667
    %6736 = vmatprep.subr.mxu0 %v664
    %6737 = vmatpush1.msra.mxu0 %v663
    %6738 = vmatprep.subr.mxu0 %v660
    %6739 = vmatpush1.msra.mxu0 %v659
    %6740 = vmatprep.subr.mxu0 %v656
    %6741 = vmatpush1.msra.mxu0 %v655
    %6742 = vmatprep.subr.mxu0 %v652
    %6743 = vmatpush1.msra.mxu0 %v651
    %6744 = vmatprep.subr.mxu0 %v648
    %6745 = vmatpush1.msra.mxu0 %v647
    %6746 = vmatprep.subr.mxu0 0.0
    %6747 = vmatpush2.msra.mxu0 0.0
    %6748 = vmatprep.subr.mxu0 0.0
    %6749 = vmatpush2.msra.mxu0 0.0
    %6750 = vmatprep.subr.mxu0 0.0
    %6751 = vmatpush2.msra.mxu0 0.0
    %6752 = vmatprep.subr.mxu0 0.0
    %6753 = vmatpush2.msra.mxu0 0.0
    %6754 = vmatprep.subr.mxu0 0.0
    %6755 = vmatpush2.msra.mxu0 0.0
    %6756 = vmatprep.subr.mxu0 0.0
    %6757 = vmatpush2.msra.mxu0 0.0
    %6758 = vmatprep.subr.mxu0 0.0
    %6759 = vmatpush2.msra.mxu0 0.0
    %6760 = vmatprep.subr.mxu0 0.0
    %6761 = vmatpush2.msra.mxu0 0.0
    %6762 = vmatprep.subr.mxu0 0.0
    %6763 = vmatpush2.msra.mxu0 0.0
    %6764 = vmatprep.subr.mxu0 0.0
    %6765 = vmatpush2.msra.mxu0 0.0
    %6766 = vmatprep.subr.mxu0 0.0
    %6767 = vmatpush2.msra.mxu0 0.0
    %6768 = vmatprep.subr.mxu0 0.0
    %6769 = vmatpush2.msra.mxu0 0.0
    %6770 = vmatprep.subr.mxu0 0.0
    %6771 = vmatpush2.msra.mxu0 0.0
    %6772 = vmatprep.subr.mxu0 0.0
    %6773 = vmatpush2.msra.mxu0 0.0
    %6774 = vmatprep.subr.mxu0 0.0
    %6775 = vmatpush2.msra.mxu0 0.0
    %6776 = vmatprep.subr.mxu0 0.0
    %6777 = vmatpush2.msra.mxu0 0.0
    %6778 = vmatprep.mubr.f32.mxu0 0.0
    %6779 = vmatmul.mubr.f32.gmra.mxu0 %v6712
    %v6780 = vpop.f32.mrf.mxu0
    %v6781 = vadd.f32 %v6636, %v6780
    %v6782 = vpop.f32.mrf.mxu0
    %v6783 = vadd.f32 %v6638, %v6782
    %6784 = vdwg.mxu0
    %6785 = vmatprep.subr.mxu0 %v710
    %6786 = vmatpush1.msra.mxu0 %v709
    %6787 = vmatprep.subr.mxu0 %v706
    %6788 = vmatpush1.msra.mxu0 %v705
    %6789 = vmatprep.subr.mxu0 %v702
    %6790 = vmatpush1.msra.mxu0 %v701
    %6791 = vmatprep.subr.mxu0 %v698
    %6792 = vmatpush1.msra.mxu0 %v697
    %6793 = vmatprep.subr.mxu0 %v694
    %6794 = vmatpush1.msra.mxu0 %v693
    %6795 = vmatprep.subr.mxu0 %v690
    %6796 = vmatpush1.msra.mxu0 %v689
    %6797 = vmatprep.subr.mxu0 %v686
    %6798 = vmatpush1.msra.mxu0 %v685
    %6799 = vmatprep.subr.mxu0 %v682
    %6800 = vmatpush1.msra.mxu0 %v681
    %6801 = vmatprep.subr.mxu0 %v678
    %6802 = vmatpush1.msra.mxu0 %v677
    %6803 = vmatprep.subr.mxu0 %v674
    %6804 = vmatpush1.msra.mxu0 %v673
    %6805 = vmatprep.subr.mxu0 %v670
    %6806 = vmatpush1.msra.mxu0 %v669
    %6807 = vmatprep.subr.mxu0 %v666
    %6808 = vmatpush1.msra.mxu0 %v665
    %6809 = vmatprep.subr.mxu0 %v662
    %6810 = vmatpush1.msra.mxu0 %v661
    %6811 = vmatprep.subr.mxu0 %v658
    %6812 = vmatpush1.msra.mxu0 %v657
    %6813 = vmatprep.subr.mxu0 %v654
    %6814 = vmatpush1.msra.mxu0 %v653
    %6815 = vmatprep.subr.mxu0 %v650
    %6816 = vmatpush1.msra.mxu0 %v649
    %6817 = vmatprep.subr.mxu0 0.0
    %6818 = vmatpush2.msra.mxu0 0.0
    %6819 = vmatprep.subr.mxu0 0.0
    %6820 = vmatpush2.msra.mxu0 0.0
    %6821 = vmatprep.subr.mxu0 0.0
    %6822 = vmatpush2.msra.mxu0 0.0
    %6823 = vmatprep.subr.mxu0 0.0
    %6824 = vmatpush2.msra.mxu0 0.0
    %6825 = vmatprep.subr.mxu0 0.0
    %6826 = vmatpush2.msra.mxu0 0.0
    %6827 = vmatprep.subr.mxu0 0.0
    %6828 = vmatpush2.msra.mxu0 0.0
    %6829 = vmatprep.subr.mxu0 0.0
    %6830 = vmatpush2.msra.mxu0 0.0
    %6831 = vmatprep.subr.mxu0 0.0
    %6832 = vmatpush2.msra.mxu0 0.0
    %6833 = vmatprep.subr.mxu0 0.0
    %6834 = vmatpush2.msra.mxu0 0.0
    %6835 = vmatprep.subr.mxu0 0.0
    %6836 = vmatpush2.msra.mxu0 0.0
    %6837 = vmatprep.subr.mxu0 0.0
    %6838 = vmatpush2.msra.mxu0 0.0
    %6839 = vmatprep.subr.mxu0 0.0
    %6840 = vmatpush2.msra.mxu0 0.0
    %6841 = vmatprep.subr.mxu0 0.0
    %6842 = vmatpush2.msra.mxu0 0.0
    %6843 = vmatprep.subr.mxu0 0.0
    %6844 = vmatpush2.msra.mxu0 0.0
    %6845 = vmatprep.subr.mxu0 0.0
    %6846 = vmatpush2.msra.mxu0 0.0
    %6847 = vmatprep.subr.mxu0 0.0
    %6848 = vmatpush2.msra.mxu0 0.0
    %6849 = vmatprep.mubr.f32.mxu0 0.0
    %6850 = vmatmul.mubr.f32.gmra.mxu0 %v6712
    %v6851 = vpop.f32.mrf.mxu0
    %v6852 = vadd.f32 %v6707, %v6851
    %v6853 = vpop.f32.mrf.mxu0
    %v6854 = vadd.f32 %v6709, %v6853
    %6855 = vdwg.mxu0
    %v6856 = vadd.f32 %v6781, %v374
    %v6857 = vadd.f32 %v6783, %v378
    %v6858 = vadd.f32 %v6852, %v382
    %v6859 = vadd.f32 %v6854, %v386
    %v6860 = vxor.u32 %v6856, 2147483648
    %v6861 = vxor.u32 %v6857, 2147483648
    %v6862 = vxor.u32 %v6858, 2147483648
    %v6863 = vmul.f32 %v6860, 1.442695
    %v6864 = vpow.pop %v6863
    %v6865 = vmul.f32 %v6861, 1.442695
    %v6866 = vpow.pop %v6865
    %v6867 = vmul.f32 %v6862, 1.442695
    %v6868 = vpow.pop %v6867
    %v6869 = vadd.f32 %v6864, 1.0
    %v6870 = vadd.f32 %v6866, 1.0
    %v6871 = vadd.f32 %v6868, 1.0
    %v6872 = vrcp.pop %v6869
    %v6873 = vmul.f32 1.0, %v6872
    %v6874 = vrcp.pop %v6870
    %v6875 = vmul.f32 1.0, %v6874
    %v6876 = vrcp.pop %v6871
    %v6877 = vmul.f32 1.0, %v6876
    %v6878 = vtanh.pop %v6859
    %v6879 = vmul.f32 %v6875, %v6069
    %v6880 = vmul.f32 %v6873, %v6878
    %v6881 = vadd.f32 %v6879, %v6880
    %v6882 = vtanh.pop %v6881
    %v6883 = vmul.f32 %v6877, %v6882
    %6884 = vmatprep.subr.mxu0 %v1212
    %6885 = vmatpush1.msra.mxu0 %v1211
    %6886 = vmatprep.subr.mxu0 %v1208
    %6887 = vmatpush1.msra.mxu0 %v1207
    %6888 = vmatprep.subr.mxu0 %v1204
    %6889 = vmatpush1.msra.mxu0 %v1203
    %6890 = vmatprep.subr.mxu0 %v1200
    %6891 = vmatpush1.msra.mxu0 %v1199
    %6892 = vmatprep.subr.mxu0 %v1196
    %6893 = vmatpush1.msra.mxu0 %v1195
    %6894 = vmatprep.subr.mxu0 %v1192
    %6895 = vmatpush1.msra.mxu0 %v1191
    %6896 = vmatprep.subr.mxu0 %v1188
    %6897 = vmatpush1.msra.mxu0 %v1187
    %6898 = vmatprep.subr.mxu0 %v1184
    %6899 = vmatpush1.msra.mxu0 %v1183
    %6900 = vmatprep.subr.mxu0 %v1180
    %6901 = vmatpush1.msra.mxu0 %v1179
    %6902 = vmatprep.subr.mxu0 %v1176
    %6903 = vmatpush1.msra.mxu0 %v1175
    %6904 = vmatprep.subr.mxu0 %v1172
    %6905 = vmatpush1.msra.mxu0 %v1171
    %6906 = vmatprep.subr.mxu0 %v1168
    %6907 = vmatpush1.msra.mxu0 %v1167
    %6908 = vmatprep.subr.mxu0 %v1164
    %6909 = vmatpush1.msra.mxu0 %v1163
    %6910 = vmatprep.subr.mxu0 %v1160
    %6911 = vmatpush1.msra.mxu0 %v1159
    %6912 = vmatprep.subr.mxu0 %v1156
    %6913 = vmatpush1.msra.mxu0 %v1155
    %6914 = vmatprep.subr.mxu0 %v1152
    %6915 = vmatpush1.msra.mxu0 %v1151
    %6916 = vmatprep.subr.mxu0 0.0
    %6917 = vmatpush2.msra.mxu0 0.0
    %6918 = vmatprep.subr.mxu0 0.0
    %6919 = vmatpush2.msra.mxu0 0.0
    %6920 = vmatprep.subr.mxu0 0.0
    %6921 = vmatpush2.msra.mxu0 0.0
    %6922 = vmatprep.subr.mxu0 0.0
    %6923 = vmatpush2.msra.mxu0 0.0
    %6924 = vmatprep.subr.mxu0 0.0
    %6925 = vmatpush2.msra.mxu0 0.0
    %6926 = vmatprep.subr.mxu0 0.0
    %6927 = vmatpush2.msra.mxu0 0.0
    %6928 = vmatprep.subr.mxu0 0.0
    %6929 = vmatpush2.msra.mxu0 0.0
    %6930 = vmatprep.subr.mxu0 0.0
    %6931 = vmatpush2.msra.mxu0 0.0
    %6932 = vmatprep.subr.mxu0 0.0
    %6933 = vmatpush2.msra.mxu0 0.0
    %6934 = vmatprep.subr.mxu0 0.0
    %6935 = vmatpush2.msra.mxu0 0.0
    %6936 = vmatprep.subr.mxu0 0.0
    %6937 = vmatpush2.msra.mxu0 0.0
    %6938 = vmatprep.subr.mxu0 0.0
    %6939 = vmatpush2.msra.mxu0 0.0
    %6940 = vmatprep.subr.mxu0 0.0
    %6941 = vmatpush2.msra.mxu0 0.0
    %6942 = vmatprep.subr.mxu0 0.0
    %6943 = vmatpush2.msra.mxu0 0.0
    %6944 = vmatprep.subr.mxu0 0.0
    %6945 = vmatpush2.msra.mxu0 0.0
    %6946 = vmatprep.subr.mxu0 0.0
    %6947 = vmatpush2.msra.mxu0 0.0
    %6948 = vmatprep.mubr.f32.mxu0 0.0
    %6949 = vmatmul.mubr.f32.gmra.mxu0 %v6383
    %v6950 = vpop.f32.mrf.mxu0
    %v6951 = vadd.f32 0.0, %v6950
    %v6952 = vpop.f32.mrf.mxu0
    %v6953 = vadd.f32 0.0, %v6952
    %6954 = vdwg.mxu0
    %6955 = vmatprep.subr.mxu0 %v1214
    %6956 = vmatpush1.msra.mxu0 %v1213
    %6957 = vmatprep.subr.mxu0 %v1210
    %6958 = vmatpush1.msra.mxu0 %v1209
    %6959 = vmatprep.subr.mxu0 %v1206
    %6960 = vmatpush1.msra.mxu0 %v1205
    %6961 = vmatprep.subr.mxu0 %v1202
    %6962 = vmatpush1.msra.mxu0 %v1201
    %6963 = vmatprep.subr.mxu0 %v1198
    %6964 = vmatpush1.msra.mxu0 %v1197
    %6965 = vmatprep.subr.mxu0 %v1194
    %6966 = vmatpush1.msra.mxu0 %v1193
    %6967 = vmatprep.subr.mxu0 %v1190
    %6968 = vmatpush1.msra.mxu0 %v1189
    %6969 = vmatprep.subr.mxu0 %v1186
    %6970 = vmatpush1.msra.mxu0 %v1185
    %6971 = vmatprep.subr.mxu0 %v1182
    %6972 = vmatpush1.msra.mxu0 %v1181
    %6973 = vmatprep.subr.mxu0 %v1178
    %6974 = vmatpush1.msra.mxu0 %v1177
    %6975 = vmatprep.subr.mxu0 %v1174
    %6976 = vmatpush1.msra.mxu0 %v1173
    %6977 = vmatprep.subr.mxu0 %v1170
    %6978 = vmatpush1.msra.mxu0 %v1169
    %6979 = vmatprep.subr.mxu0 %v1166
    %6980 = vmatpush1.msra.mxu0 %v1165
    %6981 = vmatprep.subr.mxu0 %v1162
    %6982 = vmatpush1.msra.mxu0 %v1161
    %6983 = vmatprep.subr.mxu0 %v1158
    %6984 = vmatpush1.msra.mxu0 %v1157
    %6985 = vmatprep.subr.mxu0 %v1154
    %6986 = vmatpush1.msra.mxu0 %v1153
    %6987 = vmatprep.subr.mxu0 0.0
    %6988 = vmatpush2.msra.mxu0 0.0
    %6989 = vmatprep.subr.mxu0 0.0
    %6990 = vmatpush2.msra.mxu0 0.0
    %6991 = vmatprep.subr.mxu0 0.0
    %6992 = vmatpush2.msra.mxu0 0.0
    %6993 = vmatprep.subr.mxu0 0.0
    %6994 = vmatpush2.msra.mxu0 0.0
    %6995 = vmatprep.subr.mxu0 0.0
    %6996 = vmatpush2.msra.mxu0 0.0
    %6997 = vmatprep.subr.mxu0 0.0
    %6998 = vmatpush2.msra.mxu0 0.0
    %6999 = vmatprep.subr.mxu0 0.0
    %7000 = vmatpush2.msra.mxu0 0.0
    %7001 = vmatprep.subr.mxu0 0.0
    %7002 = vmatpush2.msra.mxu0 0.0
    %7003 = vmatprep.subr.mxu0 0.0
    %7004 = vmatpush2.msra.mxu0 0.0
    %7005 = vmatprep.subr.mxu0 0.0
    %7006 = vmatpush2.msra.mxu0 0.0
    %7007 = vmatprep.subr.mxu0 0.0
    %7008 = vmatpush2.msra.mxu0 0.0
    %7009 = vmatprep.subr.mxu0 0.0
    %7010 = vmatpush2.msra.mxu0 0.0
    %7011 = vmatprep.subr.mxu0 0.0
    %7012 = vmatpush2.msra.mxu0 0.0
    %7013 = vmatprep.subr.mxu0 0.0
    %7014 = vmatpush2.msra.mxu0 0.0
    %7015 = vmatprep.subr.mxu0 0.0
    %7016 = vmatpush2.msra.mxu0 0.0
    %7017 = vmatprep.subr.mxu0 0.0
    %7018 = vmatpush2.msra.mxu0 0.0
    %7019 = vmatprep.mubr.f32.mxu0 0.0
    %7020 = vmatmul.mubr.f32.gmra.mxu0 %v6383
    %v7021 = vpop.f32.mrf.mxu0
    %v7022 = vadd.f32 0.0, %v7021
    %v7023 = vpop.f32.mrf.mxu0
    %v7024 = vadd.f32 0.0, %v7023
    %7025 = vdwg.mxu0
    %7026 = vmatprep.subr.mxu0 %v1148
    %7027 = vmatpush1.msra.mxu0 %v1147
    %7028 = vmatprep.subr.mxu0 %v1144
    %7029 = vmatpush1.msra.mxu0 %v1143
    %7030 = vmatprep.subr.mxu0 %v1140
    %7031 = vmatpush1.msra.mxu0 %v1139
    %7032 = vmatprep.subr.mxu0 %v1136
    %7033 = vmatpush1.msra.mxu0 %v1135
    %7034 = vmatprep.subr.mxu0 %v1132
    %7035 = vmatpush1.msra.mxu0 %v1131
    %7036 = vmatprep.subr.mxu0 %v1128
    %7037 = vmatpush1.msra.mxu0 %v1127
    %7038 = vmatprep.subr.mxu0 %v1124
    %7039 = vmatpush1.msra.mxu0 %v1123
    %7040 = vmatprep.subr.mxu0 %v1120
    %7041 = vmatpush1.msra.mxu0 %v1119
    %7042 = vmatprep.subr.mxu0 %v1116
    %7043 = vmatpush1.msra.mxu0 %v1115
    %7044 = vmatprep.subr.mxu0 %v1112
    %7045 = vmatpush1.msra.mxu0 %v1111
    %7046 = vmatprep.subr.mxu0 %v1108
    %7047 = vmatpush1.msra.mxu0 %v1107
    %7048 = vmatprep.subr.mxu0 %v1104
    %7049 = vmatpush1.msra.mxu0 %v1103
    %7050 = vmatprep.subr.mxu0 %v1100
    %7051 = vmatpush1.msra.mxu0 %v1099
    %7052 = vmatprep.subr.mxu0 %v1096
    %7053 = vmatpush1.msra.mxu0 %v1095
    %7054 = vmatprep.subr.mxu0 %v1092
    %7055 = vmatpush1.msra.mxu0 %v1091
    %7056 = vmatprep.subr.mxu0 %v1088
    %7057 = vmatpush1.msra.mxu0 %v1087
    %7058 = vmatprep.subr.mxu0 0.0
    %7059 = vmatpush2.msra.mxu0 0.0
    %7060 = vmatprep.subr.mxu0 0.0
    %7061 = vmatpush2.msra.mxu0 0.0
    %7062 = vmatprep.subr.mxu0 0.0
    %7063 = vmatpush2.msra.mxu0 0.0
    %7064 = vmatprep.subr.mxu0 0.0
    %7065 = vmatpush2.msra.mxu0 0.0
    %7066 = vmatprep.subr.mxu0 0.0
    %7067 = vmatpush2.msra.mxu0 0.0
    %7068 = vmatprep.subr.mxu0 0.0
    %7069 = vmatpush2.msra.mxu0 0.0
    %7070 = vmatprep.subr.mxu0 0.0
    %7071 = vmatpush2.msra.mxu0 0.0
    %7072 = vmatprep.subr.mxu0 0.0
    %7073 = vmatpush2.msra.mxu0 0.0
    %7074 = vmatprep.subr.mxu0 0.0
    %7075 = vmatpush2.msra.mxu0 0.0
    %7076 = vmatprep.subr.mxu0 0.0
    %7077 = vmatpush2.msra.mxu0 0.0
    %7078 = vmatprep.subr.mxu0 0.0
    %7079 = vmatpush2.msra.mxu0 0.0
    %7080 = vmatprep.subr.mxu0 0.0
    %7081 = vmatpush2.msra.mxu0 0.0
    %7082 = vmatprep.subr.mxu0 0.0
    %7083 = vmatpush2.msra.mxu0 0.0
    %7084 = vmatprep.subr.mxu0 0.0
    %7085 = vmatpush2.msra.mxu0 0.0
    %7086 = vmatprep.subr.mxu0 0.0
    %7087 = vmatpush2.msra.mxu0 0.0
    %7088 = vmatprep.subr.mxu0 0.0
    %7089 = vmatpush2.msra.mxu0 0.0
    %7090 = vmatprep.mubr.f32.mxu0 0.0
    %7091 = vmatmul.mubr.f32.gmra.mxu0 %v6883
    %v7092 = vpop.f32.mrf.mxu0
    %v7093 = vadd.f32 %v6951, %v7092
    %v7094 = vpop.f32.mrf.mxu0
    %v7095 = vadd.f32 %v6953, %v7094
    %7096 = vdwg.mxu0
    %7097 = vmatprep.subr.mxu0 %v1150
    %7098 = vmatpush1.msra.mxu0 %v1149
    %7099 = vmatprep.subr.mxu0 %v1146
    %7100 = vmatpush1.msra.mxu0 %v1145
    %7101 = vmatprep.subr.mxu0 %v1142
    %7102 = vmatpush1.msra.mxu0 %v1141
    %7103 = vmatprep.subr.mxu0 %v1138
    %7104 = vmatpush1.msra.mxu0 %v1137
    %7105 = vmatprep.subr.mxu0 %v1134
    %7106 = vmatpush1.msra.mxu0 %v1133
    %7107 = vmatprep.subr.mxu0 %v1130
    %7108 = vmatpush1.msra.mxu0 %v1129
    %7109 = vmatprep.subr.mxu0 %v1126
    %7110 = vmatpush1.msra.mxu0 %v1125
    %7111 = vmatprep.subr.mxu0 %v1122
    %7112 = vmatpush1.msra.mxu0 %v1121
    %7113 = vmatprep.subr.mxu0 %v1118
    %7114 = vmatpush1.msra.mxu0 %v1117
    %7115 = vmatprep.subr.mxu0 %v1114
    %7116 = vmatpush1.msra.mxu0 %v1113
    %7117 = vmatprep.subr.mxu0 %v1110
    %7118 = vmatpush1.msra.mxu0 %v1109
    %7119 = vmatprep.subr.mxu0 %v1106
    %7120 = vmatpush1.msra.mxu0 %v1105
    %7121 = vmatprep.subr.mxu0 %v1102
    %7122 = vmatpush1.msra.mxu0 %v1101
    %7123 = vmatprep.subr.mxu0 %v1098
    %7124 = vmatpush1.msra.mxu0 %v1097
    %7125 = vmatprep.subr.mxu0 %v1094
    %7126 = vmatpush1.msra.mxu0 %v1093
    %7127 = vmatprep.subr.mxu0 %v1090
    %7128 = vmatpush1.msra.mxu0 %v1089
    %7129 = vmatprep.subr.mxu0 0.0
    %7130 = vmatpush2.msra.mxu0 0.0
    %7131 = vmatprep.subr.mxu0 0.0
    %7132 = vmatpush2.msra.mxu0 0.0
    %7133 = vmatprep.subr.mxu0 0.0
    %7134 = vmatpush2.msra.mxu0 0.0
    %7135 = vmatprep.subr.mxu0 0.0
    %7136 = vmatpush2.msra.mxu0 0.0
    %7137 = vmatprep.subr.mxu0 0.0
    %7138 = vmatpush2.msra.mxu0 0.0
    %7139 = vmatprep.subr.mxu0 0.0
    %7140 = vmatpush2.msra.mxu0 0.0
    %7141 = vmatprep.subr.mxu0 0.0
    %7142 = vmatpush2.msra.mxu0 0.0
    %7143 = vmatprep.subr.mxu0 0.0
    %7144 = vmatpush2.msra.mxu0 0.0
    %7145 = vmatprep.subr.mxu0 0.0
    %7146 = vmatpush2.msra.mxu0 0.0
    %7147 = vmatprep.subr.mxu0 0.0
    %7148 = vmatpush2.msra.mxu0 0.0
    %7149 = vmatprep.subr.mxu0 0.0
    %7150 = vmatpush2.msra.mxu0 0.0
    %7151 = vmatprep.subr.mxu0 0.0
    %7152 = vmatpush2.msra.mxu0 0.0
    %7153 = vmatprep.subr.mxu0 0.0
    %7154 = vmatpush2.msra.mxu0 0.0
    %7155 = vmatprep.subr.mxu0 0.0
    %7156 = vmatpush2.msra.mxu0 0.0
    %7157 = vmatprep.subr.mxu0 0.0
    %7158 = vmatpush2.msra.mxu0 0.0
    %7159 = vmatprep.subr.mxu0 0.0
    %7160 = vmatpush2.msra.mxu0 0.0
    %7161 = vmatprep.mubr.f32.mxu0 0.0
    %7162 = vmatmul.mubr.f32.gmra.mxu0 %v6883
    %v7163 = vpop.f32.mrf.mxu0
    %v7164 = vadd.f32 %v7022, %v7163
    %v7165 = vpop.f32.mrf.mxu0
    %v7166 = vadd.f32 %v7024, %v7165
    %7167 = vdwg.mxu0
    %v7168 = vadd.f32 %v7093, %v396
    %v7169 = vadd.f32 %v7095, %v400
    %v7170 = vadd.f32 %v7164, %v404
    %v7171 = vadd.f32 %v7166, %v408
    %v7172 = vxor.u32 %v7168, 2147483648
    %v7173 = vxor.u32 %v7169, 2147483648
    %v7174 = vxor.u32 %v7170, 2147483648
    %v7175 = vmul.f32 %v7172, 1.442695
    %v7176 = vpow.pop %v7175
    %v7177 = vmul.f32 %v7173, 1.442695
    %v7178 = vpow.pop %v7177
    %v7179 = vmul.f32 %v7174, 1.442695
    %v7180 = vpow.pop %v7179
    %v7181 = vadd.f32 %v7176, 1.0
    %v7182 = vadd.f32 %v7178, 1.0
    %v7183 = vadd.f32 %v7180, 1.0
    %v7184 = vrcp.pop %v7181
    %v7185 = vmul.f32 1.0, %v7184
    %v7186 = vrcp.pop %v7182
    %v7187 = vmul.f32 1.0, %v7186
    %v7188 = vrcp.pop %v7183
    %v7189 = vmul.f32 1.0, %v7188
    %v7190 = vtanh.pop %v7171
    %v7191 = vmul.f32 %v7187, %v6381
    %v7192 = vmul.f32 %v7185, %v7190
    %v7193 = vadd.f32 %v7191, %v7192
    %v7194 = vtanh.pop %v7193
    %v7195 = vmul.f32 %v7189, %v7194
    %v7196 = vld [vmem:[#allocation13] sm:$0xff]
    %v7197 = vld [vmem:[#allocation13 + $0x8] sm:$0xff]
    %v7198 = vld [vmem:[#allocation13 + $0x10] sm:$0xff]
    %v7199 = vld [vmem:[#allocation13 + $0x18] sm:$0xff]
    %v7200 = vld [vmem:[#allocation13 + $0x20] sm:$0xff]
    %v7201 = vld [vmem:[#allocation13 + $0x28] sm:$0xff]
    %v7202 = vld [vmem:[#allocation13 + $0x30] sm:$0xff]
    %v7203 = vld [vmem:[#allocation13 + $0x38] sm:$0xff]
    %v7204 = vld [vmem:[#allocation13 + $0x40] sm:$0xff]
    %v7205 = vld [vmem:[#allocation13 + $0x48] sm:$0xff]
    %v7206 = vld [vmem:[#allocation13 + $0x50] sm:$0xff]
    %v7207 = vld [vmem:[#allocation13 + $0x58] sm:$0xff]
    %v7208 = vld [vmem:[#allocation13 + $0x60] sm:$0xff]
    %v7209 = vld [vmem:[#allocation13 + $0x68] sm:$0xff]
    %v7210 = vld [vmem:[#allocation13 + $0x70] sm:$0xff]
    %v7211 = vld [vmem:[#allocation13 + $0x78] sm:$0xff]
    %v7212 = vld [vmem:[%s11] sm:$0x1]
    %v7214 = vlaneseq
    %v7215 = vshrl.u32 %v7214, 7
    %v7216 = vsub.s32 0, %v7215
    %v7217 = vrot.slane %v7212, %v7216
    %7219 = vmatprep.subr.mxu0 0.0
    %7220 = vmatpush1.msra.mxu0 %v7211
    %7221 = vmatprep.subr.mxu0 0.0
    %7222 = vmatpush1.msra.mxu0 %v7210
    %7223 = vmatprep.subr.mxu0 0.0
    %7224 = vmatpush1.msra.mxu0 %v7209
    %7225 = vmatprep.subr.mxu0 0.0
    %7226 = vmatpush1.msra.mxu0 %v7208
    %7227 = vmatprep.subr.mxu0 0.0
    %7228 = vmatpush1.msra.mxu0 %v7207
    %7229 = vmatprep.subr.mxu0 0.0
    %7230 = vmatpush1.msra.mxu0 %v7206
    %7231 = vmatprep.subr.mxu0 0.0
    %7232 = vmatpush1.msra.mxu0 %v7205
    %7233 = vmatprep.subr.mxu0 0.0
    %7234 = vmatpush1.msra.mxu0 %v7204
    %7235 = vmatprep.subr.mxu0 0.0
    %7236 = vmatpush1.msra.mxu0 %v7203
    %7237 = vmatprep.subr.mxu0 0.0
    %7238 = vmatpush1.msra.mxu0 %v7202
    %7239 = vmatprep.subr.mxu0 0.0
    %7240 = vmatpush1.msra.mxu0 %v7201
    %7241 = vmatprep.subr.mxu0 0.0
    %7242 = vmatpush1.msra.mxu0 %v7200
    %7243 = vmatprep.subr.mxu0 0.0
    %7244 = vmatpush1.msra.mxu0 %v7199
    %7245 = vmatprep.subr.mxu0 0.0
    %7246 = vmatpush1.msra.mxu0 %v7198
    %7247 = vmatprep.subr.mxu0 0.0
    %7248 = vmatpush1.msra.mxu0 %v7197
    %7249 = vmatprep.subr.mxu0 0.0
    %7250 = vmatpush1.msra.mxu0 %v7196
    %7251 = vmatprep.subr.mxu0 0.0
    %7252 = vmatpush2.msra.mxu0 0.0
    %7253 = vmatprep.subr.mxu0 0.0
    %7254 = vmatpush2.msra.mxu0 0.0
    %7255 = vmatprep.subr.mxu0 0.0
    %7256 = vmatpush2.msra.mxu0 0.0
    %7257 = vmatprep.subr.mxu0 0.0
    %7258 = vmatpush2.msra.mxu0 0.0
    %7259 = vmatprep.subr.mxu0 0.0
    %7260 = vmatpush2.msra.mxu0 0.0
    %7261 = vmatprep.subr.mxu0 0.0
    %7262 = vmatpush2.msra.mxu0 0.0
    %7263 = vmatprep.subr.mxu0 0.0
    %7264 = vmatpush2.msra.mxu0 0.0
    %7265 = vmatprep.subr.mxu0 0.0
    %7266 = vmatpush2.msra.mxu0 0.0
    %7267 = vmatprep.subr.mxu0 0.0
    %7268 = vmatpush2.msra.mxu0 0.0
    %7269 = vmatprep.subr.mxu0 0.0
    %7270 = vmatpush2.msra.mxu0 0.0
    %7271 = vmatprep.subr.mxu0 0.0
    %7272 = vmatpush2.msra.mxu0 0.0
    %7273 = vmatprep.subr.mxu0 0.0
    %7274 = vmatpush2.msra.mxu0 0.0
    %7275 = vmatprep.subr.mxu0 0.0
    %7276 = vmatpush2.msra.mxu0 0.0
    %7277 = vmatprep.subr.mxu0 0.0
    %7278 = vmatpush2.msra.mxu0 0.0
    %7279 = vmatprep.subr.mxu0 0.0
    %7280 = vmatpush2.msra.mxu0 0.0
    %7281 = vmatprep.subr.mxu0 0.0
    %7282 = vmatpush2.msra.mxu0 0.0
    %7283 = vmatprep.mubr.f32.mxu0 0.0
    %7284 = vmatmul.mubr.f32.gmra.mxu0 %v7195
    %v7285 = vpop.f32.mrf.mxu0
    %v7286 = vadd.f32 %v7217, %v7285
    %v7287 = vpop.f32.mrf.mxu0
    %7288 = vdwg.mxu0
    %v7289 = vmax.f32 %v7286, 0.0
    %v7290 = vld [vmem:[#allocation14] sm:$0xff]
    %v7291 = vld [vmem:[#allocation14 + $0x8] sm:$0xff]
    %v7292 = vld [vmem:[#allocation14 + $0x10] sm:$0xff]
    %v7293 = vld [vmem:[#allocation14 + $0x18] sm:$0xff]
    %v7294 = vld [vmem:[#allocation14 + $0x20] sm:$0xff]
    %v7295 = vld [vmem:[#allocation14 + $0x28] sm:$0xff]
    %v7296 = vld [vmem:[#allocation14 + $0x30] sm:$0xff]
    %v7297 = vld [vmem:[#allocation14 + $0x38] sm:$0xff]
    %v7298 = vld [vmem:[#allocation14 + $0x40] sm:$0xff]
    %v7299 = vld [vmem:[#allocation14 + $0x48] sm:$0xff]
    %v7300 = vld [vmem:[#allocation14 + $0x50] sm:$0xff]
    %v7301 = vld [vmem:[#allocation14 + $0x58] sm:$0xff]
    %v7302 = vld [vmem:[#allocation14 + $0x60] sm:$0xff]
    %v7303 = vld [vmem:[#allocation14 + $0x68] sm:$0xff]
    %v7304 = vld [vmem:[#allocation14 + $0x70] sm:$0xff]
    %v7305 = vld [vmem:[#allocation14 + $0x78] sm:$0xff]
    %v7306 = vld [vmem:[%s13] sm:$0x1]
    %v7308 = vlaneseq
    %v7309 = vshrl.u32 %v7308, 7
    %v7310 = vsub.s32 0, %v7309
    %v7311 = vrot.slane %v7306, %v7310
    %7313 = vmatprep.subr.mxu0 0.0
    %7314 = vmatpush1.msra.mxu0 %v7305
    %7315 = vmatprep.subr.mxu0 0.0
    %7316 = vmatpush1.msra.mxu0 %v7304
    %7317 = vmatprep.subr.mxu0 0.0
    %7318 = vmatpush1.msra.mxu0 %v7303
    %7319 = vmatprep.subr.mxu0 0.0
    %7320 = vmatpush1.msra.mxu0 %v7302
    %7321 = vmatprep.subr.mxu0 0.0
    %7322 = vmatpush1.msra.mxu0 %v7301
    %7323 = vmatprep.subr.mxu0 0.0
    %7324 = vmatpush1.msra.mxu0 %v7300
    %7325 = vmatprep.subr.mxu0 0.0
    %7326 = vmatpush1.msra.mxu0 %v7299
    %7327 = vmatprep.subr.mxu0 0.0
    %7328 = vmatpush1.msra.mxu0 %v7298
    %7329 = vmatprep.subr.mxu0 0.0
    %7330 = vmatpush1.msra.mxu0 %v7297
    %7331 = vmatprep.subr.mxu0 0.0
    %7332 = vmatpush1.msra.mxu0 %v7296
    %7333 = vmatprep.subr.mxu0 0.0
    %7334 = vmatpush1.msra.mxu0 %v7295
    %7335 = vmatprep.subr.mxu0 0.0
    %7336 = vmatpush1.msra.mxu0 %v7294
    %7337 = vmatprep.subr.mxu0 0.0
    %7338 = vmatpush1.msra.mxu0 %v7293
    %7339 = vmatprep.subr.mxu0 0.0
    %7340 = vmatpush1.msra.mxu0 %v7292
    %7341 = vmatprep.subr.mxu0 0.0
    %7342 = vmatpush1.msra.mxu0 %v7291
    %7343 = vmatprep.subr.mxu0 0.0
    %7344 = vmatpush1.msra.mxu0 %v7290
    %7345 = vmatprep.subr.mxu0 0.0
    %7346 = vmatpush2.msra.mxu0 0.0
    %7347 = vmatprep.subr.mxu0 0.0
    %7348 = vmatpush2.msra.mxu0 0.0
    %7349 = vmatprep.subr.mxu0 0.0
    %7350 = vmatpush2.msra.mxu0 0.0
    %7351 = vmatprep.subr.mxu0 0.0
    %7352 = vmatpush2.msra.mxu0 0.0
    %7353 = vmatprep.subr.mxu0 0.0
    %7354 = vmatpush2.msra.mxu0 0.0
    %7355 = vmatprep.subr.mxu0 0.0
    %7356 = vmatpush2.msra.mxu0 0.0
    %7357 = vmatprep.subr.mxu0 0.0
    %7358 = vmatpush2.msra.mxu0 0.0
    %7359 = vmatprep.subr.mxu0 0.0
    %7360 = vmatpush2.msra.mxu0 0.0
    %7361 = vmatprep.subr.mxu0 0.0
    %7362 = vmatpush2.msra.mxu0 0.0
    %7363 = vmatprep.subr.mxu0 0.0
    %7364 = vmatpush2.msra.mxu0 0.0
    %7365 = vmatprep.subr.mxu0 0.0
    %7366 = vmatpush2.msra.mxu0 0.0
    %7367 = vmatprep.subr.mxu0 0.0
    %7368 = vmatpush2.msra.mxu0 0.0
    %7369 = vmatprep.subr.mxu0 0.0
    %7370 = vmatpush2.msra.mxu0 0.0
    %7371 = vmatprep.subr.mxu0 0.0
    %7372 = vmatpush2.msra.mxu0 0.0
    %7373 = vmatprep.subr.mxu0 0.0
    %7374 = vmatpush2.msra.mxu0 0.0
    %7375 = vmatprep.subr.mxu0 0.0
    %7376 = vmatpush2.msra.mxu0 0.0
    %7377 = vmatprep.mubr.f32.mxu0 0.0
    %7378 = vmatmul.mubr.f32.gmra.mxu0 %v7289
    %v7379 = vpop.f32.mrf.mxu0
    %v7380 = vadd.f32 %v7311, %v7379
    %v7381 = vpop.f32.mrf.mxu0
    %7382 = vdwg.mxu0
    %v7383 = vmax.f32 %v7380, 0.0
    %v7384 = vld [vmem:[#allocation16] sm:$0xff]
    %v7385 = vld [vmem:[#allocation16 + $0x8] sm:$0xff]
    %v7386 = vld [vmem:[#allocation16 + $0x10] sm:$0xff]
    %v7387 = vld [vmem:[#allocation16 + $0x18] sm:$0xff]
    %v7388 = vld [vmem:[#allocation16 + $0x20] sm:$0xff]
    %v7389 = vld [vmem:[#allocation16 + $0x28] sm:$0xff]
    %v7390 = vld [vmem:[#allocation16 + $0x30] sm:$0xff]
    %v7391 = vld [vmem:[#allocation16 + $0x38] sm:$0xff]
    %v7392 = vld [vmem:[#allocation16 + $0x40] sm:$0xff]
    %v7393 = vld [vmem:[#allocation16 + $0x48] sm:$0xff]
    %v7394 = vld [vmem:[#allocation16 + $0x50] sm:$0xff]
    %v7395 = vld [vmem:[#allocation16 + $0x58] sm:$0xff]
    %v7396 = vld [vmem:[#allocation16 + $0x60] sm:$0xff]
    %v7397 = vld [vmem:[#allocation16 + $0x68] sm:$0xff]
    %v7398 = vld [vmem:[#allocation16 + $0x70] sm:$0xff]
    %v7399 = vld [vmem:[#allocation16 + $0x78] sm:$0xff]
    %v7400 = vld [vmem:[%s15] sm:$0x1]
    %v7402 = vlaneseq
    %v7403 = vshrl.u32 %v7402, 7
    %v7404 = vsub.s32 0, %v7403
    %v7405 = vrot.slane %v7400, %v7404
    %7407 = vmatprep.subr.mxu0 0.0
    %7408 = vmatpush1.msra.mxu0 %v7399
    %7409 = vmatprep.subr.mxu0 0.0
    %7410 = vmatpush1.msra.mxu0 %v7398
    %7411 = vmatprep.subr.mxu0 0.0
    %7412 = vmatpush1.msra.mxu0 %v7397
    %7413 = vmatprep.subr.mxu0 0.0
    %7414 = vmatpush1.msra.mxu0 %v7396
    %7415 = vmatprep.subr.mxu0 0.0
    %7416 = vmatpush1.msra.mxu0 %v7395
    %7417 = vmatprep.subr.mxu0 0.0
    %7418 = vmatpush1.msra.mxu0 %v7394
    %7419 = vmatprep.subr.mxu0 0.0
    %7420 = vmatpush1.msra.mxu0 %v7393
    %7421 = vmatprep.subr.mxu0 0.0
    %7422 = vmatpush1.msra.mxu0 %v7392
    %7423 = vmatprep.subr.mxu0 0.0
    %7424 = vmatpush1.msra.mxu0 %v7391
    %7425 = vmatprep.subr.mxu0 0.0
    %7426 = vmatpush1.msra.mxu0 %v7390
    %7427 = vmatprep.subr.mxu0 0.0
    %7428 = vmatpush1.msra.mxu0 %v7389
    %7429 = vmatprep.subr.mxu0 0.0
    %7430 = vmatpush1.msra.mxu0 %v7388
    %7431 = vmatprep.subr.mxu0 0.0
    %7432 = vmatpush1.msra.mxu0 %v7387
    %7433 = vmatprep.subr.mxu0 0.0
    %7434 = vmatpush1.msra.mxu0 %v7386
    %7435 = vmatprep.subr.mxu0 0.0
    %7436 = vmatpush1.msra.mxu0 %v7385
    %7437 = vmatprep.subr.mxu0 0.0
    %7438 = vmatpush1.msra.mxu0 %v7384
    %7439 = vmatprep.subr.mxu0 0.0
    %7440 = vmatpush2.msra.mxu0 0.0
    %7441 = vmatprep.subr.mxu0 0.0
    %7442 = vmatpush2.msra.mxu0 0.0
    %7443 = vmatprep.subr.mxu0 0.0
    %7444 = vmatpush2.msra.mxu0 0.0
    %7445 = vmatprep.subr.mxu0 0.0
    %7446 = vmatpush2.msra.mxu0 0.0
    %7447 = vmatprep.subr.mxu0 0.0
    %7448 = vmatpush2.msra.mxu0 0.0
    %7449 = vmatprep.subr.mxu0 0.0
    %7450 = vmatpush2.msra.mxu0 0.0
    %7451 = vmatprep.subr.mxu0 0.0
    %7452 = vmatpush2.msra.mxu0 0.0
    %7453 = vmatprep.subr.mxu0 0.0
    %7454 = vmatpush2.msra.mxu0 0.0
    %7455 = vmatprep.subr.mxu0 0.0
    %7456 = vmatpush2.msra.mxu0 0.0
    %7457 = vmatprep.subr.mxu0 0.0
    %7458 = vmatpush2.msra.mxu0 0.0
    %7459 = vmatprep.subr.mxu0 0.0
    %7460 = vmatpush2.msra.mxu0 0.0
    %7461 = vmatprep.subr.mxu0 0.0
    %7462 = vmatpush2.msra.mxu0 0.0
    %7463 = vmatprep.subr.mxu0 0.0
    %7464 = vmatpush2.msra.mxu0 0.0
    %7465 = vmatprep.subr.mxu0 0.0
    %7466 = vmatpush2.msra.mxu0 0.0
    %7467 = vmatprep.subr.mxu0 0.0
    %7468 = vmatpush2.msra.mxu0 0.0
    %7469 = vmatprep.subr.mxu0 0.0
    %7470 = vmatpush2.msra.mxu0 0.0
    %7471 = vmatprep.mubr.f32.mxu0 0.0
    %7472 = vmatmul.mubr.f32.gmra.mxu0 %v7383
    %v7473 = vpop.f32.mrf.mxu0
    %v7474 = vadd.f32 %v7405, %v7473
    %v7475 = vpop.f32.mrf.mxu0
    %7476 = vdwg.mxu0
    %7477 = vst [vmem:[#allocation17] sm:$0x3] %v7474
    // Predicated region
    $region102: #{_lambda_.1} parent=1 // pred_check
      _
    $region103: #{_lambda_.1} parent=1 // pred_check_branch
      %7479 = sbr.rel (0) target = $region105
    $region104: #{_lambda_.1} parent=1 // pred_region
      %s7481 = ssub.s32 32, 32
      %7482 = vsyncadd [#allocation4], %s7481
      %s7484 = sshll.u32 [#allocation17], 4
      %s7485 = int_to_ptr.vmem [resolvable:$true] %s7484
      %7487 = dma.vmem_to_hbm [thread:$0]  %s7485, 32, %s16, [#allocation4]
    $region105: #{_lambda_.1} parent=1 // pred_fallthru
      _
    // Predicated region
    $region106: #{_lambda_.1} parent=1 // pred_check
      _
    $region107: #{_lambda_.1} parent=1 // pred_check_branch
      %7489 = sbr.rel (0) target = $region109
    $region108: #{_lambda_.1} parent=1 // pred_region
      %7490 = dma.done [#allocation4], 32
    $region109: #{_lambda_.1} parent=1 // pred_fallthru
      _
    %7491 = vsyncpa [#allocation3], 1
    %7492 = vsyncpa [#allocation6], 1
    %7493 = vsyncpa [#allocation9], 1
    %7494 = vsyncpa [#allocation12], 1
    %7495 = vsyncpa [#allocation15], 1
    %7496 = vsyncpa [#allocation4], 1

</llo_original>
